<compile_context>
chip_gen: v7x
topology: tpu7x:2x2x1
jax: 0.10.0
libtpu: 0.0.40
codegen_flags: <defaults>
</compile_context>

<pallas_src>
import functools

import jax
import jax.numpy as jnp
from jax.experimental import pallas as pl
from jax.experimental.pallas import tpu as pltpu


def _attn_kernel(*args, num_heads, scale, compute_dtype, exp_dtype, has_bias):
    """One (batch, q-tile, k-tile) grid step of the fused attention forward."""
    if has_bias:
        (q_ref, k_ref, v_ref, bias_ref,
         wq_ref, bq_ref, wk_ref, bk_ref, wv_ref, bv_ref, wp_ref, bp_ref,
         o_ref, q_scr, m_scr, l_scr, acc_scr) = args
    else:
        (q_ref, k_ref, v_ref,
         wq_ref, bq_ref, wk_ref, bk_ref, wv_ref, bv_ref, wp_ref, bp_ref,
         o_ref, q_scr, m_scr, l_scr, acc_scr) = args
        bias_ref = None

    ki = pl.program_id(2)
    nk_tiles = pl.num_programs(2)

    H = num_heads
    tq, qk_dim = q_scr.shape
    v_dim = acc_scr.shape[1]
    dqk = qk_dim // H
    dv = v_dim // H

    # ---- once per (batch, q-tile): fused q projection (single dim->qk_dim matmul),
    #      scale folded into q; reset online-softmax state. -------------------------
    @pl.when(ki == 0)
    def _init():
        xq = q_ref[0].astype(compute_dtype)                                # (tq, dim)
        qp = jnp.dot(xq, wq_ref[...], preferred_element_type=jnp.float32)  # (tq, qk_dim)
        q_scr[...] = ((qp + bq_ref[...]) * scale).astype(compute_dtype)
        m_scr[...] = jnp.full(m_scr.shape, -jnp.inf, dtype=jnp.float32)
        l_scr[...] = jnp.zeros(l_scr.shape, jnp.float32)
        acc_scr[...] = jnp.zeros(acc_scr.shape, jnp.float32)

    # ---- every k-tile: fused K/V projections + per-head online-softmax update ----
    xk = k_ref[0].astype(compute_dtype)                                    # (tk, dim)
    xv = v_ref[0].astype(compute_dtype)                                    # (tk, dim)
    k_proj = (jnp.dot(xk, wk_ref[...], preferred_element_type=jnp.float32)
              + bk_ref[...]).astype(compute_dtype)                         # (tk, qk_dim)
    v_proj = (jnp.dot(xv, wv_ref[...], preferred_element_type=jnp.float32)
              + bv_ref[...]).astype(compute_dtype)                         # (tk, v_dim)
    bias = bias_ref[0].astype(jnp.float32) if has_bias else None           # (tq, tk)

    qp = q_scr[...]                                                        # (tq, qk_dim)

    # Per-head scores / PV (K=dqk contraction is inherent to the module); the
    # softmax statistics and accumulator live lane-dense and are updated per head.
    for h in range(H):
        qh = qp[:, h * dqk:(h + 1) * dqk]                                  # (tq, dqk)
        kh = k_proj[:, h * dqk:(h + 1) * dqk]                              # (tk, dqk)
        vh = v_proj[:, h * dv:(h + 1) * dv]                                # (tk, dv)

        s = jax.lax.dot_general(qh, kh, (((1,), (1,)), ((), ())),
                                preferred_element_type=jnp.float32)        # (tq, tk)
        if bias is not None:
            s = s + bias

        m_prev = m_scr[:, h:h + 1]                                         # (tq, 1) f32
        m_new = jnp.maximum(m_prev, jnp.max(s, axis=-1, keepdims=True))
        alpha = jnp.exp(m_prev - m_new)                                    # (tq, 1) f32
        # exp in bf16 on v6e/v7x (packed EUP); sum / acc stay f32.
        p = jnp.exp((s - m_new).astype(exp_dtype))                         # (tq, tk)
        l_new = (alpha * l_scr[:, h:h + 1]
                 + jnp.sum(p.astype(jnp.float32), axis=-1, keepdims=True))
        pv = jnp.dot(p.astype(compute_dtype), vh,
                     preferred_element_type=jnp.float32)                   # (tq, dv)

        sl = slice(h * dv, (h + 1) * dv)
        acc_scr[:, sl] = alpha * acc_scr[:, sl] + pv
        m_scr[:, h:h + 1] = m_new
        l_scr[:, h:h + 1] = l_new

    # ---- once per (batch, q-tile): per-head normalize, then ONE fused output
    #      projection over the lane-dense (tq, v_dim) accumulator. -----------------
    @pl.when(ki == nk_tiles - 1)
    def _finalize():
        for h in range(H):
            sl = slice(h * dv, (h + 1) * dv)
            inv = pl.reciprocal(l_scr[:, h:h + 1], approx=True)            # (tq, 1)
            acc_scr[:, sl] = acc_scr[:, sl] * inv
        out = jnp.dot(acc_scr[...].astype(compute_dtype), wp_ref[...],
                      preferred_element_type=jnp.float32)                  # (tq, out_dim)
        o_ref[0] = (out + bp_ref[...]).astype(o_ref.dtype)


def _pick_tile(n, preferred, multiples):
    """Largest tile <= preferred dividing n, trying coarser MXU alignments first
    (falls back to the full extent, which is always layout-legal)."""
    if n <= preferred:
        return n
    for m in multiples:
        t = (preferred // m) * m
        while t >= m:
            if n % t == 0:
                return t
            t -= m
    return n


def _padded_2d_bytes(rows, cols, itemsize):
    """VMEM footprint of a 2-D tile after (sublane, 128-lane) padding."""
    sub = {1: 32, 2: 16, 4: 8}.get(itemsize, 8)
    r = -(-rows // sub) * sub
    c = -(-cols // 128) * 128
    return r * c * itemsize


def _vmem_capacity_bytes():
    try:  # narrow probe only; conservative default (v7x per-core VMEM) otherwise
        cap = getattr(pltpu.get_tpu_info(), "vmem_capacity_bytes", None)
        if cap:
            return int(cap)
    except Exception:
        pass
    return 64 << 20


def _auto_exp_dtype(compute_dtype):
    """bf16 exp only where the EUP supports it (v6e / v7x) and compute is bf16."""
    if jnp.dtype(compute_dtype) != jnp.dtype(jnp.bfloat16):
        return jnp.float32
    try:
        kind = jax.devices()[0].device_kind.lower()
    except Exception:
        return jnp.float32
    if ("v6" in kind) or ("v7" in kind) or ("7x" in kind):
        return jnp.bfloat16
    return jnp.float32


def compress_full_attn(query, key, value, att_bias, params, *, num_heads,
                       qk_compress=1, scale_mode='v1',
                       q_tile=256, k_tile=256,
                       compute_dtype=jnp.bfloat16, exp_dtype=None):
    """Fused CompressFullAttnModule.forward (eval mode, dropout = identity)."""
    B, nq, dim = query.shape
    _, nk, _ = key.shape
    assert value.shape[1] == nk

    wq, bq = params['wq'], params['bq']
    wk, bk = params['wk'], params['bk']
    wv, bv = params['wv'], params['bv']
    wp, bp = params['wp'], params['bp']

    qk_dim = wq.shape[0]
    v_dim = wv.shape[0]
    out_dim = wp.shape[0]
    assert qk_dim % num_heads == 0 and v_dim % num_heads == 0

    head_dim = dim // num_heads
    if scale_mode == 'v1':
        scale = head_dim ** (-0.5)
    elif scale_mode == 'v2':
        scale = (head_dim / qk_compress) ** (-0.5)
    else:
        raise NotImplementedError(scale_mode)

    out_dtype = query.dtype
    if exp_dtype is None:
        exp_dtype = _auto_exp_dtype(compute_dtype)

    # One-time weight re-layout: transpose to (in, out) so the kernel does full-width
    # matmuls with NO transposes, NO per-head weight slices, NO head merge reshapes.
    wq_t = wq.T.astype(compute_dtype)                      # (dim, qk_dim)
    wk_t = wk.T.astype(compute_dtype)                      # (dim, qk_dim)
    wv_t = wv.T.astype(compute_dtype)                      # (dim, v_dim)
    wp_t = wp.T.astype(compute_dtype)                      # (v_dim, out_dim)
    bq_2d = bq.reshape(1, qk_dim).astype(jnp.float32)
    bk_2d = bk.reshape(1, qk_dim).astype(jnp.float32)
    bv_2d = bv.reshape(1, v_dim).astype(jnp.float32)
    bp_2d = bp.reshape(1, out_dim).astype(jnp.float32)

    q_in = query.astype(compute_dtype)
    k_in = key.astype(compute_dtype)
    v_in = value.astype(compute_dtype)

    has_bias = att_bias is not None
    bias_in = att_bias.astype(compute_dtype) if has_bias else None   # bf16 bias stream

    cd_b = jnp.dtype(compute_dtype).itemsize
    out_b = jnp.dtype(out_dtype).itemsize

    # Tile selection: 256/128-aligned where possible (v6e/v7x 256-wide MXU),
    # 16-sublane minimum for bf16 packing (8 for f32).
    sub_min = 16 if cd_b == 2 else 8
    tq = _pick_tile(nq, q_tile, (256, 128, sub_min))
    tk = _pick_tile(nk, k_tile, (256, 128))
    grid = (B, nq // tq, nk // tk)
    # NOTE(v7x): parallel work = B * (nq // tq); keep it >= 2 and even where
    # possible so both TensorCores are busy.

    kernel = functools.partial(
        _attn_kernel, num_heads=num_heads, scale=float(scale),
        compute_dtype=compute_dtype, exp_dtype=exp_dtype, has_bias=has_bias)

    # Lane-dense scratch (softmax state + accumulator live across the ki axis).
    scratch_shapes = [
        pltpu.VMEM((tq, qk_dim), compute_dtype),   # pre-scaled projected q
        pltpu.VMEM((tq, num_heads), jnp.float32),  # running max  m  (per head col)
        pltpu.VMEM((tq, num_heads), jnp.float32),  # running sum  l
        pltpu.VMEM((tq, v_dim), jnp.float32),      # running unnormalized output
    ]

    act_specs = [
        pl.BlockSpec((1, tq, dim), lambda b, qi, ki: (b, qi, 0)),   # query
        pl.BlockSpec((1, tk, dim), lambda b, qi, ki: (b, ki, 0)),   # key
        pl.BlockSpec((1, tk, dim), lambda b, qi, ki: (b, ki, 0)),   # value
    ]
    if has_bias:
        act_specs.append(pl.BlockSpec((1, tq, tk), lambda b, qi, ki: (b, qi, ki)))
    # Grid-invariant weights: whole-array VMEM residents (single copy, no per-step
    # DMA, no double buffering).
    weight_spec = pl.BlockSpec(memory_space=pltpu.MemorySpace.VMEM)
    in_specs = act_specs + [weight_spec] * 8
    out_spec = pl.BlockSpec((1, tq, out_dim), lambda b, qi, ki: (b, qi, 0))

    weights = (wq_t, bq_2d, wk_t, bk_2d, wv_t, bv_2d, wp_t, bp_2d)
    inputs = ((q_in, k_in, v_in, bias_in) if has_bias else (q_in, k_in, v_in)) + weights

    # Cost estimate (advisory, for XLA scheduling around the call).
    q_tiles = nq // tq
    flops = 2 * B * (nq * dim * qk_dim
                     + q_tiles * nk * dim * (qk_dim + v_dim)
                     + nq * nk * (qk_dim + v_dim)
                     + nq * v_dim * out_dim)
    transcendentals = B * num_heads * nq * nk
    bytes_accessed = ((q_in.size + k_in.size + v_in.size) * cd_b
                      + (bias_in.size * cd_b if has_bias else 0)
                      + B * nq * out_dim * out_b
                      + (wq_t.size + wk_t.size + wv_t.size + wp_t.size) * cd_b)
    cost = pl.CostEstimate(flops=int(flops), transcendentals=int(transcendentals),
                           bytes_accessed=int(bytes_accessed))

    # VMEM budget: padded-footprint estimate + headroom, clamped to device capacity.
    est = 0
    est += 2 * _padded_2d_bytes(tq, dim, cd_b)               # q block (x2 buffers)
    est += 2 * 2 * _padded_2d_bytes(tk, dim, cd_b)           # k, v blocks
    if has_bias:
        est += 2 * _padded_2d_bytes(tq, tk, cd_b)            # bias block
    est += 2 * _padded_2d_bytes(tq, out_dim, out_b)          # output block
    for w in (wq_t, wk_t, wv_t, wp_t):                       # resident weights
        est += _padded_2d_bytes(w.shape[0], w.shape[1], cd_b)
    for bvec in (bq_2d, bk_2d, bv_2d, bp_2d):
        est += _padded_2d_bytes(1, bvec.shape[1], 4)
    est += _padded_2d_bytes(tq, qk_dim, cd_b)                # q_scr
    est += 2 * _padded_2d_bytes(tq, num_heads, 4)            # m, l
    est += _padded_2d_bytes(tq, v_dim, 4)                    # acc
    est += 4 * _padded_2d_bytes(tq, tk, 4)                   # s / p temporaries
    est += _padded_2d_bytes(tk, qk_dim, 4) + _padded_2d_bytes(tk, v_dim, 4)
    cap = _vmem_capacity_bytes()
    vmem_limit = int(min(max(est + (8 << 20), 32 << 20), cap))

    fn = pl.pallas_call(
        kernel,
        out_shape=jax.ShapeDtypeStruct((B, nq, out_dim), out_dtype),
        grid_spec=pltpu.PrefetchScalarGridSpec(
            num_scalar_prefetch=0,
            grid=grid,
            in_specs=in_specs,
            out_specs=out_spec,
            scratch_shapes=scratch_shapes),
        compiler_params=pltpu.CompilerParams(
            dimension_semantics=("parallel", "parallel", "arbitrary"),
            vmem_limit_bytes=vmem_limit),
        cost_estimate=cost,
    )
    return fn(*inputs)


def _reference(query, key, value, att_bias, params, *, num_heads, scale):
    """Pure-JAX reference (mirrors the PyTorch module)."""
    wq, bq = params['wq'], params['bq'].reshape(-1)
    wk, bk = params['wk'], params['bk'].reshape(-1)
    wv, bv = params['wv'], params['bv'].reshape(-1)
    wp, bp = params['wp'], params['bp'].reshape(-1)
    B = query.shape[0]
    q = query @ wq.T + bq
    k = key @ wk.T + bk
    v = value @ wv.T + bv
    dqk = wq.shape[0] // num_heads
    dv = wv.shape[0] // num_heads
    qh = q.reshape(B, -1, num_heads, dqk).transpose(0, 2, 1, 3)
    kh = k.reshape(B, -1, num_heads, dqk).transpose(0, 2, 1, 3)
    vh = v.reshape(B, -1, num_heads, dv).transpose(0, 2, 1, 3)
    attn = jnp.einsum('bhqc,bhkc->bhqk', qh, kh) * scale
    if att_bias is not None:
        attn = attn + att_bias[:, None, :, :]
    attn = jax.nn.softmax(attn, axis=-1)
    out = jnp.einsum('bhqk,bhkc->bhqc', attn, vh)
    out = out.transpose(0, 2, 1, 3).reshape(B, -1, num_heads * dv)
    return out @ wp.T + bp


def _max_rel_err(a, b):
    return float(jnp.max(jnp.abs(a - b)) / (jnp.max(jnp.abs(b)) + 1e-6))


if __name__ == "__main__":
    keys = jax.random.split(jax.random.PRNGKey(0), 23)

    # ---- config 1: exercises q/k tiling + multi-tile online softmax, bf16 path ----
    B, NQ, NK, DIM, H, QKC = 2, 256, 256, 128, 8, 2
    OUT_DIM = DIM
    QK_DIM = DIM // QKC
    query = jax.random.normal(keys[0], (B, NQ, DIM), jnp.float32)
    key_in = jax.random.normal(keys[1], (B, NK, DIM), jnp.float32)
    value = jax.random.normal(keys[2], (B, NK, DIM), jnp.float32)
    att_bias = 0.1 * jax.random.normal(keys[3], (B, NQ, NK), jnp.float32)
    params = {
        'wq': 0.1 * jax.random.normal(keys[4], (QK_DIM, DIM), jnp.float32),
        'bq': 0.01 * jax.random.normal(keys[5], (QK_DIM,), jnp.float32),
        'wk': 0.1 * jax.random.normal(keys[6], (QK_DIM, DIM), jnp.float32),
        'bk': 0.01 * jax.random.normal(keys[7], (QK_DIM,), jnp.float32),
        'wv': 0.1 * jax.random.normal(keys[8], (DIM, DIM), jnp.float32),
        'bv': 0.01 * jax.random.normal(keys[9], (DIM,), jnp.float32),
        'wp': 0.1 * jax.random.normal(keys[10], (OUT_DIM, DIM), jnp.float32),
        'bp': 0.01 * jax.random.normal(keys[11], (OUT_DIM,), jnp.float32),
    }
    out = compress_full_attn(query, key_in, value, att_bias, params,
                             num_heads=H, qk_compress=QKC, scale_mode='v1',
                             q_tile=128, k_tile=128,
                             compute_dtype=jnp.bfloat16)
    out = jax.block_until_ready(out)
    ref = _reference(query, key_in, value, att_bias, params, num_heads=H,
                     scale=(DIM // H) ** (-0.5))
    assert out.shape == (B, NQ, OUT_DIM)
    err = _max_rel_err(out.astype(jnp.float32), ref)
    assert err < 2e-2, f"tiled bf16 kernel mismatch: rel err = {err}"

    # ---- config 2: tiny shapes (single tile), f32 path, NO bias, 'v2' scale ----
    B2, N2, D2, H2, QKC2 = 2, 8, 32, 4, 2
    params2 = {
        'wq': 0.1 * jax.random.normal(keys[12], (D2 // QKC2, D2), jnp.float32),
        'bq': 0.01 * jax.random.normal(keys[13], (D2 // QKC2,), jnp.float32),
        'wk': 0.1 * jax.random.normal(keys[14], (D2 // QKC2, D2), jnp.float32),
        'bk': 0.01 * jax.random.normal(keys[15], (D2 // QKC2,), jnp.float32),
        'wv': 0.1 * jax.random.normal(keys[16], (D2, D2), jnp.float32),
        'bv': 0.01 * jax.random.normal(keys[17], (D2,), jnp.float32),
        'wp': 0.1 * jax.random.normal(keys[18], (D2, D2), jnp.float32),
        'bp': 0.01 * jax.random.normal(keys[19], (D2,), jnp.float32),
    }
    q2 = jax.random.normal(keys[20], (B2, N2, D2), jnp.float32)
    k2 = jax.random.normal(keys[21], (B2, N2, D2), jnp.float32)
    v2 = jax.random.normal(keys[22], (B2, N2, D2), jnp.float32)
    out2 = compress_full_attn(q2, k2, v2, None, params2, num_heads=H2,
                              qk_compress=QKC2, scale_mode='v2',
                              compute_dtype=jnp.float32)
    out2 = jax.block_until_ready(out2)
    ref2 = _reference(q2, k2, v2, None, params2, num_heads=H2,
                      scale=((D2 // H2) / QKC2) ** (-0.5))
    assert jnp.allclose(out2, ref2, atol=2e-3, rtol=2e-3), "f32 kernel mismatch"

    print("KERNEL_OK")
</pallas_src>

<mosaic_0001>
module attributes {stable_mosaic.version = 11 : i64} {
  func.func @_attn_kernel(%arg0: i32, %arg1: i32, %arg2: i32, %arg3: memref<1x128x128xbf16, #tpu.memory_space<vmem>>, %arg4: memref<1x128x128xbf16, #tpu.memory_space<vmem>>, %arg5: memref<1x128x128xbf16, #tpu.memory_space<vmem>>, %arg6: memref<1x128x128xbf16, #tpu.memory_space<vmem>>, %arg7: memref<128x64xbf16, #tpu.memory_space<vmem>>, %arg8: memref<1x64xf32, #tpu.memory_space<vmem>>, %arg9: memref<128x64xbf16, #tpu.memory_space<vmem>>, %arg10: memref<1x64xf32, #tpu.memory_space<vmem>>, %arg11: memref<128x128xbf16, #tpu.memory_space<vmem>>, %arg12: memref<1x128xf32, #tpu.memory_space<vmem>>, %arg13: memref<128x128xbf16, #tpu.memory_space<vmem>>, %arg14: memref<1x128xf32, #tpu.memory_space<vmem>>, %arg15: memref<1x128x128xf32, #tpu.memory_space<vmem>>, %arg16: memref<128x64xbf16, #tpu.memory_space<vmem>>, %arg17: memref<128x8xf32, #tpu.memory_space<vmem>>, %arg18: memref<128x8xf32, #tpu.memory_space<vmem>>, %arg19: memref<128x128xf32, #tpu.memory_space<vmem>>) attributes {dimension_semantics = [#tpu.dimension_semantics<parallel>, #tpu.dimension_semantics<parallel>, #tpu.dimension_semantics<arbitrary>], iteration_bounds = array<i64: 2, 2, 2>, scalar_prefetch = 0 : i64, scratch_operands = 4 : i64, tpu.core_type = #tpu.core_type<tc>, window_params = [{transform_indices = @transform_0, window_bounds = array<i64: 1, 128, 128>}, {transform_indices = @transform_1, window_bounds = array<i64: 1, 128, 128>}, {transform_indices = @transform_2, window_bounds = array<i64: 1, 128, 128>}, {transform_indices = @transform_3, window_bounds = array<i64: 1, 128, 128>}, {pipeline_mode = #tpu.pipeline_mode<synchronous>, transform_indices = @transform_4, window_bounds = array<i64: 128, 64>}, {pipeline_mode = #tpu.pipeline_mode<synchronous>, transform_indices = @transform_5, window_bounds = array<i64: 1, 64>}, {pipeline_mode = #tpu.pipeline_mode<synchronous>, transform_indices = @transform_6, window_bounds = array<i64: 128, 64>}, {pipeline_mode = #tpu.pipeline_mode<synchronous>, transform_indices = @transform_7, window_bounds = array<i64: 1, 64>}, {pipeline_mode = #tpu.pipeline_mode<synchronous>, transform_indices = @transform_8, window_bounds = array<i64: 128, 128>}, {pipeline_mode = #tpu.pipeline_mode<synchronous>, transform_indices = @transform_9, window_bounds = array<i64: 1, 128>}, {pipeline_mode = #tpu.pipeline_mode<synchronous>, transform_indices = @transform_10, window_bounds = array<i64: 128, 128>}, {pipeline_mode = #tpu.pipeline_mode<synchronous>, transform_indices = @transform_11, window_bounds = array<i64: 1, 128>}, {transform_indices = @transform_12, window_bounds = array<i64: 1, 128, 128>}]} {
    %c0_i32 = arith.constant 0 : i32
    %0 = arith.cmpi eq, %arg2, %c0_i32 : i32
    %1 = arith.extui %0 : i1 to i32
    %c0_i32_0 = arith.constant 0 : i32
    %2 = arith.cmpi ne, %1, %c0_i32_0 : i32
    scf.if %2 {
      %c0_135 = arith.constant 0 : index
      %c0_136 = arith.constant 0 : index
      %c0_137 = arith.constant 0 : index
      %250 = vector.load %arg3[%c0_135, %c0_136, %c0_137] : memref<1x128x128xbf16, #tpu.memory_space<vmem>>, vector<1x128x128xbf16>
      %251 = vector.shape_cast %250 : vector<1x128x128xbf16> to vector<128x128xbf16>
      %c0_138 = arith.constant 0 : index
      %c0_139 = arith.constant 0 : index
      %252 = vector.load %arg7[%c0_138, %c0_139] : memref<128x64xbf16, #tpu.memory_space<vmem>>, vector<128x64xbf16>
      %cst_140 = arith.constant dense<0.000000e+00> : vector<128x64xf32>
      %253 = tpu.matmul %251, %252, %cst_140 {dimension_numbers = #tpu.dot_dimension_numbers<[1], [0], [0], [1], [0, 0, 1, 1], [], []>} : vector<128x128xbf16>, vector<128x64xbf16>, vector<128x64xf32> -> vector<128x64xf32>
      %c0_141 = arith.constant 0 : index
      %c0_142 = arith.constant 0 : index
      %254 = vector.load %arg8[%c0_141, %c0_142] : memref<1x64xf32, #tpu.memory_space<vmem>>, vector<1x64xf32>
      %255 = vector.broadcast %254 : vector<1x64xf32> to vector<128x64xf32>
      %256 = arith.addf %253, %255 : vector<128x64xf32>
      %cst_143 = arith.constant 2.500000e-01 : f32
      %257 = vector.broadcast %cst_143 : f32 to vector<128x64xf32>
      %258 = arith.mulf %256, %257 : vector<128x64xf32>
      %259 = arith.truncf %258 : vector<128x64xf32> to vector<128x64xbf16>
      %c0_144 = arith.constant 0 : index
      %c0_145 = arith.constant 0 : index
      %260 = vector.load %arg16[%c0_144, %c0_145] : memref<128x64xbf16, #tpu.memory_space<vmem>>, vector<128x64xbf16>
      tpu.vector_store %arg16[%c0_144, %c0_145], %259 {strides = array<i32>} : memref<128x64xbf16, #tpu.memory_space<vmem>>, vector<128x64xbf16>,
      %cst_146 = arith.constant 0xFF800000 : f32
      %261 = vector.broadcast %cst_146 : f32 to vector<128x8xf32>
      %c0_147 = arith.constant 0 : index
      %c0_148 = arith.constant 0 : index
      %262 = vector.load %arg17[%c0_147, %c0_148] : memref<128x8xf32, #tpu.memory_space<vmem>>, vector<128x8xf32>
      tpu.vector_store %arg17[%c0_147, %c0_148], %261 {strides = array<i32>} : memref<128x8xf32, #tpu.memory_space<vmem>>, vector<128x8xf32>,
      %cst_149 = arith.constant 0.000000e+00 : f32
      %263 = vector.broadcast %cst_149 : f32 to vector<128x8xf32>
      %c0_150 = arith.constant 0 : index
      %c0_151 = arith.constant 0 : index
      %264 = vector.load %arg18[%c0_150, %c0_151] : memref<128x8xf32, #tpu.memory_space<vmem>>, vector<128x8xf32>
      tpu.vector_store %arg18[%c0_150, %c0_151], %263 {strides = array<i32>} : memref<128x8xf32, #tpu.memory_space<vmem>>, vector<128x8xf32>,
      %cst_152 = arith.constant 0.000000e+00 : f32
      %265 = vector.broadcast %cst_152 : f32 to vector<128x128xf32>
      %c0_153 = arith.constant 0 : index
      %c0_154 = arith.constant 0 : index
      %266 = vector.load %arg19[%c0_153, %c0_154] : memref<128x128xf32, #tpu.memory_space<vmem>>, vector<128x128xf32>
      tpu.vector_store %arg19[%c0_153, %c0_154], %265 {strides = array<i32>} : memref<128x128xf32, #tpu.memory_space<vmem>>, vector<128x128xf32>,
    } else {
    }
    %c0 = arith.constant 0 : index
    %c0_1 = arith.constant 0 : index
    %c0_2 = arith.constant 0 : index
    %3 = vector.load %arg4[%c0, %c0_1, %c0_2] : memref<1x128x128xbf16, #tpu.memory_space<vmem>>, vector<1x128x128xbf16>
    %4 = vector.shape_cast %3 : vector<1x128x128xbf16> to vector<128x128xbf16>
    %c0_3 = arith.constant 0 : index
    %c0_4 = arith.constant 0 : index
    %c0_5 = arith.constant 0 : index
    %5 = vector.load %arg5[%c0_3, %c0_4, %c0_5] : memref<1x128x128xbf16, #tpu.memory_space<vmem>>, vector<1x128x128xbf16>
    %6 = vector.shape_cast %5 : vector<1x128x128xbf16> to vector<128x128xbf16>
    %c0_6 = arith.constant 0 : index
    %c0_7 = arith.constant 0 : index
    %7 = vector.load %arg9[%c0_6, %c0_7] : memref<128x64xbf16, #tpu.memory_space<vmem>>, vector<128x64xbf16>
    %cst = arith.constant dense<0.000000e+00> : vector<128x64xf32>
    %8 = tpu.matmul %4, %7, %cst {dimension_numbers = #tpu.dot_dimension_numbers<[1], [0], [0], [1], [0, 0, 1, 1], [], []>} : vector<128x128xbf16>, vector<128x64xbf16>, vector<128x64xf32> -> vector<128x64xf32>
    %c0_8 = arith.constant 0 : index
    %c0_9 = arith.constant 0 : index
    %9 = vector.load %arg10[%c0_8, %c0_9] : memref<1x64xf32, #tpu.memory_space<vmem>>, vector<1x64xf32>
    %10 = vector.broadcast %9 : vector<1x64xf32> to vector<128x64xf32>
    %11 = arith.addf %8, %10 : vector<128x64xf32>
    %12 = arith.truncf %11 : vector<128x64xf32> to vector<128x64xbf16>
    %c0_10 = arith.constant 0 : index
    %c0_11 = arith.constant 0 : index
    %13 = vector.load %arg11[%c0_10, %c0_11] : memref<128x128xbf16, #tpu.memory_space<vmem>>, vector<128x128xbf16>
    %cst_12 = arith.constant dense<0.000000e+00> : vector<128x128xf32>
    %14 = tpu.matmul %6, %13, %cst_12 {dimension_numbers = #tpu.dot_dimension_numbers<[1], [0], [0], [1], [0, 0, 1, 1], [], []>} : vector<128x128xbf16>, vector<128x128xbf16>, vector<128x128xf32> -> vector<128x128xf32>
    %c0_13 = arith.constant 0 : index
    %c0_14 = arith.constant 0 : index
    %15 = vector.load %arg12[%c0_13, %c0_14] : memref<1x128xf32, #tpu.memory_space<vmem>>, vector<1x128xf32>
    %16 = vector.broadcast %15 : vector<1x128xf32> to vector<128x128xf32>
    %17 = arith.addf %14, %16 : vector<128x128xf32>
    %18 = arith.truncf %17 : vector<128x128xf32> to vector<128x128xbf16>
    %c0_15 = arith.constant 0 : index
    %c0_16 = arith.constant 0 : index
    %c0_17 = arith.constant 0 : index
    %19 = vector.load %arg6[%c0_15, %c0_16, %c0_17] : memref<1x128x128xbf16, #tpu.memory_space<vmem>>, vector<1x128x128xbf16>
    %20 = vector.shape_cast %19 : vector<1x128x128xbf16> to vector<128x128xbf16>
    %21 = arith.extf %20 : vector<128x128xbf16> to vector<128x128xf32>
    %c0_18 = arith.constant 0 : index
    %c0_19 = arith.constant 0 : index
    %22 = vector.load %arg16[%c0_18, %c0_19] : memref<128x64xbf16, #tpu.memory_space<vmem>>, vector<128x64xbf16>
    %23 = vector.extract_strided_slice %22 {offsets = [0, 0], sizes = [128, 8], strides = [1, 1]} : vector<128x64xbf16> to vector<128x8xbf16>
    %24 = vector.extract_strided_slice %12 {offsets = [0, 0], sizes = [128, 8], strides = [1, 1]} : vector<128x64xbf16> to vector<128x8xbf16>
    %25 = vector.extract_strided_slice %18 {offsets = [0, 0], sizes = [128, 16], strides = [1, 1]} : vector<128x128xbf16> to vector<128x16xbf16>
    %cst_20 = arith.constant dense<0.000000e+00> : vector<128x128xf32>
    %26 = tpu.matmul %23, %24, %cst_20 {dimension_numbers = #tpu.dot_dimension_numbers<[1], [1], [0], [0], [0, 0, 1, 0], [], []>} : vector<128x8xbf16>, vector<128x8xbf16>, vector<128x128xf32> -> vector<128x128xf32>
    %27 = arith.addf %26, %21 : vector<128x128xf32>
    %c0_21 = arith.constant 0 : index
    %c0_22 = arith.constant 0 : index
    %28 = vector.load %arg17[%c0_21, %c0_22] : memref<128x8xf32, #tpu.memory_space<vmem>>, vector<128x1xf32>
    %cst_23 = arith.constant dense<0xFF800000> : vector<128xf32>
    %29 = vector.multi_reduction <maximumf>, %27, %cst_23 [1] : vector<128x128xf32> to vector<128xf32>
    %30 = vector.shape_cast %29 : vector<128xf32> to vector<128x1xf32>
    %31 = arith.maximumf %28, %30 : vector<128x1xf32>
    %32 = arith.subf %28, %31 : vector<128x1xf32>
    %33 = math.exp %32 : vector<128x1xf32>
    %34 = vector.broadcast %31 : vector<128x1xf32> to vector<128x128xf32>
    %35 = arith.subf %27, %34 : vector<128x128xf32>
    %36 = math.exp %35 : vector<128x128xf32>
    %c0_24 = arith.constant 0 : index
    %c0_25 = arith.constant 0 : index
    %37 = vector.load %arg18[%c0_24, %c0_25] : memref<128x8xf32, #tpu.memory_space<vmem>>, vector<128x1xf32>
    %38 = arith.mulf %33, %37 : vector<128x1xf32>
    %cst_26 = arith.constant dense<0.000000e+00> : vector<128xf32>
    %39 = vector.multi_reduction <add>, %36, %cst_26 [1] : vector<128x128xf32> to vector<128xf32>
    %40 = vector.shape_cast %39 : vector<128xf32> to vector<128x1xf32>
    %41 = arith.addf %38, %40 : vector<128x1xf32>
    %42 = arith.truncf %36 : vector<128x128xf32> to vector<128x128xbf16>
    %cst_27 = arith.constant dense<0.000000e+00> : vector<128x16xf32>
    %43 = tpu.matmul %42, %25, %cst_27 {dimension_numbers = #tpu.dot_dimension_numbers<[1], [0], [0], [1], [0, 0, 1, 1], [], []>} : vector<128x128xbf16>, vector<128x16xbf16>, vector<128x16xf32> -> vector<128x16xf32>
    %c0_28 = arith.constant 0 : index
    %c0_29 = arith.constant 0 : index
    %44 = vector.load %arg19[%c0_28, %c0_29] : memref<128x128xf32, #tpu.memory_space<vmem>>, vector<128x16xf32>
    %45 = vector.broadcast %33 : vector<128x1xf32> to vector<128x16xf32>
    %46 = arith.mulf %45, %44 : vector<128x16xf32>
    %47 = arith.addf %46, %43 : vector<128x16xf32>
    %c0_30 = arith.constant 0 : index
    %c0_31 = arith.constant 0 : index
    %48 = vector.load %arg19[%c0_30, %c0_31] : memref<128x128xf32, #tpu.memory_space<vmem>>, vector<128x16xf32>
    tpu.vector_store %arg19[%c0_30, %c0_31], %47 {strides = array<i32>} : memref<128x128xf32, #tpu.memory_space<vmem>>, vector<128x16xf32>,
    %c0_32 = arith.constant 0 : index
    %c0_33 = arith.constant 0 : index
    %49 = vector.load %arg17[%c0_32, %c0_33] : memref<128x8xf32, #tpu.memory_space<vmem>>, vector<128x1xf32>
    tpu.vector_store %arg17[%c0_32, %c0_33], %31 {strides = array<i32>} : memref<128x8xf32, #tpu.memory_space<vmem>>, vector<128x1xf32>,
    %c0_34 = arith.constant 0 : index
    %c0_35 = arith.constant 0 : index
    %50 = vector.load %arg18[%c0_34, %c0_35] : memref<128x8xf32, #tpu.memory_space<vmem>>, vector<128x1xf32>
    tpu.vector_store %arg18[%c0_34, %c0_35], %41 {strides = array<i32>} : memref<128x8xf32, #tpu.memory_space<vmem>>, vector<128x1xf32>,
    %51 = vector.extract_strided_slice %22 {offsets = [0, 8], sizes = [128, 8], strides = [1, 1]} : vector<128x64xbf16> to vector<128x8xbf16>
    %52 = vector.extract_strided_slice %12 {offsets = [0, 8], sizes = [128, 8], strides = [1, 1]} : vector<128x64xbf16> to vector<128x8xbf16>
    %53 = vector.extract_strided_slice %18 {offsets = [0, 16], sizes = [128, 16], strides = [1, 1]} : vector<128x128xbf16> to vector<128x16xbf16>
    %cst_36 = arith.constant dense<0.000000e+00> : vector<128x128xf32>
    %54 = tpu.matmul %51, %52, %cst_36 {dimension_numbers = #tpu.dot_dimension_numbers<[1], [1], [0], [0], [0, 0, 1, 0], [], []>} : vector<128x8xbf16>, vector<128x8xbf16>, vector<128x128xf32> -> vector<128x128xf32>
    %55 = arith.addf %54, %21 : vector<128x128xf32>
    %c0_37 = arith.constant 0 : index
    %c1 = arith.constant 1 : index
    %56 = vector.load %arg17[%c0_37, %c1] : memref<128x8xf32, #tpu.memory_space<vmem>>, vector<128x1xf32>
    %cst_38 = arith.constant dense<0xFF800000> : vector<128xf32>
    %57 = vector.multi_reduction <maximumf>, %55, %cst_38 [1] : vector<128x128xf32> to vector<128xf32>
    %58 = vector.shape_cast %57 : vector<128xf32> to vector<128x1xf32>
    %59 = arith.maximumf %56, %58 : vector<128x1xf32>
    %60 = arith.subf %56, %59 : vector<128x1xf32>
    %61 = math.exp %60 : vector<128x1xf32>
    %62 = vector.broadcast %59 : vector<128x1xf32> to vector<128x128xf32>
    %63 = arith.subf %55, %62 : vector<128x128xf32>
    %64 = math.exp %63 : vector<128x128xf32>
    %c0_39 = arith.constant 0 : index
    %c1_40 = arith.constant 1 : index
    %65 = vector.load %arg18[%c0_39, %c1_40] : memref<128x8xf32, #tpu.memory_space<vmem>>, vector<128x1xf32>
    %66 = arith.mulf %61, %65 : vector<128x1xf32>
    %cst_41 = arith.constant dense<0.000000e+00> : vector<128xf32>
    %67 = vector.multi_reduction <add>, %64, %cst_41 [1] : vector<128x128xf32> to vector<128xf32>
    %68 = vector.shape_cast %67 : vector<128xf32> to vector<128x1xf32>
    %69 = arith.addf %66, %68 : vector<128x1xf32>
    %70 = arith.truncf %64 : vector<128x128xf32> to vector<128x128xbf16>
    %cst_42 = arith.constant dense<0.000000e+00> : vector<128x16xf32>
    %71 = tpu.matmul %70, %53, %cst_42 {dimension_numbers = #tpu.dot_dimension_numbers<[1], [0], [0], [1], [0, 0, 1, 1], [], []>} : vector<128x128xbf16>, vector<128x16xbf16>, vector<128x16xf32> -> vector<128x16xf32>
    %c0_43 = arith.constant 0 : index
    %c16 = arith.constant 16 : index
    %72 = vector.load %arg19[%c0_43, %c16] : memref<128x128xf32, #tpu.memory_space<vmem>>, vector<128x16xf32>
    %73 = vector.broadcast %61 : vector<128x1xf32> to vector<128x16xf32>
    %74 = arith.mulf %73, %72 : vector<128x16xf32>
    %75 = arith.addf %74, %71 : vector<128x16xf32>
    %c0_44 = arith.constant 0 : index
    %c16_45 = arith.constant 16 : index
    %76 = vector.load %arg19[%c0_44, %c16_45] : memref<128x128xf32, #tpu.memory_space<vmem>>, vector<128x16xf32>
    tpu.vector_store %arg19[%c0_44, %c16_45], %75 {strides = array<i32>} : memref<128x128xf32, #tpu.memory_space<vmem>>, vector<128x16xf32>,
    %c0_46 = arith.constant 0 : index
    %c1_47 = arith.constant 1 : index
    %77 = vector.load %arg17[%c0_46, %c1_47] : memref<128x8xf32, #tpu.memory_space<vmem>>, vector<128x1xf32>
    tpu.vector_store %arg17[%c0_46, %c1_47], %59 {strides = array<i32>} : memref<128x8xf32, #tpu.memory_space<vmem>>, vector<128x1xf32>,
    %c0_48 = arith.constant 0 : index
    %c1_49 = arith.constant 1 : index
    %78 = vector.load %arg18[%c0_48, %c1_49] : memref<128x8xf32, #tpu.memory_space<vmem>>, vector<128x1xf32>
    tpu.vector_store %arg18[%c0_48, %c1_49], %69 {strides = array<i32>} : memref<128x8xf32, #tpu.memory_space<vmem>>, vector<128x1xf32>,
    %79 = vector.extract_strided_slice %22 {offsets = [0, 16], sizes = [128, 8], strides = [1, 1]} : vector<128x64xbf16> to vector<128x8xbf16>
    %80 = vector.extract_strided_slice %12 {offsets = [0, 16], sizes = [128, 8], strides = [1, 1]} : vector<128x64xbf16> to vector<128x8xbf16>
    %81 = vector.extract_strided_slice %18 {offsets = [0, 32], sizes = [128, 16], strides = [1, 1]} : vector<128x128xbf16> to vector<128x16xbf16>
    %cst_50 = arith.constant dense<0.000000e+00> : vector<128x128xf32>
    %82 = tpu.matmul %79, %80, %cst_50 {dimension_numbers = #tpu.dot_dimension_numbers<[1], [1], [0], [0], [0, 0, 1, 0], [], []>} : vector<128x8xbf16>, vector<128x8xbf16>, vector<128x128xf32> -> vector<128x128xf32>
    %83 = arith.addf %82, %21 : vector<128x128xf32>
    %c0_51 = arith.constant 0 : index
    %c2 = arith.constant 2 : index
    %84 = vector.load %arg17[%c0_51, %c2] : memref<128x8xf32, #tpu.memory_space<vmem>>, vector<128x1xf32>
    %cst_52 = arith.constant dense<0xFF800000> : vector<128xf32>
    %85 = vector.multi_reduction <maximumf>, %83, %cst_52 [1] : vector<128x128xf32> to vector<128xf32>
    %86 = vector.shape_cast %85 : vector<128xf32> to vector<128x1xf32>
    %87 = arith.maximumf %84, %86 : vector<128x1xf32>
    %88 = arith.subf %84, %87 : vector<128x1xf32>
    %89 = math.exp %88 : vector<128x1xf32>
    %90 = vector.broadcast %87 : vector<128x1xf32> to vector<128x128xf32>
    %91 = arith.subf %83, %90 : vector<128x128xf32>
    %92 = math.exp %91 : vector<128x128xf32>
    %c0_53 = arith.constant 0 : index
    %c2_54 = arith.constant 2 : index
    %93 = vector.load %arg18[%c0_53, %c2_54] : memref<128x8xf32, #tpu.memory_space<vmem>>, vector<128x1xf32>
    %94 = arith.mulf %89, %93 : vector<128x1xf32>
    %cst_55 = arith.constant dense<0.000000e+00> : vector<128xf32>
    %95 = vector.multi_reduction <add>, %92, %cst_55 [1] : vector<128x128xf32> to vector<128xf32>
    %96 = vector.shape_cast %95 : vector<128xf32> to vector<128x1xf32>
    %97 = arith.addf %94, %96 : vector<128x1xf32>
    %98 = arith.truncf %92 : vector<128x128xf32> to vector<128x128xbf16>
    %cst_56 = arith.constant dense<0.000000e+00> : vector<128x16xf32>
    %99 = tpu.matmul %98, %81, %cst_56 {dimension_numbers = #tpu.dot_dimension_numbers<[1], [0], [0], [1], [0, 0, 1, 1], [], []>} : vector<128x128xbf16>, vector<128x16xbf16>, vector<128x16xf32> -> vector<128x16xf32>
    %c0_57 = arith.constant 0 : index
    %c32 = arith.constant 32 : index
    %100 = vector.load %arg19[%c0_57, %c32] : memref<128x128xf32, #tpu.memory_space<vmem>>, vector<128x16xf32>
    %101 = vector.broadcast %89 : vector<128x1xf32> to vector<128x16xf32>
    %102 = arith.mulf %101, %100 : vector<128x16xf32>
    %103 = arith.addf %102, %99 : vector<128x16xf32>
    %c0_58 = arith.constant 0 : index
    %c32_59 = arith.constant 32 : index
    %104 = vector.load %arg19[%c0_58, %c32_59] : memref<128x128xf32, #tpu.memory_space<vmem>>, vector<128x16xf32>
    tpu.vector_store %arg19[%c0_58, %c32_59], %103 {strides = array<i32>} : memref<128x128xf32, #tpu.memory_space<vmem>>, vector<128x16xf32>,
    %c0_60 = arith.constant 0 : index
    %c2_61 = arith.constant 2 : index
    %105 = vector.load %arg17[%c0_60, %c2_61] : memref<128x8xf32, #tpu.memory_space<vmem>>, vector<128x1xf32>
    tpu.vector_store %arg17[%c0_60, %c2_61], %87 {strides = array<i32>} : memref<128x8xf32, #tpu.memory_space<vmem>>, vector<128x1xf32>,
    %c0_62 = arith.constant 0 : index
    %c2_63 = arith.constant 2 : index
    %106 = vector.load %arg18[%c0_62, %c2_63] : memref<128x8xf32, #tpu.memory_space<vmem>>, vector<128x1xf32>
    tpu.vector_store %arg18[%c0_62, %c2_63], %97 {strides = array<i32>} : memref<128x8xf32, #tpu.memory_space<vmem>>, vector<128x1xf32>,
    %107 = vector.extract_strided_slice %22 {offsets = [0, 24], sizes = [128, 8], strides = [1, 1]} : vector<128x64xbf16> to vector<128x8xbf16>
    %108 = vector.extract_strided_slice %12 {offsets = [0, 24], sizes = [128, 8], strides = [1, 1]} : vector<128x64xbf16> to vector<128x8xbf16>
    %109 = vector.extract_strided_slice %18 {offsets = [0, 48], sizes = [128, 16], strides = [1, 1]} : vector<128x128xbf16> to vector<128x16xbf16>
    %cst_64 = arith.constant dense<0.000000e+00> : vector<128x128xf32>
    %110 = tpu.matmul %107, %108, %cst_64 {dimension_numbers = #tpu.dot_dimension_numbers<[1], [1], [0], [0], [0, 0, 1, 0], [], []>} : vector<128x8xbf16>, vector<128x8xbf16>, vector<128x128xf32> -> vector<128x128xf32>
    %111 = arith.addf %110, %21 : vector<128x128xf32>
    %c0_65 = arith.constant 0 : index
    %c3 = arith.constant 3 : index
    %112 = vector.load %arg17[%c0_65, %c3] : memref<128x8xf32, #tpu.memory_space<vmem>>, vector<128x1xf32>
    %cst_66 = arith.constant dense<0xFF800000> : vector<128xf32>
    %113 = vector.multi_reduction <maximumf>, %111, %cst_66 [1] : vector<128x128xf32> to vector<128xf32>
    %114 = vector.shape_cast %113 : vector<128xf32> to vector<128x1xf32>
    %115 = arith.maximumf %112, %114 : vector<128x1xf32>
    %116 = arith.subf %112, %115 : vector<128x1xf32>
    %117 = math.exp %116 : vector<128x1xf32>
    %118 = vector.broadcast %115 : vector<128x1xf32> to vector<128x128xf32>
    %119 = arith.subf %111, %118 : vector<128x128xf32>
    %120 = math.exp %119 : vector<128x128xf32>
    %c0_67 = arith.constant 0 : index
    %c3_68 = arith.constant 3 : index
    %121 = vector.load %arg18[%c0_67, %c3_68] : memref<128x8xf32, #tpu.memory_space<vmem>>, vector<128x1xf32>
    %122 = arith.mulf %117, %121 : vector<128x1xf32>
    %cst_69 = arith.constant dense<0.000000e+00> : vector<128xf32>
    %123 = vector.multi_reduction <add>, %120, %cst_69 [1] : vector<128x128xf32> to vector<128xf32>
    %124 = vector.shape_cast %123 : vector<128xf32> to vector<128x1xf32>
    %125 = arith.addf %122, %124 : vector<128x1xf32>
    %126 = arith.truncf %120 : vector<128x128xf32> to vector<128x128xbf16>
    %cst_70 = arith.constant dense<0.000000e+00> : vector<128x16xf32>
    %127 = tpu.matmul %126, %109, %cst_70 {dimension_numbers = #tpu.dot_dimension_numbers<[1], [0], [0], [1], [0, 0, 1, 1], [], []>} : vector<128x128xbf16>, vector<128x16xbf16>, vector<128x16xf32> -> vector<128x16xf32>
    %c0_71 = arith.constant 0 : index
    %c48 = arith.constant 48 : index
    %128 = vector.load %arg19[%c0_71, %c48] : memref<128x128xf32, #tpu.memory_space<vmem>>, vector<128x16xf32>
    %129 = vector.broadcast %117 : vector<128x1xf32> to vector<128x16xf32>
    %130 = arith.mulf %129, %128 : vector<128x16xf32>
    %131 = arith.addf %130, %127 : vector<128x16xf32>
    %c0_72 = arith.constant 0 : index
    %c48_73 = arith.constant 48 : index
    %132 = vector.load %arg19[%c0_72, %c48_73] : memref<128x128xf32, #tpu.memory_space<vmem>>, vector<128x16xf32>
    tpu.vector_store %arg19[%c0_72, %c48_73], %131 {strides = array<i32>} : memref<128x128xf32, #tpu.memory_space<vmem>>, vector<128x16xf32>,
    %c0_74 = arith.constant 0 : index
    %c3_75 = arith.constant 3 : index
    %133 = vector.load %arg17[%c0_74, %c3_75] : memref<128x8xf32, #tpu.memory_space<vmem>>, vector<128x1xf32>
    tpu.vector_store %arg17[%c0_74, %c3_75], %115 {strides = array<i32>} : memref<128x8xf32, #tpu.memory_space<vmem>>, vector<128x1xf32>,
    %c0_76 = arith.constant 0 : index
    %c3_77 = arith.constant 3 : index
    %134 = vector.load %arg18[%c0_76, %c3_77] : memref<128x8xf32, #tpu.memory_space<vmem>>, vector<128x1xf32>
    tpu.vector_store %arg18[%c0_76, %c3_77], %125 {strides = array<i32>} : memref<128x8xf32, #tpu.memory_space<vmem>>, vector<128x1xf32>,
    %135 = vector.extract_strided_slice %22 {offsets = [0, 32], sizes = [128, 8], strides = [1, 1]} : vector<128x64xbf16> to vector<128x8xbf16>
    %136 = vector.extract_strided_slice %12 {offsets = [0, 32], sizes = [128, 8], strides = [1, 1]} : vector<128x64xbf16> to vector<128x8xbf16>
    %137 = vector.extract_strided_slice %18 {offsets = [0, 64], sizes = [128, 16], strides = [1, 1]} : vector<128x128xbf16> to vector<128x16xbf16>
    %cst_78 = arith.constant dense<0.000000e+00> : vector<128x128xf32>
    %138 = tpu.matmul %135, %136, %cst_78 {dimension_numbers = #tpu.dot_dimension_numbers<[1], [1], [0], [0], [0, 0, 1, 0], [], []>} : vector<128x8xbf16>, vector<128x8xbf16>, vector<128x128xf32> -> vector<128x128xf32>
    %139 = arith.addf %138, %21 : vector<128x128xf32>
    %c0_79 = arith.constant 0 : index
    %c4 = arith.constant 4 : index
    %140 = vector.load %arg17[%c0_79, %c4] : memref<128x8xf32, #tpu.memory_space<vmem>>, vector<128x1xf32>
    %cst_80 = arith.constant dense<0xFF800000> : vector<128xf32>
    %141 = vector.multi_reduction <maximumf>, %139, %cst_80 [1] : vector<128x128xf32> to vector<128xf32>
    %142 = vector.shape_cast %141 : vector<128xf32> to vector<128x1xf32>
    %143 = arith.maximumf %140, %142 : vector<128x1xf32>
    %144 = arith.subf %140, %143 : vector<128x1xf32>
    %145 = math.exp %144 : vector<128x1xf32>
    %146 = vector.broadcast %143 : vector<128x1xf32> to vector<128x128xf32>
    %147 = arith.subf %139, %146 : vector<128x128xf32>
    %148 = math.exp %147 : vector<128x128xf32>
    %c0_81 = arith.constant 0 : index
    %c4_82 = arith.constant 4 : index
    %149 = vector.load %arg18[%c0_81, %c4_82] : memref<128x8xf32, #tpu.memory_space<vmem>>, vector<128x1xf32>
    %150 = arith.mulf %145, %149 : vector<128x1xf32>
    %cst_83 = arith.constant dense<0.000000e+00> : vector<128xf32>
    %151 = vector.multi_reduction <add>, %148, %cst_83 [1] : vector<128x128xf32> to vector<128xf32>
    %152 = vector.shape_cast %151 : vector<128xf32> to vector<128x1xf32>
    %153 = arith.addf %150, %152 : vector<128x1xf32>
    %154 = arith.truncf %148 : vector<128x128xf32> to vector<128x128xbf16>
    %cst_84 = arith.constant dense<0.000000e+00> : vector<128x16xf32>
    %155 = tpu.matmul %154, %137, %cst_84 {dimension_numbers = #tpu.dot_dimension_numbers<[1], [0], [0], [1], [0, 0, 1, 1], [], []>} : vector<128x128xbf16>, vector<128x16xbf16>, vector<128x16xf32> -> vector<128x16xf32>
    %c0_85 = arith.constant 0 : index
    %c64 = arith.constant 64 : index
    %156 = vector.load %arg19[%c0_85, %c64] : memref<128x128xf32, #tpu.memory_space<vmem>>, vector<128x16xf32>
    %157 = vector.broadcast %145 : vector<128x1xf32> to vector<128x16xf32>
    %158 = arith.mulf %157, %156 : vector<128x16xf32>
    %159 = arith.addf %158, %155 : vector<128x16xf32>
    %c0_86 = arith.constant 0 : index
    %c64_87 = arith.constant 64 : index
    %160 = vector.load %arg19[%c0_86, %c64_87] : memref<128x128xf32, #tpu.memory_space<vmem>>, vector<128x16xf32>
    tpu.vector_store %arg19[%c0_86, %c64_87], %159 {strides = array<i32>} : memref<128x128xf32, #tpu.memory_space<vmem>>, vector<128x16xf32>,
    %c0_88 = arith.constant 0 : index
    %c4_89 = arith.constant 4 : index
    %161 = vector.load %arg17[%c0_88, %c4_89] : memref<128x8xf32, #tpu.memory_space<vmem>>, vector<128x1xf32>
    tpu.vector_store %arg17[%c0_88, %c4_89], %143 {strides = array<i32>} : memref<128x8xf32, #tpu.memory_space<vmem>>, vector<128x1xf32>,
    %c0_90 = arith.constant 0 : index
    %c4_91 = arith.constant 4 : index
    %162 = vector.load %arg18[%c0_90, %c4_91] : memref<128x8xf32, #tpu.memory_space<vmem>>, vector<128x1xf32>
    tpu.vector_store %arg18[%c0_90, %c4_91], %153 {strides = array<i32>} : memref<128x8xf32, #tpu.memory_space<vmem>>, vector<128x1xf32>,
    %163 = vector.extract_strided_slice %22 {offsets = [0, 40], sizes = [128, 8], strides = [1, 1]} : vector<128x64xbf16> to vector<128x8xbf16>
    %164 = vector.extract_strided_slice %12 {offsets = [0, 40], sizes = [128, 8], strides = [1, 1]} : vector<128x64xbf16> to vector<128x8xbf16>
    %165 = vector.extract_strided_slice %18 {offsets = [0, 80], sizes = [128, 16], strides = [1, 1]} : vector<128x128xbf16> to vector<128x16xbf16>
    %cst_92 = arith.constant dense<0.000000e+00> : vector<128x128xf32>
    %166 = tpu.matmul %163, %164, %cst_92 {dimension_numbers = #tpu.dot_dimension_numbers<[1], [1], [0], [0], [0, 0, 1, 0], [], []>} : vector<128x8xbf16>, vector<128x8xbf16>, vector<128x128xf32> -> vector<128x128xf32>
    %167 = arith.addf %166, %21 : vector<128x128xf32>
    %c0_93 = arith.constant 0 : index
    %c5 = arith.constant 5 : index
    %168 = vector.load %arg17[%c0_93, %c5] : memref<128x8xf32, #tpu.memory_space<vmem>>, vector<128x1xf32>
    %cst_94 = arith.constant dense<0xFF800000> : vector<128xf32>
    %169 = vector.multi_reduction <maximumf>, %167, %cst_94 [1] : vector<128x128xf32> to vector<128xf32>
    %170 = vector.shape_cast %169 : vector<128xf32> to vector<128x1xf32>
    %171 = arith.maximumf %168, %170 : vector<128x1xf32>
    %172 = arith.subf %168, %171 : vector<128x1xf32>
    %173 = math.exp %172 : vector<128x1xf32>
    %174 = vector.broadcast %171 : vector<128x1xf32> to vector<128x128xf32>
    %175 = arith.subf %167, %174 : vector<128x128xf32>
    %176 = math.exp %175 : vector<128x128xf32>
    %c0_95 = arith.constant 0 : index
    %c5_96 = arith.constant 5 : index
    %177 = vector.load %arg18[%c0_95, %c5_96] : memref<128x8xf32, #tpu.memory_space<vmem>>, vector<128x1xf32>
    %178 = arith.mulf %173, %177 : vector<128x1xf32>
    %cst_97 = arith.constant dense<0.000000e+00> : vector<128xf32>
    %179 = vector.multi_reduction <add>, %176, %cst_97 [1] : vector<128x128xf32> to vector<128xf32>
    %180 = vector.shape_cast %179 : vector<128xf32> to vector<128x1xf32>
    %181 = arith.addf %178, %180 : vector<128x1xf32>
    %182 = arith.truncf %176 : vector<128x128xf32> to vector<128x128xbf16>
    %cst_98 = arith.constant dense<0.000000e+00> : vector<128x16xf32>
    %183 = tpu.matmul %182, %165, %cst_98 {dimension_numbers = #tpu.dot_dimension_numbers<[1], [0], [0], [1], [0, 0, 1, 1], [], []>} : vector<128x128xbf16>, vector<128x16xbf16>, vector<128x16xf32> -> vector<128x16xf32>
    %c0_99 = arith.constant 0 : index
    %c80 = arith.constant 80 : index
    %184 = vector.load %arg19[%c0_99, %c80] : memref<128x128xf32, #tpu.memory_space<vmem>>, vector<128x16xf32>
    %185 = vector.broadcast %173 : vector<128x1xf32> to vector<128x16xf32>
    %186 = arith.mulf %185, %184 : vector<128x16xf32>
    %187 = arith.addf %186, %183 : vector<128x16xf32>
    %c0_100 = arith.constant 0 : index
    %c80_101 = arith.constant 80 : index
    %188 = vector.load %arg19[%c0_100, %c80_101] : memref<128x128xf32, #tpu.memory_space<vmem>>, vector<128x16xf32>
    tpu.vector_store %arg19[%c0_100, %c80_101], %187 {strides = array<i32>} : memref<128x128xf32, #tpu.memory_space<vmem>>, vector<128x16xf32>,
    %c0_102 = arith.constant 0 : index
    %c5_103 = arith.constant 5 : index
    %189 = vector.load %arg17[%c0_102, %c5_103] : memref<128x8xf32, #tpu.memory_space<vmem>>, vector<128x1xf32>
    tpu.vector_store %arg17[%c0_102, %c5_103], %171 {strides = array<i32>} : memref<128x8xf32, #tpu.memory_space<vmem>>, vector<128x1xf32>,
    %c0_104 = arith.constant 0 : index
    %c5_105 = arith.constant 5 : index
    %190 = vector.load %arg18[%c0_104, %c5_105] : memref<128x8xf32, #tpu.memory_space<vmem>>, vector<128x1xf32>
    tpu.vector_store %arg18[%c0_104, %c5_105], %181 {strides = array<i32>} : memref<128x8xf32, #tpu.memory_space<vmem>>, vector<128x1xf32>,
    %191 = vector.extract_strided_slice %22 {offsets = [0, 48], sizes = [128, 8], strides = [1, 1]} : vector<128x64xbf16> to vector<128x8xbf16>
    %192 = vector.extract_strided_slice %12 {offsets = [0, 48], sizes = [128, 8], strides = [1, 1]} : vector<128x64xbf16> to vector<128x8xbf16>
    %193 = vector.extract_strided_slice %18 {offsets = [0, 96], sizes = [128, 16], strides = [1, 1]} : vector<128x128xbf16> to vector<128x16xbf16>
    %cst_106 = arith.constant dense<0.000000e+00> : vector<128x128xf32>
    %194 = tpu.matmul %191, %192, %cst_106 {dimension_numbers = #tpu.dot_dimension_numbers<[1], [1], [0], [0], [0, 0, 1, 0], [], []>} : vector<128x8xbf16>, vector<128x8xbf16>, vector<128x128xf32> -> vector<128x128xf32>
    %195 = arith.addf %194, %21 : vector<128x128xf32>
    %c0_107 = arith.constant 0 : index
    %c6 = arith.constant 6 : index
    %196 = vector.load %arg17[%c0_107, %c6] : memref<128x8xf32, #tpu.memory_space<vmem>>, vector<128x1xf32>
    %cst_108 = arith.constant dense<0xFF800000> : vector<128xf32>
    %197 = vector.multi_reduction <maximumf>, %195, %cst_108 [1] : vector<128x128xf32> to vector<128xf32>
    %198 = vector.shape_cast %197 : vector<128xf32> to vector<128x1xf32>
    %199 = arith.maximumf %196, %198 : vector<128x1xf32>
    %200 = arith.subf %196, %199 : vector<128x1xf32>
    %201 = math.exp %200 : vector<128x1xf32>
    %202 = vector.broadcast %199 : vector<128x1xf32> to vector<128x128xf32>
    %203 = arith.subf %195, %202 : vector<128x128xf32>
    %204 = math.exp %203 : vector<128x128xf32>
    %c0_109 = arith.constant 0 : index
    %c6_110 = arith.constant 6 : index
    %205 = vector.load %arg18[%c0_109, %c6_110] : memref<128x8xf32, #tpu.memory_space<vmem>>, vector<128x1xf32>
    %206 = arith.mulf %201, %205 : vector<128x1xf32>
    %cst_111 = arith.constant dense<0.000000e+00> : vector<128xf32>
    %207 = vector.multi_reduction <add>, %204, %cst_111 [1] : vector<128x128xf32> to vector<128xf32>
    %208 = vector.shape_cast %207 : vector<128xf32> to vector<128x1xf32>
    %209 = arith.addf %206, %208 : vector<128x1xf32>
    %210 = arith.truncf %204 : vector<128x128xf32> to vector<128x128xbf16>
    %cst_112 = arith.constant dense<0.000000e+00> : vector<128x16xf32>
    %211 = tpu.matmul %210, %193, %cst_112 {dimension_numbers = #tpu.dot_dimension_numbers<[1], [0], [0], [1], [0, 0, 1, 1], [], []>} : vector<128x128xbf16>, vector<128x16xbf16>, vector<128x16xf32> -> vector<128x16xf32>
    %c0_113 = arith.constant 0 : index
    %c96 = arith.constant 96 : index
    %212 = vector.load %arg19[%c0_113, %c96] : memref<128x128xf32, #tpu.memory_space<vmem>>, vector<128x16xf32>
    %213 = vector.broadcast %201 : vector<128x1xf32> to vector<128x16xf32>
    %214 = arith.mulf %213, %212 : vector<128x16xf32>
    %215 = arith.addf %214, %211 : vector<128x16xf32>
    %c0_114 = arith.constant 0 : index
    %c96_115 = arith.constant 96 : index
    %216 = vector.load %arg19[%c0_114, %c96_115] : memref<128x128xf32, #tpu.memory_space<vmem>>, vector<128x16xf32>
    tpu.vector_store %arg19[%c0_114, %c96_115], %215 {strides = array<i32>} : memref<128x128xf32, #tpu.memory_space<vmem>>, vector<128x16xf32>,
    %c0_116 = arith.constant 0 : index
    %c6_117 = arith.constant 6 : index
    %217 = vector.load %arg17[%c0_116, %c6_117] : memref<128x8xf32, #tpu.memory_space<vmem>>, vector<128x1xf32>
    tpu.vector_store %arg17[%c0_116, %c6_117], %199 {strides = array<i32>} : memref<128x8xf32, #tpu.memory_space<vmem>>, vector<128x1xf32>,
    %c0_118 = arith.constant 0 : index
    %c6_119 = arith.constant 6 : index
    %218 = vector.load %arg18[%c0_118, %c6_119] : memref<128x8xf32, #tpu.memory_space<vmem>>, vector<128x1xf32>
    tpu.vector_store %arg18[%c0_118, %c6_119], %209 {strides = array<i32>} : memref<128x8xf32, #tpu.memory_space<vmem>>, vector<128x1xf32>,
    %219 = vector.extract_strided_slice %22 {offsets = [0, 56], sizes = [128, 8], strides = [1, 1]} : vector<128x64xbf16> to vector<128x8xbf16>
    %220 = vector.extract_strided_slice %12 {offsets = [0, 56], sizes = [128, 8], strides = [1, 1]} : vector<128x64xbf16> to vector<128x8xbf16>
    %221 = vector.extract_strided_slice %18 {offsets = [0, 112], sizes = [128, 16], strides = [1, 1]} : vector<128x128xbf16> to vector<128x16xbf16>
    %cst_120 = arith.constant dense<0.000000e+00> : vector<128x128xf32>
    %222 = tpu.matmul %219, %220, %cst_120 {dimension_numbers = #tpu.dot_dimension_numbers<[1], [1], [0], [0], [0, 0, 1, 0], [], []>} : vector<128x8xbf16>, vector<128x8xbf16>, vector<128x128xf32> -> vector<128x128xf32>
    %223 = arith.addf %222, %21 : vector<128x128xf32>
    %c0_121 = arith.constant 0 : index
    %c7 = arith.constant 7 : index
    %224 = vector.load %arg17[%c0_121, %c7] : memref<128x8xf32, #tpu.memory_space<vmem>>, vector<128x1xf32>
    %cst_122 = arith.constant dense<0xFF800000> : vector<128xf32>
    %225 = vector.multi_reduction <maximumf>, %223, %cst_122 [1] : vector<128x128xf32> to vector<128xf32>
    %226 = vector.shape_cast %225 : vector<128xf32> to vector<128x1xf32>
    %227 = arith.maximumf %224, %226 : vector<128x1xf32>
    %228 = arith.subf %224, %227 : vector<128x1xf32>
    %229 = math.exp %228 : vector<128x1xf32>
    %230 = vector.broadcast %227 : vector<128x1xf32> to vector<128x128xf32>
    %231 = arith.subf %223, %230 : vector<128x128xf32>
    %232 = math.exp %231 : vector<128x128xf32>
    %c0_123 = arith.constant 0 : index
    %c7_124 = arith.constant 7 : index
    %233 = vector.load %arg18[%c0_123, %c7_124] : memref<128x8xf32, #tpu.memory_space<vmem>>, vector<128x1xf32>
    %234 = arith.mulf %229, %233 : vector<128x1xf32>
    %cst_125 = arith.constant dense<0.000000e+00> : vector<128xf32>
    %235 = vector.multi_reduction <add>, %232, %cst_125 [1] : vector<128x128xf32> to vector<128xf32>
    %236 = vector.shape_cast %235 : vector<128xf32> to vector<128x1xf32>
    %237 = arith.addf %234, %236 : vector<128x1xf32>
    %238 = arith.truncf %232 : vector<128x128xf32> to vector<128x128xbf16>
    %cst_126 = arith.constant dense<0.000000e+00> : vector<128x16xf32>
    %239 = tpu.matmul %238, %221, %cst_126 {dimension_numbers = #tpu.dot_dimension_numbers<[1], [0], [0], [1], [0, 0, 1, 1], [], []>} : vector<128x128xbf16>, vector<128x16xbf16>, vector<128x16xf32> -> vector<128x16xf32>
    %c0_127 = arith.constant 0 : index
    %c112 = arith.constant 112 : index
    %240 = vector.load %arg19[%c0_127, %c112] : memref<128x128xf32, #tpu.memory_space<vmem>>, vector<128x16xf32>
    %241 = vector.broadcast %229 : vector<128x1xf32> to vector<128x16xf32>
    %242 = arith.mulf %241, %240 : vector<128x16xf32>
    %243 = arith.addf %242, %239 : vector<128x16xf32>
    %c0_128 = arith.constant 0 : index
    %c112_129 = arith.constant 112 : index
    %244 = vector.load %arg19[%c0_128, %c112_129] : memref<128x128xf32, #tpu.memory_space<vmem>>, vector<128x16xf32>
    tpu.vector_store %arg19[%c0_128, %c112_129], %243 {strides = array<i32>} : memref<128x128xf32, #tpu.memory_space<vmem>>, vector<128x16xf32>,
    %c0_130 = arith.constant 0 : index
    %c7_131 = arith.constant 7 : index
    %245 = vector.load %arg17[%c0_130, %c7_131] : memref<128x8xf32, #tpu.memory_space<vmem>>, vector<128x1xf32>
    tpu.vector_store %arg17[%c0_130, %c7_131], %227 {strides = array<i32>} : memref<128x8xf32, #tpu.memory_space<vmem>>, vector<128x1xf32>,
    %c0_132 = arith.constant 0 : index
    %c7_133 = arith.constant 7 : index
    %246 = vector.load %arg18[%c0_132, %c7_133] : memref<128x8xf32, #tpu.memory_space<vmem>>, vector<128x1xf32>
    tpu.vector_store %arg18[%c0_132, %c7_133], %237 {strides = array<i32>} : memref<128x8xf32, #tpu.memory_space<vmem>>, vector<128x1xf32>,
    %c1_i32 = arith.constant 1 : i32
    %247 = arith.cmpi eq, %arg2, %c1_i32 : i32
    %248 = arith.extui %247 : i1 to i32
    %c0_i32_134 = arith.constant 0 : i32
    %249 = arith.cmpi ne, %248, %c0_i32_134 : i32
    scf.if %249 {
      %c0_135 = arith.constant 0 : index
      %c0_136 = arith.constant 0 : index
      %250 = vector.load %arg18[%c0_135, %c0_136] : memref<128x8xf32, #tpu.memory_space<vmem>>, vector<128x1xf32>
      %251 = tpu.reciprocal %250 {approx = true} : vector<128x1xf32> -> vector<128x1xf32>
      %c0_137 = arith.constant 0 : index
      %c0_138 = arith.constant 0 : index
      %252 = vector.load %arg19[%c0_137, %c0_138] : memref<128x128xf32, #tpu.memory_space<vmem>>, vector<128x16xf32>
      %253 = vector.broadcast %251 : vector<128x1xf32> to vector<128x16xf32>
      %254 = arith.mulf %252, %253 : vector<128x16xf32>
      %c0_139 = arith.constant 0 : index
      %c0_140 = arith.constant 0 : index
      %255 = vector.load %arg19[%c0_139, %c0_140] : memref<128x128xf32, #tpu.memory_space<vmem>>, vector<128x16xf32>
      tpu.vector_store %arg19[%c0_139, %c0_140], %254 {strides = array<i32>} : memref<128x128xf32, #tpu.memory_space<vmem>>, vector<128x16xf32>,
      %c0_141 = arith.constant 0 : index
      %c1_142 = arith.constant 1 : index
      %256 = vector.load %arg18[%c0_141, %c1_142] : memref<128x8xf32, #tpu.memory_space<vmem>>, vector<128x1xf32>
      %257 = tpu.reciprocal %256 {approx = true} : vector<128x1xf32> -> vector<128x1xf32>
      %c0_143 = arith.constant 0 : index
      %c16_144 = arith.constant 16 : index
      %258 = vector.load %arg19[%c0_143, %c16_144] : memref<128x128xf32, #tpu.memory_space<vmem>>, vector<128x16xf32>
      %259 = vector.broadcast %257 : vector<128x1xf32> to vector<128x16xf32>
      %260 = arith.mulf %258, %259 : vector<128x16xf32>
      %c0_145 = arith.constant 0 : index
      %c16_146 = arith.constant 16 : index
      %261 = vector.load %arg19[%c0_145, %c16_146] : memref<128x128xf32, #tpu.memory_space<vmem>>, vector<128x16xf32>
      tpu.vector_store %arg19[%c0_145, %c16_146], %260 {strides = array<i32>} : memref<128x128xf32, #tpu.memory_space<vmem>>, vector<128x16xf32>,
      %c0_147 = arith.constant 0 : index
      %c2_148 = arith.constant 2 : index
      %262 = vector.load %arg18[%c0_147, %c2_148] : memref<128x8xf32, #tpu.memory_space<vmem>>, vector<128x1xf32>
      %263 = tpu.reciprocal %262 {approx = true} : vector<128x1xf32> -> vector<128x1xf32>
      %c0_149 = arith.constant 0 : index
      %c32_150 = arith.constant 32 : index
      %264 = vector.load %arg19[%c0_149, %c32_150] : memref<128x128xf32, #tpu.memory_space<vmem>>, vector<128x16xf32>
      %265 = vector.broadcast %263 : vector<128x1xf32> to vector<128x16xf32>
      %266 = arith.mulf %264, %265 : vector<128x16xf32>
      %c0_151 = arith.constant 0 : index
      %c32_152 = arith.constant 32 : index
      %267 = vector.load %arg19[%c0_151, %c32_152] : memref<128x128xf32, #tpu.memory_space<vmem>>, vector<128x16xf32>
      tpu.vector_store %arg19[%c0_151, %c32_152], %266 {strides = array<i32>} : memref<128x128xf32, #tpu.memory_space<vmem>>, vector<128x16xf32>,
      %c0_153 = arith.constant 0 : index
      %c3_154 = arith.constant 3 : index
      %268 = vector.load %arg18[%c0_153, %c3_154] : memref<128x8xf32, #tpu.memory_space<vmem>>, vector<128x1xf32>
      %269 = tpu.reciprocal %268 {approx = true} : vector<128x1xf32> -> vector<128x1xf32>
      %c0_155 = arith.constant 0 : index
      %c48_156 = arith.constant 48 : index
      %270 = vector.load %arg19[%c0_155, %c48_156] : memref<128x128xf32, #tpu.memory_space<vmem>>, vector<128x16xf32>
      %271 = vector.broadcast %269 : vector<128x1xf32> to vector<128x16xf32>
      %272 = arith.mulf %270, %271 : vector<128x16xf32>
      %c0_157 = arith.constant 0 : index
      %c48_158 = arith.constant 48 : index
      %273 = vector.load %arg19[%c0_157, %c48_158] : memref<128x128xf32, #tpu.memory_space<vmem>>, vector<128x16xf32>
      tpu.vector_store %arg19[%c0_157, %c48_158], %272 {strides = array<i32>} : memref<128x128xf32, #tpu.memory_space<vmem>>, vector<128x16xf32>,
      %c0_159 = arith.constant 0 : index
      %c4_160 = arith.constant 4 : index
      %274 = vector.load %arg18[%c0_159, %c4_160] : memref<128x8xf32, #tpu.memory_space<vmem>>, vector<128x1xf32>
      %275 = tpu.reciprocal %274 {approx = true} : vector<128x1xf32> -> vector<128x1xf32>
      %c0_161 = arith.constant 0 : index
      %c64_162 = arith.constant 64 : index
      %276 = vector.load %arg19[%c0_161, %c64_162] : memref<128x128xf32, #tpu.memory_space<vmem>>, vector<128x16xf32>
      %277 = vector.broadcast %275 : vector<128x1xf32> to vector<128x16xf32>
      %278 = arith.mulf %276, %277 : vector<128x16xf32>
      %c0_163 = arith.constant 0 : index
      %c64_164 = arith.constant 64 : index
      %279 = vector.load %arg19[%c0_163, %c64_164] : memref<128x128xf32, #tpu.memory_space<vmem>>, vector<128x16xf32>
      tpu.vector_store %arg19[%c0_163, %c64_164], %278 {strides = array<i32>} : memref<128x128xf32, #tpu.memory_space<vmem>>, vector<128x16xf32>,
      %c0_165 = arith.constant 0 : index
      %c5_166 = arith.constant 5 : index
      %280 = vector.load %arg18[%c0_165, %c5_166] : memref<128x8xf32, #tpu.memory_space<vmem>>, vector<128x1xf32>
      %281 = tpu.reciprocal %280 {approx = true} : vector<128x1xf32> -> vector<128x1xf32>
      %c0_167 = arith.constant 0 : index
      %c80_168 = arith.constant 80 : index
      %282 = vector.load %arg19[%c0_167, %c80_168] : memref<128x128xf32, #tpu.memory_space<vmem>>, vector<128x16xf32>
      %283 = vector.broadcast %281 : vector<128x1xf32> to vector<128x16xf32>
      %284 = arith.mulf %282, %283 : vector<128x16xf32>
      %c0_169 = arith.constant 0 : index
      %c80_170 = arith.constant 80 : index
      %285 = vector.load %arg19[%c0_169, %c80_170] : memref<128x128xf32, #tpu.memory_space<vmem>>, vector<128x16xf32>
      tpu.vector_store %arg19[%c0_169, %c80_170], %284 {strides = array<i32>} : memref<128x128xf32, #tpu.memory_space<vmem>>, vector<128x16xf32>,
      %c0_171 = arith.constant 0 : index
      %c6_172 = arith.constant 6 : index
      %286 = vector.load %arg18[%c0_171, %c6_172] : memref<128x8xf32, #tpu.memory_space<vmem>>, vector<128x1xf32>
      %287 = tpu.reciprocal %286 {approx = true} : vector<128x1xf32> -> vector<128x1xf32>
      %c0_173 = arith.constant 0 : index
      %c96_174 = arith.constant 96 : index
      %288 = vector.load %arg19[%c0_173, %c96_174] : memref<128x128xf32, #tpu.memory_space<vmem>>, vector<128x16xf32>
      %289 = vector.broadcast %287 : vector<128x1xf32> to vector<128x16xf32>
      %290 = arith.mulf %288, %289 : vector<128x16xf32>
      %c0_175 = arith.constant 0 : index
      %c96_176 = arith.constant 96 : index
      %291 = vector.load %arg19[%c0_175, %c96_176] : memref<128x128xf32, #tpu.memory_space<vmem>>, vector<128x16xf32>
      tpu.vector_store %arg19[%c0_175, %c96_176], %290 {strides = array<i32>} : memref<128x128xf32, #tpu.memory_space<vmem>>, vector<128x16xf32>,
      %c0_177 = arith.constant 0 : index
      %c7_178 = arith.constant 7 : index
      %292 = vector.load %arg18[%c0_177, %c7_178] : memref<128x8xf32, #tpu.memory_space<vmem>>, vector<128x1xf32>
      %293 = tpu.reciprocal %292 {approx = true} : vector<128x1xf32> -> vector<128x1xf32>
      %c0_179 = arith.constant 0 : index
      %c112_180 = arith.constant 112 : index
      %294 = vector.load %arg19[%c0_179, %c112_180] : memref<128x128xf32, #tpu.memory_space<vmem>>, vector<128x16xf32>
      %295 = vector.broadcast %293 : vector<128x1xf32> to vector<128x16xf32>
      %296 = arith.mulf %294, %295 : vector<128x16xf32>
      %c0_181 = arith.constant 0 : index
      %c112_182 = arith.constant 112 : index
      %297 = vector.load %arg19[%c0_181, %c112_182] : memref<128x128xf32, #tpu.memory_space<vmem>>, vector<128x16xf32>
      tpu.vector_store %arg19[%c0_181, %c112_182], %296 {strides = array<i32>} : memref<128x128xf32, #tpu.memory_space<vmem>>, vector<128x16xf32>,
      %c0_183 = arith.constant 0 : index
      %c0_184 = arith.constant 0 : index
      %298 = vector.load %arg19[%c0_183, %c0_184] : memref<128x128xf32, #tpu.memory_space<vmem>>, vector<128x128xf32>
      %299 = arith.truncf %298 : vector<128x128xf32> to vector<128x128xbf16>
      %c0_185 = arith.constant 0 : index
      %c0_186 = arith.constant 0 : index
      %300 = vector.load %arg13[%c0_185, %c0_186] : memref<128x128xbf16, #tpu.memory_space<vmem>>, vector<128x128xbf16>
      %cst_187 = arith.constant dense<0.000000e+00> : vector<128x128xf32>
      %301 = tpu.matmul %299, %300, %cst_187 {dimension_numbers = #tpu.dot_dimension_numbers<[1], [0], [0], [1], [0, 0, 1, 1], [], []>} : vector<128x128xbf16>, vector<128x128xbf16>, vector<128x128xf32> -> vector<128x128xf32>
      %c0_188 = arith.constant 0 : index
      %c0_189 = arith.constant 0 : index
      %302 = vector.load %arg14[%c0_188, %c0_189] : memref<1x128xf32, #tpu.memory_space<vmem>>, vector<1x128xf32>
      %303 = vector.broadcast %302 : vector<1x128xf32> to vector<128x128xf32>
      %304 = arith.addf %301, %303 : vector<128x128xf32>
      %c0_190 = arith.constant 0 : index
      %c0_191 = arith.constant 0 : index
      %c0_192 = arith.constant 0 : index
      %305 = vector.load %arg15[%c0_190, %c0_191, %c0_192] : memref<1x128x128xf32, #tpu.memory_space<vmem>>, vector<1x128x128xf32>
      %306 = vector.shape_cast %305 : vector<1x128x128xf32> to vector<128x128xf32>
      %307 = vector.shape_cast %304 : vector<128x128xf32> to vector<1x128x128xf32>
      tpu.vector_store %arg15[%c0_190, %c0_191, %c0_192], %307 {strides = array<i32>} : memref<1x128x128xf32, #tpu.memory_space<vmem>>, vector<1x128x128xf32>,
    } else {
    }
    return
  }
  func.func @transform_0(%arg0: i32, %arg1: i32, %arg2: i32) -> (i32, i32, i32) {
    %c0_i32 = arith.constant 0 : i32
    %c0_i32_0 = arith.constant 0 : i32
    return %arg0, %arg1, %c0_i32 : i32, i32, i32
  }
  func.func @transform_1(%arg0: i32, %arg1: i32, %arg2: i32) -> (i32, i32, i32) {
    %c0_i32 = arith.constant 0 : i32
    %c0_i32_0 = arith.constant 0 : i32
    return %arg0, %arg2, %c0_i32 : i32, i32, i32
  }
  func.func @transform_2(%arg0: i32, %arg1: i32, %arg2: i32) -> (i32, i32, i32) {
    %c0_i32 = arith.constant 0 : i32
    %c0_i32_0 = arith.constant 0 : i32
    return %arg0, %arg2, %c0_i32 : i32, i32, i32
  }
  func.func @transform_3(%arg0: i32, %arg1: i32, %arg2: i32) -> (i32, i32, i32) {
    %c0_i32 = arith.constant 0 : i32
    return %arg0, %arg1, %arg2 : i32, i32, i32
  }
  func.func @transform_4(%arg0: i32, %arg1: i32, %arg2: i32) -> (i32, i32) {
    %c0_i32 = arith.constant 0 : i32
    %c0_i32_0 = arith.constant 0 : i32
    %c0_i32_1 = arith.constant 0 : i32
    return %c0_i32, %c0_i32_0 : i32, i32
  }
  func.func @transform_5(%arg0: i32, %arg1: i32, %arg2: i32) -> (i32, i32) {
    %c0_i32 = arith.constant 0 : i32
    %c0_i32_0 = arith.constant 0 : i32
    %c0_i32_1 = arith.constant 0 : i32
    return %c0_i32, %c0_i32_0 : i32, i32
  }
  func.func @transform_6(%arg0: i32, %arg1: i32, %arg2: i32) -> (i32, i32) {
    %c0_i32 = arith.constant 0 : i32
    %c0_i32_0 = arith.constant 0 : i32
    %c0_i32_1 = arith.constant 0 : i32
    return %c0_i32, %c0_i32_0 : i32, i32
  }
  func.func @transform_7(%arg0: i32, %arg1: i32, %arg2: i32) -> (i32, i32) {
    %c0_i32 = arith.constant 0 : i32
    %c0_i32_0 = arith.constant 0 : i32
    %c0_i32_1 = arith.constant 0 : i32
    return %c0_i32, %c0_i32_0 : i32, i32
  }
  func.func @transform_8(%arg0: i32, %arg1: i32, %arg2: i32) -> (i32, i32) {
    %c0_i32 = arith.constant 0 : i32
    %c0_i32_0 = arith.constant 0 : i32
    %c0_i32_1 = arith.constant 0 : i32
    return %c0_i32, %c0_i32_0 : i32, i32
  }
  func.func @transform_9(%arg0: i32, %arg1: i32, %arg2: i32) -> (i32, i32) {
    %c0_i32 = arith.constant 0 : i32
    %c0_i32_0 = arith.constant 0 : i32
    %c0_i32_1 = arith.constant 0 : i32
    return %c0_i32, %c0_i32_0 : i32, i32
  }
  func.func @transform_10(%arg0: i32, %arg1: i32, %arg2: i32) -> (i32, i32) {
    %c0_i32 = arith.constant 0 : i32
    %c0_i32_0 = arith.constant 0 : i32
    %c0_i32_1 = arith.constant 0 : i32
    return %c0_i32, %c0_i32_0 : i32, i32
  }
  func.func @transform_11(%arg0: i32, %arg1: i32, %arg2: i32) -> (i32, i32) {
    %c0_i32 = arith.constant 0 : i32
    %c0_i32_0 = arith.constant 0 : i32
    %c0_i32_1 = arith.constant 0 : i32
    return %c0_i32, %c0_i32_0 : i32, i32
  }
  func.func @transform_12(%arg0: i32, %arg1: i32, %arg2: i32) -> (i32, i32, i32) {
    %c0_i32 = arith.constant 0 : i32
    %c0_i32_0 = arith.constant 0 : i32
    return %arg0, %arg1, %c0_i32 : i32, i32, i32
  }
}

</mosaic_0001>

<llo_original>
// kernel: tpu_custom_call.1
$region0: #{tpu_custom_call.1}
  #allocation0 [shape = 'u32[]', space=smem, size = 0x4, offset = 0x4, fixed_abs, tag = 'smem constant byte address 0x4 - core index']
  #allocation1 [shape = 'u32[144,128]{1,0:T(1,128)}', space=vmem, size = 0x12000, scoped, tag = 'internal scratch']
  #allocation2 [shape = 'bf16[128,64]{1,0:T(16,128)(2,1)}', space=vmem, size = 0x8000, scoped, tag = 'scratch operand']
  #allocation3 [shape = 'f32[128,8]{1,0:T(8,128)}', space=vmem, size = 0x10000, scoped, tag = 'scratch operand']
  #allocation4 [shape = 'f32[128,8]{1,0:T(8,128)}', space=vmem, size = 0x10000, scoped, tag = 'scratch operand']
  #allocation5 [shape = 'f32[128,128]{1,0:T(8,128)}', space=vmem, size = 0x10000, scoped, tag = 'scratch operand']
  %s0 = inlined_call_operand.hbm [shape: bf16[2,256,128], index: 0, kind: input, shape index: {}]
  %s1 = inlined_call_operand.hbm [shape: bf16[2,256,128], index: 1, kind: input, shape index: {}]
  %s2 = inlined_call_operand.hbm [shape: bf16[2,256,128], index: 2, kind: input, shape index: {}]
  %s3 = inlined_call_operand.hbm [shape: bf16[2,256,256], index: 3, kind: input, shape index: {}]
  %s4 = inlined_call_operand.vmem [shape: bf16[128,64], index: 4, kind: input, shape index: {}]
  %s5 = inlined_call_operand.vmem [shape: f32[1,64], index: 5, kind: input, shape index: {}]
  %s6 = inlined_call_operand.vmem [shape: bf16[128,64], index: 6, kind: input, shape index: {}]
  %s7 = inlined_call_operand.vmem [shape: f32[1,64], index: 7, kind: input, shape index: {}]
  %s8 = inlined_call_operand.vmem [shape: bf16[128,128], index: 8, kind: input, shape index: {}]
  %s9 = inlined_call_operand.vmem [shape: f32[1,128], index: 9, kind: input, shape index: {}]
  %s10 = inlined_call_operand.vmem [shape: bf16[128,128], index: 10, kind: input, shape index: {}]
  %s11 = inlined_call_operand.vmem [shape: f32[1,128], index: 11, kind: input, shape index: {}]
  %s12 = inlined_call_operand.hbm [shape: f32[2,256,128], index: 12, kind: output, shape index: {}]
  %s13 = sld [smem:[#allocation0]]
  $region105: #{tpu_custom_call.1} parent=0
    _
  %s15 = ssub.s32 1, %s13
  %s16 = scalar_select 0, %s15, %s13
  $region1: #{tpu_custom_call.1} parent=0
    #allocation6 [shape = 'u8[65536]{0}', space=vmem, size = 0x10000, scoped, tag = 'input window, operand 0']
    #allocation7 [shape = 's32[2]{0}', space=sflag, size = 0x8, scoped, tag = 'scoped memory for tpu_custom_call.1']
    #allocation8 [shape = 's32[2]{0}', space=sflag, size = 0x8, scoped, tag = 'scoped memory for tpu_custom_call.1']
    #allocation9 [shape = 'u8[65536]{0}', space=vmem, size = 0x10000, scoped, tag = 'input window, operand 1']
    #allocation10 [shape = 's32[2]{0}', space=sflag, size = 0x8, scoped, tag = 'scoped memory for tpu_custom_call.1']
    #allocation11 [shape = 'u8[65536]{0}', space=vmem, size = 0x10000, scoped, tag = 'input window, operand 2']
    #allocation12 [shape = 'u8[65536]{0}', space=vmem, size = 0x10000, scoped, tag = 'input window, operand 3']
    #allocation13 [shape = 's32[2]{0}', space=sflag, size = 0x8, scoped, tag = 'scoped memory for tpu_custom_call.1']
    #allocation14 [shape = 'u8[131072]{0}', space=vmem, size = 0x20000, scoped, tag = 'output window, operand 0']
    %17 = vsyncpa [#allocation7], 0
    %s18 = scalar_lea.sflag [#allocation7], 1
    %19 = vsyncpa %s18, 0
    %20 = vsyncpa [#allocation10], 0
    %s21 = scalar_lea.sflag [#allocation10], 1
    %22 = vsyncpa %s21, 0
    %23 = vsyncpa [#allocation13], 0
    %s24 = scalar_lea.sflag [#allocation13], 1
    %25 = vsyncpa %s24, 0
    %26 = vsyncpa [#allocation8], 0
    %s27 = scalar_lea.sflag [#allocation8], 1
    %28 = vsyncpa %s27, 0
    loop: start=0, step=1, limit=10
    $region2: #{tpu_custom_call.1} parent=1 // loop_pre_header
      _
    $region3: #{tpu_custom_call.1} parent=1 // loop_header
      %s30 = sphi 0, %s34
      %p31 = scmp.ge.s32.totalorder %s30, 10
      %s37 = sphi 0, %s56
      %s38 = sphi 0, %s52
      %s39 = sphi 0, %s48
      %s40 = sphi 0, %s37
      %s41 = sphi 0, %s38
      %s42 = sphi 0, %s39
      %s43 = sphi 0, %s40
      %s44 = sphi 0, %s41
      %s45 = sphi 0, %s42
      %s61 = sphi 0, %s63
      %s64 = sphi 0, %s61
      %s65 = sphi 0, %s64
      %s81 = sphi 0, %s65
      %s89 = sphi 0, %s91
      %s92 = sphi 0, %s89
      %s93 = sphi 0, %s92
      %s109 = sphi 0, %s93
      %s117 = sphi 0, %s119
      %s120 = sphi 0, %s117
      %s121 = sphi 0, %s120
      %s137 = sphi 0, %s121
      %s147 = sphi 0, %s149
      %s150 = sphi 0, %s147
      %s151 = sphi 0, %s150
      %s167 = sphi 0, %s151
      %s171 = sphi 0, %s171
      %s173 = sphi 0, %s171
      %s174 = sphi 0, %s173
      %s188 = sphi 0, %s174
      %s192 = sphi 0, %s192
      %s194 = sphi 0, %s192
      %s195 = sphi 0, %s194
      %s209 = sphi 0, %s195
      %s213 = sphi 0, %s213
      %s215 = sphi 0, %s213
      %s216 = sphi 0, %s215
      %s230 = sphi 0, %s216
      %s234 = sphi 0, %s234
      %s236 = sphi 0, %s234
      %s237 = sphi 0, %s236
      %s251 = sphi 0, %s237
      %s255 = sphi 0, %s255
      %s257 = sphi 0, %s255
      %s258 = sphi 0, %s257
      %s272 = sphi 0, %s258
      %s276 = sphi 0, %s276
      %s278 = sphi 0, %s276
      %s279 = sphi 0, %s278
      %s293 = sphi 0, %s279
      %s297 = sphi 0, %s297
      %s299 = sphi 0, %s297
      %s300 = sphi 0, %s299
      %s314 = sphi 0, %s300
      %s318 = sphi 0, %s318
      %s320 = sphi 0, %s318
      %s321 = sphi 0, %s320
      %s335 = sphi 0, %s321
      %s343 = sphi 0, %s345
      %s346 = sphi 0, %s343
      %s347 = sphi 0, %s346
      %s363 = sphi 0, %s347
    $region4: #{tpu_custom_call.1} parent=1 // loop_header_branch
      %33 = sbr.rel (%p31) target = $region8
    $region5: #{tpu_custom_call.1} parent=1 // loop_body
      %s35 = ssub.s32 %s30, 1
      %s36 = ssub.s32 %s30, 2
      %s46 = sadd.s32 1, %s39
      %p47 = scmp.ge.s32.totalorder %s46, 2
      %s48 = scalar_select %p47, 0, %s46
      %s49 = sadd.s32 1, %s38
      %s50 = scalar_select %p47, %s49, %s38
      %p51 = scmp.ge.s32.totalorder %s50, 2
      %s52 = scalar_select %p51, 0, %s50
      %s53 = sadd.s32 1, %s37
      %s54 = scalar_select %p51, %s53, %s37
      %p55 = scmp.ge.s32.totalorder %s54, 2
      %s56 = scalar_select %p55, 0, %s54
      %s57 = ssub.s32 %s37, %s56
      %s58 = ssub.s32 %s38, %s52
      %s59 = sor.u32 %s57, %s58
      %p60 = scmp.eq.s32.totalorder %s59, 0
      %s62 = sadd.s32 %s61, 1
      %s63 = scalar_select %p60, %s61, %s62
      %p66 = pneg %p60
      %p67 = scmp.eq.s32.totalorder %s30, 7
      %p68 = por %p66, %p67
      %p69 = scmp.ne.s32.totalorder %s61, %s64
      %p70 = scmp.eq.s32.totalorder %s30, 0
      %p71 = por %p69, %p70
      %p72 = scmp.ne.s32.totalorder %s61, %s64
      %p73 = scmp.eq.s32.totalorder %s35, 7
      %p74 = por %p72, %p73
      %p75 = scmp.ne.s32.totalorder %s64, %s65
      %p76 = scmp.eq.s32.totalorder %s35, 0
      %p77 = por %p75, %p76
      %p78 = scmp.ne.s32.totalorder %s64, %s65
      %p79 = scmp.eq.s32.totalorder %s36, 7
      %p80 = por %p78, %p79
      %p82 = scmp.ne.s32.totalorder %s65, %s81
      %p83 = scmp.eq.s32.totalorder %s36, 0
      %p84 = por %p82, %p83
      %s85 = ssub.s32 %s37, %s56
      %s86 = ssub.s32 %s39, %s48
      %s87 = sor.u32 %s85, %s86
      %p88 = scmp.eq.s32.totalorder %s87, 0
      %s90 = sadd.s32 %s89, 1
      %s91 = scalar_select %p88, %s89, %s90
      %p94 = pneg %p88
      %p95 = scmp.eq.s32.totalorder %s30, 7
      %p96 = por %p94, %p95
      %p97 = scmp.ne.s32.totalorder %s89, %s92
      %p98 = scmp.eq.s32.totalorder %s30, 0
      %p99 = por %p97, %p98
      %p100 = scmp.ne.s32.totalorder %s89, %s92
      %p101 = scmp.eq.s32.totalorder %s35, 7
      %p102 = por %p100, %p101
      %p103 = scmp.ne.s32.totalorder %s92, %s93
      %p104 = scmp.eq.s32.totalorder %s35, 0
      %p105 = por %p103, %p104
      %p106 = scmp.ne.s32.totalorder %s92, %s93
      %p107 = scmp.eq.s32.totalorder %s36, 7
      %p108 = por %p106, %p107
      %p110 = scmp.ne.s32.totalorder %s93, %s109
      %p111 = scmp.eq.s32.totalorder %s36, 0
      %p112 = por %p110, %p111
      %s113 = ssub.s32 %s37, %s56
      %s114 = ssub.s32 %s39, %s48
      %s115 = sor.u32 %s113, %s114
      %p116 = scmp.eq.s32.totalorder %s115, 0
      %s118 = sadd.s32 %s117, 1
      %s119 = scalar_select %p116, %s117, %s118
      %p122 = pneg %p116
      %p123 = scmp.eq.s32.totalorder %s30, 7
      %p124 = por %p122, %p123
      %p125 = scmp.ne.s32.totalorder %s117, %s120
      %p126 = scmp.eq.s32.totalorder %s30, 0
      %p127 = por %p125, %p126
      %p128 = scmp.ne.s32.totalorder %s117, %s120
      %p129 = scmp.eq.s32.totalorder %s35, 7
      %p130 = por %p128, %p129
      %p131 = scmp.ne.s32.totalorder %s120, %s121
      %p132 = scmp.eq.s32.totalorder %s35, 0
      %p133 = por %p131, %p132
      %p134 = scmp.ne.s32.totalorder %s120, %s121
      %p135 = scmp.eq.s32.totalorder %s36, 7
      %p136 = por %p134, %p135
      %p138 = scmp.ne.s32.totalorder %s121, %s137
      %p139 = scmp.eq.s32.totalorder %s36, 0
      %p140 = por %p138, %p139
      %s141 = ssub.s32 %s37, %s56
      %s142 = ssub.s32 %s38, %s52
      %s143 = sor.u32 %s141, %s142
      %s144 = ssub.s32 %s39, %s48
      %s145 = sor.u32 %s143, %s144
      %p146 = scmp.eq.s32.totalorder %s145, 0
      %s148 = sadd.s32 %s147, 1
      %s149 = scalar_select %p146, %s147, %s148
      %p152 = pneg %p146
      %p153 = scmp.eq.s32.totalorder %s30, 7
      %p154 = por %p152, %p153
      %p155 = scmp.ne.s32.totalorder %s147, %s150
      %p156 = scmp.eq.s32.totalorder %s30, 0
      %p157 = por %p155, %p156
      %p158 = scmp.ne.s32.totalorder %s147, %s150
      %p159 = scmp.eq.s32.totalorder %s35, 7
      %p160 = por %p158, %p159
      %p161 = scmp.ne.s32.totalorder %s150, %s151
      %p162 = scmp.eq.s32.totalorder %s35, 0
      %p163 = por %p161, %p162
      %p164 = scmp.ne.s32.totalorder %s150, %s151
      %p165 = scmp.eq.s32.totalorder %s36, 7
      %p166 = por %p164, %p165
      %p168 = scmp.ne.s32.totalorder %s151, %s167
      %p169 = scmp.eq.s32.totalorder %s36, 0
      %p170 = por %p168, %p169
      %s172 = sadd.s32 %s171, 1
      %p175 = scmp.eq.s32.totalorder %s30, 7
      %p176 = scmp.ne.s32.totalorder %s171, %s173
      %p177 = scmp.eq.s32.totalorder %s30, 0
      %p178 = por %p176, %p177
      %p179 = scmp.ne.s32.totalorder %s171, %s173
      %p180 = scmp.eq.s32.totalorder %s35, 7
      %p181 = por %p179, %p180
      %p182 = scmp.ne.s32.totalorder %s173, %s174
      %p183 = scmp.eq.s32.totalorder %s35, 0
      %p184 = por %p182, %p183
      %p185 = scmp.ne.s32.totalorder %s173, %s174
      %p186 = scmp.eq.s32.totalorder %s36, 7
      %p187 = por %p185, %p186
      %p189 = scmp.ne.s32.totalorder %s174, %s188
      %p190 = scmp.eq.s32.totalorder %s36, 0
      %p191 = por %p189, %p190
      %s193 = sadd.s32 %s192, 1
      %p196 = scmp.eq.s32.totalorder %s30, 7
      %p197 = scmp.ne.s32.totalorder %s192, %s194
      %p198 = scmp.eq.s32.totalorder %s30, 0
      %p199 = por %p197, %p198
      %p200 = scmp.ne.s32.totalorder %s192, %s194
      %p201 = scmp.eq.s32.totalorder %s35, 7
      %p202 = por %p200, %p201
      %p203 = scmp.ne.s32.totalorder %s194, %s195
      %p204 = scmp.eq.s32.totalorder %s35, 0
      %p205 = por %p203, %p204
      %p206 = scmp.ne.s32.totalorder %s194, %s195
      %p207 = scmp.eq.s32.totalorder %s36, 7
      %p208 = por %p206, %p207
      %p210 = scmp.ne.s32.totalorder %s195, %s209
      %p211 = scmp.eq.s32.totalorder %s36, 0
      %p212 = por %p210, %p211
      %s214 = sadd.s32 %s213, 1
      %p217 = scmp.eq.s32.totalorder %s30, 7
      %p218 = scmp.ne.s32.totalorder %s213, %s215
      %p219 = scmp.eq.s32.totalorder %s30, 0
      %p220 = por %p218, %p219
      %p221 = scmp.ne.s32.totalorder %s213, %s215
      %p222 = scmp.eq.s32.totalorder %s35, 7
      %p223 = por %p221, %p222
      %p224 = scmp.ne.s32.totalorder %s215, %s216
      %p225 = scmp.eq.s32.totalorder %s35, 0
      %p226 = por %p224, %p225
      %p227 = scmp.ne.s32.totalorder %s215, %s216
      %p228 = scmp.eq.s32.totalorder %s36, 7
      %p229 = por %p227, %p228
      %p231 = scmp.ne.s32.totalorder %s216, %s230
      %p232 = scmp.eq.s32.totalorder %s36, 0
      %p233 = por %p231, %p232
      %s235 = sadd.s32 %s234, 1
      %p238 = scmp.eq.s32.totalorder %s30, 7
      %p239 = scmp.ne.s32.totalorder %s234, %s236
      %p240 = scmp.eq.s32.totalorder %s30, 0
      %p241 = por %p239, %p240
      %p242 = scmp.ne.s32.totalorder %s234, %s236
      %p243 = scmp.eq.s32.totalorder %s35, 7
      %p244 = por %p242, %p243
      %p245 = scmp.ne.s32.totalorder %s236, %s237
      %p246 = scmp.eq.s32.totalorder %s35, 0
      %p247 = por %p245, %p246
      %p248 = scmp.ne.s32.totalorder %s236, %s237
      %p249 = scmp.eq.s32.totalorder %s36, 7
      %p250 = por %p248, %p249
      %p252 = scmp.ne.s32.totalorder %s237, %s251
      %p253 = scmp.eq.s32.totalorder %s36, 0
      %p254 = por %p252, %p253
      %s256 = sadd.s32 %s255, 1
      %p259 = scmp.eq.s32.totalorder %s30, 7
      %p260 = scmp.ne.s32.totalorder %s255, %s257
      %p261 = scmp.eq.s32.totalorder %s30, 0
      %p262 = por %p260, %p261
      %p263 = scmp.ne.s32.totalorder %s255, %s257
      %p264 = scmp.eq.s32.totalorder %s35, 7
      %p265 = por %p263, %p264
      %p266 = scmp.ne.s32.totalorder %s257, %s258
      %p267 = scmp.eq.s32.totalorder %s35, 0
      %p268 = por %p266, %p267
      %p269 = scmp.ne.s32.totalorder %s257, %s258
      %p270 = scmp.eq.s32.totalorder %s36, 7
      %p271 = por %p269, %p270
      %p273 = scmp.ne.s32.totalorder %s258, %s272
      %p274 = scmp.eq.s32.totalorder %s36, 0
      %p275 = por %p273, %p274
      %s277 = sadd.s32 %s276, 1
      %p280 = scmp.eq.s32.totalorder %s30, 7
      %p281 = scmp.ne.s32.totalorder %s276, %s278
      %p282 = scmp.eq.s32.totalorder %s30, 0
      %p283 = por %p281, %p282
      %p284 = scmp.ne.s32.totalorder %s276, %s278
      %p285 = scmp.eq.s32.totalorder %s35, 7
      %p286 = por %p284, %p285
      %p287 = scmp.ne.s32.totalorder %s278, %s279
      %p288 = scmp.eq.s32.totalorder %s35, 0
      %p289 = por %p287, %p288
      %p290 = scmp.ne.s32.totalorder %s278, %s279
      %p291 = scmp.eq.s32.totalorder %s36, 7
      %p292 = por %p290, %p291
      %p294 = scmp.ne.s32.totalorder %s279, %s293
      %p295 = scmp.eq.s32.totalorder %s36, 0
      %p296 = por %p294, %p295
      %s298 = sadd.s32 %s297, 1
      %p301 = scmp.eq.s32.totalorder %s30, 7
      %p302 = scmp.ne.s32.totalorder %s297, %s299
      %p303 = scmp.eq.s32.totalorder %s30, 0
      %p304 = por %p302, %p303
      %p305 = scmp.ne.s32.totalorder %s297, %s299
      %p306 = scmp.eq.s32.totalorder %s35, 7
      %p307 = por %p305, %p306
      %p308 = scmp.ne.s32.totalorder %s299, %s300
      %p309 = scmp.eq.s32.totalorder %s35, 0
      %p310 = por %p308, %p309
      %p311 = scmp.ne.s32.totalorder %s299, %s300
      %p312 = scmp.eq.s32.totalorder %s36, 7
      %p313 = por %p311, %p312
      %p315 = scmp.ne.s32.totalorder %s300, %s314
      %p316 = scmp.eq.s32.totalorder %s36, 0
      %p317 = por %p315, %p316
      %s319 = sadd.s32 %s318, 1
      %p322 = scmp.eq.s32.totalorder %s30, 7
      %p323 = scmp.ne.s32.totalorder %s318, %s320
      %p324 = scmp.eq.s32.totalorder %s30, 0
      %p325 = por %p323, %p324
      %p326 = scmp.ne.s32.totalorder %s318, %s320
      %p327 = scmp.eq.s32.totalorder %s35, 7
      %p328 = por %p326, %p327
      %p329 = scmp.ne.s32.totalorder %s320, %s321
      %p330 = scmp.eq.s32.totalorder %s35, 0
      %p331 = por %p329, %p330
      %p332 = scmp.ne.s32.totalorder %s320, %s321
      %p333 = scmp.eq.s32.totalorder %s36, 7
      %p334 = por %p332, %p333
      %p336 = scmp.ne.s32.totalorder %s321, %s335
      %p337 = scmp.eq.s32.totalorder %s36, 0
      %p338 = por %p336, %p337
      %s339 = ssub.s32 %s37, %s56
      %s340 = ssub.s32 %s38, %s52
      %s341 = sor.u32 %s339, %s340
      %p342 = scmp.eq.s32.totalorder %s341, 0
      %s344 = sadd.s32 %s343, 1
      %s345 = scalar_select %p342, %s343, %s344
      %p348 = pneg %p342
      %p349 = scmp.eq.s32.totalorder %s30, 7
      %p350 = por %p348, %p349
      %p351 = scmp.ne.s32.totalorder %s343, %s346
      %p352 = scmp.eq.s32.totalorder %s30, 0
      %p353 = por %p351, %p352
      %p354 = scmp.ne.s32.totalorder %s343, %s346
      %p355 = scmp.eq.s32.totalorder %s35, 7
      %p356 = por %p354, %p355
      %p357 = scmp.ne.s32.totalorder %s346, %s347
      %p358 = scmp.eq.s32.totalorder %s35, 0
      %p359 = por %p357, %p358
      %p360 = scmp.ne.s32.totalorder %s346, %s347
      %p361 = scmp.eq.s32.totalorder %s36, 7
      %p362 = por %p360, %p361
      %p364 = scmp.ne.s32.totalorder %s347, %s363
      %p365 = scmp.eq.s32.totalorder %s36, 0
      %p366 = por %p364, %p365
      %p367 = scmp.le.s32.totalorder 1, %s30
      %p368 = scmp.lt.s32.totalorder %s30, 9
      %p369 = pnand %p367, %p368
      %p370 = pneg %p369
      // Predicated region
      $region9: #{tpu_custom_call.1} parent=5 // pred_check
        _
      $region10: #{tpu_custom_call.1} parent=5 // pred_check_branch
        %372 = sbr.rel (%p369) target = $region12
      $region11: #{tpu_custom_call.1} parent=5 // pred_region
        %s373 = ssub.s32 %s30, 1
        // Predicated region
        $region13: #{tpu_custom_call.1} parent=11 // pred_check
          %p374 = pneg %p184
        $region14: #{tpu_custom_call.1} parent=11 // pred_check_branch
          %376 = sbr.rel (%p374) target = $region16
        $region15: #{tpu_custom_call.1} parent=11 // pred_region
          _
        $region16: #{tpu_custom_call.1} parent=11 // pred_fallthru
          _
        // Predicated region
        $region17: #{tpu_custom_call.1} parent=11 // pred_check
          %p377 = pneg %p205
        $region18: #{tpu_custom_call.1} parent=11 // pred_check_branch
          %379 = sbr.rel (%p377) target = $region20
        $region19: #{tpu_custom_call.1} parent=11 // pred_region
          _
        $region20: #{tpu_custom_call.1} parent=11 // pred_fallthru
          _
        // Predicated region
        $region21: #{tpu_custom_call.1} parent=11 // pred_check
          %p380 = pneg %p226
        $region22: #{tpu_custom_call.1} parent=11 // pred_check_branch
          %382 = sbr.rel (%p380) target = $region24
        $region23: #{tpu_custom_call.1} parent=11 // pred_region
          _
        $region24: #{tpu_custom_call.1} parent=11 // pred_fallthru
          _
        // Predicated region
        $region25: #{tpu_custom_call.1} parent=11 // pred_check
          %p383 = pneg %p247
        $region26: #{tpu_custom_call.1} parent=11 // pred_check_branch
          %385 = sbr.rel (%p383) target = $region28
        $region27: #{tpu_custom_call.1} parent=11 // pred_region
          _
        $region28: #{tpu_custom_call.1} parent=11 // pred_fallthru
          _
        // Predicated region
        $region29: #{tpu_custom_call.1} parent=11 // pred_check
          %p386 = pneg %p268
        $region30: #{tpu_custom_call.1} parent=11 // pred_check_branch
          %388 = sbr.rel (%p386) target = $region32
        $region31: #{tpu_custom_call.1} parent=11 // pred_region
          _
        $region32: #{tpu_custom_call.1} parent=11 // pred_fallthru
          _
        // Predicated region
        $region33: #{tpu_custom_call.1} parent=11 // pred_check
          %p389 = pneg %p289
        $region34: #{tpu_custom_call.1} parent=11 // pred_check_branch
          %391 = sbr.rel (%p389) target = $region36
        $region35: #{tpu_custom_call.1} parent=11 // pred_region
          _
        $region36: #{tpu_custom_call.1} parent=11 // pred_fallthru
          _
        // Predicated region
        $region37: #{tpu_custom_call.1} parent=11 // pred_check
          %p392 = pneg %p310
        $region38: #{tpu_custom_call.1} parent=11 // pred_check_branch
          %394 = sbr.rel (%p392) target = $region40
        $region39: #{tpu_custom_call.1} parent=11 // pred_region
          _
        $region40: #{tpu_custom_call.1} parent=11 // pred_fallthru
          _
        // Predicated region
        $region41: #{tpu_custom_call.1} parent=11 // pred_check
          %p395 = pneg %p331
        $region42: #{tpu_custom_call.1} parent=11 // pred_check_branch
          %397 = sbr.rel (%p395) target = $region44
        $region43: #{tpu_custom_call.1} parent=11 // pred_region
          _
        $region44: #{tpu_custom_call.1} parent=11 // pred_fallthru
          _
      $region12: #{tpu_custom_call.1} parent=5 // pred_fallthru
        _
      %p398 = scmp.lt.s32.totalorder %s30, 8
      // Predicated region
      $region45: #{tpu_custom_call.1} parent=5 // pred_check
        %p399 = pneg %p398
      $region46: #{tpu_custom_call.1} parent=5 // pred_check_branch
        %401 = sbr.rel (%p399) target = $region48
      $region47: #{tpu_custom_call.1} parent=5 // pred_region
        // Predicated region
        $region49: #{tpu_custom_call.1} parent=47 // pred_check
          %p402 = pneg %p71
        $region50: #{tpu_custom_call.1} parent=47 // pred_check_branch
          %404 = sbr.rel (%p402) target = $region52
        $region51: #{tpu_custom_call.1} parent=47 // pred_region
          %s405 = sand.u32 %s61, 1
          %s406 = scalar_lea.sflag [#allocation7], %s405
          %s407 = sand.u32 %s61, 1
          %s408 = smul.addr %s407, 64
          %s409 = scalar_lea.vmem [#allocation6], %s408
          %s410 = smul.u32 16, %s38
          %s412 = ssub.s32 1024, 1024
          %413 = vsyncadd %s406, %s412
          %s414 = smul.addr %s37, 32
          %s415 = sadd.s32 %s410, %s414
          %s416 = smul.addr %s415, 64
          %s417 = scalar_lea.hbm %s0, %s416
          %s418 = sshll.u32 %s409, 4
          %s419 = int_to_ptr.vmem [resolvable:$true] %s418
          %424 = dma.hbm_to_vmem [thread:$0]  %s417, 1024, %s419, %s406, 64, 64, 4
        $region52: #{tpu_custom_call.1} parent=47 // pred_fallthru
          _
        // Predicated region
        $region53: #{tpu_custom_call.1} parent=47 // pred_check
          %p425 = pneg %p99
        $region54: #{tpu_custom_call.1} parent=47 // pred_check_branch
          %427 = sbr.rel (%p425) target = $region56
        $region55: #{tpu_custom_call.1} parent=47 // pred_region
          %s428 = sand.u32 %s30, 1
          %s429 = scalar_lea.sflag [#allocation10], %s428
          %s430 = sand.u32 %s89, 1
          %s431 = smul.addr %s430, 64
          %s432 = scalar_lea.vmem [#allocation9], %s431
          %s433 = smul.u32 16, %s39
          %s435 = ssub.s32 1024, 1024
          %436 = vsyncadd %s429, %s435
          %s437 = smul.addr %s37, 32
          %s438 = sadd.s32 %s433, %s437
          %s439 = smul.addr %s438, 64
          %s440 = scalar_lea.hbm %s1, %s439
          %s441 = sshll.u32 %s432, 4
          %s442 = int_to_ptr.vmem [resolvable:$true] %s441
          %447 = dma.hbm_to_vmem [thread:$0]  %s440, 1024, %s442, %s429, 64, 64, 4
        $region56: #{tpu_custom_call.1} parent=47 // pred_fallthru
          _
        // Predicated region
        $region57: #{tpu_custom_call.1} parent=47 // pred_check
          %p448 = pneg %p127
        $region58: #{tpu_custom_call.1} parent=47 // pred_check_branch
          %450 = sbr.rel (%p448) target = $region60
        $region59: #{tpu_custom_call.1} parent=47 // pred_region
          %s451 = sand.u32 %s30, 1
          %s452 = scalar_lea.sflag [#allocation10], %s451
          %s453 = sand.u32 %s117, 1
          %s454 = smul.addr %s453, 64
          %s455 = scalar_lea.vmem [#allocation11], %s454
          %s456 = smul.u32 16, %s39
          %s458 = ssub.s32 1024, 1024
          %459 = vsyncadd %s452, %s458
          %s460 = smul.addr %s37, 32
          %s461 = sadd.s32 %s456, %s460
          %s462 = smul.addr %s461, 64
          %s463 = scalar_lea.hbm %s2, %s462
          %s464 = sshll.u32 %s455, 4
          %s465 = int_to_ptr.vmem [resolvable:$true] %s464
          %470 = dma.hbm_to_vmem [thread:$0]  %s463, 1024, %s465, %s452, 64, 64, 4
        $region60: #{tpu_custom_call.1} parent=47 // pred_fallthru
          _
        // Predicated region
        $region61: #{tpu_custom_call.1} parent=47 // pred_check
          %p471 = pneg %p157
        $region62: #{tpu_custom_call.1} parent=47 // pred_check_branch
          %473 = sbr.rel (%p471) target = $region64
        $region63: #{tpu_custom_call.1} parent=47 // pred_region
          %s474 = sand.u32 %s147, 1
          %s475 = scalar_lea.sflag [#allocation13], %s474
          %s476 = sand.u32 %s147, 1
          %s477 = smul.addr %s476, 64
          %s478 = scalar_lea.vmem [#allocation12], %s477
          %s479 = smul.u32 16, %s38
          %s481 = ssub.s32 1024, 1024
          %482 = vsyncadd %s475, %s481
          %s483 = smul.addr %s479, 2
          %s484 = sadd.s32 %s39, %s483
          %s485 = smul.addr %s37, 64
          %s486 = sadd.s32 %s484, %s485
          %s487 = smul.addr %s486, 64
          %s488 = scalar_lea.hbm %s3, %s487
          %s489 = sshll.u32 %s478, 4
          %s490 = int_to_ptr.vmem [resolvable:$true] %s489
          %495 = dma.hbm_to_vmem [thread:$0]  %s488, 1024, %s490, %s475, 128, 64, 4
        $region64: #{tpu_custom_call.1} parent=47 // pred_fallthru
          _
      $region48: #{tpu_custom_call.1} parent=5 // pred_fallthru
        _
      %p496 = scmp.le.s32.totalorder 1, %s30
      %p497 = scmp.lt.s32.totalorder %s30, 9
      %p498 = pnand %p496, %p497
      %p499 = pneg %p498
      // Predicated region
      $region65: #{tpu_custom_call.1} parent=5 // pred_check
        _
      $region66: #{tpu_custom_call.1} parent=5 // pred_check_branch
        %501 = sbr.rel (%p498) target = $region68
      $region67: #{tpu_custom_call.1} parent=5 // pred_region
        %s502 = ssub.s32 %s30, 1
        %s503 = sand.u32 %s64, 1
        %s504 = scalar_lea.sflag [#allocation7], %s503
        %s505 = sand.u32 %s64, 1
        %s506 = smul.addr %s505, 64
        %s507 = scalar_lea.vmem [#allocation6], %s506
        // Predicated region
        $region69: #{tpu_custom_call.1} parent=67 // pred_check
          %p508 = pneg %p77
        $region70: #{tpu_custom_call.1} parent=67 // pred_check_branch
          %510 = sbr.rel (%p508) target = $region72
        $region71: #{tpu_custom_call.1} parent=67 // pred_region
          %511 = dma.done %s504, 1024
        $region72: #{tpu_custom_call.1} parent=67 // pred_fallthru
          _
        %s512 = sand.u32 %s35, 1
        %s513 = scalar_lea.sflag [#allocation10], %s512
        %s514 = sand.u32 %s92, 1
        %s515 = smul.addr %s514, 64
        %s516 = scalar_lea.vmem [#allocation9], %s515
        // Predicated region
        $region73: #{tpu_custom_call.1} parent=67 // pred_check
          %p517 = pneg %p105
        $region74: #{tpu_custom_call.1} parent=67 // pred_check_branch
          %519 = sbr.rel (%p517) target = $region76
        $region75: #{tpu_custom_call.1} parent=67 // pred_region
          %520 = dma.done %s513, 1024
        $region76: #{tpu_custom_call.1} parent=67 // pred_fallthru
          _
        %s521 = sand.u32 %s35, 1
        %s522 = scalar_lea.sflag [#allocation10], %s521
        %s523 = sand.u32 %s120, 1
        %s524 = smul.addr %s523, 64
        %s525 = scalar_lea.vmem [#allocation11], %s524
        // Predicated region
        $region77: #{tpu_custom_call.1} parent=67 // pred_check
          %p526 = pneg %p133
        $region78: #{tpu_custom_call.1} parent=67 // pred_check_branch
          %528 = sbr.rel (%p526) target = $region80
        $region79: #{tpu_custom_call.1} parent=67 // pred_region
          %529 = dma.done %s522, 1024
        $region80: #{tpu_custom_call.1} parent=67 // pred_fallthru
          _
        %s530 = sand.u32 %s150, 1
        %s531 = scalar_lea.sflag [#allocation13], %s530
        %s532 = sand.u32 %s150, 1
        %s533 = smul.addr %s532, 64
        %s534 = scalar_lea.vmem [#allocation12], %s533
        // Predicated region
        $region81: #{tpu_custom_call.1} parent=67 // pred_check
          %p535 = pneg %p163
        $region82: #{tpu_custom_call.1} parent=67 // pred_check_branch
          %537 = sbr.rel (%p535) target = $region84
        $region83: #{tpu_custom_call.1} parent=67 // pred_region
          %538 = dma.done %s531, 1024
        $region84: #{tpu_custom_call.1} parent=67 // pred_fallthru
          _
        %s539 = sand.u32 %s64, 1
        %s540 = scalar_lea.sflag [#allocation7], %s539
        %s541 = sand.u32 %s64, 1
        %s542 = smul.addr %s541, 64
        %s543 = scalar_lea.vmem [#allocation6], %s542
        %p544 = pneg %p77
        %p545 = pneg %p74
        %s546 = sand.u32 %s35, 1
        %s547 = scalar_lea.sflag [#allocation10], %s546
        %s548 = sand.u32 %s92, 1
        %s549 = smul.addr %s548, 64
        %s550 = scalar_lea.vmem [#allocation9], %s549
        %p551 = pneg %p105
        %p552 = pneg %p102
        %s553 = sand.u32 %s35, 1
        %s554 = scalar_lea.sflag [#allocation10], %s553
        %s555 = sand.u32 %s120, 1
        %s556 = smul.addr %s555, 64
        %s557 = scalar_lea.vmem [#allocation11], %s556
        %p558 = pneg %p133
        %p559 = pneg %p130
        %s560 = sand.u32 %s150, 1
        %s561 = scalar_lea.sflag [#allocation13], %s560
        %s562 = sand.u32 %s150, 1
        %s563 = smul.addr %s562, 64
        %s564 = scalar_lea.vmem [#allocation12], %s563
        %p565 = pneg %p163
        %p566 = pneg %p160
        %p567 = pneg %p184
        %p568 = pneg %p181
        %p569 = pneg %p205
        %p570 = pneg %p202
        %p571 = pneg %p226
        %p572 = pneg %p223
        %p573 = pneg %p247
        %p574 = pneg %p244
        %p575 = pneg %p268
        %p576 = pneg %p265
        %p577 = pneg %p289
        %p578 = pneg %p286
        %p579 = pneg %p310
        %p580 = pneg %p307
        %p581 = pneg %p331
        %p582 = pneg %p328
        %p583 = pneg %p359
        %p584 = pneg %p356
        %s585 = sand.u32 %s346, 1
        %s586 = scalar_lea.sflag [#allocation8], %s585
        %s587 = sand.u32 %s346, 1
        %s588 = smul.addr %s587, 128
        %s589 = scalar_lea.vmem [#allocation14], %s588
        %s590 = smul.u32 16, %s41
        %s591 = smul.u32 16, %s42
        %s592 = smul.u32 16, %s42
        %s593 = smul.u32 16, %s41
        %s594 = smul.u32 16, %s41
        %p596 = scmp.eq.s32.totalorder %s42, 0
        // Predicated region
        $region85: #{tpu_custom_call.1} parent=67 // pred_check
          %p597 = pneg %p596
        $region86: #{tpu_custom_call.1} parent=67 // pred_check_branch
          %599 = sbr.rel (%p597) target = $region88
        $region87: #{tpu_custom_call.1} parent=67 // pred_region
          %v600 = vld [vmem:[%s507] sm:$0xf]
          %v601 = vld [vmem:[%s507 + $0x4] sm:$0xf]
          %v602 = vld [vmem:[%s507 + $0x8] sm:$0xf]
          %v603 = vld [vmem:[%s507 + $0xc] sm:$0xf]
          %v604 = vld [vmem:[%s507 + $0x10] sm:$0xf]
          %v605 = vld [vmem:[%s507 + $0x14] sm:$0xf]
          %v606 = vld [vmem:[%s507 + $0x18] sm:$0xf]
          %v607 = vld [vmem:[%s507 + $0x1c] sm:$0xf]
          %v608 = vld [vmem:[%s507 + $0x20] sm:$0xf]
          %v609 = vld [vmem:[%s507 + $0x24] sm:$0xf]
          %v610 = vld [vmem:[%s507 + $0x28] sm:$0xf]
          %v611 = vld [vmem:[%s507 + $0x2c] sm:$0xf]
          %v612 = vld [vmem:[%s507 + $0x30] sm:$0xf]
          %v613 = vld [vmem:[%s507 + $0x34] sm:$0xf]
          %v614 = vld [vmem:[%s507 + $0x38] sm:$0xf]
          %v615 = vld [vmem:[%s507 + $0x3c] sm:$0xf]
          %v616 = vld [vmem:[%s4] sm:$0xf]
          %v617 = vld [vmem:[%s4 + $0x4] sm:$0xf]
          %v618 = vld [vmem:[%s4 + $0x8] sm:$0xf]
          %v619 = vld [vmem:[%s4 + $0xc] sm:$0xf]
          %v620 = vld [vmem:[%s4 + $0x10] sm:$0xf]
          %v621 = vld [vmem:[%s4 + $0x14] sm:$0xf]
          %v622 = vld [vmem:[%s4 + $0x18] sm:$0xf]
          %v623 = vld [vmem:[%s4 + $0x1c] sm:$0xf]
          %v624 = vld [vmem:[%s4 + $0x20] sm:$0xf]
          %v625 = vld [vmem:[%s4 + $0x24] sm:$0xf]
          %v626 = vld [vmem:[%s4 + $0x28] sm:$0xf]
          %v627 = vld [vmem:[%s4 + $0x2c] sm:$0xf]
          %v628 = vld [vmem:[%s4 + $0x30] sm:$0xf]
          %v629 = vld [vmem:[%s4 + $0x34] sm:$0xf]
          %v630 = vld [vmem:[%s4 + $0x38] sm:$0xf]
          %v631 = vld [vmem:[%s4 + $0x3c] sm:$0xf]
          %v632 = vld [vmem:[%s5] sm:$0x1]
          %v634 = vlaneseq
          %v635 = vshrl.u32 %v634, 7
          %v636 = vsub.s32 0, %v635
          %v637 = vrot.slane %v632, %v636
          %v655 = vunpack.c.l.b16 %v600
          %v656 = vunpack.c.l.b16 %v601
          %v657 = vunpack.c.l.b16 %v602
          %v658 = vunpack.c.l.b16 %v603
          %v659 = vunpack.c.l.b16 %v604
          %v660 = vunpack.c.l.b16 %v605
          %v661 = vunpack.c.l.b16 %v606
          %v662 = vunpack.c.l.b16 %v607
          %v663 = vunpack.c.l.b16 %v608
          %v664 = vunpack.c.l.b16 %v609
          %v665 = vunpack.c.l.b16 %v610
          %v666 = vunpack.c.l.b16 %v611
          %v667 = vunpack.c.l.b16 %v612
          %v668 = vunpack.c.l.b16 %v613
          %v669 = vunpack.c.l.b16 %v614
          %v670 = vunpack.c.l.b16 %v615
          %v671 = vpack.c.b16 %v656, %v655
          %v672 = vpack.c.b16 %v658, %v657
          %v673 = vpack.c.b16 %v660, %v659
          %v674 = vpack.c.b16 %v662, %v661
          %v675 = vpack.c.b16 %v664, %v663
          %v676 = vpack.c.b16 %v666, %v665
          %v677 = vpack.c.b16 %v668, %v667
          %v678 = vpack.c.b16 %v670, %v669
          %v703 = vunpack.c.l.b16 %v616
          %v704 = vunpack.c.l.b16 %v617
          %v705 = vunpack.c.l.b16 %v618
          %v706 = vunpack.c.l.b16 %v619
          %v707 = vunpack.c.l.b16 %v620
          %v708 = vunpack.c.l.b16 %v621
          %v709 = vunpack.c.l.b16 %v622
          %v710 = vunpack.c.l.b16 %v623
          %v711 = vunpack.c.l.b16 %v624
          %v712 = vunpack.c.l.b16 %v625
          %v713 = vunpack.c.l.b16 %v626
          %v714 = vunpack.c.l.b16 %v627
          %v715 = vunpack.c.l.b16 %v628
          %v716 = vunpack.c.l.b16 %v629
          %v717 = vunpack.c.l.b16 %v630
          %v718 = vunpack.c.l.b16 %v631
          %v719 = vpack.c.b16 %v704, %v703
          %v720 = vpack.c.b16 %v706, %v705
          %v721 = vpack.c.b16 %v708, %v707
          %v722 = vpack.c.b16 %v710, %v709
          %v723 = vpack.c.b16 %v712, %v711
          %v724 = vpack.c.b16 %v714, %v713
          %v725 = vpack.c.b16 %v716, %v715
          %v726 = vpack.c.b16 %v718, %v717
          %735 = vmatprep.subr.bf16.mxu0 0
          %736 = vmatpush1.bf16.msra.mxu0 %v719
          %737 = vmatprep.subr.bf16.mxu0 0
          %738 = vmatpush1.bf16.msra.mxu0 %v720
          %739 = vmatprep.subr.bf16.mxu0 0
          %740 = vmatpush1.bf16.msra.mxu0 %v721
          %741 = vmatprep.subr.bf16.mxu0 0
          %742 = vmatpush1.bf16.msra.mxu0 %v722
          %743 = vmatprep.subr.bf16.mxu0 0
          %744 = vmatpush1.bf16.msra.mxu0 %v723
          %745 = vmatprep.subr.bf16.mxu0 0
          %746 = vmatpush1.bf16.msra.mxu0 %v724
          %747 = vmatprep.subr.bf16.mxu0 0
          %748 = vmatpush1.bf16.msra.mxu0 %v725
          %749 = vmatprep.subr.bf16.mxu0 0
          %750 = vmatpush1.bf16.msra.mxu0 %v726
          %751 = vmatprep.subr.bf16.mxu0 0
          %752 = vmatpush1.bf16.msra.mxu0 0
          %753 = vmatprep.subr.bf16.mxu0 0
          %754 = vmatpush1.bf16.msra.mxu0 0
          %755 = vmatprep.subr.bf16.mxu0 0
          %756 = vmatpush1.bf16.msra.mxu0 0
          %757 = vmatprep.subr.bf16.mxu0 0
          %758 = vmatpush1.bf16.msra.mxu0 0
          %759 = vmatprep.subr.bf16.mxu0 0
          %760 = vmatpush1.bf16.msra.mxu0 0
          %761 = vmatprep.subr.bf16.mxu0 0
          %762 = vmatpush1.bf16.msra.mxu0 0
          %763 = vmatprep.subr.bf16.mxu0 0
          %764 = vmatpush1.bf16.msra.mxu0 0
          %765 = vmatprep.subr.bf16.mxu0 0
          %766 = vmatpush1.bf16.msra.mxu0 0
          %767 = vmatprep.mubr.bf16.mxu0 0
          %768 = vmatmul.mubr.bf16.gmra.mrb[0].mxu0 %v671
          %v769 = vpop.f32.mrb[0].mxu0
          %v770 = vadd.f32 %v637, %v769
          %v771 = vpop.f32.mrb[0].mxu0
          %v772 = vpop.f32.mrb[0].mxu0
          %v773 = vadd.f32 %v637, %v772
          %v774 = vpop.f32.mrb[0].mxu0
          %775 = vmatprep.mubr.bf16.mxu0 0
          %776 = vmatmul.mubr.bf16.gmra.mrb[0].mxu0 %v672
          %v777 = vpop.f32.mrb[0].mxu0
          %v778 = vadd.f32 %v637, %v777
          %v779 = vpop.f32.mrb[0].mxu0
          %v780 = vpop.f32.mrb[0].mxu0
          %v781 = vadd.f32 %v637, %v780
          %v782 = vpop.f32.mrb[0].mxu0
          %783 = vmatprep.mubr.bf16.mxu0 0
          %784 = vmatmul.mubr.bf16.gmra.mrb[0].mxu0 %v673
          %v785 = vpop.f32.mrb[0].mxu0
          %v786 = vadd.f32 %v637, %v785
          %v787 = vpop.f32.mrb[0].mxu0
          %v788 = vpop.f32.mrb[0].mxu0
          %v789 = vadd.f32 %v637, %v788
          %v790 = vpop.f32.mrb[0].mxu0
          %791 = vmatprep.mubr.bf16.mxu0 0
          %792 = vmatmul.mubr.bf16.gmra.mrb[0].mxu0 %v674
          %v793 = vpop.f32.mrb[0].mxu0
          %v794 = vadd.f32 %v637, %v793
          %v795 = vpop.f32.mrb[0].mxu0
          %v796 = vpop.f32.mrb[0].mxu0
          %v797 = vadd.f32 %v637, %v796
          %v798 = vpop.f32.mrb[0].mxu0
          %799 = vmatprep.mubr.bf16.mxu0 0
          %800 = vmatmul.mubr.bf16.gmra.mrb[0].mxu0 %v675
          %v801 = vpop.f32.mrb[0].mxu0
          %v802 = vadd.f32 %v637, %v801
          %v803 = vpop.f32.mrb[0].mxu0
          %v804 = vpop.f32.mrb[0].mxu0
          %v805 = vadd.f32 %v637, %v804
          %v806 = vpop.f32.mrb[0].mxu0
          %807 = vmatprep.mubr.bf16.mxu0 0
          %808 = vmatmul.mubr.bf16.gmra.mrb[0].mxu0 %v676
          %v809 = vpop.f32.mrb[0].mxu0
          %v810 = vadd.f32 %v637, %v809
          %v811 = vpop.f32.mrb[0].mxu0
          %v812 = vpop.f32.mrb[0].mxu0
          %v813 = vadd.f32 %v637, %v812
          %v814 = vpop.f32.mrb[0].mxu0
          %815 = vmatprep.mubr.bf16.mxu0 0
          %816 = vmatmul.mubr.bf16.gmra.mrb[0].mxu0 %v677
          %v817 = vpop.f32.mrb[0].mxu0
          %v818 = vadd.f32 %v637, %v817
          %v819 = vpop.f32.mrb[0].mxu0
          %v820 = vpop.f32.mrb[0].mxu0
          %v821 = vadd.f32 %v637, %v820
          %v822 = vpop.f32.mrb[0].mxu0
          %823 = vmatprep.mubr.bf16.mxu0 0
          %824 = vmatmul.mubr.bf16.gmra.mrb[0].mxu0 %v678
          %v825 = vpop.f32.mrb[0].mxu0
          %v826 = vadd.f32 %v637, %v825
          %v827 = vpop.f32.mrb[0].mxu0
          %v828 = vpop.f32.mrb[0].mxu0
          %v829 = vadd.f32 %v637, %v828
          %v830 = vpop.f32.mrb[0].mxu0
          %831 = vdwg.mxu0
          %v832 = vmul.f32 %v770, 0.25
          %v833 = vmul.f32 %v773, 0.25
          %v834 = vmul.f32 %v778, 0.25
          %v835 = vmul.f32 %v781, 0.25
          %v836 = vmul.f32 %v786, 0.25
          %v837 = vmul.f32 %v789, 0.25
          %v838 = vmul.f32 %v794, 0.25
          %v839 = vmul.f32 %v797, 0.25
          %v840 = vmul.f32 %v802, 0.25
          %v841 = vmul.f32 %v805, 0.25
          %v842 = vmul.f32 %v810, 0.25
          %v843 = vmul.f32 %v813, 0.25
          %v844 = vmul.f32 %v818, 0.25
          %v845 = vmul.f32 %v821, 0.25
          %v846 = vmul.f32 %v826, 0.25
          %v847 = vmul.f32 %v829, 0.25
          %v848 = vpack.c.bf16 %v833, %v832
          %v849 = vpack.c.bf16 %v835, %v834
          %v850 = vpack.c.bf16 %v837, %v836
          %v851 = vpack.c.bf16 %v839, %v838
          %v852 = vpack.c.bf16 %v841, %v840
          %v853 = vpack.c.bf16 %v843, %v842
          %v854 = vpack.c.bf16 %v845, %v844
          %v855 = vpack.c.bf16 %v847, %v846
          %vm856 = vcmask 523264
          %857 = vst.msk [vmem:[#allocation2] sm:$0xff] %vm856, %v848
          %858 = vst.msk [vmem:[#allocation2 + $0x8] sm:$0xff] %vm856, %v849
          %859 = vst.msk [vmem:[#allocation2 + $0x10] sm:$0xff] %vm856, %v850
          %860 = vst.msk [vmem:[#allocation2 + $0x18] sm:$0xff] %vm856, %v851
          %861 = vst.msk [vmem:[#allocation2 + $0x20] sm:$0xff] %vm856, %v852
          %862 = vst.msk [vmem:[#allocation2 + $0x28] sm:$0xff] %vm856, %v853
          %863 = vst.msk [vmem:[#allocation2 + $0x30] sm:$0xff] %vm856, %v854
          %864 = vst.msk [vmem:[#allocation2 + $0x38] sm:$0xff] %vm856, %v855
          %vm865 = vcmask 64512
          %866 = vst.msk [vmem:[#allocation3] sm:$0xff] %vm865, -inf
          %867 = vst.msk [vmem:[#allocation3 + $0x8] sm:$0xff] %vm865, -inf
          %868 = vst.msk [vmem:[#allocation3 + $0x10] sm:$0xff] %vm865, -inf
          %869 = vst.msk [vmem:[#allocation3 + $0x18] sm:$0xff] %vm865, -inf
          %870 = vst.msk [vmem:[#allocation3 + $0x20] sm:$0xff] %vm865, -inf
          %871 = vst.msk [vmem:[#allocation3 + $0x28] sm:$0xff] %vm865, -inf
          %872 = vst.msk [vmem:[#allocation3 + $0x30] sm:$0xff] %vm865, -inf
          %873 = vst.msk [vmem:[#allocation3 + $0x38] sm:$0xff] %vm865, -inf
          %874 = vst.msk [vmem:[#allocation3 + $0x40] sm:$0xff] %vm865, -inf
          %875 = vst.msk [vmem:[#allocation3 + $0x48] sm:$0xff] %vm865, -inf
          %876 = vst.msk [vmem:[#allocation3 + $0x50] sm:$0xff] %vm865, -inf
          %877 = vst.msk [vmem:[#allocation3 + $0x58] sm:$0xff] %vm865, -inf
          %878 = vst.msk [vmem:[#allocation3 + $0x60] sm:$0xff] %vm865, -inf
          %879 = vst.msk [vmem:[#allocation3 + $0x68] sm:$0xff] %vm865, -inf
          %880 = vst.msk [vmem:[#allocation3 + $0x70] sm:$0xff] %vm865, -inf
          %881 = vst.msk [vmem:[#allocation3 + $0x78] sm:$0xff] %vm865, -inf
          %882 = vst.msk [vmem:[#allocation4] sm:$0xff] %vm865, 0.0
          %883 = vst.msk [vmem:[#allocation4 + $0x8] sm:$0xff] %vm865, 0.0
          %884 = vst.msk [vmem:[#allocation4 + $0x10] sm:$0xff] %vm865, 0.0
          %885 = vst.msk [vmem:[#allocation4 + $0x18] sm:$0xff] %vm865, 0.0
          %886 = vst.msk [vmem:[#allocation4 + $0x20] sm:$0xff] %vm865, 0.0
          %887 = vst.msk [vmem:[#allocation4 + $0x28] sm:$0xff] %vm865, 0.0
          %888 = vst.msk [vmem:[#allocation4 + $0x30] sm:$0xff] %vm865, 0.0
          %889 = vst.msk [vmem:[#allocation4 + $0x38] sm:$0xff] %vm865, 0.0
          %890 = vst.msk [vmem:[#allocation4 + $0x40] sm:$0xff] %vm865, 0.0
          %891 = vst.msk [vmem:[#allocation4 + $0x48] sm:$0xff] %vm865, 0.0
          %892 = vst.msk [vmem:[#allocation4 + $0x50] sm:$0xff] %vm865, 0.0
          %893 = vst.msk [vmem:[#allocation4 + $0x58] sm:$0xff] %vm865, 0.0
          %894 = vst.msk [vmem:[#allocation4 + $0x60] sm:$0xff] %vm865, 0.0
          %895 = vst.msk [vmem:[#allocation4 + $0x68] sm:$0xff] %vm865, 0.0
          %896 = vst.msk [vmem:[#allocation4 + $0x70] sm:$0xff] %vm865, 0.0
          %897 = vst.msk [vmem:[#allocation4 + $0x78] sm:$0xff] %vm865, 0.0
          %898 = vst [vmem:[#allocation5] sm:$0xff] 0.0
          %899 = vst [vmem:[#allocation5 + $0x8] sm:$0xff] 0.0
          %900 = vst [vmem:[#allocation5 + $0x10] sm:$0xff] 0.0
          %901 = vst [vmem:[#allocation5 + $0x18] sm:$0xff] 0.0
          %902 = vst [vmem:[#allocation5 + $0x20] sm:$0xff] 0.0
          %903 = vst [vmem:[#allocation5 + $0x28] sm:$0xff] 0.0
          %904 = vst [vmem:[#allocation5 + $0x30] sm:$0xff] 0.0
          %905 = vst [vmem:[#allocation5 + $0x38] sm:$0xff] 0.0
          %906 = vst [vmem:[#allocation5 + $0x40] sm:$0xff] 0.0
          %907 = vst [vmem:[#allocation5 + $0x48] sm:$0xff] 0.0
          %908 = vst [vmem:[#allocation5 + $0x50] sm:$0xff] 0.0
          %909 = vst [vmem:[#allocation5 + $0x58] sm:$0xff] 0.0
          %910 = vst [vmem:[#allocation5 + $0x60] sm:$0xff] 0.0
          %911 = vst [vmem:[#allocation5 + $0x68] sm:$0xff] 0.0
          %912 = vst [vmem:[#allocation5 + $0x70] sm:$0xff] 0.0
          %913 = vst [vmem:[#allocation5 + $0x78] sm:$0xff] 0.0
        $region88: #{tpu_custom_call.1} parent=67 // pred_fallthru
          _
        %v914 = vld [vmem:[%s516] sm:$0xf]
        %v915 = vld [vmem:[%s516 + $0x4] sm:$0xf]
        %v916 = vld [vmem:[%s516 + $0x8] sm:$0xf]
        %v917 = vld [vmem:[%s516 + $0xc] sm:$0xf]
        %v918 = vld [vmem:[%s516 + $0x10] sm:$0xf]
        %v919 = vld [vmem:[%s516 + $0x14] sm:$0xf]
        %v920 = vld [vmem:[%s516 + $0x18] sm:$0xf]
        %v921 = vld [vmem:[%s516 + $0x1c] sm:$0xf]
        %v922 = vld [vmem:[%s516 + $0x20] sm:$0xf]
        %v923 = vld [vmem:[%s516 + $0x24] sm:$0xf]
        %v924 = vld [vmem:[%s516 + $0x28] sm:$0xf]
        %v925 = vld [vmem:[%s516 + $0x2c] sm:$0xf]
        %v926 = vld [vmem:[%s516 + $0x30] sm:$0xf]
        %v927 = vld [vmem:[%s516 + $0x34] sm:$0xf]
        %v928 = vld [vmem:[%s516 + $0x38] sm:$0xf]
        %v929 = vld [vmem:[%s516 + $0x3c] sm:$0xf]
        %v930 = vld [vmem:[%s525] sm:$0xf]
        %v931 = vld [vmem:[%s525 + $0x4] sm:$0xf]
        %v932 = vld [vmem:[%s525 + $0x8] sm:$0xf]
        %v933 = vld [vmem:[%s525 + $0xc] sm:$0xf]
        %v934 = vld [vmem:[%s525 + $0x10] sm:$0xf]
        %v935 = vld [vmem:[%s525 + $0x14] sm:$0xf]
        %v936 = vld [vmem:[%s525 + $0x18] sm:$0xf]
        %v937 = vld [vmem:[%s525 + $0x1c] sm:$0xf]
        %v938 = vld [vmem:[%s525 + $0x20] sm:$0xf]
        %v939 = vld [vmem:[%s525 + $0x24] sm:$0xf]
        %v940 = vld [vmem:[%s525 + $0x28] sm:$0xf]
        %v941 = vld [vmem:[%s525 + $0x2c] sm:$0xf]
        %v942 = vld [vmem:[%s525 + $0x30] sm:$0xf]
        %v943 = vld [vmem:[%s525 + $0x34] sm:$0xf]
        %v944 = vld [vmem:[%s525 + $0x38] sm:$0xf]
        %v945 = vld [vmem:[%s525 + $0x3c] sm:$0xf]
        %v946 = vld [vmem:[%s6] sm:$0xf]
        %v947 = vld [vmem:[%s6 + $0x4] sm:$0xf]
        %v948 = vld [vmem:[%s6 + $0x8] sm:$0xf]
        %v949 = vld [vmem:[%s6 + $0xc] sm:$0xf]
        %v950 = vld [vmem:[%s6 + $0x10] sm:$0xf]
        %v951 = vld [vmem:[%s6 + $0x14] sm:$0xf]
        %v952 = vld [vmem:[%s6 + $0x18] sm:$0xf]
        %v953 = vld [vmem:[%s6 + $0x1c] sm:$0xf]
        %v954 = vld [vmem:[%s6 + $0x20] sm:$0xf]
        %v955 = vld [vmem:[%s6 + $0x24] sm:$0xf]
        %v956 = vld [vmem:[%s6 + $0x28] sm:$0xf]
        %v957 = vld [vmem:[%s6 + $0x2c] sm:$0xf]
        %v958 = vld [vmem:[%s6 + $0x30] sm:$0xf]
        %v959 = vld [vmem:[%s6 + $0x34] sm:$0xf]
        %v960 = vld [vmem:[%s6 + $0x38] sm:$0xf]
        %v961 = vld [vmem:[%s6 + $0x3c] sm:$0xf]
        %v962 = vld [vmem:[%s7] sm:$0x1]
        %v964 = vlaneseq
        %v965 = vshrl.u32 %v964, 7
        %v966 = vsub.s32 0, %v965
        %v967 = vrot.slane %v962, %v966
        %v985 = vunpack.c.l.b16 %v914
        %v986 = vunpack.c.l.b16 %v915
        %v987 = vunpack.c.l.b16 %v916
        %v988 = vunpack.c.l.b16 %v917
        %v989 = vunpack.c.l.b16 %v918
        %v990 = vunpack.c.l.b16 %v919
        %v991 = vunpack.c.l.b16 %v920
        %v992 = vunpack.c.l.b16 %v921
        %v993 = vunpack.c.l.b16 %v922
        %v994 = vunpack.c.l.b16 %v923
        %v995 = vunpack.c.l.b16 %v924
        %v996 = vunpack.c.l.b16 %v925
        %v997 = vunpack.c.l.b16 %v926
        %v998 = vunpack.c.l.b16 %v927
        %v999 = vunpack.c.l.b16 %v928
        %v1000 = vunpack.c.l.b16 %v929
        %v1001 = vpack.c.b16 %v986, %v985
        %v1002 = vpack.c.b16 %v988, %v987
        %v1003 = vpack.c.b16 %v990, %v989
        %v1004 = vpack.c.b16 %v992, %v991
        %v1005 = vpack.c.b16 %v994, %v993
        %v1006 = vpack.c.b16 %v996, %v995
        %v1007 = vpack.c.b16 %v998, %v997
        %v1008 = vpack.c.b16 %v1000, %v999
        %v1033 = vunpack.c.l.b16 %v946
        %v1034 = vunpack.c.l.b16 %v947
        %v1035 = vunpack.c.l.b16 %v948
        %v1036 = vunpack.c.l.b16 %v949
        %v1037 = vunpack.c.l.b16 %v950
        %v1038 = vunpack.c.l.b16 %v951
        %v1039 = vunpack.c.l.b16 %v952
        %v1040 = vunpack.c.l.b16 %v953
        %v1041 = vunpack.c.l.b16 %v954
        %v1042 = vunpack.c.l.b16 %v955
        %v1043 = vunpack.c.l.b16 %v956
        %v1044 = vunpack.c.l.b16 %v957
        %v1045 = vunpack.c.l.b16 %v958
        %v1046 = vunpack.c.l.b16 %v959
        %v1047 = vunpack.c.l.b16 %v960
        %v1048 = vunpack.c.l.b16 %v961
        %v1049 = vpack.c.b16 %v1034, %v1033
        %v1050 = vpack.c.b16 %v1036, %v1035
        %v1051 = vpack.c.b16 %v1038, %v1037
        %v1052 = vpack.c.b16 %v1040, %v1039
        %v1053 = vpack.c.b16 %v1042, %v1041
        %v1054 = vpack.c.b16 %v1044, %v1043
        %v1055 = vpack.c.b16 %v1046, %v1045
        %v1056 = vpack.c.b16 %v1048, %v1047
        %1065 = vmatprep.subr.bf16.mxu0 0
        %1066 = vmatpush1.bf16.msra.mxu0 %v1049
        %1067 = vmatprep.subr.bf16.mxu0 0
        %1068 = vmatpush1.bf16.msra.mxu0 %v1050
        %1069 = vmatprep.subr.bf16.mxu0 0
        %1070 = vmatpush1.bf16.msra.mxu0 %v1051
        %1071 = vmatprep.subr.bf16.mxu0 0
        %1072 = vmatpush1.bf16.msra.mxu0 %v1052
        %1073 = vmatprep.subr.bf16.mxu0 0
        %1074 = vmatpush1.bf16.msra.mxu0 %v1053
        %1075 = vmatprep.subr.bf16.mxu0 0
        %1076 = vmatpush1.bf16.msra.mxu0 %v1054
        %1077 = vmatprep.subr.bf16.mxu0 0
        %1078 = vmatpush1.bf16.msra.mxu0 %v1055
        %1079 = vmatprep.subr.bf16.mxu0 0
        %1080 = vmatpush1.bf16.msra.mxu0 %v1056
        %1081 = vmatprep.subr.bf16.mxu0 0
        %1082 = vmatpush1.bf16.msra.mxu0 0
        %1083 = vmatprep.subr.bf16.mxu0 0
        %1084 = vmatpush1.bf16.msra.mxu0 0
        %1085 = vmatprep.subr.bf16.mxu0 0
        %1086 = vmatpush1.bf16.msra.mxu0 0
        %1087 = vmatprep.subr.bf16.mxu0 0
        %1088 = vmatpush1.bf16.msra.mxu0 0
        %1089 = vmatprep.subr.bf16.mxu0 0
        %1090 = vmatpush1.bf16.msra.mxu0 0
        %1091 = vmatprep.subr.bf16.mxu0 0
        %1092 = vmatpush1.bf16.msra.mxu0 0
        %1093 = vmatprep.subr.bf16.mxu0 0
        %1094 = vmatpush1.bf16.msra.mxu0 0
        %1095 = vmatprep.subr.bf16.mxu0 0
        %1096 = vmatpush1.bf16.msra.mxu0 0
        %1097 = vmatprep.mubr.bf16.mxu0 0
        %1098 = vmatmul.mubr.bf16.gmra.mrb[0].mxu0 %v1001
        %v1099 = vpop.f32.mrb[0].mxu0
        %v1100 = vadd.f32 %v967, %v1099
        %v1101 = vpop.f32.mrb[0].mxu0
        %v1102 = vpop.f32.mrb[0].mxu0
        %v1103 = vadd.f32 %v967, %v1102
        %v1104 = vpop.f32.mrb[0].mxu0
        %1105 = vmatprep.mubr.bf16.mxu0 0
        %1106 = vmatmul.mubr.bf16.gmra.mrb[0].mxu0 %v1002
        %v1107 = vpop.f32.mrb[0].mxu0
        %v1108 = vadd.f32 %v967, %v1107
        %v1109 = vpop.f32.mrb[0].mxu0
        %v1110 = vpop.f32.mrb[0].mxu0
        %v1111 = vadd.f32 %v967, %v1110
        %v1112 = vpop.f32.mrb[0].mxu0
        %1113 = vmatprep.mubr.bf16.mxu0 0
        %1114 = vmatmul.mubr.bf16.gmra.mrb[0].mxu0 %v1003
        %v1115 = vpop.f32.mrb[0].mxu0
        %v1116 = vadd.f32 %v967, %v1115
        %v1117 = vpop.f32.mrb[0].mxu0
        %v1118 = vpop.f32.mrb[0].mxu0
        %v1119 = vadd.f32 %v967, %v1118
        %v1120 = vpop.f32.mrb[0].mxu0
        %1121 = vmatprep.mubr.bf16.mxu0 0
        %1122 = vmatmul.mubr.bf16.gmra.mrb[0].mxu0 %v1004
        %v1123 = vpop.f32.mrb[0].mxu0
        %v1124 = vadd.f32 %v967, %v1123
        %v1125 = vpop.f32.mrb[0].mxu0
        %v1126 = vpop.f32.mrb[0].mxu0
        %v1127 = vadd.f32 %v967, %v1126
        %v1128 = vpop.f32.mrb[0].mxu0
        %1129 = vmatprep.mubr.bf16.mxu0 0
        %1130 = vmatmul.mubr.bf16.gmra.mrb[0].mxu0 %v1005
        %v1131 = vpop.f32.mrb[0].mxu0
        %v1132 = vadd.f32 %v967, %v1131
        %v1133 = vpop.f32.mrb[0].mxu0
        %v1134 = vpop.f32.mrb[0].mxu0
        %v1135 = vadd.f32 %v967, %v1134
        %v1136 = vpop.f32.mrb[0].mxu0
        %1137 = vmatprep.mubr.bf16.mxu0 0
        %1138 = vmatmul.mubr.bf16.gmra.mrb[0].mxu0 %v1006
        %v1139 = vpop.f32.mrb[0].mxu0
        %v1140 = vadd.f32 %v967, %v1139
        %v1141 = vpop.f32.mrb[0].mxu0
        %v1142 = vpop.f32.mrb[0].mxu0
        %v1143 = vadd.f32 %v967, %v1142
        %v1144 = vpop.f32.mrb[0].mxu0
        %1145 = vmatprep.mubr.bf16.mxu0 0
        %1146 = vmatmul.mubr.bf16.gmra.mrb[0].mxu0 %v1007
        %v1147 = vpop.f32.mrb[0].mxu0
        %v1148 = vadd.f32 %v967, %v1147
        %v1149 = vpop.f32.mrb[0].mxu0
        %v1150 = vpop.f32.mrb[0].mxu0
        %v1151 = vadd.f32 %v967, %v1150
        %v1152 = vpop.f32.mrb[0].mxu0
        %1153 = vmatprep.mubr.bf16.mxu0 0
        %1154 = vmatmul.mubr.bf16.gmra.mrb[0].mxu0 %v1008
        %v1155 = vpop.f32.mrb[0].mxu0
        %v1156 = vadd.f32 %v967, %v1155
        %v1157 = vpop.f32.mrb[0].mxu0
        %v1158 = vpop.f32.mrb[0].mxu0
        %v1159 = vadd.f32 %v967, %v1158
        %v1160 = vpop.f32.mrb[0].mxu0
        %1161 = vdwg.mxu0
        %v1162 = vpack.c.bf16 %v1103, %v1100
        %v1163 = vpack.c.bf16 %v1111, %v1108
        %v1164 = vpack.c.bf16 %v1119, %v1116
        %v1165 = vpack.c.bf16 %v1127, %v1124
        %v1166 = vpack.c.bf16 %v1135, %v1132
        %v1167 = vpack.c.bf16 %v1143, %v1140
        %v1168 = vpack.c.bf16 %v1151, %v1148
        %v1169 = vpack.c.bf16 %v1159, %v1156
        %v1170 = vld [vmem:[%s8] sm:$0xf]
        %v1171 = vld [vmem:[%s8 + $0x4] sm:$0xf]
        %v1172 = vld [vmem:[%s8 + $0x8] sm:$0xf]
        %v1173 = vld [vmem:[%s8 + $0xc] sm:$0xf]
        %v1174 = vld [vmem:[%s8 + $0x10] sm:$0xf]
        %v1175 = vld [vmem:[%s8 + $0x14] sm:$0xf]
        %v1176 = vld [vmem:[%s8 + $0x18] sm:$0xf]
        %v1177 = vld [vmem:[%s8 + $0x1c] sm:$0xf]
        %v1178 = vld [vmem:[%s8 + $0x20] sm:$0xf]
        %v1179 = vld [vmem:[%s8 + $0x24] sm:$0xf]
        %v1180 = vld [vmem:[%s8 + $0x28] sm:$0xf]
        %v1181 = vld [vmem:[%s8 + $0x2c] sm:$0xf]
        %v1182 = vld [vmem:[%s8 + $0x30] sm:$0xf]
        %v1183 = vld [vmem:[%s8 + $0x34] sm:$0xf]
        %v1184 = vld [vmem:[%s8 + $0x38] sm:$0xf]
        %v1185 = vld [vmem:[%s8 + $0x3c] sm:$0xf]
        %v1186 = vld [vmem:[%s9] sm:$0x1]
        %v1188 = vlaneseq
        %v1189 = vshrl.u32 %v1188, 7
        %v1190 = vsub.s32 0, %v1189
        %v1191 = vrot.slane %v1186, %v1190
        %v1209 = vunpack.c.l.b16 %v930
        %v1210 = vunpack.c.l.b16 %v931
        %v1211 = vunpack.c.l.b16 %v932
        %v1212 = vunpack.c.l.b16 %v933
        %v1213 = vunpack.c.l.b16 %v934
        %v1214 = vunpack.c.l.b16 %v935
        %v1215 = vunpack.c.l.b16 %v936
        %v1216 = vunpack.c.l.b16 %v937
        %v1217 = vunpack.c.l.b16 %v938
        %v1218 = vunpack.c.l.b16 %v939
        %v1219 = vunpack.c.l.b16 %v940
        %v1220 = vunpack.c.l.b16 %v941
        %v1221 = vunpack.c.l.b16 %v942
        %v1222 = vunpack.c.l.b16 %v943
        %v1223 = vunpack.c.l.b16 %v944
        %v1224 = vunpack.c.l.b16 %v945
        %v1225 = vpack.c.b16 %v1210, %v1209
        %v1226 = vpack.c.b16 %v1212, %v1211
        %v1227 = vpack.c.b16 %v1214, %v1213
        %v1228 = vpack.c.b16 %v1216, %v1215
        %v1229 = vpack.c.b16 %v1218, %v1217
        %v1230 = vpack.c.b16 %v1220, %v1219
        %v1231 = vpack.c.b16 %v1222, %v1221
        %v1232 = vpack.c.b16 %v1224, %v1223
        %v1257 = vunpack.c.l.b16 %v1170
        %v1258 = vunpack.c.l.b16 %v1171
        %v1259 = vunpack.c.l.b16 %v1172
        %v1260 = vunpack.c.l.b16 %v1173
        %v1261 = vunpack.c.l.b16 %v1174
        %v1262 = vunpack.c.l.b16 %v1175
        %v1263 = vunpack.c.l.b16 %v1176
        %v1264 = vunpack.c.l.b16 %v1177
        %v1265 = vunpack.c.l.b16 %v1178
        %v1266 = vunpack.c.l.b16 %v1179
        %v1267 = vunpack.c.l.b16 %v1180
        %v1268 = vunpack.c.l.b16 %v1181
        %v1269 = vunpack.c.l.b16 %v1182
        %v1270 = vunpack.c.l.b16 %v1183
        %v1271 = vunpack.c.l.b16 %v1184
        %v1272 = vunpack.c.l.b16 %v1185
        %v1273 = vpack.c.b16 %v1258, %v1257
        %v1274 = vpack.c.b16 %v1260, %v1259
        %v1275 = vpack.c.b16 %v1262, %v1261
        %v1276 = vpack.c.b16 %v1264, %v1263
        %v1277 = vpack.c.b16 %v1266, %v1265
        %v1278 = vpack.c.b16 %v1268, %v1267
        %v1279 = vpack.c.b16 %v1270, %v1269
        %v1280 = vpack.c.b16 %v1272, %v1271
        %1289 = vmatprep.subr.bf16.mxu0 0
        %1290 = vmatpush1.bf16.msra.mxu0 %v1273
        %1291 = vmatprep.subr.bf16.mxu0 0
        %1292 = vmatpush1.bf16.msra.mxu0 %v1274
        %1293 = vmatprep.subr.bf16.mxu0 0
        %1294 = vmatpush1.bf16.msra.mxu0 %v1275
        %1295 = vmatprep.subr.bf16.mxu0 0
        %1296 = vmatpush1.bf16.msra.mxu0 %v1276
        %1297 = vmatprep.subr.bf16.mxu0 0
        %1298 = vmatpush1.bf16.msra.mxu0 %v1277
        %1299 = vmatprep.subr.bf16.mxu0 0
        %1300 = vmatpush1.bf16.msra.mxu0 %v1278
        %1301 = vmatprep.subr.bf16.mxu0 0
        %1302 = vmatpush1.bf16.msra.mxu0 %v1279
        %1303 = vmatprep.subr.bf16.mxu0 0
        %1304 = vmatpush1.bf16.msra.mxu0 %v1280
        %1305 = vmatprep.subr.bf16.mxu0 0
        %1306 = vmatpush1.bf16.msra.mxu0 0
        %1307 = vmatprep.subr.bf16.mxu0 0
        %1308 = vmatpush1.bf16.msra.mxu0 0
        %1309 = vmatprep.subr.bf16.mxu0 0
        %1310 = vmatpush1.bf16.msra.mxu0 0
        %1311 = vmatprep.subr.bf16.mxu0 0
        %1312 = vmatpush1.bf16.msra.mxu0 0
        %1313 = vmatprep.subr.bf16.mxu0 0
        %1314 = vmatpush1.bf16.msra.mxu0 0
        %1315 = vmatprep.subr.bf16.mxu0 0
        %1316 = vmatpush1.bf16.msra.mxu0 0
        %1317 = vmatprep.subr.bf16.mxu0 0
        %1318 = vmatpush1.bf16.msra.mxu0 0
        %1319 = vmatprep.subr.bf16.mxu0 0
        %1320 = vmatpush1.bf16.msra.mxu0 0
        %1321 = vmatprep.mubr.bf16.mxu0 0
        %1322 = vmatmul.mubr.bf16.gmra.mrb[0].mxu0 %v1225
        %v1323 = vpop.f32.mrb[0].mxu0
        %v1324 = vadd.f32 %v1191, %v1323
        %v1325 = vpop.f32.mrb[0].mxu0
        %v1326 = vpop.f32.mrb[0].mxu0
        %v1327 = vadd.f32 %v1191, %v1326
        %v1328 = vpop.f32.mrb[0].mxu0
        %1329 = vmatprep.mubr.bf16.mxu0 0
        %1330 = vmatmul.mubr.bf16.gmra.mrb[0].mxu0 %v1226
        %v1331 = vpop.f32.mrb[0].mxu0
        %v1332 = vadd.f32 %v1191, %v1331
        %v1333 = vpop.f32.mrb[0].mxu0
        %v1334 = vpop.f32.mrb[0].mxu0
        %v1335 = vadd.f32 %v1191, %v1334
        %v1336 = vpop.f32.mrb[0].mxu0
        %1337 = vmatprep.mubr.bf16.mxu0 0
        %1338 = vmatmul.mubr.bf16.gmra.mrb[0].mxu0 %v1227
        %v1339 = vpop.f32.mrb[0].mxu0
        %v1340 = vadd.f32 %v1191, %v1339
        %v1341 = vpop.f32.mrb[0].mxu0
        %v1342 = vpop.f32.mrb[0].mxu0
        %v1343 = vadd.f32 %v1191, %v1342
        %v1344 = vpop.f32.mrb[0].mxu0
        %1345 = vmatprep.mubr.bf16.mxu0 0
        %1346 = vmatmul.mubr.bf16.gmra.mrb[0].mxu0 %v1228
        %v1347 = vpop.f32.mrb[0].mxu0
        %v1348 = vadd.f32 %v1191, %v1347
        %v1349 = vpop.f32.mrb[0].mxu0
        %v1350 = vpop.f32.mrb[0].mxu0
        %v1351 = vadd.f32 %v1191, %v1350
        %v1352 = vpop.f32.mrb[0].mxu0
        %1353 = vmatprep.mubr.bf16.mxu0 0
        %1354 = vmatmul.mubr.bf16.gmra.mrb[0].mxu0 %v1229
        %v1355 = vpop.f32.mrb[0].mxu0
        %v1356 = vadd.f32 %v1191, %v1355
        %v1357 = vpop.f32.mrb[0].mxu0
        %v1358 = vpop.f32.mrb[0].mxu0
        %v1359 = vadd.f32 %v1191, %v1358
        %v1360 = vpop.f32.mrb[0].mxu0
        %1361 = vmatprep.mubr.bf16.mxu0 0
        %1362 = vmatmul.mubr.bf16.gmra.mrb[0].mxu0 %v1230
        %v1363 = vpop.f32.mrb[0].mxu0
        %v1364 = vadd.f32 %v1191, %v1363
        %v1365 = vpop.f32.mrb[0].mxu0
        %v1366 = vpop.f32.mrb[0].mxu0
        %v1367 = vadd.f32 %v1191, %v1366
        %v1368 = vpop.f32.mrb[0].mxu0
        %1369 = vmatprep.mubr.bf16.mxu0 0
        %1370 = vmatmul.mubr.bf16.gmra.mrb[0].mxu0 %v1231
        %v1371 = vpop.f32.mrb[0].mxu0
        %v1372 = vadd.f32 %v1191, %v1371
        %v1373 = vpop.f32.mrb[0].mxu0
        %v1374 = vpop.f32.mrb[0].mxu0
        %v1375 = vadd.f32 %v1191, %v1374
        %v1376 = vpop.f32.mrb[0].mxu0
        %1377 = vmatprep.mubr.bf16.mxu0 0
        %1378 = vmatmul.mubr.bf16.gmra.mrb[0].mxu0 %v1232
        %v1379 = vpop.f32.mrb[0].mxu0
        %v1380 = vadd.f32 %v1191, %v1379
        %v1381 = vpop.f32.mrb[0].mxu0
        %v1382 = vpop.f32.mrb[0].mxu0
        %v1383 = vadd.f32 %v1191, %v1382
        %v1384 = vpop.f32.mrb[0].mxu0
        %1385 = vdwg.mxu0
        %v1386 = vpack.c.bf16 %v1327, %v1324
        %v1387 = vpack.c.bf16 %v1335, %v1332
        %v1388 = vpack.c.bf16 %v1343, %v1340
        %v1389 = vpack.c.bf16 %v1351, %v1348
        %v1390 = vpack.c.bf16 %v1359, %v1356
        %v1391 = vpack.c.bf16 %v1367, %v1364
        %v1392 = vpack.c.bf16 %v1375, %v1372
        %v1393 = vpack.c.bf16 %v1383, %v1380
        %v1394 = vld [vmem:[%s534] sm:$0xf]
        %v1395 = vld [vmem:[%s534 + $0x4] sm:$0xf]
        %v1396 = vld [vmem:[%s534 + $0x8] sm:$0xf]
        %v1397 = vld [vmem:[%s534 + $0xc] sm:$0xf]
        %v1398 = vld [vmem:[%s534 + $0x10] sm:$0xf]
        %v1399 = vld [vmem:[%s534 + $0x14] sm:$0xf]
        %v1400 = vld [vmem:[%s534 + $0x18] sm:$0xf]
        %v1401 = vld [vmem:[%s534 + $0x1c] sm:$0xf]
        %v1402 = vld [vmem:[%s534 + $0x20] sm:$0xf]
        %v1403 = vld [vmem:[%s534 + $0x24] sm:$0xf]
        %v1404 = vld [vmem:[%s534 + $0x28] sm:$0xf]
        %v1405 = vld [vmem:[%s534 + $0x2c] sm:$0xf]
        %v1406 = vld [vmem:[%s534 + $0x30] sm:$0xf]
        %v1407 = vld [vmem:[%s534 + $0x34] sm:$0xf]
        %v1408 = vld [vmem:[%s534 + $0x38] sm:$0xf]
        %v1409 = vld [vmem:[%s534 + $0x3c] sm:$0xf]
        %v1410 = vunpack.c.l.bf16 %v1394
        %v1411 = vunpack.c.l.bf16 %v1395
        %v1412 = vunpack.c.l.bf16 %v1396
        %v1413 = vunpack.c.l.bf16 %v1397
        %v1414 = vunpack.c.l.bf16 %v1398
        %v1415 = vunpack.c.l.bf16 %v1399
        %v1416 = vunpack.c.l.bf16 %v1400
        %v1417 = vunpack.c.l.bf16 %v1401
        %v1418 = vunpack.c.l.bf16 %v1402
        %v1419 = vunpack.c.l.bf16 %v1403
        %v1420 = vunpack.c.l.bf16 %v1404
        %v1421 = vunpack.c.l.bf16 %v1405
        %v1422 = vunpack.c.l.bf16 %v1406
        %v1423 = vunpack.c.l.bf16 %v1407
        %v1424 = vunpack.c.l.bf16 %v1408
        %v1425 = vunpack.c.l.bf16 %v1409
        %v1426 = vld [vmem:[#allocation2] sm:$0xff]
        %v1427 = vld [vmem:[#allocation2 + $0x8] sm:$0xff]
        %v1428 = vld [vmem:[#allocation2 + $0x10] sm:$0xff]
        %v1429 = vld [vmem:[#allocation2 + $0x18] sm:$0xff]
        %v1430 = vld [vmem:[#allocation2 + $0x20] sm:$0xff]
        %v1431 = vld [vmem:[#allocation2 + $0x28] sm:$0xff]
        %v1432 = vld [vmem:[#allocation2 + $0x30] sm:$0xff]
        %v1433 = vld [vmem:[#allocation2 + $0x38] sm:$0xff]
        %vm1434 = vcmask 64512
        %v1436 = vsel %vm1434, %v1426, 0
        %v1439 = vsel %vm1434, %v1427, 0
        %v1442 = vsel %vm1434, %v1428, 0
        %v1445 = vsel %vm1434, %v1429, 0
        %v1448 = vsel %vm1434, %v1430, 0
        %v1451 = vsel %vm1434, %v1431, 0
        %v1454 = vsel %vm1434, %v1432, 0
        %v1457 = vsel %vm1434, %v1433, 0
        %v1460 = vsel %vm1434, %v1162, 0
        %v1463 = vsel %vm1434, %v1163, 0
        %v1466 = vsel %vm1434, %v1164, 0
        %v1469 = vsel %vm1434, %v1165, 0
        %v1472 = vsel %vm1434, %v1166, 0
        %v1475 = vsel %vm1434, %v1167, 0
        %v1478 = vsel %vm1434, %v1168, 0
        %v1481 = vsel %vm1434, %v1169, 0
        %1483 = vmatprep.subr.bf16.mxu0 0
        %1484 = vmatpush1.bf16.xpose.msra.mxu0 %v1460
        %1485 = vmatprep.subr.bf16.mxu0 0
        %1486 = vmatpush1.bf16.xpose.msra.mxu0 %v1463
        %1487 = vmatprep.subr.bf16.mxu0 0
        %1488 = vmatpush1.bf16.xpose.msra.mxu0 %v1466
        %1489 = vmatprep.subr.bf16.mxu0 0
        %1490 = vmatpush1.bf16.xpose.msra.mxu0 %v1469
        %1491 = vmatprep.subr.bf16.mxu0 0
        %1492 = vmatpush1.bf16.xpose.msra.mxu0 %v1472
        %1493 = vmatprep.subr.bf16.mxu0 0
        %1494 = vmatpush1.bf16.xpose.msra.mxu0 %v1475
        %1495 = vmatprep.subr.bf16.mxu0 0
        %1496 = vmatpush1.bf16.xpose.msra.mxu0 %v1478
        %1497 = vmatprep.subr.bf16.mxu0 0
        %1498 = vmatpush1.bf16.xpose.msra.mxu0 %v1481
        %1499 = vmatprep.subr.bf16.mxu0 0
        %1500 = vmatpush1.bf16.xpose.msra.mxu0 0
        %1501 = vmatprep.subr.bf16.mxu0 0
        %1502 = vmatpush1.bf16.xpose.msra.mxu0 0
        %1503 = vmatprep.subr.bf16.mxu0 0
        %1504 = vmatpush1.bf16.xpose.msra.mxu0 0
        %1505 = vmatprep.subr.bf16.mxu0 0
        %1506 = vmatpush1.bf16.xpose.msra.mxu0 0
        %1507 = vmatprep.subr.bf16.mxu0 0
        %1508 = vmatpush1.bf16.xpose.msra.mxu0 0
        %1509 = vmatprep.subr.bf16.mxu0 0
        %1510 = vmatpush1.bf16.xpose.msra.mxu0 0
        %1511 = vmatprep.subr.bf16.mxu0 0
        %1512 = vmatpush1.bf16.xpose.msra.mxu0 0
        %1513 = vmatprep.subr.bf16.mxu0 0
        %1514 = vmatpush1.bf16.xpose.msra.mxu0 0
        %1515 = vmatprep.mubr.bf16.mxu0 0
        %1516 = vmatmul.mubr.bf16.gmra.mrb[0].mxu0 %v1436
        %v1517 = vpop.f32.mrb[0].mxu0
        %v1518 = vadd.f32 %v1410, %v1517
        %v1519 = vpop.f32.mrb[0].mxu0
        %v1520 = vpop.f32.mrb[0].mxu0
        %v1521 = vadd.f32 %v1411, %v1520
        %v1522 = vpop.f32.mrb[0].mxu0
        %1523 = vmatprep.mubr.bf16.mxu0 0
        %1524 = vmatmul.mubr.bf16.gmra.mrb[0].mxu0 %v1439
        %v1525 = vpop.f32.mrb[0].mxu0
        %v1526 = vadd.f32 %v1412, %v1525
        %v1527 = vpop.f32.mrb[0].mxu0
        %v1528 = vpop.f32.mrb[0].mxu0
        %v1529 = vadd.f32 %v1413, %v1528
        %v1530 = vpop.f32.mrb[0].mxu0
        %1531 = vmatprep.mubr.bf16.mxu0 0
        %1532 = vmatmul.mubr.bf16.gmra.mrb[0].mxu0 %v1442
        %v1533 = vpop.f32.mrb[0].mxu0
        %v1534 = vadd.f32 %v1414, %v1533
        %v1535 = vpop.f32.mrb[0].mxu0
        %v1536 = vpop.f32.mrb[0].mxu0
        %v1537 = vadd.f32 %v1415, %v1536
        %v1538 = vpop.f32.mrb[0].mxu0
        %1539 = vmatprep.mubr.bf16.mxu0 0
        %1540 = vmatmul.mubr.bf16.gmra.mrb[0].mxu0 %v1445
        %v1541 = vpop.f32.mrb[0].mxu0
        %v1542 = vadd.f32 %v1416, %v1541
        %v1543 = vpop.f32.mrb[0].mxu0
        %v1544 = vpop.f32.mrb[0].mxu0
        %v1545 = vadd.f32 %v1417, %v1544
        %v1546 = vpop.f32.mrb[0].mxu0
        %1547 = vmatprep.mubr.bf16.mxu0 0
        %1548 = vmatmul.mubr.bf16.gmra.mrb[0].mxu0 %v1448
        %v1549 = vpop.f32.mrb[0].mxu0
        %v1550 = vadd.f32 %v1418, %v1549
        %v1551 = vpop.f32.mrb[0].mxu0
        %v1552 = vpop.f32.mrb[0].mxu0
        %v1553 = vadd.f32 %v1419, %v1552
        %v1554 = vpop.f32.mrb[0].mxu0
        %1555 = vmatprep.mubr.bf16.mxu0 0
        %1556 = vmatmul.mubr.bf16.gmra.mrb[0].mxu0 %v1451
        %v1557 = vpop.f32.mrb[0].mxu0
        %v1558 = vadd.f32 %v1420, %v1557
        %v1559 = vpop.f32.mrb[0].mxu0
        %v1560 = vpop.f32.mrb[0].mxu0
        %v1561 = vadd.f32 %v1421, %v1560
        %v1562 = vpop.f32.mrb[0].mxu0
        %1563 = vmatprep.mubr.bf16.mxu0 0
        %1564 = vmatmul.mubr.bf16.gmra.mrb[0].mxu0 %v1454
        %v1565 = vpop.f32.mrb[0].mxu0
        %v1566 = vadd.f32 %v1422, %v1565
        %v1567 = vpop.f32.mrb[0].mxu0
        %v1568 = vpop.f32.mrb[0].mxu0
        %v1569 = vadd.f32 %v1423, %v1568
        %v1570 = vpop.f32.mrb[0].mxu0
        %1571 = vmatprep.mubr.bf16.mxu0 0
        %1572 = vmatmul.mubr.bf16.gmra.mrb[0].mxu0 %v1457
        %v1573 = vpop.f32.mrb[0].mxu0
        %v1574 = vadd.f32 %v1424, %v1573
        %v1575 = vpop.f32.mrb[0].mxu0
        %v1576 = vpop.f32.mrb[0].mxu0
        %v1577 = vadd.f32 %v1425, %v1576
        %v1578 = vpop.f32.mrb[0].mxu0
        %1579 = vdwg.mxu0
        %v1580 = vld [vmem:[#allocation3] sm:$0xff]
        %v1581 = vld [vmem:[#allocation3 + $0x8] sm:$0xff]
        %v1582 = vld [vmem:[#allocation3 + $0x10] sm:$0xff]
        %v1583 = vld [vmem:[#allocation3 + $0x18] sm:$0xff]
        %v1584 = vld [vmem:[#allocation3 + $0x20] sm:$0xff]
        %v1585 = vld [vmem:[#allocation3 + $0x28] sm:$0xff]
        %v1586 = vld [vmem:[#allocation3 + $0x30] sm:$0xff]
        %v1587 = vld [vmem:[#allocation3 + $0x38] sm:$0xff]
        %v1588 = vld [vmem:[#allocation3 + $0x40] sm:$0xff]
        %v1589 = vld [vmem:[#allocation3 + $0x48] sm:$0xff]
        %v1590 = vld [vmem:[#allocation3 + $0x50] sm:$0xff]
        %v1591 = vld [vmem:[#allocation3 + $0x58] sm:$0xff]
        %v1592 = vld [vmem:[#allocation3 + $0x60] sm:$0xff]
        %v1593 = vld [vmem:[#allocation3 + $0x68] sm:$0xff]
        %v1594 = vld [vmem:[#allocation3 + $0x70] sm:$0xff]
        %v1595 = vld [vmem:[#allocation3 + $0x78] sm:$0xff]
        %1596 = vmax.xlane.f32.xlu0 %v1518
        %v1597 = vpop.xlane.xlu0 %1596
        %1598 = vmax.xlane.f32.xlu0 %v1521
        %v1599 = vpop.xlane.xlu0 %1598
        %1600 = vmax.xlane.f32.xlu0 %v1526
        %v1601 = vpop.xlane.xlu0 %1600
        %1602 = vmax.xlane.f32.xlu0 %v1529
        %v1603 = vpop.xlane.xlu0 %1602
        %1604 = vmax.xlane.f32.xlu0 %v1534
        %v1605 = vpop.xlane.xlu0 %1604
        %1606 = vmax.xlane.f32.xlu0 %v1537
        %v1607 = vpop.xlane.xlu0 %1606
        %1608 = vmax.xlane.f32.xlu0 %v1542
        %v1609 = vpop.xlane.xlu0 %1608
        %1610 = vmax.xlane.f32.xlu0 %v1545
        %v1611 = vpop.xlane.xlu0 %1610
        %1612 = vmax.xlane.f32.xlu0 %v1550
        %v1613 = vpop.xlane.xlu0 %1612
        %1614 = vmax.xlane.f32.xlu0 %v1553
        %v1615 = vpop.xlane.xlu0 %1614
        %1616 = vmax.xlane.f32.xlu0 %v1558
        %v1617 = vpop.xlane.xlu0 %1616
        %1618 = vmax.xlane.f32.xlu0 %v1561
        %v1619 = vpop.xlane.xlu0 %1618
        %1620 = vmax.xlane.f32.xlu0 %v1566
        %v1621 = vpop.xlane.xlu0 %1620
        %1622 = vmax.xlane.f32.xlu0 %v1569
        %v1623 = vpop.xlane.xlu0 %1622
        %1624 = vmax.xlane.f32.xlu0 %v1574
        %v1625 = vpop.xlane.xlu0 %1624
        %1626 = vmax.xlane.f32.xlu0 %v1577
        %v1627 = vpop.xlane.xlu0 %1626
        %v1628 = vmax.f32 %v1580, %v1597
        %v1629 = vmax.f32 %v1581, %v1599
        %v1630 = vmax.f32 %v1582, %v1601
        %v1631 = vmax.f32 %v1583, %v1603
        %v1632 = vmax.f32 %v1584, %v1605
        %v1633 = vmax.f32 %v1585, %v1607
        %v1634 = vmax.f32 %v1586, %v1609
        %v1635 = vmax.f32 %v1587, %v1611
        %v1636 = vmax.f32 %v1588, %v1613
        %v1637 = vmax.f32 %v1589, %v1615
        %v1638 = vmax.f32 %v1590, %v1617
        %v1639 = vmax.f32 %v1591, %v1619
        %v1640 = vmax.f32 %v1592, %v1621
        %v1641 = vmax.f32 %v1593, %v1623
        %v1642 = vmax.f32 %v1594, %v1625
        %v1643 = vmax.f32 %v1595, %v1627
        %v1644 = vsub.f32 %v1580, %v1628
        %v1645 = vsub.f32 %v1581, %v1629
        %v1646 = vsub.f32 %v1582, %v1630
        %v1647 = vsub.f32 %v1583, %v1631
        %v1648 = vsub.f32 %v1584, %v1632
        %v1649 = vsub.f32 %v1585, %v1633
        %v1650 = vsub.f32 %v1586, %v1634
        %v1651 = vsub.f32 %v1587, %v1635
        %v1652 = vsub.f32 %v1588, %v1636
        %v1653 = vsub.f32 %v1589, %v1637
        %v1654 = vsub.f32 %v1590, %v1638
        %v1655 = vsub.f32 %v1591, %v1639
        %v1656 = vsub.f32 %v1592, %v1640
        %v1657 = vsub.f32 %v1593, %v1641
        %v1658 = vsub.f32 %v1594, %v1642
        %v1659 = vsub.f32 %v1595, %v1643
        %v1660 = vmul.f32 %v1644, 1.442695
        %v1661 = vpow.pop %v1660
        %v1662 = vmul.f32 %v1645, 1.442695
        %v1663 = vpow.pop %v1662
        %v1664 = vmul.f32 %v1646, 1.442695
        %v1665 = vpow.pop %v1664
        %v1666 = vmul.f32 %v1647, 1.442695
        %v1667 = vpow.pop %v1666
        %v1668 = vmul.f32 %v1648, 1.442695
        %v1669 = vpow.pop %v1668
        %v1670 = vmul.f32 %v1649, 1.442695
        %v1671 = vpow.pop %v1670
        %v1672 = vmul.f32 %v1650, 1.442695
        %v1673 = vpow.pop %v1672
        %v1674 = vmul.f32 %v1651, 1.442695
        %v1675 = vpow.pop %v1674
        %v1676 = vmul.f32 %v1652, 1.442695
        %v1677 = vpow.pop %v1676
        %v1678 = vmul.f32 %v1653, 1.442695
        %v1679 = vpow.pop %v1678
        %v1680 = vmul.f32 %v1654, 1.442695
        %v1681 = vpow.pop %v1680
        %v1682 = vmul.f32 %v1655, 1.442695
        %v1683 = vpow.pop %v1682
        %v1684 = vmul.f32 %v1656, 1.442695
        %v1685 = vpow.pop %v1684
        %v1686 = vmul.f32 %v1657, 1.442695
        %v1687 = vpow.pop %v1686
        %v1688 = vmul.f32 %v1658, 1.442695
        %v1689 = vpow.pop %v1688
        %v1690 = vmul.f32 %v1659, 1.442695
        %v1691 = vpow.pop %v1690
        %1693 = vset.pattern.permute.xlu0 0
        %1694 = vperm.xlu0 %1693, %v1628
        %v1695 = vpop.permute.xlu0 %1694
        %1698 = vset.pattern.permute.xlu0 0
        %1699 = vperm.xlu0 %1698, %v1629
        %v1700 = vpop.permute.xlu0 %1699
        %1703 = vset.pattern.permute.xlu0 0
        %1704 = vperm.xlu0 %1703, %v1630
        %v1705 = vpop.permute.xlu0 %1704
        %1708 = vset.pattern.permute.xlu0 0
        %1709 = vperm.xlu0 %1708, %v1631
        %v1710 = vpop.permute.xlu0 %1709
        %1713 = vset.pattern.permute.xlu0 0
        %1714 = vperm.xlu0 %1713, %v1632
        %v1715 = vpop.permute.xlu0 %1714
        %1718 = vset.pattern.permute.xlu0 0
        %1719 = vperm.xlu0 %1718, %v1633
        %v1720 = vpop.permute.xlu0 %1719
        %1723 = vset.pattern.permute.xlu0 0
        %1724 = vperm.xlu0 %1723, %v1634
        %v1725 = vpop.permute.xlu0 %1724
        %1728 = vset.pattern.permute.xlu0 0
        %1729 = vperm.xlu0 %1728, %v1635
        %v1730 = vpop.permute.xlu0 %1729
        %1733 = vset.pattern.permute.xlu0 0
        %1734 = vperm.xlu0 %1733, %v1636
        %v1735 = vpop.permute.xlu0 %1734
        %1738 = vset.pattern.permute.xlu0 0
        %1739 = vperm.xlu0 %1738, %v1637
        %v1740 = vpop.permute.xlu0 %1739
        %1743 = vset.pattern.permute.xlu0 0
        %1744 = vperm.xlu0 %1743, %v1638
        %v1745 = vpop.permute.xlu0 %1744
        %1748 = vset.pattern.permute.xlu0 0
        %1749 = vperm.xlu0 %1748, %v1639
        %v1750 = vpop.permute.xlu0 %1749
        %1753 = vset.pattern.permute.xlu0 0
        %1754 = vperm.xlu0 %1753, %v1640
        %v1755 = vpop.permute.xlu0 %1754
        %1758 = vset.pattern.permute.xlu0 0
        %1759 = vperm.xlu0 %1758, %v1641
        %v1760 = vpop.permute.xlu0 %1759
        %1763 = vset.pattern.permute.xlu0 0
        %1764 = vperm.xlu0 %1763, %v1642
        %v1765 = vpop.permute.xlu0 %1764
        %1768 = vset.pattern.permute.xlu0 0
        %1769 = vperm.xlu0 %1768, %v1643
        %v1770 = vpop.permute.xlu0 %1769
        %v1772 = vsub.f32 %v1518, %v1695
        %v1773 = vsub.f32 %v1521, %v1700
        %v1774 = vsub.f32 %v1526, %v1705
        %v1775 = vsub.f32 %v1529, %v1710
        %v1776 = vsub.f32 %v1534, %v1715
        %v1777 = vsub.f32 %v1537, %v1720
        %v1778 = vsub.f32 %v1542, %v1725
        %v1779 = vsub.f32 %v1545, %v1730
        %v1780 = vsub.f32 %v1550, %v1735
        %v1781 = vsub.f32 %v1553, %v1740
        %v1782 = vsub.f32 %v1558, %v1745
        %v1783 = vsub.f32 %v1561, %v1750
        %v1784 = vsub.f32 %v1566, %v1755
        %v1785 = vsub.f32 %v1569, %v1760
        %v1786 = vsub.f32 %v1574, %v1765
        %v1787 = vsub.f32 %v1577, %v1770
        %v1788 = vmul.f32 %v1772, 1.442695
        %v1789 = vpow.pop %v1788
        %v1790 = vmul.f32 %v1773, 1.442695
        %v1791 = vpow.pop %v1790
        %v1792 = vmul.f32 %v1774, 1.442695
        %v1793 = vpow.pop %v1792
        %v1794 = vmul.f32 %v1775, 1.442695
        %v1795 = vpow.pop %v1794
        %v1796 = vmul.f32 %v1776, 1.442695
        %v1797 = vpow.pop %v1796
        %v1798 = vmul.f32 %v1777, 1.442695
        %v1799 = vpow.pop %v1798
        %v1800 = vmul.f32 %v1778, 1.442695
        %v1801 = vpow.pop %v1800
        %v1802 = vmul.f32 %v1779, 1.442695
        %v1803 = vpow.pop %v1802
        %v1804 = vmul.f32 %v1780, 1.442695
        %v1805 = vpow.pop %v1804
        %v1806 = vmul.f32 %v1781, 1.442695
        %v1807 = vpow.pop %v1806
        %v1808 = vmul.f32 %v1782, 1.442695
        %v1809 = vpow.pop %v1808
        %v1810 = vmul.f32 %v1783, 1.442695
        %v1811 = vpow.pop %v1810
        %v1812 = vmul.f32 %v1784, 1.442695
        %v1813 = vpow.pop %v1812
        %v1814 = vmul.f32 %v1785, 1.442695
        %v1815 = vpow.pop %v1814
        %v1816 = vmul.f32 %v1786, 1.442695
        %v1817 = vpow.pop %v1816
        %v1818 = vmul.f32 %v1787, 1.442695
        %v1819 = vpow.pop %v1818
        %v1820 = vld [vmem:[#allocation4] sm:$0xff]
        %v1821 = vld [vmem:[#allocation4 + $0x8] sm:$0xff]
        %v1822 = vld [vmem:[#allocation4 + $0x10] sm:$0xff]
        %v1823 = vld [vmem:[#allocation4 + $0x18] sm:$0xff]
        %v1824 = vld [vmem:[#allocation4 + $0x20] sm:$0xff]
        %v1825 = vld [vmem:[#allocation4 + $0x28] sm:$0xff]
        %v1826 = vld [vmem:[#allocation4 + $0x30] sm:$0xff]
        %v1827 = vld [vmem:[#allocation4 + $0x38] sm:$0xff]
        %v1828 = vld [vmem:[#allocation4 + $0x40] sm:$0xff]
        %v1829 = vld [vmem:[#allocation4 + $0x48] sm:$0xff]
        %v1830 = vld [vmem:[#allocation4 + $0x50] sm:$0xff]
        %v1831 = vld [vmem:[#allocation4 + $0x58] sm:$0xff]
        %v1832 = vld [vmem:[#allocation4 + $0x60] sm:$0xff]
        %v1833 = vld [vmem:[#allocation4 + $0x68] sm:$0xff]
        %v1834 = vld [vmem:[#allocation4 + $0x70] sm:$0xff]
        %v1835 = vld [vmem:[#allocation4 + $0x78] sm:$0xff]
        %v1836 = vmul.f32 %v1661, %v1820
        %v1837 = vmul.f32 %v1663, %v1821
        %v1838 = vmul.f32 %v1665, %v1822
        %v1839 = vmul.f32 %v1667, %v1823
        %v1840 = vmul.f32 %v1669, %v1824
        %v1841 = vmul.f32 %v1671, %v1825
        %v1842 = vmul.f32 %v1673, %v1826
        %v1843 = vmul.f32 %v1675, %v1827
        %v1844 = vmul.f32 %v1677, %v1828
        %v1845 = vmul.f32 %v1679, %v1829
        %v1846 = vmul.f32 %v1681, %v1830
        %v1847 = vmul.f32 %v1683, %v1831
        %v1848 = vmul.f32 %v1685, %v1832
        %v1849 = vmul.f32 %v1687, %v1833
        %v1850 = vmul.f32 %v1689, %v1834
        %v1851 = vmul.f32 %v1691, %v1835
        %1852 = vadd.xlane.f32.xlu0 %v1789
        %v1853 = vpop.xlane.xlu0 %1852
        %1854 = vadd.xlane.f32.xlu0 %v1791
        %v1855 = vpop.xlane.xlu0 %1854
        %1856 = vadd.xlane.f32.xlu0 %v1793
        %v1857 = vpop.xlane.xlu0 %1856
        %1858 = vadd.xlane.f32.xlu0 %v1795
        %v1859 = vpop.xlane.xlu0 %1858
        %1860 = vadd.xlane.f32.xlu0 %v1797
        %v1861 = vpop.xlane.xlu0 %1860
        %1862 = vadd.xlane.f32.xlu0 %v1799
        %v1863 = vpop.xlane.xlu0 %1862
        %1864 = vadd.xlane.f32.xlu0 %v1801
        %v1865 = vpop.xlane.xlu0 %1864
        %1866 = vadd.xlane.f32.xlu0 %v1803
        %v1867 = vpop.xlane.xlu0 %1866
        %1868 = vadd.xlane.f32.xlu0 %v1805
        %v1869 = vpop.xlane.xlu0 %1868
        %1870 = vadd.xlane.f32.xlu0 %v1807
        %v1871 = vpop.xlane.xlu0 %1870
        %1872 = vadd.xlane.f32.xlu0 %v1809
        %v1873 = vpop.xlane.xlu0 %1872
        %1874 = vadd.xlane.f32.xlu0 %v1811
        %v1875 = vpop.xlane.xlu0 %1874
        %1876 = vadd.xlane.f32.xlu0 %v1813
        %v1877 = vpop.xlane.xlu0 %1876
        %1878 = vadd.xlane.f32.xlu0 %v1815
        %v1879 = vpop.xlane.xlu0 %1878
        %1880 = vadd.xlane.f32.xlu0 %v1817
        %v1881 = vpop.xlane.xlu0 %1880
        %1882 = vadd.xlane.f32.xlu0 %v1819
        %v1883 = vpop.xlane.xlu0 %1882
        %v1884 = vadd.f32 %v1836, %v1853
        %v1885 = vadd.f32 %v1837, %v1855
        %v1886 = vadd.f32 %v1838, %v1857
        %v1887 = vadd.f32 %v1839, %v1859
        %v1888 = vadd.f32 %v1840, %v1861
        %v1889 = vadd.f32 %v1841, %v1863
        %v1890 = vadd.f32 %v1842, %v1865
        %v1891 = vadd.f32 %v1843, %v1867
        %v1892 = vadd.f32 %v1844, %v1869
        %v1893 = vadd.f32 %v1845, %v1871
        %v1894 = vadd.f32 %v1846, %v1873
        %v1895 = vadd.f32 %v1847, %v1875
        %v1896 = vadd.f32 %v1848, %v1877
        %v1897 = vadd.f32 %v1849, %v1879
        %v1898 = vadd.f32 %v1850, %v1881
        %v1899 = vadd.f32 %v1851, %v1883
        %v1900 = vpack.c.bf16 %v1791, %v1789
        %v1901 = vpack.c.bf16 %v1795, %v1793
        %v1902 = vpack.c.bf16 %v1799, %v1797
        %v1903 = vpack.c.bf16 %v1803, %v1801
        %v1904 = vpack.c.bf16 %v1807, %v1805
        %v1905 = vpack.c.bf16 %v1811, %v1809
        %v1906 = vpack.c.bf16 %v1815, %v1813
        %v1907 = vpack.c.bf16 %v1819, %v1817
        %1908 = vmatprep.subr.bf16.mxu0 0
        %1909 = vmatpush1.bf16.msra.mxu0 %v1386
        %1910 = vmatprep.subr.bf16.mxu0 0
        %1911 = vmatpush1.bf16.msra.mxu0 %v1387
        %1912 = vmatprep.subr.bf16.mxu0 0
        %1913 = vmatpush1.bf16.msra.mxu0 %v1388
        %1914 = vmatprep.subr.bf16.mxu0 0
        %1915 = vmatpush1.bf16.msra.mxu0 %v1389
        %1916 = vmatprep.subr.bf16.mxu0 0
        %1917 = vmatpush1.bf16.msra.mxu0 %v1390
        %1918 = vmatprep.subr.bf16.mxu0 0
        %1919 = vmatpush1.bf16.msra.mxu0 %v1391
        %1920 = vmatprep.subr.bf16.mxu0 0
        %1921 = vmatpush1.bf16.msra.mxu0 %v1392
        %1922 = vmatprep.subr.bf16.mxu0 0
        %1923 = vmatpush1.bf16.msra.mxu0 %v1393
        %1924 = vmatprep.subr.bf16.mxu0 0
        %1925 = vmatpush1.bf16.msra.mxu0 0
        %1926 = vmatprep.subr.bf16.mxu0 0
        %1927 = vmatpush1.bf16.msra.mxu0 0
        %1928 = vmatprep.subr.bf16.mxu0 0
        %1929 = vmatpush1.bf16.msra.mxu0 0
        %1930 = vmatprep.subr.bf16.mxu0 0
        %1931 = vmatpush1.bf16.msra.mxu0 0
        %1932 = vmatprep.subr.bf16.mxu0 0
        %1933 = vmatpush1.bf16.msra.mxu0 0
        %1934 = vmatprep.subr.bf16.mxu0 0
        %1935 = vmatpush1.bf16.msra.mxu0 0
        %1936 = vmatprep.subr.bf16.mxu0 0
        %1937 = vmatpush1.bf16.msra.mxu0 0
        %1938 = vmatprep.subr.bf16.mxu0 0
        %1939 = vmatpush1.bf16.msra.mxu0 0
        %1940 = vmatprep.mubr.bf16.mxu0 0
        %1941 = vmatmul.mubr.bf16.gmra.mrb[0].mxu0 %v1900
        %v1942 = vpop.f32.mrb[0].mxu0
        %v1943 = vadd.f32 0.0, %v1942
        %v1944 = vpop.f32.mrb[0].mxu0
        %v1945 = vpop.f32.mrb[0].mxu0
        %v1946 = vadd.f32 0.0, %v1945
        %v1947 = vpop.f32.mrb[0].mxu0
        %1948 = vmatprep.mubr.bf16.mxu0 0
        %1949 = vmatmul.mubr.bf16.gmra.mrb[0].mxu0 %v1901
        %v1950 = vpop.f32.mrb[0].mxu0
        %v1951 = vadd.f32 0.0, %v1950
        %v1952 = vpop.f32.mrb[0].mxu0
        %v1953 = vpop.f32.mrb[0].mxu0
        %v1954 = vadd.f32 0.0, %v1953
        %v1955 = vpop.f32.mrb[0].mxu0
        %1956 = vmatprep.mubr.bf16.mxu0 0
        %1957 = vmatmul.mubr.bf16.gmra.mrb[0].mxu0 %v1902
        %v1958 = vpop.f32.mrb[0].mxu0
        %v1959 = vadd.f32 0.0, %v1958
        %v1960 = vpop.f32.mrb[0].mxu0
        %v1961 = vpop.f32.mrb[0].mxu0
        %v1962 = vadd.f32 0.0, %v1961
        %v1963 = vpop.f32.mrb[0].mxu0
        %1964 = vmatprep.mubr.bf16.mxu0 0
        %1965 = vmatmul.mubr.bf16.gmra.mrb[0].mxu0 %v1903
        %v1966 = vpop.f32.mrb[0].mxu0
        %v1967 = vadd.f32 0.0, %v1966
        %v1968 = vpop.f32.mrb[0].mxu0
        %v1969 = vpop.f32.mrb[0].mxu0
        %v1970 = vadd.f32 0.0, %v1969
        %v1971 = vpop.f32.mrb[0].mxu0
        %1972 = vmatprep.mubr.bf16.mxu0 0
        %1973 = vmatmul.mubr.bf16.gmra.mrb[0].mxu0 %v1904
        %v1974 = vpop.f32.mrb[0].mxu0
        %v1975 = vadd.f32 0.0, %v1974
        %v1976 = vpop.f32.mrb[0].mxu0
        %v1977 = vpop.f32.mrb[0].mxu0
        %v1978 = vadd.f32 0.0, %v1977
        %v1979 = vpop.f32.mrb[0].mxu0
        %1980 = vmatprep.mubr.bf16.mxu0 0
        %1981 = vmatmul.mubr.bf16.gmra.mrb[0].mxu0 %v1905
        %v1982 = vpop.f32.mrb[0].mxu0
        %v1983 = vadd.f32 0.0, %v1982
        %v1984 = vpop.f32.mrb[0].mxu0
        %v1985 = vpop.f32.mrb[0].mxu0
        %v1986 = vadd.f32 0.0, %v1985
        %v1987 = vpop.f32.mrb[0].mxu0
        %1988 = vmatprep.mubr.bf16.mxu0 0
        %1989 = vmatmul.mubr.bf16.gmra.mrb[0].mxu0 %v1906
        %v1990 = vpop.f32.mrb[0].mxu0
        %v1991 = vadd.f32 0.0, %v1990
        %v1992 = vpop.f32.mrb[0].mxu0
        %v1993 = vpop.f32.mrb[0].mxu0
        %v1994 = vadd.f32 0.0, %v1993
        %v1995 = vpop.f32.mrb[0].mxu0
        %1996 = vmatprep.mubr.bf16.mxu0 0
        %1997 = vmatmul.mubr.bf16.gmra.mrb[0].mxu0 %v1907
        %v1998 = vpop.f32.mrb[0].mxu0
        %v1999 = vadd.f32 0.0, %v1998
        %v2000 = vpop.f32.mrb[0].mxu0
        %v2001 = vpop.f32.mrb[0].mxu0
        %v2002 = vadd.f32 0.0, %v2001
        %v2003 = vpop.f32.mrb[0].mxu0
        %2004 = vdwg.mxu0
        %v2005 = vld [vmem:[#allocation5] sm:$0xff]
        %v2006 = vld [vmem:[#allocation5 + $0x8] sm:$0xff]
        %v2007 = vld [vmem:[#allocation5 + $0x10] sm:$0xff]
        %v2008 = vld [vmem:[#allocation5 + $0x18] sm:$0xff]
        %v2009 = vld [vmem:[#allocation5 + $0x20] sm:$0xff]
        %v2010 = vld [vmem:[#allocation5 + $0x28] sm:$0xff]
        %v2011 = vld [vmem:[#allocation5 + $0x30] sm:$0xff]
        %v2012 = vld [vmem:[#allocation5 + $0x38] sm:$0xff]
        %v2013 = vld [vmem:[#allocation5 + $0x40] sm:$0xff]
        %v2014 = vld [vmem:[#allocation5 + $0x48] sm:$0xff]
        %v2015 = vld [vmem:[#allocation5 + $0x50] sm:$0xff]
        %v2016 = vld [vmem:[#allocation5 + $0x58] sm:$0xff]
        %v2017 = vld [vmem:[#allocation5 + $0x60] sm:$0xff]
        %v2018 = vld [vmem:[#allocation5 + $0x68] sm:$0xff]
        %v2019 = vld [vmem:[#allocation5 + $0x70] sm:$0xff]
        %v2020 = vld [vmem:[#allocation5 + $0x78] sm:$0xff]
        %2022 = vset.pattern.permute.xlu0 0
        %2023 = vperm.xlu0 %2022, %v1661
        %v2024 = vpop.permute.xlu0 %2023
        %2027 = vset.pattern.permute.xlu0 0
        %2028 = vperm.xlu0 %2027, %v1663
        %v2029 = vpop.permute.xlu0 %2028
        %2032 = vset.pattern.permute.xlu0 0
        %2033 = vperm.xlu0 %2032, %v1665
        %v2034 = vpop.permute.xlu0 %2033
        %2037 = vset.pattern.permute.xlu0 0
        %2038 = vperm.xlu0 %2037, %v1667
        %v2039 = vpop.permute.xlu0 %2038
        %2042 = vset.pattern.permute.xlu0 0
        %2043 = vperm.xlu0 %2042, %v1669
        %v2044 = vpop.permute.xlu0 %2043
        %2047 = vset.pattern.permute.xlu0 0
        %2048 = vperm.xlu0 %2047, %v1671
        %v2049 = vpop.permute.xlu0 %2048
        %2052 = vset.pattern.permute.xlu0 0
        %2053 = vperm.xlu0 %2052, %v1673
        %v2054 = vpop.permute.xlu0 %2053
        %2057 = vset.pattern.permute.xlu0 0
        %2058 = vperm.xlu0 %2057, %v1675
        %v2059 = vpop.permute.xlu0 %2058
        %2062 = vset.pattern.permute.xlu0 0
        %2063 = vperm.xlu0 %2062, %v1677
        %v2064 = vpop.permute.xlu0 %2063
        %2067 = vset.pattern.permute.xlu0 0
        %2068 = vperm.xlu0 %2067, %v1679
        %v2069 = vpop.permute.xlu0 %2068
        %2072 = vset.pattern.permute.xlu0 0
        %2073 = vperm.xlu0 %2072, %v1681
        %v2074 = vpop.permute.xlu0 %2073
        %2077 = vset.pattern.permute.xlu0 0
        %2078 = vperm.xlu0 %2077, %v1683
        %v2079 = vpop.permute.xlu0 %2078
        %2082 = vset.pattern.permute.xlu0 0
        %2083 = vperm.xlu0 %2082, %v1685
        %v2084 = vpop.permute.xlu0 %2083
        %2087 = vset.pattern.permute.xlu0 0
        %2088 = vperm.xlu0 %2087, %v1687
        %v2089 = vpop.permute.xlu0 %2088
        %2092 = vset.pattern.permute.xlu0 0
        %2093 = vperm.xlu0 %2092, %v1689
        %v2094 = vpop.permute.xlu0 %2093
        %2097 = vset.pattern.permute.xlu0 0
        %2098 = vperm.xlu0 %2097, %v1691
        %v2099 = vpop.permute.xlu0 %2098
        %v2101 = vmul.f32 %v2024, %v2005
        %v2102 = vmul.f32 %v2029, %v2006
        %v2103 = vmul.f32 %v2034, %v2007
        %v2104 = vmul.f32 %v2039, %v2008
        %v2105 = vmul.f32 %v2044, %v2009
        %v2106 = vmul.f32 %v2049, %v2010
        %v2107 = vmul.f32 %v2054, %v2011
        %v2108 = vmul.f32 %v2059, %v2012
        %v2109 = vmul.f32 %v2064, %v2013
        %v2110 = vmul.f32 %v2069, %v2014
        %v2111 = vmul.f32 %v2074, %v2015
        %v2112 = vmul.f32 %v2079, %v2016
        %v2113 = vmul.f32 %v2084, %v2017
        %v2114 = vmul.f32 %v2089, %v2018
        %v2115 = vmul.f32 %v2094, %v2019
        %v2116 = vmul.f32 %v2099, %v2020
        %v2117 = vadd.f32 %v2101, %v1943
        %v2118 = vadd.f32 %v2102, %v1946
        %v2119 = vadd.f32 %v2103, %v1951
        %v2120 = vadd.f32 %v2104, %v1954
        %v2121 = vadd.f32 %v2105, %v1959
        %v2122 = vadd.f32 %v2106, %v1962
        %v2123 = vadd.f32 %v2107, %v1967
        %v2124 = vadd.f32 %v2108, %v1970
        %v2125 = vadd.f32 %v2109, %v1975
        %v2126 = vadd.f32 %v2110, %v1978
        %v2127 = vadd.f32 %v2111, %v1983
        %v2128 = vadd.f32 %v2112, %v1986
        %v2129 = vadd.f32 %v2113, %v1991
        %v2130 = vadd.f32 %v2114, %v1994
        %v2131 = vadd.f32 %v2115, %v1999
        %v2132 = vadd.f32 %v2116, %v2002
        %vm2133 = vcmask 130048
        %2134 = vst.msk [vmem:[#allocation5] sm:$0xff] %vm2133, %v2117
        %2135 = vst.msk [vmem:[#allocation5 + $0x8] sm:$0xff] %vm2133, %v2118
        %2136 = vst.msk [vmem:[#allocation5 + $0x10] sm:$0xff] %vm2133, %v2119
        %2137 = vst.msk [vmem:[#allocation5 + $0x18] sm:$0xff] %vm2133, %v2120
        %2138 = vst.msk [vmem:[#allocation5 + $0x20] sm:$0xff] %vm2133, %v2121
        %2139 = vst.msk [vmem:[#allocation5 + $0x28] sm:$0xff] %vm2133, %v2122
        %2140 = vst.msk [vmem:[#allocation5 + $0x30] sm:$0xff] %vm2133, %v2123
        %2141 = vst.msk [vmem:[#allocation5 + $0x38] sm:$0xff] %vm2133, %v2124
        %2142 = vst.msk [vmem:[#allocation5 + $0x40] sm:$0xff] %vm2133, %v2125
        %2143 = vst.msk [vmem:[#allocation5 + $0x48] sm:$0xff] %vm2133, %v2126
        %2144 = vst.msk [vmem:[#allocation5 + $0x50] sm:$0xff] %vm2133, %v2127
        %2145 = vst.msk [vmem:[#allocation5 + $0x58] sm:$0xff] %vm2133, %v2128
        %2146 = vst.msk [vmem:[#allocation5 + $0x60] sm:$0xff] %vm2133, %v2129
        %2147 = vst.msk [vmem:[#allocation5 + $0x68] sm:$0xff] %vm2133, %v2130
        %2148 = vst.msk [vmem:[#allocation5 + $0x70] sm:$0xff] %vm2133, %v2131
        %2149 = vst.msk [vmem:[#allocation5 + $0x78] sm:$0xff] %vm2133, %v2132
        %vm2150 = vcmask 7168
        %2151 = vst.msk [vmem:[#allocation3] sm:$0xff] %vm2150, %v1628
        %2152 = vst.msk [vmem:[#allocation3 + $0x8] sm:$0xff] %vm2150, %v1629
        %2153 = vst.msk [vmem:[#allocation3 + $0x10] sm:$0xff] %vm2150, %v1630
        %2154 = vst.msk [vmem:[#allocation3 + $0x18] sm:$0xff] %vm2150, %v1631
        %2155 = vst.msk [vmem:[#allocation3 + $0x20] sm:$0xff] %vm2150, %v1632
        %2156 = vst.msk [vmem:[#allocation3 + $0x28] sm:$0xff] %vm2150, %v1633
        %2157 = vst.msk [vmem:[#allocation3 + $0x30] sm:$0xff] %vm2150, %v1634
        %2158 = vst.msk [vmem:[#allocation3 + $0x38] sm:$0xff] %vm2150, %v1635
        %2159 = vst.msk [vmem:[#allocation3 + $0x40] sm:$0xff] %vm2150, %v1636
        %2160 = vst.msk [vmem:[#allocation3 + $0x48] sm:$0xff] %vm2150, %v1637
        %2161 = vst.msk [vmem:[#allocation3 + $0x50] sm:$0xff] %vm2150, %v1638
        %2162 = vst.msk [vmem:[#allocation3 + $0x58] sm:$0xff] %vm2150, %v1639
        %2163 = vst.msk [vmem:[#allocation3 + $0x60] sm:$0xff] %vm2150, %v1640
        %2164 = vst.msk [vmem:[#allocation3 + $0x68] sm:$0xff] %vm2150, %v1641
        %2165 = vst.msk [vmem:[#allocation3 + $0x70] sm:$0xff] %vm2150, %v1642
        %2166 = vst.msk [vmem:[#allocation3 + $0x78] sm:$0xff] %vm2150, %v1643
        %2167 = vst.msk [vmem:[#allocation4] sm:$0xff] %vm2150, %v1884
        %2168 = vst.msk [vmem:[#allocation4 + $0x8] sm:$0xff] %vm2150, %v1885
        %2169 = vst.msk [vmem:[#allocation4 + $0x10] sm:$0xff] %vm2150, %v1886
        %2170 = vst.msk [vmem:[#allocation4 + $0x18] sm:$0xff] %vm2150, %v1887
        %2171 = vst.msk [vmem:[#allocation4 + $0x20] sm:$0xff] %vm2150, %v1888
        %2172 = vst.msk [vmem:[#allocation4 + $0x28] sm:$0xff] %vm2150, %v1889
        %2173 = vst.msk [vmem:[#allocation4 + $0x30] sm:$0xff] %vm2150, %v1890
        %2174 = vst.msk [vmem:[#allocation4 + $0x38] sm:$0xff] %vm2150, %v1891
        %2175 = vst.msk [vmem:[#allocation4 + $0x40] sm:$0xff] %vm2150, %v1892
        %2176 = vst.msk [vmem:[#allocation4 + $0x48] sm:$0xff] %vm2150, %v1893
        %2177 = vst.msk [vmem:[#allocation4 + $0x50] sm:$0xff] %vm2150, %v1894
        %2178 = vst.msk [vmem:[#allocation4 + $0x58] sm:$0xff] %vm2150, %v1895
        %2179 = vst.msk [vmem:[#allocation4 + $0x60] sm:$0xff] %vm2150, %v1896
        %2180 = vst.msk [vmem:[#allocation4 + $0x68] sm:$0xff] %vm2150, %v1897
        %2181 = vst.msk [vmem:[#allocation4 + $0x70] sm:$0xff] %vm2150, %v1898
        %2182 = vst.msk [vmem:[#allocation4 + $0x78] sm:$0xff] %vm2150, %v1899
        %2191 = vrot.lane.b32.xlu0 %v1426, 120
        %v2192 = vpop.permute.xlu0 %2191
        %2193 = vrot.lane.b32.xlu0 %v1427, 120
        %v2194 = vpop.permute.xlu0 %2193
        %2195 = vrot.lane.b32.xlu0 %v1428, 120
        %v2196 = vpop.permute.xlu0 %2195
        %2197 = vrot.lane.b32.xlu0 %v1429, 120
        %v2198 = vpop.permute.xlu0 %2197
        %2199 = vrot.lane.b32.xlu0 %v1430, 120
        %v2200 = vpop.permute.xlu0 %2199
        %2201 = vrot.lane.b32.xlu0 %v1431, 120
        %v2202 = vpop.permute.xlu0 %2201
        %2203 = vrot.lane.b32.xlu0 %v1432, 120
        %v2204 = vpop.permute.xlu0 %2203
        %2205 = vrot.lane.b32.xlu0 %v1433, 120
        %v2206 = vpop.permute.xlu0 %2205
        %2215 = vrot.lane.b32.xlu0 %v1162, 120
        %v2216 = vpop.permute.xlu0 %2215
        %2217 = vrot.lane.b32.xlu0 %v1163, 120
        %v2218 = vpop.permute.xlu0 %2217
        %2219 = vrot.lane.b32.xlu0 %v1164, 120
        %v2220 = vpop.permute.xlu0 %2219
        %2221 = vrot.lane.b32.xlu0 %v1165, 120
        %v2222 = vpop.permute.xlu0 %2221
        %2223 = vrot.lane.b32.xlu0 %v1166, 120
        %v2224 = vpop.permute.xlu0 %2223
        %2225 = vrot.lane.b32.xlu0 %v1167, 120
        %v2226 = vpop.permute.xlu0 %2225
        %2227 = vrot.lane.b32.xlu0 %v1168, 120
        %v2228 = vpop.permute.xlu0 %2227
        %2229 = vrot.lane.b32.xlu0 %v1169, 120
        %v2230 = vpop.permute.xlu0 %2229
        %v2232 = vsel %vm1434, %v2192, 0
        %v2235 = vsel %vm1434, %v2194, 0
        %v2238 = vsel %vm1434, %v2196, 0
        %v2241 = vsel %vm1434, %v2198, 0
        %v2244 = vsel %vm1434, %v2200, 0
        %v2247 = vsel %vm1434, %v2202, 0
        %v2250 = vsel %vm1434, %v2204, 0
        %v2253 = vsel %vm1434, %v2206, 0
        %v2256 = vsel %vm1434, %v2216, 0
        %v2259 = vsel %vm1434, %v2218, 0
        %v2262 = vsel %vm1434, %v2220, 0
        %v2265 = vsel %vm1434, %v2222, 0
        %v2268 = vsel %vm1434, %v2224, 0
        %v2271 = vsel %vm1434, %v2226, 0
        %v2274 = vsel %vm1434, %v2228, 0
        %v2277 = vsel %vm1434, %v2230, 0
        %2279 = vmatprep.subr.bf16.mxu0 0
        %2280 = vmatpush1.bf16.xpose.msra.mxu0 %v2256
        %2281 = vmatprep.subr.bf16.mxu0 0
        %2282 = vmatpush1.bf16.xpose.msra.mxu0 %v2259
        %2283 = vmatprep.subr.bf16.mxu0 0
        %2284 = vmatpush1.bf16.xpose.msra.mxu0 %v2262
        %2285 = vmatprep.subr.bf16.mxu0 0
        %2286 = vmatpush1.bf16.xpose.msra.mxu0 %v2265
        %2287 = vmatprep.subr.bf16.mxu0 0
        %2288 = vmatpush1.bf16.xpose.msra.mxu0 %v2268
        %2289 = vmatprep.subr.bf16.mxu0 0
        %2290 = vmatpush1.bf16.xpose.msra.mxu0 %v2271
        %2291 = vmatprep.subr.bf16.mxu0 0
        %2292 = vmatpush1.bf16.xpose.msra.mxu0 %v2274
        %2293 = vmatprep.subr.bf16.mxu0 0
        %2294 = vmatpush1.bf16.xpose.msra.mxu0 %v2277
        %2295 = vmatprep.subr.bf16.mxu0 0
        %2296 = vmatpush1.bf16.xpose.msra.mxu0 0
        %2297 = vmatprep.subr.bf16.mxu0 0
        %2298 = vmatpush1.bf16.xpose.msra.mxu0 0
        %2299 = vmatprep.subr.bf16.mxu0 0
        %2300 = vmatpush1.bf16.xpose.msra.mxu0 0
        %2301 = vmatprep.subr.bf16.mxu0 0
        %2302 = vmatpush1.bf16.xpose.msra.mxu0 0
        %2303 = vmatprep.subr.bf16.mxu0 0
        %2304 = vmatpush1.bf16.xpose.msra.mxu0 0
        %2305 = vmatprep.subr.bf16.mxu0 0
        %2306 = vmatpush1.bf16.xpose.msra.mxu0 0
        %2307 = vmatprep.subr.bf16.mxu0 0
        %2308 = vmatpush1.bf16.xpose.msra.mxu0 0
        %2309 = vmatprep.subr.bf16.mxu0 0
        %2310 = vmatpush1.bf16.xpose.msra.mxu0 0
        %2311 = vmatprep.mubr.bf16.mxu0 0
        %2312 = vmatmul.mubr.bf16.gmra.mrb[0].mxu0 %v2232
        %v2313 = vpop.f32.mrb[0].mxu0
        %v2314 = vadd.f32 %v1410, %v2313
        %v2315 = vpop.f32.mrb[0].mxu0
        %v2316 = vpop.f32.mrb[0].mxu0
        %v2317 = vadd.f32 %v1411, %v2316
        %v2318 = vpop.f32.mrb[0].mxu0
        %2319 = vmatprep.mubr.bf16.mxu0 0
        %2320 = vmatmul.mubr.bf16.gmra.mrb[0].mxu0 %v2235
        %v2321 = vpop.f32.mrb[0].mxu0
        %v2322 = vadd.f32 %v1412, %v2321
        %v2323 = vpop.f32.mrb[0].mxu0
        %v2324 = vpop.f32.mrb[0].mxu0
        %v2325 = vadd.f32 %v1413, %v2324
        %v2326 = vpop.f32.mrb[0].mxu0
        %2327 = vmatprep.mubr.bf16.mxu0 0
        %2328 = vmatmul.mubr.bf16.gmra.mrb[0].mxu0 %v2238
        %v2329 = vpop.f32.mrb[0].mxu0
        %v2330 = vadd.f32 %v1414, %v2329
        %v2331 = vpop.f32.mrb[0].mxu0
        %v2332 = vpop.f32.mrb[0].mxu0
        %v2333 = vadd.f32 %v1415, %v2332
        %v2334 = vpop.f32.mrb[0].mxu0
        %2335 = vmatprep.mubr.bf16.mxu0 0
        %2336 = vmatmul.mubr.bf16.gmra.mrb[0].mxu0 %v2241
        %v2337 = vpop.f32.mrb[0].mxu0
        %v2338 = vadd.f32 %v1416, %v2337
        %v2339 = vpop.f32.mrb[0].mxu0
        %v2340 = vpop.f32.mrb[0].mxu0
        %v2341 = vadd.f32 %v1417, %v2340
        %v2342 = vpop.f32.mrb[0].mxu0
        %2343 = vmatprep.mubr.bf16.mxu0 0
        %2344 = vmatmul.mubr.bf16.gmra.mrb[0].mxu0 %v2244
        %v2345 = vpop.f32.mrb[0].mxu0
        %v2346 = vadd.f32 %v1418, %v2345
        %v2347 = vpop.f32.mrb[0].mxu0
        %v2348 = vpop.f32.mrb[0].mxu0
        %v2349 = vadd.f32 %v1419, %v2348
        %v2350 = vpop.f32.mrb[0].mxu0
        %2351 = vmatprep.mubr.bf16.mxu0 0
        %2352 = vmatmul.mubr.bf16.gmra.mrb[0].mxu0 %v2247
        %v2353 = vpop.f32.mrb[0].mxu0
        %v2354 = vadd.f32 %v1420, %v2353
        %v2355 = vpop.f32.mrb[0].mxu0
        %v2356 = vpop.f32.mrb[0].mxu0
        %v2357 = vadd.f32 %v1421, %v2356
        %v2358 = vpop.f32.mrb[0].mxu0
        %2359 = vmatprep.mubr.bf16.mxu0 0
        %2360 = vmatmul.mubr.bf16.gmra.mrb[0].mxu0 %v2250
        %v2361 = vpop.f32.mrb[0].mxu0
        %v2362 = vadd.f32 %v1422, %v2361
        %v2363 = vpop.f32.mrb[0].mxu0
        %v2364 = vpop.f32.mrb[0].mxu0
        %v2365 = vadd.f32 %v1423, %v2364
        %v2366 = vpop.f32.mrb[0].mxu0
        %2367 = vmatprep.mubr.bf16.mxu0 0
        %2368 = vmatmul.mubr.bf16.gmra.mrb[0].mxu0 %v2253
        %v2369 = vpop.f32.mrb[0].mxu0
        %v2370 = vadd.f32 %v1424, %v2369
        %v2371 = vpop.f32.mrb[0].mxu0
        %v2372 = vpop.f32.mrb[0].mxu0
        %v2373 = vadd.f32 %v1425, %v2372
        %v2374 = vpop.f32.mrb[0].mxu0
        %2375 = vdwg.mxu0
        %v2376 = vld [vmem:[#allocation3] sm:$0xff]
        %v2377 = vld [vmem:[#allocation3 + $0x8] sm:$0xff]
        %v2378 = vld [vmem:[#allocation3 + $0x10] sm:$0xff]
        %v2379 = vld [vmem:[#allocation3 + $0x18] sm:$0xff]
        %v2380 = vld [vmem:[#allocation3 + $0x20] sm:$0xff]
        %v2381 = vld [vmem:[#allocation3 + $0x28] sm:$0xff]
        %v2382 = vld [vmem:[#allocation3 + $0x30] sm:$0xff]
        %v2383 = vld [vmem:[#allocation3 + $0x38] sm:$0xff]
        %v2384 = vld [vmem:[#allocation3 + $0x40] sm:$0xff]
        %v2385 = vld [vmem:[#allocation3 + $0x48] sm:$0xff]
        %v2386 = vld [vmem:[#allocation3 + $0x50] sm:$0xff]
        %v2387 = vld [vmem:[#allocation3 + $0x58] sm:$0xff]
        %v2388 = vld [vmem:[#allocation3 + $0x60] sm:$0xff]
        %v2389 = vld [vmem:[#allocation3 + $0x68] sm:$0xff]
        %v2390 = vld [vmem:[#allocation3 + $0x70] sm:$0xff]
        %v2391 = vld [vmem:[#allocation3 + $0x78] sm:$0xff]
        %2392 = vmax.xlane.f32.xlu0 %v2314
        %v2393 = vpop.xlane.xlu0 %2392
        %2394 = vmax.xlane.f32.xlu0 %v2317
        %v2395 = vpop.xlane.xlu0 %2394
        %2396 = vmax.xlane.f32.xlu0 %v2322
        %v2397 = vpop.xlane.xlu0 %2396
        %2398 = vmax.xlane.f32.xlu0 %v2325
        %v2399 = vpop.xlane.xlu0 %2398
        %2400 = vmax.xlane.f32.xlu0 %v2330
        %v2401 = vpop.xlane.xlu0 %2400
        %2402 = vmax.xlane.f32.xlu0 %v2333
        %v2403 = vpop.xlane.xlu0 %2402
        %2404 = vmax.xlane.f32.xlu0 %v2338
        %v2405 = vpop.xlane.xlu0 %2404
        %2406 = vmax.xlane.f32.xlu0 %v2341
        %v2407 = vpop.xlane.xlu0 %2406
        %2408 = vmax.xlane.f32.xlu0 %v2346
        %v2409 = vpop.xlane.xlu0 %2408
        %2410 = vmax.xlane.f32.xlu0 %v2349
        %v2411 = vpop.xlane.xlu0 %2410
        %2412 = vmax.xlane.f32.xlu0 %v2354
        %v2413 = vpop.xlane.xlu0 %2412
        %2414 = vmax.xlane.f32.xlu0 %v2357
        %v2415 = vpop.xlane.xlu0 %2414
        %2416 = vmax.xlane.f32.xlu0 %v2362
        %v2417 = vpop.xlane.xlu0 %2416
        %2418 = vmax.xlane.f32.xlu0 %v2365
        %v2419 = vpop.xlane.xlu0 %2418
        %2420 = vmax.xlane.f32.xlu0 %v2370
        %v2421 = vpop.xlane.xlu0 %2420
        %2422 = vmax.xlane.f32.xlu0 %v2373
        %v2423 = vpop.xlane.xlu0 %2422
        %v2424 = vmax.f32 %v2376, %v2393
        %v2425 = vmax.f32 %v2377, %v2395
        %v2426 = vmax.f32 %v2378, %v2397
        %v2427 = vmax.f32 %v2379, %v2399
        %v2428 = vmax.f32 %v2380, %v2401
        %v2429 = vmax.f32 %v2381, %v2403
        %v2430 = vmax.f32 %v2382, %v2405
        %v2431 = vmax.f32 %v2383, %v2407
        %v2432 = vmax.f32 %v2384, %v2409
        %v2433 = vmax.f32 %v2385, %v2411
        %v2434 = vmax.f32 %v2386, %v2413
        %v2435 = vmax.f32 %v2387, %v2415
        %v2436 = vmax.f32 %v2388, %v2417
        %v2437 = vmax.f32 %v2389, %v2419
        %v2438 = vmax.f32 %v2390, %v2421
        %v2439 = vmax.f32 %v2391, %v2423
        %v2440 = vsub.f32 %v2376, %v2424
        %v2441 = vsub.f32 %v2377, %v2425
        %v2442 = vsub.f32 %v2378, %v2426
        %v2443 = vsub.f32 %v2379, %v2427
        %v2444 = vsub.f32 %v2380, %v2428
        %v2445 = vsub.f32 %v2381, %v2429
        %v2446 = vsub.f32 %v2382, %v2430
        %v2447 = vsub.f32 %v2383, %v2431
        %v2448 = vsub.f32 %v2384, %v2432
        %v2449 = vsub.f32 %v2385, %v2433
        %v2450 = vsub.f32 %v2386, %v2434
        %v2451 = vsub.f32 %v2387, %v2435
        %v2452 = vsub.f32 %v2388, %v2436
        %v2453 = vsub.f32 %v2389, %v2437
        %v2454 = vsub.f32 %v2390, %v2438
        %v2455 = vsub.f32 %v2391, %v2439
        %v2456 = vmul.f32 %v2440, 1.442695
        %v2457 = vpow.pop %v2456
        %v2458 = vmul.f32 %v2441, 1.442695
        %v2459 = vpow.pop %v2458
        %v2460 = vmul.f32 %v2442, 1.442695
        %v2461 = vpow.pop %v2460
        %v2462 = vmul.f32 %v2443, 1.442695
        %v2463 = vpow.pop %v2462
        %v2464 = vmul.f32 %v2444, 1.442695
        %v2465 = vpow.pop %v2464
        %v2466 = vmul.f32 %v2445, 1.442695
        %v2467 = vpow.pop %v2466
        %v2468 = vmul.f32 %v2446, 1.442695
        %v2469 = vpow.pop %v2468
        %v2470 = vmul.f32 %v2447, 1.442695
        %v2471 = vpow.pop %v2470
        %v2472 = vmul.f32 %v2448, 1.442695
        %v2473 = vpow.pop %v2472
        %v2474 = vmul.f32 %v2449, 1.442695
        %v2475 = vpow.pop %v2474
        %v2476 = vmul.f32 %v2450, 1.442695
        %v2477 = vpow.pop %v2476
        %v2478 = vmul.f32 %v2451, 1.442695
        %v2479 = vpow.pop %v2478
        %v2480 = vmul.f32 %v2452, 1.442695
        %v2481 = vpow.pop %v2480
        %v2482 = vmul.f32 %v2453, 1.442695
        %v2483 = vpow.pop %v2482
        %v2484 = vmul.f32 %v2454, 1.442695
        %v2485 = vpow.pop %v2484
        %v2486 = vmul.f32 %v2455, 1.442695
        %v2487 = vpow.pop %v2486
        %2489 = vset.pattern.permute.xlu0 1
        %2490 = vperm.xlu0 %2489, %v2424
        %v2491 = vpop.permute.xlu0 %2490
        %2494 = vset.pattern.permute.xlu0 1
        %2495 = vperm.xlu0 %2494, %v2425
        %v2496 = vpop.permute.xlu0 %2495
        %2499 = vset.pattern.permute.xlu0 1
        %2500 = vperm.xlu0 %2499, %v2426
        %v2501 = vpop.permute.xlu0 %2500
        %2504 = vset.pattern.permute.xlu0 1
        %2505 = vperm.xlu0 %2504, %v2427
        %v2506 = vpop.permute.xlu0 %2505
        %2509 = vset.pattern.permute.xlu0 1
        %2510 = vperm.xlu0 %2509, %v2428
        %v2511 = vpop.permute.xlu0 %2510
        %2514 = vset.pattern.permute.xlu0 1
        %2515 = vperm.xlu0 %2514, %v2429
        %v2516 = vpop.permute.xlu0 %2515
        %2519 = vset.pattern.permute.xlu0 1
        %2520 = vperm.xlu0 %2519, %v2430
        %v2521 = vpop.permute.xlu0 %2520
        %2524 = vset.pattern.permute.xlu0 1
        %2525 = vperm.xlu0 %2524, %v2431
        %v2526 = vpop.permute.xlu0 %2525
        %2529 = vset.pattern.permute.xlu0 1
        %2530 = vperm.xlu0 %2529, %v2432
        %v2531 = vpop.permute.xlu0 %2530
        %2534 = vset.pattern.permute.xlu0 1
        %2535 = vperm.xlu0 %2534, %v2433
        %v2536 = vpop.permute.xlu0 %2535
        %2539 = vset.pattern.permute.xlu0 1
        %2540 = vperm.xlu0 %2539, %v2434
        %v2541 = vpop.permute.xlu0 %2540
        %2544 = vset.pattern.permute.xlu0 1
        %2545 = vperm.xlu0 %2544, %v2435
        %v2546 = vpop.permute.xlu0 %2545
        %2549 = vset.pattern.permute.xlu0 1
        %2550 = vperm.xlu0 %2549, %v2436
        %v2551 = vpop.permute.xlu0 %2550
        %2554 = vset.pattern.permute.xlu0 1
        %2555 = vperm.xlu0 %2554, %v2437
        %v2556 = vpop.permute.xlu0 %2555
        %2559 = vset.pattern.permute.xlu0 1
        %2560 = vperm.xlu0 %2559, %v2438
        %v2561 = vpop.permute.xlu0 %2560
        %2564 = vset.pattern.permute.xlu0 1
        %2565 = vperm.xlu0 %2564, %v2439
        %v2566 = vpop.permute.xlu0 %2565
        %v2568 = vsub.f32 %v2314, %v2491
        %v2569 = vsub.f32 %v2317, %v2496
        %v2570 = vsub.f32 %v2322, %v2501
        %v2571 = vsub.f32 %v2325, %v2506
        %v2572 = vsub.f32 %v2330, %v2511
        %v2573 = vsub.f32 %v2333, %v2516
        %v2574 = vsub.f32 %v2338, %v2521
        %v2575 = vsub.f32 %v2341, %v2526
        %v2576 = vsub.f32 %v2346, %v2531
        %v2577 = vsub.f32 %v2349, %v2536
        %v2578 = vsub.f32 %v2354, %v2541
        %v2579 = vsub.f32 %v2357, %v2546
        %v2580 = vsub.f32 %v2362, %v2551
        %v2581 = vsub.f32 %v2365, %v2556
        %v2582 = vsub.f32 %v2370, %v2561
        %v2583 = vsub.f32 %v2373, %v2566
        %v2584 = vmul.f32 %v2568, 1.442695
        %v2585 = vpow.pop %v2584
        %v2586 = vmul.f32 %v2569, 1.442695
        %v2587 = vpow.pop %v2586
        %v2588 = vmul.f32 %v2570, 1.442695
        %v2589 = vpow.pop %v2588
        %v2590 = vmul.f32 %v2571, 1.442695
        %v2591 = vpow.pop %v2590
        %v2592 = vmul.f32 %v2572, 1.442695
        %v2593 = vpow.pop %v2592
        %v2594 = vmul.f32 %v2573, 1.442695
        %v2595 = vpow.pop %v2594
        %v2596 = vmul.f32 %v2574, 1.442695
        %v2597 = vpow.pop %v2596
        %v2598 = vmul.f32 %v2575, 1.442695
        %v2599 = vpow.pop %v2598
        %v2600 = vmul.f32 %v2576, 1.442695
        %v2601 = vpow.pop %v2600
        %v2602 = vmul.f32 %v2577, 1.442695
        %v2603 = vpow.pop %v2602
        %v2604 = vmul.f32 %v2578, 1.442695
        %v2605 = vpow.pop %v2604
        %v2606 = vmul.f32 %v2579, 1.442695
        %v2607 = vpow.pop %v2606
        %v2608 = vmul.f32 %v2580, 1.442695
        %v2609 = vpow.pop %v2608
        %v2610 = vmul.f32 %v2581, 1.442695
        %v2611 = vpow.pop %v2610
        %v2612 = vmul.f32 %v2582, 1.442695
        %v2613 = vpow.pop %v2612
        %v2614 = vmul.f32 %v2583, 1.442695
        %v2615 = vpow.pop %v2614
        %v2616 = vld [vmem:[#allocation4] sm:$0xff]
        %v2617 = vld [vmem:[#allocation4 + $0x8] sm:$0xff]
        %v2618 = vld [vmem:[#allocation4 + $0x10] sm:$0xff]
        %v2619 = vld [vmem:[#allocation4 + $0x18] sm:$0xff]
        %v2620 = vld [vmem:[#allocation4 + $0x20] sm:$0xff]
        %v2621 = vld [vmem:[#allocation4 + $0x28] sm:$0xff]
        %v2622 = vld [vmem:[#allocation4 + $0x30] sm:$0xff]
        %v2623 = vld [vmem:[#allocation4 + $0x38] sm:$0xff]
        %v2624 = vld [vmem:[#allocation4 + $0x40] sm:$0xff]
        %v2625 = vld [vmem:[#allocation4 + $0x48] sm:$0xff]
        %v2626 = vld [vmem:[#allocation4 + $0x50] sm:$0xff]
        %v2627 = vld [vmem:[#allocation4 + $0x58] sm:$0xff]
        %v2628 = vld [vmem:[#allocation4 + $0x60] sm:$0xff]
        %v2629 = vld [vmem:[#allocation4 + $0x68] sm:$0xff]
        %v2630 = vld [vmem:[#allocation4 + $0x70] sm:$0xff]
        %v2631 = vld [vmem:[#allocation4 + $0x78] sm:$0xff]
        %v2632 = vmul.f32 %v2457, %v2616
        %v2633 = vmul.f32 %v2459, %v2617
        %v2634 = vmul.f32 %v2461, %v2618
        %v2635 = vmul.f32 %v2463, %v2619
        %v2636 = vmul.f32 %v2465, %v2620
        %v2637 = vmul.f32 %v2467, %v2621
        %v2638 = vmul.f32 %v2469, %v2622
        %v2639 = vmul.f32 %v2471, %v2623
        %v2640 = vmul.f32 %v2473, %v2624
        %v2641 = vmul.f32 %v2475, %v2625
        %v2642 = vmul.f32 %v2477, %v2626
        %v2643 = vmul.f32 %v2479, %v2627
        %v2644 = vmul.f32 %v2481, %v2628
        %v2645 = vmul.f32 %v2483, %v2629
        %v2646 = vmul.f32 %v2485, %v2630
        %v2647 = vmul.f32 %v2487, %v2631
        %2648 = vadd.xlane.f32.xlu0 %v2585
        %v2649 = vpop.xlane.xlu0 %2648
        %2650 = vadd.xlane.f32.xlu0 %v2587
        %v2651 = vpop.xlane.xlu0 %2650
        %2652 = vadd.xlane.f32.xlu0 %v2589
        %v2653 = vpop.xlane.xlu0 %2652
        %2654 = vadd.xlane.f32.xlu0 %v2591
        %v2655 = vpop.xlane.xlu0 %2654
        %2656 = vadd.xlane.f32.xlu0 %v2593
        %v2657 = vpop.xlane.xlu0 %2656
        %2658 = vadd.xlane.f32.xlu0 %v2595
        %v2659 = vpop.xlane.xlu0 %2658
        %2660 = vadd.xlane.f32.xlu0 %v2597
        %v2661 = vpop.xlane.xlu0 %2660
        %2662 = vadd.xlane.f32.xlu0 %v2599
        %v2663 = vpop.xlane.xlu0 %2662
        %2664 = vadd.xlane.f32.xlu0 %v2601
        %v2665 = vpop.xlane.xlu0 %2664
        %2666 = vadd.xlane.f32.xlu0 %v2603
        %v2667 = vpop.xlane.xlu0 %2666
        %2668 = vadd.xlane.f32.xlu0 %v2605
        %v2669 = vpop.xlane.xlu0 %2668
        %2670 = vadd.xlane.f32.xlu0 %v2607
        %v2671 = vpop.xlane.xlu0 %2670
        %2672 = vadd.xlane.f32.xlu0 %v2609
        %v2673 = vpop.xlane.xlu0 %2672
        %2674 = vadd.xlane.f32.xlu0 %v2611
        %v2675 = vpop.xlane.xlu0 %2674
        %2676 = vadd.xlane.f32.xlu0 %v2613
        %v2677 = vpop.xlane.xlu0 %2676
        %2678 = vadd.xlane.f32.xlu0 %v2615
        %v2679 = vpop.xlane.xlu0 %2678
        %v2680 = vadd.f32 %v2632, %v2649
        %v2681 = vadd.f32 %v2633, %v2651
        %v2682 = vadd.f32 %v2634, %v2653
        %v2683 = vadd.f32 %v2635, %v2655
        %v2684 = vadd.f32 %v2636, %v2657
        %v2685 = vadd.f32 %v2637, %v2659
        %v2686 = vadd.f32 %v2638, %v2661
        %v2687 = vadd.f32 %v2639, %v2663
        %v2688 = vadd.f32 %v2640, %v2665
        %v2689 = vadd.f32 %v2641, %v2667
        %v2690 = vadd.f32 %v2642, %v2669
        %v2691 = vadd.f32 %v2643, %v2671
        %v2692 = vadd.f32 %v2644, %v2673
        %v2693 = vadd.f32 %v2645, %v2675
        %v2694 = vadd.f32 %v2646, %v2677
        %v2695 = vadd.f32 %v2647, %v2679
        %v2696 = vpack.c.bf16 %v2587, %v2585
        %v2697 = vpack.c.bf16 %v2591, %v2589
        %v2698 = vpack.c.bf16 %v2595, %v2593
        %v2699 = vpack.c.bf16 %v2599, %v2597
        %v2700 = vpack.c.bf16 %v2603, %v2601
        %v2701 = vpack.c.bf16 %v2607, %v2605
        %v2702 = vpack.c.bf16 %v2611, %v2609
        %v2703 = vpack.c.bf16 %v2615, %v2613
        %2712 = vrot.lane.b32.xlu0 %v1386, 112
        %v2713 = vpop.permute.xlu0 %2712
        %2714 = vrot.lane.b32.xlu0 %v1387, 112
        %v2715 = vpop.permute.xlu0 %2714
        %2716 = vrot.lane.b32.xlu0 %v1388, 112
        %v2717 = vpop.permute.xlu0 %2716
        %2718 = vrot.lane.b32.xlu0 %v1389, 112
        %v2719 = vpop.permute.xlu0 %2718
        %2720 = vrot.lane.b32.xlu0 %v1390, 112
        %v2721 = vpop.permute.xlu0 %2720
        %2722 = vrot.lane.b32.xlu0 %v1391, 112
        %v2723 = vpop.permute.xlu0 %2722
        %2724 = vrot.lane.b32.xlu0 %v1392, 112
        %v2725 = vpop.permute.xlu0 %2724
        %2726 = vrot.lane.b32.xlu0 %v1393, 112
        %v2727 = vpop.permute.xlu0 %2726
        %2736 = vmatprep.subr.bf16.mxu0 0
        %2737 = vmatpush1.bf16.msra.mxu0 %v2713
        %2738 = vmatprep.subr.bf16.mxu0 0
        %2739 = vmatpush1.bf16.msra.mxu0 %v2715
        %2740 = vmatprep.subr.bf16.mxu0 0
        %2741 = vmatpush1.bf16.msra.mxu0 %v2717
        %2742 = vmatprep.subr.bf16.mxu0 0
        %2743 = vmatpush1.bf16.msra.mxu0 %v2719
        %2744 = vmatprep.subr.bf16.mxu0 0
        %2745 = vmatpush1.bf16.msra.mxu0 %v2721
        %2746 = vmatprep.subr.bf16.mxu0 0
        %2747 = vmatpush1.bf16.msra.mxu0 %v2723
        %2748 = vmatprep.subr.bf16.mxu0 0
        %2749 = vmatpush1.bf16.msra.mxu0 %v2725
        %2750 = vmatprep.subr.bf16.mxu0 0
        %2751 = vmatpush1.bf16.msra.mxu0 %v2727
        %2752 = vmatprep.subr.bf16.mxu0 0
        %2753 = vmatpush1.bf16.msra.mxu0 0
        %2754 = vmatprep.subr.bf16.mxu0 0
        %2755 = vmatpush1.bf16.msra.mxu0 0
        %2756 = vmatprep.subr.bf16.mxu0 0
        %2757 = vmatpush1.bf16.msra.mxu0 0
        %2758 = vmatprep.subr.bf16.mxu0 0
        %2759 = vmatpush1.bf16.msra.mxu0 0
        %2760 = vmatprep.subr.bf16.mxu0 0
        %2761 = vmatpush1.bf16.msra.mxu0 0
        %2762 = vmatprep.subr.bf16.mxu0 0
        %2763 = vmatpush1.bf16.msra.mxu0 0
        %2764 = vmatprep.subr.bf16.mxu0 0
        %2765 = vmatpush1.bf16.msra.mxu0 0
        %2766 = vmatprep.subr.bf16.mxu0 0
        %2767 = vmatpush1.bf16.msra.mxu0 0
        %2768 = vmatprep.mubr.bf16.mxu0 0
        %2769 = vmatmul.mubr.bf16.gmra.mrb[0].mxu0 %v2696
        %v2770 = vpop.f32.mrb[0].mxu0
        %v2771 = vadd.f32 0.0, %v2770
        %v2772 = vpop.f32.mrb[0].mxu0
        %v2773 = vpop.f32.mrb[0].mxu0
        %v2774 = vadd.f32 0.0, %v2773
        %v2775 = vpop.f32.mrb[0].mxu0
        %2776 = vmatprep.mubr.bf16.mxu0 0
        %2777 = vmatmul.mubr.bf16.gmra.mrb[0].mxu0 %v2697
        %v2778 = vpop.f32.mrb[0].mxu0
        %v2779 = vadd.f32 0.0, %v2778
        %v2780 = vpop.f32.mrb[0].mxu0
        %v2781 = vpop.f32.mrb[0].mxu0
        %v2782 = vadd.f32 0.0, %v2781
        %v2783 = vpop.f32.mrb[0].mxu0
        %2784 = vmatprep.mubr.bf16.mxu0 0
        %2785 = vmatmul.mubr.bf16.gmra.mrb[0].mxu0 %v2698
        %v2786 = vpop.f32.mrb[0].mxu0
        %v2787 = vadd.f32 0.0, %v2786
        %v2788 = vpop.f32.mrb[0].mxu0
        %v2789 = vpop.f32.mrb[0].mxu0
        %v2790 = vadd.f32 0.0, %v2789
        %v2791 = vpop.f32.mrb[0].mxu0
        %2792 = vmatprep.mubr.bf16.mxu0 0
        %2793 = vmatmul.mubr.bf16.gmra.mrb[0].mxu0 %v2699
        %v2794 = vpop.f32.mrb[0].mxu0
        %v2795 = vadd.f32 0.0, %v2794
        %v2796 = vpop.f32.mrb[0].mxu0
        %v2797 = vpop.f32.mrb[0].mxu0
        %v2798 = vadd.f32 0.0, %v2797
        %v2799 = vpop.f32.mrb[0].mxu0
        %2800 = vmatprep.mubr.bf16.mxu0 0
        %2801 = vmatmul.mubr.bf16.gmra.mrb[0].mxu0 %v2700
        %v2802 = vpop.f32.mrb[0].mxu0
        %v2803 = vadd.f32 0.0, %v2802
        %v2804 = vpop.f32.mrb[0].mxu0
        %v2805 = vpop.f32.mrb[0].mxu0
        %v2806 = vadd.f32 0.0, %v2805
        %v2807 = vpop.f32.mrb[0].mxu0
        %2808 = vmatprep.mubr.bf16.mxu0 0
        %2809 = vmatmul.mubr.bf16.gmra.mrb[0].mxu0 %v2701
        %v2810 = vpop.f32.mrb[0].mxu0
        %v2811 = vadd.f32 0.0, %v2810
        %v2812 = vpop.f32.mrb[0].mxu0
        %v2813 = vpop.f32.mrb[0].mxu0
        %v2814 = vadd.f32 0.0, %v2813
        %v2815 = vpop.f32.mrb[0].mxu0
        %2816 = vmatprep.mubr.bf16.mxu0 0
        %2817 = vmatmul.mubr.bf16.gmra.mrb[0].mxu0 %v2702
        %v2818 = vpop.f32.mrb[0].mxu0
        %v2819 = vadd.f32 0.0, %v2818
        %v2820 = vpop.f32.mrb[0].mxu0
        %v2821 = vpop.f32.mrb[0].mxu0
        %v2822 = vadd.f32 0.0, %v2821
        %v2823 = vpop.f32.mrb[0].mxu0
        %2824 = vmatprep.mubr.bf16.mxu0 0
        %2825 = vmatmul.mubr.bf16.gmra.mrb[0].mxu0 %v2703
        %v2826 = vpop.f32.mrb[0].mxu0
        %v2827 = vadd.f32 0.0, %v2826
        %v2828 = vpop.f32.mrb[0].mxu0
        %v2829 = vpop.f32.mrb[0].mxu0
        %v2830 = vadd.f32 0.0, %v2829
        %v2831 = vpop.f32.mrb[0].mxu0
        %2832 = vdwg.mxu0
        %v2833 = vld [vmem:[#allocation5] sm:$0xff]
        %v2834 = vld [vmem:[#allocation5 + $0x8] sm:$0xff]
        %v2835 = vld [vmem:[#allocation5 + $0x10] sm:$0xff]
        %v2836 = vld [vmem:[#allocation5 + $0x18] sm:$0xff]
        %v2837 = vld [vmem:[#allocation5 + $0x20] sm:$0xff]
        %v2838 = vld [vmem:[#allocation5 + $0x28] sm:$0xff]
        %v2839 = vld [vmem:[#allocation5 + $0x30] sm:$0xff]
        %v2840 = vld [vmem:[#allocation5 + $0x38] sm:$0xff]
        %v2841 = vld [vmem:[#allocation5 + $0x40] sm:$0xff]
        %v2842 = vld [vmem:[#allocation5 + $0x48] sm:$0xff]
        %v2843 = vld [vmem:[#allocation5 + $0x50] sm:$0xff]
        %v2844 = vld [vmem:[#allocation5 + $0x58] sm:$0xff]
        %v2845 = vld [vmem:[#allocation5 + $0x60] sm:$0xff]
        %v2846 = vld [vmem:[#allocation5 + $0x68] sm:$0xff]
        %v2847 = vld [vmem:[#allocation5 + $0x70] sm:$0xff]
        %v2848 = vld [vmem:[#allocation5 + $0x78] sm:$0xff]
        %2850 = vset.pattern.permute.xlu0 1
        %2851 = vperm.xlu0 %2850, %v2457
        %v2852 = vpop.permute.xlu0 %2851
        %2855 = vset.pattern.permute.xlu0 1
        %2856 = vperm.xlu0 %2855, %v2459
        %v2857 = vpop.permute.xlu0 %2856
        %2860 = vset.pattern.permute.xlu0 1
        %2861 = vperm.xlu0 %2860, %v2461
        %v2862 = vpop.permute.xlu0 %2861
        %2865 = vset.pattern.permute.xlu0 1
        %2866 = vperm.xlu0 %2865, %v2463
        %v2867 = vpop.permute.xlu0 %2866
        %2870 = vset.pattern.permute.xlu0 1
        %2871 = vperm.xlu0 %2870, %v2465
        %v2872 = vpop.permute.xlu0 %2871
        %2875 = vset.pattern.permute.xlu0 1
        %2876 = vperm.xlu0 %2875, %v2467
        %v2877 = vpop.permute.xlu0 %2876
        %2880 = vset.pattern.permute.xlu0 1
        %2881 = vperm.xlu0 %2880, %v2469
        %v2882 = vpop.permute.xlu0 %2881
        %2885 = vset.pattern.permute.xlu0 1
        %2886 = vperm.xlu0 %2885, %v2471
        %v2887 = vpop.permute.xlu0 %2886
        %2890 = vset.pattern.permute.xlu0 1
        %2891 = vperm.xlu0 %2890, %v2473
        %v2892 = vpop.permute.xlu0 %2891
        %2895 = vset.pattern.permute.xlu0 1
        %2896 = vperm.xlu0 %2895, %v2475
        %v2897 = vpop.permute.xlu0 %2896
        %2900 = vset.pattern.permute.xlu0 1
        %2901 = vperm.xlu0 %2900, %v2477
        %v2902 = vpop.permute.xlu0 %2901
        %2905 = vset.pattern.permute.xlu0 1
        %2906 = vperm.xlu0 %2905, %v2479
        %v2907 = vpop.permute.xlu0 %2906
        %2910 = vset.pattern.permute.xlu0 1
        %2911 = vperm.xlu0 %2910, %v2481
        %v2912 = vpop.permute.xlu0 %2911
        %2915 = vset.pattern.permute.xlu0 1
        %2916 = vperm.xlu0 %2915, %v2483
        %v2917 = vpop.permute.xlu0 %2916
        %2920 = vset.pattern.permute.xlu0 1
        %2921 = vperm.xlu0 %2920, %v2485
        %v2922 = vpop.permute.xlu0 %2921
        %2925 = vset.pattern.permute.xlu0 1
        %2926 = vperm.xlu0 %2925, %v2487
        %v2927 = vpop.permute.xlu0 %2926
        %v2929 = vmul.f32 %v2852, %v2833
        %v2930 = vmul.f32 %v2857, %v2834
        %v2931 = vmul.f32 %v2862, %v2835
        %v2932 = vmul.f32 %v2867, %v2836
        %v2933 = vmul.f32 %v2872, %v2837
        %v2934 = vmul.f32 %v2877, %v2838
        %v2935 = vmul.f32 %v2882, %v2839
        %v2936 = vmul.f32 %v2887, %v2840
        %v2937 = vmul.f32 %v2892, %v2841
        %v2938 = vmul.f32 %v2897, %v2842
        %v2939 = vmul.f32 %v2902, %v2843
        %v2940 = vmul.f32 %v2907, %v2844
        %v2941 = vmul.f32 %v2912, %v2845
        %v2942 = vmul.f32 %v2917, %v2846
        %v2943 = vmul.f32 %v2922, %v2847
        %v2944 = vmul.f32 %v2927, %v2848
        %2961 = vrot.lane.b32.xlu0 %v2771, 16
        %v2962 = vpop.permute.xlu0 %2961
        %2963 = vrot.lane.b32.xlu0 %v2774, 16
        %v2964 = vpop.permute.xlu0 %2963
        %2965 = vrot.lane.b32.xlu0 %v2779, 16
        %v2966 = vpop.permute.xlu0 %2965
        %2967 = vrot.lane.b32.xlu0 %v2782, 16
        %v2968 = vpop.permute.xlu0 %2967
        %2969 = vrot.lane.b32.xlu0 %v2787, 16
        %v2970 = vpop.permute.xlu0 %2969
        %2971 = vrot.lane.b32.xlu0 %v2790, 16
        %v2972 = vpop.permute.xlu0 %2971
        %2973 = vrot.lane.b32.xlu0 %v2795, 16
        %v2974 = vpop.permute.xlu0 %2973
        %2975 = vrot.lane.b32.xlu0 %v2798, 16
        %v2976 = vpop.permute.xlu0 %2975
        %2977 = vrot.lane.b32.xlu0 %v2803, 16
        %v2978 = vpop.permute.xlu0 %2977
        %2979 = vrot.lane.b32.xlu0 %v2806, 16
        %v2980 = vpop.permute.xlu0 %2979
        %2981 = vrot.lane.b32.xlu0 %v2811, 16
        %v2982 = vpop.permute.xlu0 %2981
        %2983 = vrot.lane.b32.xlu0 %v2814, 16
        %v2984 = vpop.permute.xlu0 %2983
        %2985 = vrot.lane.b32.xlu0 %v2819, 16
        %v2986 = vpop.permute.xlu0 %2985
        %2987 = vrot.lane.b32.xlu0 %v2822, 16
        %v2988 = vpop.permute.xlu0 %2987
        %2989 = vrot.lane.b32.xlu0 %v2827, 16
        %v2990 = vpop.permute.xlu0 %2989
        %2991 = vrot.lane.b32.xlu0 %v2830, 16
        %v2992 = vpop.permute.xlu0 %2991
        %v3009 = vadd.f32 %v2929, %v2962
        %v3010 = vadd.f32 %v2930, %v2964
        %v3011 = vadd.f32 %v2931, %v2966
        %v3012 = vadd.f32 %v2932, %v2968
        %v3013 = vadd.f32 %v2933, %v2970
        %v3014 = vadd.f32 %v2934, %v2972
        %v3015 = vadd.f32 %v2935, %v2974
        %v3016 = vadd.f32 %v2936, %v2976
        %v3017 = vadd.f32 %v2937, %v2978
        %v3018 = vadd.f32 %v2938, %v2980
        %v3019 = vadd.f32 %v2939, %v2982
        %v3020 = vadd.f32 %v2940, %v2984
        %v3021 = vadd.f32 %v2941, %v2986
        %v3022 = vadd.f32 %v2942, %v2988
        %v3023 = vadd.f32 %v2943, %v2990
        %v3024 = vadd.f32 %v2944, %v2992
        %vm3025 = vcmask 261248
        %3026 = vst.msk [vmem:[#allocation5] sm:$0xff] %vm3025, %v3009
        %3027 = vst.msk [vmem:[#allocation5 + $0x8] sm:$0xff] %vm3025, %v3010
        %3028 = vst.msk [vmem:[#allocation5 + $0x10] sm:$0xff] %vm3025, %v3011
        %3029 = vst.msk [vmem:[#allocation5 + $0x18] sm:$0xff] %vm3025, %v3012
        %3030 = vst.msk [vmem:[#allocation5 + $0x20] sm:$0xff] %vm3025, %v3013
        %3031 = vst.msk [vmem:[#allocation5 + $0x28] sm:$0xff] %vm3025, %v3014
        %3032 = vst.msk [vmem:[#allocation5 + $0x30] sm:$0xff] %vm3025, %v3015
        %3033 = vst.msk [vmem:[#allocation5 + $0x38] sm:$0xff] %vm3025, %v3016
        %3034 = vst.msk [vmem:[#allocation5 + $0x40] sm:$0xff] %vm3025, %v3017
        %3035 = vst.msk [vmem:[#allocation5 + $0x48] sm:$0xff] %vm3025, %v3018
        %3036 = vst.msk [vmem:[#allocation5 + $0x50] sm:$0xff] %vm3025, %v3019
        %3037 = vst.msk [vmem:[#allocation5 + $0x58] sm:$0xff] %vm3025, %v3020
        %3038 = vst.msk [vmem:[#allocation5 + $0x60] sm:$0xff] %vm3025, %v3021
        %3039 = vst.msk [vmem:[#allocation5 + $0x68] sm:$0xff] %vm3025, %v3022
        %3040 = vst.msk [vmem:[#allocation5 + $0x70] sm:$0xff] %vm3025, %v3023
        %3041 = vst.msk [vmem:[#allocation5 + $0x78] sm:$0xff] %vm3025, %v3024
        %vm3042 = vcmask 15368
        %3043 = vst.msk [vmem:[#allocation3] sm:$0xff] %vm3042, %v2424
        %3044 = vst.msk [vmem:[#allocation3 + $0x8] sm:$0xff] %vm3042, %v2425
        %3045 = vst.msk [vmem:[#allocation3 + $0x10] sm:$0xff] %vm3042, %v2426
        %3046 = vst.msk [vmem:[#allocation3 + $0x18] sm:$0xff] %vm3042, %v2427
        %3047 = vst.msk [vmem:[#allocation3 + $0x20] sm:$0xff] %vm3042, %v2428
        %3048 = vst.msk [vmem:[#allocation3 + $0x28] sm:$0xff] %vm3042, %v2429
        %3049 = vst.msk [vmem:[#allocation3 + $0x30] sm:$0xff] %vm3042, %v2430
        %3050 = vst.msk [vmem:[#allocation3 + $0x38] sm:$0xff] %vm3042, %v2431
        %3051 = vst.msk [vmem:[#allocation3 + $0x40] sm:$0xff] %vm3042, %v2432
        %3052 = vst.msk [vmem:[#allocation3 + $0x48] sm:$0xff] %vm3042, %v2433
        %3053 = vst.msk [vmem:[#allocation3 + $0x50] sm:$0xff] %vm3042, %v2434
        %3054 = vst.msk [vmem:[#allocation3 + $0x58] sm:$0xff] %vm3042, %v2435
        %3055 = vst.msk [vmem:[#allocation3 + $0x60] sm:$0xff] %vm3042, %v2436
        %3056 = vst.msk [vmem:[#allocation3 + $0x68] sm:$0xff] %vm3042, %v2437
        %3057 = vst.msk [vmem:[#allocation3 + $0x70] sm:$0xff] %vm3042, %v2438
        %3058 = vst.msk [vmem:[#allocation3 + $0x78] sm:$0xff] %vm3042, %v2439
        %3059 = vst.msk [vmem:[#allocation4] sm:$0xff] %vm3042, %v2680
        %3060 = vst.msk [vmem:[#allocation4 + $0x8] sm:$0xff] %vm3042, %v2681
        %3061 = vst.msk [vmem:[#allocation4 + $0x10] sm:$0xff] %vm3042, %v2682
        %3062 = vst.msk [vmem:[#allocation4 + $0x18] sm:$0xff] %vm3042, %v2683
        %3063 = vst.msk [vmem:[#allocation4 + $0x20] sm:$0xff] %vm3042, %v2684
        %3064 = vst.msk [vmem:[#allocation4 + $0x28] sm:$0xff] %vm3042, %v2685
        %3065 = vst.msk [vmem:[#allocation4 + $0x30] sm:$0xff] %vm3042, %v2686
        %3066 = vst.msk [vmem:[#allocation4 + $0x38] sm:$0xff] %vm3042, %v2687
        %3067 = vst.msk [vmem:[#allocation4 + $0x40] sm:$0xff] %vm3042, %v2688
        %3068 = vst.msk [vmem:[#allocation4 + $0x48] sm:$0xff] %vm3042, %v2689
        %3069 = vst.msk [vmem:[#allocation4 + $0x50] sm:$0xff] %vm3042, %v2690
        %3070 = vst.msk [vmem:[#allocation4 + $0x58] sm:$0xff] %vm3042, %v2691
        %3071 = vst.msk [vmem:[#allocation4 + $0x60] sm:$0xff] %vm3042, %v2692
        %3072 = vst.msk [vmem:[#allocation4 + $0x68] sm:$0xff] %vm3042, %v2693
        %3073 = vst.msk [vmem:[#allocation4 + $0x70] sm:$0xff] %vm3042, %v2694
        %3074 = vst.msk [vmem:[#allocation4 + $0x78] sm:$0xff] %vm3042, %v2695
        %3075 = vrot.lane.b32.xlu0 %v1426, 112
        %v3076 = vpop.permute.xlu0 %3075
        %3077 = vrot.lane.b32.xlu0 %v1427, 112
        %v3078 = vpop.permute.xlu0 %3077
        %3079 = vrot.lane.b32.xlu0 %v1428, 112
        %v3080 = vpop.permute.xlu0 %3079
        %3081 = vrot.lane.b32.xlu0 %v1429, 112
        %v3082 = vpop.permute.xlu0 %3081
        %3083 = vrot.lane.b32.xlu0 %v1430, 112
        %v3084 = vpop.permute.xlu0 %3083
        %3085 = vrot.lane.b32.xlu0 %v1431, 112
        %v3086 = vpop.permute.xlu0 %3085
        %3087 = vrot.lane.b32.xlu0 %v1432, 112
        %v3088 = vpop.permute.xlu0 %3087
        %3089 = vrot.lane.b32.xlu0 %v1433, 112
        %v3090 = vpop.permute.xlu0 %3089
        %3091 = vrot.lane.b32.xlu0 %v1162, 112
        %v3092 = vpop.permute.xlu0 %3091
        %3093 = vrot.lane.b32.xlu0 %v1163, 112
        %v3094 = vpop.permute.xlu0 %3093
        %3095 = vrot.lane.b32.xlu0 %v1164, 112
        %v3096 = vpop.permute.xlu0 %3095
        %3097 = vrot.lane.b32.xlu0 %v1165, 112
        %v3098 = vpop.permute.xlu0 %3097
        %3099 = vrot.lane.b32.xlu0 %v1166, 112
        %v3100 = vpop.permute.xlu0 %3099
        %3101 = vrot.lane.b32.xlu0 %v1167, 112
        %v3102 = vpop.permute.xlu0 %3101
        %3103 = vrot.lane.b32.xlu0 %v1168, 112
        %v3104 = vpop.permute.xlu0 %3103
        %3105 = vrot.lane.b32.xlu0 %v1169, 112
        %v3106 = vpop.permute.xlu0 %3105
        %v3108 = vsel %vm1434, %v3076, 0
        %v3111 = vsel %vm1434, %v3078, 0
        %v3114 = vsel %vm1434, %v3080, 0
        %v3117 = vsel %vm1434, %v3082, 0
        %v3120 = vsel %vm1434, %v3084, 0
        %v3123 = vsel %vm1434, %v3086, 0
        %v3126 = vsel %vm1434, %v3088, 0
        %v3129 = vsel %vm1434, %v3090, 0
        %v3132 = vsel %vm1434, %v3092, 0
        %v3135 = vsel %vm1434, %v3094, 0
        %v3138 = vsel %vm1434, %v3096, 0
        %v3141 = vsel %vm1434, %v3098, 0
        %v3144 = vsel %vm1434, %v3100, 0
        %v3147 = vsel %vm1434, %v3102, 0
        %v3150 = vsel %vm1434, %v3104, 0
        %v3153 = vsel %vm1434, %v3106, 0
        %3155 = vmatprep.subr.bf16.mxu0 0
        %3156 = vmatpush1.bf16.xpose.msra.mxu0 %v3132
        %3157 = vmatprep.subr.bf16.mxu0 0
        %3158 = vmatpush1.bf16.xpose.msra.mxu0 %v3135
        %3159 = vmatprep.subr.bf16.mxu0 0
        %3160 = vmatpush1.bf16.xpose.msra.mxu0 %v3138
        %3161 = vmatprep.subr.bf16.mxu0 0
        %3162 = vmatpush1.bf16.xpose.msra.mxu0 %v3141
        %3163 = vmatprep.subr.bf16.mxu0 0
        %3164 = vmatpush1.bf16.xpose.msra.mxu0 %v3144
        %3165 = vmatprep.subr.bf16.mxu0 0
        %3166 = vmatpush1.bf16.xpose.msra.mxu0 %v3147
        %3167 = vmatprep.subr.bf16.mxu0 0
        %3168 = vmatpush1.bf16.xpose.msra.mxu0 %v3150
        %3169 = vmatprep.subr.bf16.mxu0 0
        %3170 = vmatpush1.bf16.xpose.msra.mxu0 %v3153
        %3171 = vmatprep.subr.bf16.mxu0 0
        %3172 = vmatpush1.bf16.xpose.msra.mxu0 0
        %3173 = vmatprep.subr.bf16.mxu0 0
        %3174 = vmatpush1.bf16.xpose.msra.mxu0 0
        %3175 = vmatprep.subr.bf16.mxu0 0
        %3176 = vmatpush1.bf16.xpose.msra.mxu0 0
        %3177 = vmatprep.subr.bf16.mxu0 0
        %3178 = vmatpush1.bf16.xpose.msra.mxu0 0
        %3179 = vmatprep.subr.bf16.mxu0 0
        %3180 = vmatpush1.bf16.xpose.msra.mxu0 0
        %3181 = vmatprep.subr.bf16.mxu0 0
        %3182 = vmatpush1.bf16.xpose.msra.mxu0 0
        %3183 = vmatprep.subr.bf16.mxu0 0
        %3184 = vmatpush1.bf16.xpose.msra.mxu0 0
        %3185 = vmatprep.subr.bf16.mxu0 0
        %3186 = vmatpush1.bf16.xpose.msra.mxu0 0
        %3187 = vmatprep.mubr.bf16.mxu0 0
        %3188 = vmatmul.mubr.bf16.gmra.mrb[0].mxu0 %v3108
        %v3189 = vpop.f32.mrb[0].mxu0
        %v3190 = vadd.f32 %v1410, %v3189
        %v3191 = vpop.f32.mrb[0].mxu0
        %v3192 = vpop.f32.mrb[0].mxu0
        %v3193 = vadd.f32 %v1411, %v3192
        %v3194 = vpop.f32.mrb[0].mxu0
        %3195 = vmatprep.mubr.bf16.mxu0 0
        %3196 = vmatmul.mubr.bf16.gmra.mrb[0].mxu0 %v3111
        %v3197 = vpop.f32.mrb[0].mxu0
        %v3198 = vadd.f32 %v1412, %v3197
        %v3199 = vpop.f32.mrb[0].mxu0
        %v3200 = vpop.f32.mrb[0].mxu0
        %v3201 = vadd.f32 %v1413, %v3200
        %v3202 = vpop.f32.mrb[0].mxu0
        %3203 = vmatprep.mubr.bf16.mxu0 0
        %3204 = vmatmul.mubr.bf16.gmra.mrb[0].mxu0 %v3114
        %v3205 = vpop.f32.mrb[0].mxu0
        %v3206 = vadd.f32 %v1414, %v3205
        %v3207 = vpop.f32.mrb[0].mxu0
        %v3208 = vpop.f32.mrb[0].mxu0
        %v3209 = vadd.f32 %v1415, %v3208
        %v3210 = vpop.f32.mrb[0].mxu0
        %3211 = vmatprep.mubr.bf16.mxu0 0
        %3212 = vmatmul.mubr.bf16.gmra.mrb[0].mxu0 %v3117
        %v3213 = vpop.f32.mrb[0].mxu0
        %v3214 = vadd.f32 %v1416, %v3213
        %v3215 = vpop.f32.mrb[0].mxu0
        %v3216 = vpop.f32.mrb[0].mxu0
        %v3217 = vadd.f32 %v1417, %v3216
        %v3218 = vpop.f32.mrb[0].mxu0
        %3219 = vmatprep.mubr.bf16.mxu0 0
        %3220 = vmatmul.mubr.bf16.gmra.mrb[0].mxu0 %v3120
        %v3221 = vpop.f32.mrb[0].mxu0
        %v3222 = vadd.f32 %v1418, %v3221
        %v3223 = vpop.f32.mrb[0].mxu0
        %v3224 = vpop.f32.mrb[0].mxu0
        %v3225 = vadd.f32 %v1419, %v3224
        %v3226 = vpop.f32.mrb[0].mxu0
        %3227 = vmatprep.mubr.bf16.mxu0 0
        %3228 = vmatmul.mubr.bf16.gmra.mrb[0].mxu0 %v3123
        %v3229 = vpop.f32.mrb[0].mxu0
        %v3230 = vadd.f32 %v1420, %v3229
        %v3231 = vpop.f32.mrb[0].mxu0
        %v3232 = vpop.f32.mrb[0].mxu0
        %v3233 = vadd.f32 %v1421, %v3232
        %v3234 = vpop.f32.mrb[0].mxu0
        %3235 = vmatprep.mubr.bf16.mxu0 0
        %3236 = vmatmul.mubr.bf16.gmra.mrb[0].mxu0 %v3126
        %v3237 = vpop.f32.mrb[0].mxu0
        %v3238 = vadd.f32 %v1422, %v3237
        %v3239 = vpop.f32.mrb[0].mxu0
        %v3240 = vpop.f32.mrb[0].mxu0
        %v3241 = vadd.f32 %v1423, %v3240
        %v3242 = vpop.f32.mrb[0].mxu0
        %3243 = vmatprep.mubr.bf16.mxu0 0
        %3244 = vmatmul.mubr.bf16.gmra.mrb[0].mxu0 %v3129
        %v3245 = vpop.f32.mrb[0].mxu0
        %v3246 = vadd.f32 %v1424, %v3245
        %v3247 = vpop.f32.mrb[0].mxu0
        %v3248 = vpop.f32.mrb[0].mxu0
        %v3249 = vadd.f32 %v1425, %v3248
        %v3250 = vpop.f32.mrb[0].mxu0
        %3251 = vdwg.mxu0
        %v3252 = vld [vmem:[#allocation3] sm:$0xff]
        %v3253 = vld [vmem:[#allocation3 + $0x8] sm:$0xff]
        %v3254 = vld [vmem:[#allocation3 + $0x10] sm:$0xff]
        %v3255 = vld [vmem:[#allocation3 + $0x18] sm:$0xff]
        %v3256 = vld [vmem:[#allocation3 + $0x20] sm:$0xff]
        %v3257 = vld [vmem:[#allocation3 + $0x28] sm:$0xff]
        %v3258 = vld [vmem:[#allocation3 + $0x30] sm:$0xff]
        %v3259 = vld [vmem:[#allocation3 + $0x38] sm:$0xff]
        %v3260 = vld [vmem:[#allocation3 + $0x40] sm:$0xff]
        %v3261 = vld [vmem:[#allocation3 + $0x48] sm:$0xff]
        %v3262 = vld [vmem:[#allocation3 + $0x50] sm:$0xff]
        %v3263 = vld [vmem:[#allocation3 + $0x58] sm:$0xff]
        %v3264 = vld [vmem:[#allocation3 + $0x60] sm:$0xff]
        %v3265 = vld [vmem:[#allocation3 + $0x68] sm:$0xff]
        %v3266 = vld [vmem:[#allocation3 + $0x70] sm:$0xff]
        %v3267 = vld [vmem:[#allocation3 + $0x78] sm:$0xff]
        %3268 = vmax.xlane.f32.xlu0 %v3190
        %v3269 = vpop.xlane.xlu0 %3268
        %3270 = vmax.xlane.f32.xlu0 %v3193
        %v3271 = vpop.xlane.xlu0 %3270
        %3272 = vmax.xlane.f32.xlu0 %v3198
        %v3273 = vpop.xlane.xlu0 %3272
        %3274 = vmax.xlane.f32.xlu0 %v3201
        %v3275 = vpop.xlane.xlu0 %3274
        %3276 = vmax.xlane.f32.xlu0 %v3206
        %v3277 = vpop.xlane.xlu0 %3276
        %3278 = vmax.xlane.f32.xlu0 %v3209
        %v3279 = vpop.xlane.xlu0 %3278
        %3280 = vmax.xlane.f32.xlu0 %v3214
        %v3281 = vpop.xlane.xlu0 %3280
        %3282 = vmax.xlane.f32.xlu0 %v3217
        %v3283 = vpop.xlane.xlu0 %3282
        %3284 = vmax.xlane.f32.xlu0 %v3222
        %v3285 = vpop.xlane.xlu0 %3284
        %3286 = vmax.xlane.f32.xlu0 %v3225
        %v3287 = vpop.xlane.xlu0 %3286
        %3288 = vmax.xlane.f32.xlu0 %v3230
        %v3289 = vpop.xlane.xlu0 %3288
        %3290 = vmax.xlane.f32.xlu0 %v3233
        %v3291 = vpop.xlane.xlu0 %3290
        %3292 = vmax.xlane.f32.xlu0 %v3238
        %v3293 = vpop.xlane.xlu0 %3292
        %3294 = vmax.xlane.f32.xlu0 %v3241
        %v3295 = vpop.xlane.xlu0 %3294
        %3296 = vmax.xlane.f32.xlu0 %v3246
        %v3297 = vpop.xlane.xlu0 %3296
        %3298 = vmax.xlane.f32.xlu0 %v3249
        %v3299 = vpop.xlane.xlu0 %3298
        %v3300 = vmax.f32 %v3252, %v3269
        %v3301 = vmax.f32 %v3253, %v3271
        %v3302 = vmax.f32 %v3254, %v3273
        %v3303 = vmax.f32 %v3255, %v3275
        %v3304 = vmax.f32 %v3256, %v3277
        %v3305 = vmax.f32 %v3257, %v3279
        %v3306 = vmax.f32 %v3258, %v3281
        %v3307 = vmax.f32 %v3259, %v3283
        %v3308 = vmax.f32 %v3260, %v3285
        %v3309 = vmax.f32 %v3261, %v3287
        %v3310 = vmax.f32 %v3262, %v3289
        %v3311 = vmax.f32 %v3263, %v3291
        %v3312 = vmax.f32 %v3264, %v3293
        %v3313 = vmax.f32 %v3265, %v3295
        %v3314 = vmax.f32 %v3266, %v3297
        %v3315 = vmax.f32 %v3267, %v3299
        %v3316 = vsub.f32 %v3252, %v3300
        %v3317 = vsub.f32 %v3253, %v3301
        %v3318 = vsub.f32 %v3254, %v3302
        %v3319 = vsub.f32 %v3255, %v3303
        %v3320 = vsub.f32 %v3256, %v3304
        %v3321 = vsub.f32 %v3257, %v3305
        %v3322 = vsub.f32 %v3258, %v3306
        %v3323 = vsub.f32 %v3259, %v3307
        %v3324 = vsub.f32 %v3260, %v3308
        %v3325 = vsub.f32 %v3261, %v3309
        %v3326 = vsub.f32 %v3262, %v3310
        %v3327 = vsub.f32 %v3263, %v3311
        %v3328 = vsub.f32 %v3264, %v3312
        %v3329 = vsub.f32 %v3265, %v3313
        %v3330 = vsub.f32 %v3266, %v3314
        %v3331 = vsub.f32 %v3267, %v3315
        %v3332 = vmul.f32 %v3316, 1.442695
        %v3333 = vpow.pop %v3332
        %v3334 = vmul.f32 %v3317, 1.442695
        %v3335 = vpow.pop %v3334
        %v3336 = vmul.f32 %v3318, 1.442695
        %v3337 = vpow.pop %v3336
        %v3338 = vmul.f32 %v3319, 1.442695
        %v3339 = vpow.pop %v3338
        %v3340 = vmul.f32 %v3320, 1.442695
        %v3341 = vpow.pop %v3340
        %v3342 = vmul.f32 %v3321, 1.442695
        %v3343 = vpow.pop %v3342
        %v3344 = vmul.f32 %v3322, 1.442695
        %v3345 = vpow.pop %v3344
        %v3346 = vmul.f32 %v3323, 1.442695
        %v3347 = vpow.pop %v3346
        %v3348 = vmul.f32 %v3324, 1.442695
        %v3349 = vpow.pop %v3348
        %v3350 = vmul.f32 %v3325, 1.442695
        %v3351 = vpow.pop %v3350
        %v3352 = vmul.f32 %v3326, 1.442695
        %v3353 = vpow.pop %v3352
        %v3354 = vmul.f32 %v3327, 1.442695
        %v3355 = vpow.pop %v3354
        %v3356 = vmul.f32 %v3328, 1.442695
        %v3357 = vpow.pop %v3356
        %v3358 = vmul.f32 %v3329, 1.442695
        %v3359 = vpow.pop %v3358
        %v3360 = vmul.f32 %v3330, 1.442695
        %v3361 = vpow.pop %v3360
        %v3362 = vmul.f32 %v3331, 1.442695
        %v3363 = vpow.pop %v3362
        %3365 = vset.pattern.permute.xlu0 2
        %3366 = vperm.xlu0 %3365, %v3300
        %v3367 = vpop.permute.xlu0 %3366
        %3370 = vset.pattern.permute.xlu0 2
        %3371 = vperm.xlu0 %3370, %v3301
        %v3372 = vpop.permute.xlu0 %3371
        %3375 = vset.pattern.permute.xlu0 2
        %3376 = vperm.xlu0 %3375, %v3302
        %v3377 = vpop.permute.xlu0 %3376
        %3380 = vset.pattern.permute.xlu0 2
        %3381 = vperm.xlu0 %3380, %v3303
        %v3382 = vpop.permute.xlu0 %3381
        %3385 = vset.pattern.permute.xlu0 2
        %3386 = vperm.xlu0 %3385, %v3304
        %v3387 = vpop.permute.xlu0 %3386
        %3390 = vset.pattern.permute.xlu0 2
        %3391 = vperm.xlu0 %3390, %v3305
        %v3392 = vpop.permute.xlu0 %3391
        %3395 = vset.pattern.permute.xlu0 2
        %3396 = vperm.xlu0 %3395, %v3306
        %v3397 = vpop.permute.xlu0 %3396
        %3400 = vset.pattern.permute.xlu0 2
        %3401 = vperm.xlu0 %3400, %v3307
        %v3402 = vpop.permute.xlu0 %3401
        %3405 = vset.pattern.permute.xlu0 2
        %3406 = vperm.xlu0 %3405, %v3308
        %v3407 = vpop.permute.xlu0 %3406
        %3410 = vset.pattern.permute.xlu0 2
        %3411 = vperm.xlu0 %3410, %v3309
        %v3412 = vpop.permute.xlu0 %3411
        %3415 = vset.pattern.permute.xlu0 2
        %3416 = vperm.xlu0 %3415, %v3310
        %v3417 = vpop.permute.xlu0 %3416
        %3420 = vset.pattern.permute.xlu0 2
        %3421 = vperm.xlu0 %3420, %v3311
        %v3422 = vpop.permute.xlu0 %3421
        %3425 = vset.pattern.permute.xlu0 2
        %3426 = vperm.xlu0 %3425, %v3312
        %v3427 = vpop.permute.xlu0 %3426
        %3430 = vset.pattern.permute.xlu0 2
        %3431 = vperm.xlu0 %3430, %v3313
        %v3432 = vpop.permute.xlu0 %3431
        %3435 = vset.pattern.permute.xlu0 2
        %3436 = vperm.xlu0 %3435, %v3314
        %v3437 = vpop.permute.xlu0 %3436
        %3440 = vset.pattern.permute.xlu0 2
        %3441 = vperm.xlu0 %3440, %v3315
        %v3442 = vpop.permute.xlu0 %3441
        %v3444 = vsub.f32 %v3190, %v3367
        %v3445 = vsub.f32 %v3193, %v3372
        %v3446 = vsub.f32 %v3198, %v3377
        %v3447 = vsub.f32 %v3201, %v3382
        %v3448 = vsub.f32 %v3206, %v3387
        %v3449 = vsub.f32 %v3209, %v3392
        %v3450 = vsub.f32 %v3214, %v3397
        %v3451 = vsub.f32 %v3217, %v3402
        %v3452 = vsub.f32 %v3222, %v3407
        %v3453 = vsub.f32 %v3225, %v3412
        %v3454 = vsub.f32 %v3230, %v3417
        %v3455 = vsub.f32 %v3233, %v3422
        %v3456 = vsub.f32 %v3238, %v3427
        %v3457 = vsub.f32 %v3241, %v3432
        %v3458 = vsub.f32 %v3246, %v3437
        %v3459 = vsub.f32 %v3249, %v3442
        %v3460 = vmul.f32 %v3444, 1.442695
        %v3461 = vpow.pop %v3460
        %v3462 = vmul.f32 %v3445, 1.442695
        %v3463 = vpow.pop %v3462
        %v3464 = vmul.f32 %v3446, 1.442695
        %v3465 = vpow.pop %v3464
        %v3466 = vmul.f32 %v3447, 1.442695
        %v3467 = vpow.pop %v3466
        %v3468 = vmul.f32 %v3448, 1.442695
        %v3469 = vpow.pop %v3468
        %v3470 = vmul.f32 %v3449, 1.442695
        %v3471 = vpow.pop %v3470
        %v3472 = vmul.f32 %v3450, 1.442695
        %v3473 = vpow.pop %v3472
        %v3474 = vmul.f32 %v3451, 1.442695
        %v3475 = vpow.pop %v3474
        %v3476 = vmul.f32 %v3452, 1.442695
        %v3477 = vpow.pop %v3476
        %v3478 = vmul.f32 %v3453, 1.442695
        %v3479 = vpow.pop %v3478
        %v3480 = vmul.f32 %v3454, 1.442695
        %v3481 = vpow.pop %v3480
        %v3482 = vmul.f32 %v3455, 1.442695
        %v3483 = vpow.pop %v3482
        %v3484 = vmul.f32 %v3456, 1.442695
        %v3485 = vpow.pop %v3484
        %v3486 = vmul.f32 %v3457, 1.442695
        %v3487 = vpow.pop %v3486
        %v3488 = vmul.f32 %v3458, 1.442695
        %v3489 = vpow.pop %v3488
        %v3490 = vmul.f32 %v3459, 1.442695
        %v3491 = vpow.pop %v3490
        %v3492 = vld [vmem:[#allocation4] sm:$0xff]
        %v3493 = vld [vmem:[#allocation4 + $0x8] sm:$0xff]
        %v3494 = vld [vmem:[#allocation4 + $0x10] sm:$0xff]
        %v3495 = vld [vmem:[#allocation4 + $0x18] sm:$0xff]
        %v3496 = vld [vmem:[#allocation4 + $0x20] sm:$0xff]
        %v3497 = vld [vmem:[#allocation4 + $0x28] sm:$0xff]
        %v3498 = vld [vmem:[#allocation4 + $0x30] sm:$0xff]
        %v3499 = vld [vmem:[#allocation4 + $0x38] sm:$0xff]
        %v3500 = vld [vmem:[#allocation4 + $0x40] sm:$0xff]
        %v3501 = vld [vmem:[#allocation4 + $0x48] sm:$0xff]
        %v3502 = vld [vmem:[#allocation4 + $0x50] sm:$0xff]
        %v3503 = vld [vmem:[#allocation4 + $0x58] sm:$0xff]
        %v3504 = vld [vmem:[#allocation4 + $0x60] sm:$0xff]
        %v3505 = vld [vmem:[#allocation4 + $0x68] sm:$0xff]
        %v3506 = vld [vmem:[#allocation4 + $0x70] sm:$0xff]
        %v3507 = vld [vmem:[#allocation4 + $0x78] sm:$0xff]
        %v3508 = vmul.f32 %v3333, %v3492
        %v3509 = vmul.f32 %v3335, %v3493
        %v3510 = vmul.f32 %v3337, %v3494
        %v3511 = vmul.f32 %v3339, %v3495
        %v3512 = vmul.f32 %v3341, %v3496
        %v3513 = vmul.f32 %v3343, %v3497
        %v3514 = vmul.f32 %v3345, %v3498
        %v3515 = vmul.f32 %v3347, %v3499
        %v3516 = vmul.f32 %v3349, %v3500
        %v3517 = vmul.f32 %v3351, %v3501
        %v3518 = vmul.f32 %v3353, %v3502
        %v3519 = vmul.f32 %v3355, %v3503
        %v3520 = vmul.f32 %v3357, %v3504
        %v3521 = vmul.f32 %v3359, %v3505
        %v3522 = vmul.f32 %v3361, %v3506
        %v3523 = vmul.f32 %v3363, %v3507
        %3524 = vadd.xlane.f32.xlu0 %v3461
        %v3525 = vpop.xlane.xlu0 %3524
        %3526 = vadd.xlane.f32.xlu0 %v3463
        %v3527 = vpop.xlane.xlu0 %3526
        %3528 = vadd.xlane.f32.xlu0 %v3465
        %v3529 = vpop.xlane.xlu0 %3528
        %3530 = vadd.xlane.f32.xlu0 %v3467
        %v3531 = vpop.xlane.xlu0 %3530
        %3532 = vadd.xlane.f32.xlu0 %v3469
        %v3533 = vpop.xlane.xlu0 %3532
        %3534 = vadd.xlane.f32.xlu0 %v3471
        %v3535 = vpop.xlane.xlu0 %3534
        %3536 = vadd.xlane.f32.xlu0 %v3473
        %v3537 = vpop.xlane.xlu0 %3536
        %3538 = vadd.xlane.f32.xlu0 %v3475
        %v3539 = vpop.xlane.xlu0 %3538
        %3540 = vadd.xlane.f32.xlu0 %v3477
        %v3541 = vpop.xlane.xlu0 %3540
        %3542 = vadd.xlane.f32.xlu0 %v3479
        %v3543 = vpop.xlane.xlu0 %3542
        %3544 = vadd.xlane.f32.xlu0 %v3481
        %v3545 = vpop.xlane.xlu0 %3544
        %3546 = vadd.xlane.f32.xlu0 %v3483
        %v3547 = vpop.xlane.xlu0 %3546
        %3548 = vadd.xlane.f32.xlu0 %v3485
        %v3549 = vpop.xlane.xlu0 %3548
        %3550 = vadd.xlane.f32.xlu0 %v3487
        %v3551 = vpop.xlane.xlu0 %3550
        %3552 = vadd.xlane.f32.xlu0 %v3489
        %v3553 = vpop.xlane.xlu0 %3552
        %3554 = vadd.xlane.f32.xlu0 %v3491
        %v3555 = vpop.xlane.xlu0 %3554
        %v3556 = vadd.f32 %v3508, %v3525
        %v3557 = vadd.f32 %v3509, %v3527
        %v3558 = vadd.f32 %v3510, %v3529
        %v3559 = vadd.f32 %v3511, %v3531
        %v3560 = vadd.f32 %v3512, %v3533
        %v3561 = vadd.f32 %v3513, %v3535
        %v3562 = vadd.f32 %v3514, %v3537
        %v3563 = vadd.f32 %v3515, %v3539
        %v3564 = vadd.f32 %v3516, %v3541
        %v3565 = vadd.f32 %v3517, %v3543
        %v3566 = vadd.f32 %v3518, %v3545
        %v3567 = vadd.f32 %v3519, %v3547
        %v3568 = vadd.f32 %v3520, %v3549
        %v3569 = vadd.f32 %v3521, %v3551
        %v3570 = vadd.f32 %v3522, %v3553
        %v3571 = vadd.f32 %v3523, %v3555
        %v3572 = vpack.c.bf16 %v3463, %v3461
        %v3573 = vpack.c.bf16 %v3467, %v3465
        %v3574 = vpack.c.bf16 %v3471, %v3469
        %v3575 = vpack.c.bf16 %v3475, %v3473
        %v3576 = vpack.c.bf16 %v3479, %v3477
        %v3577 = vpack.c.bf16 %v3483, %v3481
        %v3578 = vpack.c.bf16 %v3487, %v3485
        %v3579 = vpack.c.bf16 %v3491, %v3489
        %3580 = vrot.lane.b32.xlu0 %v1386, 96
        %v3581 = vpop.permute.xlu0 %3580
        %3582 = vrot.lane.b32.xlu0 %v1387, 96
        %v3583 = vpop.permute.xlu0 %3582
        %3584 = vrot.lane.b32.xlu0 %v1388, 96
        %v3585 = vpop.permute.xlu0 %3584
        %3586 = vrot.lane.b32.xlu0 %v1389, 96
        %v3587 = vpop.permute.xlu0 %3586
        %3588 = vrot.lane.b32.xlu0 %v1390, 96
        %v3589 = vpop.permute.xlu0 %3588
        %3590 = vrot.lane.b32.xlu0 %v1391, 96
        %v3591 = vpop.permute.xlu0 %3590
        %3592 = vrot.lane.b32.xlu0 %v1392, 96
        %v3593 = vpop.permute.xlu0 %3592
        %3594 = vrot.lane.b32.xlu0 %v1393, 96
        %v3595 = vpop.permute.xlu0 %3594
        %3604 = vmatprep.subr.bf16.mxu0 0
        %3605 = vmatpush1.bf16.msra.mxu0 %v3581
        %3606 = vmatprep.subr.bf16.mxu0 0
        %3607 = vmatpush1.bf16.msra.mxu0 %v3583
        %3608 = vmatprep.subr.bf16.mxu0 0
        %3609 = vmatpush1.bf16.msra.mxu0 %v3585
        %3610 = vmatprep.subr.bf16.mxu0 0
        %3611 = vmatpush1.bf16.msra.mxu0 %v3587
        %3612 = vmatprep.subr.bf16.mxu0 0
        %3613 = vmatpush1.bf16.msra.mxu0 %v3589
        %3614 = vmatprep.subr.bf16.mxu0 0
        %3615 = vmatpush1.bf16.msra.mxu0 %v3591
        %3616 = vmatprep.subr.bf16.mxu0 0
        %3617 = vmatpush1.bf16.msra.mxu0 %v3593
        %3618 = vmatprep.subr.bf16.mxu0 0
        %3619 = vmatpush1.bf16.msra.mxu0 %v3595
        %3620 = vmatprep.subr.bf16.mxu0 0
        %3621 = vmatpush1.bf16.msra.mxu0 0
        %3622 = vmatprep.subr.bf16.mxu0 0
        %3623 = vmatpush1.bf16.msra.mxu0 0
        %3624 = vmatprep.subr.bf16.mxu0 0
        %3625 = vmatpush1.bf16.msra.mxu0 0
        %3626 = vmatprep.subr.bf16.mxu0 0
        %3627 = vmatpush1.bf16.msra.mxu0 0
        %3628 = vmatprep.subr.bf16.mxu0 0
        %3629 = vmatpush1.bf16.msra.mxu0 0
        %3630 = vmatprep.subr.bf16.mxu0 0
        %3631 = vmatpush1.bf16.msra.mxu0 0
        %3632 = vmatprep.subr.bf16.mxu0 0
        %3633 = vmatpush1.bf16.msra.mxu0 0
        %3634 = vmatprep.subr.bf16.mxu0 0
        %3635 = vmatpush1.bf16.msra.mxu0 0
        %3636 = vmatprep.mubr.bf16.mxu0 0
        %3637 = vmatmul.mubr.bf16.gmra.mrb[0].mxu0 %v3572
        %v3638 = vpop.f32.mrb[0].mxu0
        %v3639 = vadd.f32 0.0, %v3638
        %v3640 = vpop.f32.mrb[0].mxu0
        %v3641 = vpop.f32.mrb[0].mxu0
        %v3642 = vadd.f32 0.0, %v3641
        %v3643 = vpop.f32.mrb[0].mxu0
        %3644 = vmatprep.mubr.bf16.mxu0 0
        %3645 = vmatmul.mubr.bf16.gmra.mrb[0].mxu0 %v3573
        %v3646 = vpop.f32.mrb[0].mxu0
        %v3647 = vadd.f32 0.0, %v3646
        %v3648 = vpop.f32.mrb[0].mxu0
        %v3649 = vpop.f32.mrb[0].mxu0
        %v3650 = vadd.f32 0.0, %v3649
        %v3651 = vpop.f32.mrb[0].mxu0
        %3652 = vmatprep.mubr.bf16.mxu0 0
        %3653 = vmatmul.mubr.bf16.gmra.mrb[0].mxu0 %v3574
        %v3654 = vpop.f32.mrb[0].mxu0
        %v3655 = vadd.f32 0.0, %v3654
        %v3656 = vpop.f32.mrb[0].mxu0
        %v3657 = vpop.f32.mrb[0].mxu0
        %v3658 = vadd.f32 0.0, %v3657
        %v3659 = vpop.f32.mrb[0].mxu0
        %3660 = vmatprep.mubr.bf16.mxu0 0
        %3661 = vmatmul.mubr.bf16.gmra.mrb[0].mxu0 %v3575
        %v3662 = vpop.f32.mrb[0].mxu0
        %v3663 = vadd.f32 0.0, %v3662
        %v3664 = vpop.f32.mrb[0].mxu0
        %v3665 = vpop.f32.mrb[0].mxu0
        %v3666 = vadd.f32 0.0, %v3665
        %v3667 = vpop.f32.mrb[0].mxu0
        %3668 = vmatprep.mubr.bf16.mxu0 0
        %3669 = vmatmul.mubr.bf16.gmra.mrb[0].mxu0 %v3576
        %v3670 = vpop.f32.mrb[0].mxu0
        %v3671 = vadd.f32 0.0, %v3670
        %v3672 = vpop.f32.mrb[0].mxu0
        %v3673 = vpop.f32.mrb[0].mxu0
        %v3674 = vadd.f32 0.0, %v3673
        %v3675 = vpop.f32.mrb[0].mxu0
        %3676 = vmatprep.mubr.bf16.mxu0 0
        %3677 = vmatmul.mubr.bf16.gmra.mrb[0].mxu0 %v3577
        %v3678 = vpop.f32.mrb[0].mxu0
        %v3679 = vadd.f32 0.0, %v3678
        %v3680 = vpop.f32.mrb[0].mxu0
        %v3681 = vpop.f32.mrb[0].mxu0
        %v3682 = vadd.f32 0.0, %v3681
        %v3683 = vpop.f32.mrb[0].mxu0
        %3684 = vmatprep.mubr.bf16.mxu0 0
        %3685 = vmatmul.mubr.bf16.gmra.mrb[0].mxu0 %v3578
        %v3686 = vpop.f32.mrb[0].mxu0
        %v3687 = vadd.f32 0.0, %v3686
        %v3688 = vpop.f32.mrb[0].mxu0
        %v3689 = vpop.f32.mrb[0].mxu0
        %v3690 = vadd.f32 0.0, %v3689
        %v3691 = vpop.f32.mrb[0].mxu0
        %3692 = vmatprep.mubr.bf16.mxu0 0
        %3693 = vmatmul.mubr.bf16.gmra.mrb[0].mxu0 %v3579
        %v3694 = vpop.f32.mrb[0].mxu0
        %v3695 = vadd.f32 0.0, %v3694
        %v3696 = vpop.f32.mrb[0].mxu0
        %v3697 = vpop.f32.mrb[0].mxu0
        %v3698 = vadd.f32 0.0, %v3697
        %v3699 = vpop.f32.mrb[0].mxu0
        %3700 = vdwg.mxu0
        %v3701 = vld [vmem:[#allocation5] sm:$0xff]
        %v3702 = vld [vmem:[#allocation5 + $0x8] sm:$0xff]
        %v3703 = vld [vmem:[#allocation5 + $0x10] sm:$0xff]
        %v3704 = vld [vmem:[#allocation5 + $0x18] sm:$0xff]
        %v3705 = vld [vmem:[#allocation5 + $0x20] sm:$0xff]
        %v3706 = vld [vmem:[#allocation5 + $0x28] sm:$0xff]
        %v3707 = vld [vmem:[#allocation5 + $0x30] sm:$0xff]
        %v3708 = vld [vmem:[#allocation5 + $0x38] sm:$0xff]
        %v3709 = vld [vmem:[#allocation5 + $0x40] sm:$0xff]
        %v3710 = vld [vmem:[#allocation5 + $0x48] sm:$0xff]
        %v3711 = vld [vmem:[#allocation5 + $0x50] sm:$0xff]
        %v3712 = vld [vmem:[#allocation5 + $0x58] sm:$0xff]
        %v3713 = vld [vmem:[#allocation5 + $0x60] sm:$0xff]
        %v3714 = vld [vmem:[#allocation5 + $0x68] sm:$0xff]
        %v3715 = vld [vmem:[#allocation5 + $0x70] sm:$0xff]
        %v3716 = vld [vmem:[#allocation5 + $0x78] sm:$0xff]
        %3718 = vset.pattern.permute.xlu0 2
        %3719 = vperm.xlu0 %3718, %v3333
        %v3720 = vpop.permute.xlu0 %3719
        %3723 = vset.pattern.permute.xlu0 2
        %3724 = vperm.xlu0 %3723, %v3335
        %v3725 = vpop.permute.xlu0 %3724
        %3728 = vset.pattern.permute.xlu0 2
        %3729 = vperm.xlu0 %3728, %v3337
        %v3730 = vpop.permute.xlu0 %3729
        %3733 = vset.pattern.permute.xlu0 2
        %3734 = vperm.xlu0 %3733, %v3339
        %v3735 = vpop.permute.xlu0 %3734
        %3738 = vset.pattern.permute.xlu0 2
        %3739 = vperm.xlu0 %3738, %v3341
        %v3740 = vpop.permute.xlu0 %3739
        %3743 = vset.pattern.permute.xlu0 2
        %3744 = vperm.xlu0 %3743, %v3343
        %v3745 = vpop.permute.xlu0 %3744
        %3748 = vset.pattern.permute.xlu0 2
        %3749 = vperm.xlu0 %3748, %v3345
        %v3750 = vpop.permute.xlu0 %3749
        %3753 = vset.pattern.permute.xlu0 2
        %3754 = vperm.xlu0 %3753, %v3347
        %v3755 = vpop.permute.xlu0 %3754
        %3758 = vset.pattern.permute.xlu0 2
        %3759 = vperm.xlu0 %3758, %v3349
        %v3760 = vpop.permute.xlu0 %3759
        %3763 = vset.pattern.permute.xlu0 2
        %3764 = vperm.xlu0 %3763, %v3351
        %v3765 = vpop.permute.xlu0 %3764
        %3768 = vset.pattern.permute.xlu0 2
        %3769 = vperm.xlu0 %3768, %v3353
        %v3770 = vpop.permute.xlu0 %3769
        %3773 = vset.pattern.permute.xlu0 2
        %3774 = vperm.xlu0 %3773, %v3355
        %v3775 = vpop.permute.xlu0 %3774
        %3778 = vset.pattern.permute.xlu0 2
        %3779 = vperm.xlu0 %3778, %v3357
        %v3780 = vpop.permute.xlu0 %3779
        %3783 = vset.pattern.permute.xlu0 2
        %3784 = vperm.xlu0 %3783, %v3359
        %v3785 = vpop.permute.xlu0 %3784
        %3788 = vset.pattern.permute.xlu0 2
        %3789 = vperm.xlu0 %3788, %v3361
        %v3790 = vpop.permute.xlu0 %3789
        %3793 = vset.pattern.permute.xlu0 2
        %3794 = vperm.xlu0 %3793, %v3363
        %v3795 = vpop.permute.xlu0 %3794
        %v3797 = vmul.f32 %v3720, %v3701
        %v3798 = vmul.f32 %v3725, %v3702
        %v3799 = vmul.f32 %v3730, %v3703
        %v3800 = vmul.f32 %v3735, %v3704
        %v3801 = vmul.f32 %v3740, %v3705
        %v3802 = vmul.f32 %v3745, %v3706
        %v3803 = vmul.f32 %v3750, %v3707
        %v3804 = vmul.f32 %v3755, %v3708
        %v3805 = vmul.f32 %v3760, %v3709
        %v3806 = vmul.f32 %v3765, %v3710
        %v3807 = vmul.f32 %v3770, %v3711
        %v3808 = vmul.f32 %v3775, %v3712
        %v3809 = vmul.f32 %v3780, %v3713
        %v3810 = vmul.f32 %v3785, %v3714
        %v3811 = vmul.f32 %v3790, %v3715
        %v3812 = vmul.f32 %v3795, %v3716
        %3829 = vrot.lane.b32.xlu0 %v3639, 32
        %v3830 = vpop.permute.xlu0 %3829
        %3831 = vrot.lane.b32.xlu0 %v3642, 32
        %v3832 = vpop.permute.xlu0 %3831
        %3833 = vrot.lane.b32.xlu0 %v3647, 32
        %v3834 = vpop.permute.xlu0 %3833
        %3835 = vrot.lane.b32.xlu0 %v3650, 32
        %v3836 = vpop.permute.xlu0 %3835
        %3837 = vrot.lane.b32.xlu0 %v3655, 32
        %v3838 = vpop.permute.xlu0 %3837
        %3839 = vrot.lane.b32.xlu0 %v3658, 32
        %v3840 = vpop.permute.xlu0 %3839
        %3841 = vrot.lane.b32.xlu0 %v3663, 32
        %v3842 = vpop.permute.xlu0 %3841
        %3843 = vrot.lane.b32.xlu0 %v3666, 32
        %v3844 = vpop.permute.xlu0 %3843
        %3845 = vrot.lane.b32.xlu0 %v3671, 32
        %v3846 = vpop.permute.xlu0 %3845
        %3847 = vrot.lane.b32.xlu0 %v3674, 32
        %v3848 = vpop.permute.xlu0 %3847
        %3849 = vrot.lane.b32.xlu0 %v3679, 32
        %v3850 = vpop.permute.xlu0 %3849
        %3851 = vrot.lane.b32.xlu0 %v3682, 32
        %v3852 = vpop.permute.xlu0 %3851
        %3853 = vrot.lane.b32.xlu0 %v3687, 32
        %v3854 = vpop.permute.xlu0 %3853
        %3855 = vrot.lane.b32.xlu0 %v3690, 32
        %v3856 = vpop.permute.xlu0 %3855
        %3857 = vrot.lane.b32.xlu0 %v3695, 32
        %v3858 = vpop.permute.xlu0 %3857
        %3859 = vrot.lane.b32.xlu0 %v3698, 32
        %v3860 = vpop.permute.xlu0 %3859
        %v3877 = vadd.f32 %v3797, %v3830
        %v3878 = vadd.f32 %v3798, %v3832
        %v3879 = vadd.f32 %v3799, %v3834
        %v3880 = vadd.f32 %v3800, %v3836
        %v3881 = vadd.f32 %v3801, %v3838
        %v3882 = vadd.f32 %v3802, %v3840
        %v3883 = vadd.f32 %v3803, %v3842
        %v3884 = vadd.f32 %v3804, %v3844
        %v3885 = vadd.f32 %v3805, %v3846
        %v3886 = vadd.f32 %v3806, %v3848
        %v3887 = vadd.f32 %v3807, %v3850
        %v3888 = vadd.f32 %v3808, %v3852
        %v3889 = vadd.f32 %v3809, %v3854
        %v3890 = vadd.f32 %v3810, %v3856
        %v3891 = vadd.f32 %v3811, %v3858
        %v3892 = vadd.f32 %v3812, %v3860
        %vm3893 = vcmask 392448
        %3894 = vst.msk [vmem:[#allocation5] sm:$0xff] %vm3893, %v3877
        %3895 = vst.msk [vmem:[#allocation5 + $0x8] sm:$0xff] %vm3893, %v3878
        %3896 = vst.msk [vmem:[#allocation5 + $0x10] sm:$0xff] %vm3893, %v3879
        %3897 = vst.msk [vmem:[#allocation5 + $0x18] sm:$0xff] %vm3893, %v3880
        %3898 = vst.msk [vmem:[#allocation5 + $0x20] sm:$0xff] %vm3893, %v3881
        %3899 = vst.msk [vmem:[#allocation5 + $0x28] sm:$0xff] %vm3893, %v3882
        %3900 = vst.msk [vmem:[#allocation5 + $0x30] sm:$0xff] %vm3893, %v3883
        %3901 = vst.msk [vmem:[#allocation5 + $0x38] sm:$0xff] %vm3893, %v3884
        %3902 = vst.msk [vmem:[#allocation5 + $0x40] sm:$0xff] %vm3893, %v3885
        %3903 = vst.msk [vmem:[#allocation5 + $0x48] sm:$0xff] %vm3893, %v3886
        %3904 = vst.msk [vmem:[#allocation5 + $0x50] sm:$0xff] %vm3893, %v3887
        %3905 = vst.msk [vmem:[#allocation5 + $0x58] sm:$0xff] %vm3893, %v3888
        %3906 = vst.msk [vmem:[#allocation5 + $0x60] sm:$0xff] %vm3893, %v3889
        %3907 = vst.msk [vmem:[#allocation5 + $0x68] sm:$0xff] %vm3893, %v3890
        %3908 = vst.msk [vmem:[#allocation5 + $0x70] sm:$0xff] %vm3893, %v3891
        %3909 = vst.msk [vmem:[#allocation5 + $0x78] sm:$0xff] %vm3893, %v3892
        %vm3910 = vcmask 23568
        %3911 = vst.msk [vmem:[#allocation3] sm:$0xff] %vm3910, %v3300
        %3912 = vst.msk [vmem:[#allocation3 + $0x8] sm:$0xff] %vm3910, %v3301
        %3913 = vst.msk [vmem:[#allocation3 + $0x10] sm:$0xff] %vm3910, %v3302
        %3914 = vst.msk [vmem:[#allocation3 + $0x18] sm:$0xff] %vm3910, %v3303
        %3915 = vst.msk [vmem:[#allocation3 + $0x20] sm:$0xff] %vm3910, %v3304
        %3916 = vst.msk [vmem:[#allocation3 + $0x28] sm:$0xff] %vm3910, %v3305
        %3917 = vst.msk [vmem:[#allocation3 + $0x30] sm:$0xff] %vm3910, %v3306
        %3918 = vst.msk [vmem:[#allocation3 + $0x38] sm:$0xff] %vm3910, %v3307
        %3919 = vst.msk [vmem:[#allocation3 + $0x40] sm:$0xff] %vm3910, %v3308
        %3920 = vst.msk [vmem:[#allocation3 + $0x48] sm:$0xff] %vm3910, %v3309
        %3921 = vst.msk [vmem:[#allocation3 + $0x50] sm:$0xff] %vm3910, %v3310
        %3922 = vst.msk [vmem:[#allocation3 + $0x58] sm:$0xff] %vm3910, %v3311
        %3923 = vst.msk [vmem:[#allocation3 + $0x60] sm:$0xff] %vm3910, %v3312
        %3924 = vst.msk [vmem:[#allocation3 + $0x68] sm:$0xff] %vm3910, %v3313
        %3925 = vst.msk [vmem:[#allocation3 + $0x70] sm:$0xff] %vm3910, %v3314
        %3926 = vst.msk [vmem:[#allocation3 + $0x78] sm:$0xff] %vm3910, %v3315
        %3927 = vst.msk [vmem:[#allocation4] sm:$0xff] %vm3910, %v3556
        %3928 = vst.msk [vmem:[#allocation4 + $0x8] sm:$0xff] %vm3910, %v3557
        %3929 = vst.msk [vmem:[#allocation4 + $0x10] sm:$0xff] %vm3910, %v3558
        %3930 = vst.msk [vmem:[#allocation4 + $0x18] sm:$0xff] %vm3910, %v3559
        %3931 = vst.msk [vmem:[#allocation4 + $0x20] sm:$0xff] %vm3910, %v3560
        %3932 = vst.msk [vmem:[#allocation4 + $0x28] sm:$0xff] %vm3910, %v3561
        %3933 = vst.msk [vmem:[#allocation4 + $0x30] sm:$0xff] %vm3910, %v3562
        %3934 = vst.msk [vmem:[#allocation4 + $0x38] sm:$0xff] %vm3910, %v3563
        %3935 = vst.msk [vmem:[#allocation4 + $0x40] sm:$0xff] %vm3910, %v3564
        %3936 = vst.msk [vmem:[#allocation4 + $0x48] sm:$0xff] %vm3910, %v3565
        %3937 = vst.msk [vmem:[#allocation4 + $0x50] sm:$0xff] %vm3910, %v3566
        %3938 = vst.msk [vmem:[#allocation4 + $0x58] sm:$0xff] %vm3910, %v3567
        %3939 = vst.msk [vmem:[#allocation4 + $0x60] sm:$0xff] %vm3910, %v3568
        %3940 = vst.msk [vmem:[#allocation4 + $0x68] sm:$0xff] %vm3910, %v3569
        %3941 = vst.msk [vmem:[#allocation4 + $0x70] sm:$0xff] %vm3910, %v3570
        %3942 = vst.msk [vmem:[#allocation4 + $0x78] sm:$0xff] %vm3910, %v3571
        %3943 = vrot.lane.b32.xlu0 %v1426, 104
        %v3944 = vpop.permute.xlu0 %3943
        %3945 = vrot.lane.b32.xlu0 %v1427, 104
        %v3946 = vpop.permute.xlu0 %3945
        %3947 = vrot.lane.b32.xlu0 %v1428, 104
        %v3948 = vpop.permute.xlu0 %3947
        %3949 = vrot.lane.b32.xlu0 %v1429, 104
        %v3950 = vpop.permute.xlu0 %3949
        %3951 = vrot.lane.b32.xlu0 %v1430, 104
        %v3952 = vpop.permute.xlu0 %3951
        %3953 = vrot.lane.b32.xlu0 %v1431, 104
        %v3954 = vpop.permute.xlu0 %3953
        %3955 = vrot.lane.b32.xlu0 %v1432, 104
        %v3956 = vpop.permute.xlu0 %3955
        %3957 = vrot.lane.b32.xlu0 %v1433, 104
        %v3958 = vpop.permute.xlu0 %3957
        %3959 = vrot.lane.b32.xlu0 %v1162, 104
        %v3960 = vpop.permute.xlu0 %3959
        %3961 = vrot.lane.b32.xlu0 %v1163, 104
        %v3962 = vpop.permute.xlu0 %3961
        %3963 = vrot.lane.b32.xlu0 %v1164, 104
        %v3964 = vpop.permute.xlu0 %3963
        %3965 = vrot.lane.b32.xlu0 %v1165, 104
        %v3966 = vpop.permute.xlu0 %3965
        %3967 = vrot.lane.b32.xlu0 %v1166, 104
        %v3968 = vpop.permute.xlu0 %3967
        %3969 = vrot.lane.b32.xlu0 %v1167, 104
        %v3970 = vpop.permute.xlu0 %3969
        %3971 = vrot.lane.b32.xlu0 %v1168, 104
        %v3972 = vpop.permute.xlu0 %3971
        %3973 = vrot.lane.b32.xlu0 %v1169, 104
        %v3974 = vpop.permute.xlu0 %3973
        %v3976 = vsel %vm1434, %v3944, 0
        %v3979 = vsel %vm1434, %v3946, 0
        %v3982 = vsel %vm1434, %v3948, 0
        %v3985 = vsel %vm1434, %v3950, 0
        %v3988 = vsel %vm1434, %v3952, 0
        %v3991 = vsel %vm1434, %v3954, 0
        %v3994 = vsel %vm1434, %v3956, 0
        %v3997 = vsel %vm1434, %v3958, 0
        %v4000 = vsel %vm1434, %v3960, 0
        %v4003 = vsel %vm1434, %v3962, 0
        %v4006 = vsel %vm1434, %v3964, 0
        %v4009 = vsel %vm1434, %v3966, 0
        %v4012 = vsel %vm1434, %v3968, 0
        %v4015 = vsel %vm1434, %v3970, 0
        %v4018 = vsel %vm1434, %v3972, 0
        %v4021 = vsel %vm1434, %v3974, 0
        %4023 = vmatprep.subr.bf16.mxu0 0
        %4024 = vmatpush1.bf16.xpose.msra.mxu0 %v4000
        %4025 = vmatprep.subr.bf16.mxu0 0
        %4026 = vmatpush1.bf16.xpose.msra.mxu0 %v4003
        %4027 = vmatprep.subr.bf16.mxu0 0
        %4028 = vmatpush1.bf16.xpose.msra.mxu0 %v4006
        %4029 = vmatprep.subr.bf16.mxu0 0
        %4030 = vmatpush1.bf16.xpose.msra.mxu0 %v4009
        %4031 = vmatprep.subr.bf16.mxu0 0
        %4032 = vmatpush1.bf16.xpose.msra.mxu0 %v4012
        %4033 = vmatprep.subr.bf16.mxu0 0
        %4034 = vmatpush1.bf16.xpose.msra.mxu0 %v4015
        %4035 = vmatprep.subr.bf16.mxu0 0
        %4036 = vmatpush1.bf16.xpose.msra.mxu0 %v4018
        %4037 = vmatprep.subr.bf16.mxu0 0
        %4038 = vmatpush1.bf16.xpose.msra.mxu0 %v4021
        %4039 = vmatprep.subr.bf16.mxu0 0
        %4040 = vmatpush1.bf16.xpose.msra.mxu0 0
        %4041 = vmatprep.subr.bf16.mxu0 0
        %4042 = vmatpush1.bf16.xpose.msra.mxu0 0
        %4043 = vmatprep.subr.bf16.mxu0 0
        %4044 = vmatpush1.bf16.xpose.msra.mxu0 0
        %4045 = vmatprep.subr.bf16.mxu0 0
        %4046 = vmatpush1.bf16.xpose.msra.mxu0 0
        %4047 = vmatprep.subr.bf16.mxu0 0
        %4048 = vmatpush1.bf16.xpose.msra.mxu0 0
        %4049 = vmatprep.subr.bf16.mxu0 0
        %4050 = vmatpush1.bf16.xpose.msra.mxu0 0
        %4051 = vmatprep.subr.bf16.mxu0 0
        %4052 = vmatpush1.bf16.xpose.msra.mxu0 0
        %4053 = vmatprep.subr.bf16.mxu0 0
        %4054 = vmatpush1.bf16.xpose.msra.mxu0 0
        %4055 = vmatprep.mubr.bf16.mxu0 0
        %4056 = vmatmul.mubr.bf16.gmra.mrb[0].mxu0 %v3976
        %v4057 = vpop.f32.mrb[0].mxu0
        %v4058 = vadd.f32 %v1410, %v4057
        %v4059 = vpop.f32.mrb[0].mxu0
        %v4060 = vpop.f32.mrb[0].mxu0
        %v4061 = vadd.f32 %v1411, %v4060
        %v4062 = vpop.f32.mrb[0].mxu0
        %4063 = vmatprep.mubr.bf16.mxu0 0
        %4064 = vmatmul.mubr.bf16.gmra.mrb[0].mxu0 %v3979
        %v4065 = vpop.f32.mrb[0].mxu0
        %v4066 = vadd.f32 %v1412, %v4065
        %v4067 = vpop.f32.mrb[0].mxu0
        %v4068 = vpop.f32.mrb[0].mxu0
        %v4069 = vadd.f32 %v1413, %v4068
        %v4070 = vpop.f32.mrb[0].mxu0
        %4071 = vmatprep.mubr.bf16.mxu0 0
        %4072 = vmatmul.mubr.bf16.gmra.mrb[0].mxu0 %v3982
        %v4073 = vpop.f32.mrb[0].mxu0
        %v4074 = vadd.f32 %v1414, %v4073
        %v4075 = vpop.f32.mrb[0].mxu0
        %v4076 = vpop.f32.mrb[0].mxu0
        %v4077 = vadd.f32 %v1415, %v4076
        %v4078 = vpop.f32.mrb[0].mxu0
        %4079 = vmatprep.mubr.bf16.mxu0 0
        %4080 = vmatmul.mubr.bf16.gmra.mrb[0].mxu0 %v3985
        %v4081 = vpop.f32.mrb[0].mxu0
        %v4082 = vadd.f32 %v1416, %v4081
        %v4083 = vpop.f32.mrb[0].mxu0
        %v4084 = vpop.f32.mrb[0].mxu0
        %v4085 = vadd.f32 %v1417, %v4084
        %v4086 = vpop.f32.mrb[0].mxu0
        %4087 = vmatprep.mubr.bf16.mxu0 0
        %4088 = vmatmul.mubr.bf16.gmra.mrb[0].mxu0 %v3988
        %v4089 = vpop.f32.mrb[0].mxu0
        %v4090 = vadd.f32 %v1418, %v4089
        %v4091 = vpop.f32.mrb[0].mxu0
        %v4092 = vpop.f32.mrb[0].mxu0
        %v4093 = vadd.f32 %v1419, %v4092
        %v4094 = vpop.f32.mrb[0].mxu0
        %4095 = vmatprep.mubr.bf16.mxu0 0
        %4096 = vmatmul.mubr.bf16.gmra.mrb[0].mxu0 %v3991
        %v4097 = vpop.f32.mrb[0].mxu0
        %v4098 = vadd.f32 %v1420, %v4097
        %v4099 = vpop.f32.mrb[0].mxu0
        %v4100 = vpop.f32.mrb[0].mxu0
        %v4101 = vadd.f32 %v1421, %v4100
        %v4102 = vpop.f32.mrb[0].mxu0
        %4103 = vmatprep.mubr.bf16.mxu0 0
        %4104 = vmatmul.mubr.bf16.gmra.mrb[0].mxu0 %v3994
        %v4105 = vpop.f32.mrb[0].mxu0
        %v4106 = vadd.f32 %v1422, %v4105
        %v4107 = vpop.f32.mrb[0].mxu0
        %v4108 = vpop.f32.mrb[0].mxu0
        %v4109 = vadd.f32 %v1423, %v4108
        %v4110 = vpop.f32.mrb[0].mxu0
        %4111 = vmatprep.mubr.bf16.mxu0 0
        %4112 = vmatmul.mubr.bf16.gmra.mrb[0].mxu0 %v3997
        %v4113 = vpop.f32.mrb[0].mxu0
        %v4114 = vadd.f32 %v1424, %v4113
        %v4115 = vpop.f32.mrb[0].mxu0
        %v4116 = vpop.f32.mrb[0].mxu0
        %v4117 = vadd.f32 %v1425, %v4116
        %v4118 = vpop.f32.mrb[0].mxu0
        %4119 = vdwg.mxu0
        %v4120 = vld [vmem:[#allocation3] sm:$0xff]
        %v4121 = vld [vmem:[#allocation3 + $0x8] sm:$0xff]
        %v4122 = vld [vmem:[#allocation3 + $0x10] sm:$0xff]
        %v4123 = vld [vmem:[#allocation3 + $0x18] sm:$0xff]
        %v4124 = vld [vmem:[#allocation3 + $0x20] sm:$0xff]
        %v4125 = vld [vmem:[#allocation3 + $0x28] sm:$0xff]
        %v4126 = vld [vmem:[#allocation3 + $0x30] sm:$0xff]
        %v4127 = vld [vmem:[#allocation3 + $0x38] sm:$0xff]
        %v4128 = vld [vmem:[#allocation3 + $0x40] sm:$0xff]
        %v4129 = vld [vmem:[#allocation3 + $0x48] sm:$0xff]
        %v4130 = vld [vmem:[#allocation3 + $0x50] sm:$0xff]
        %v4131 = vld [vmem:[#allocation3 + $0x58] sm:$0xff]
        %v4132 = vld [vmem:[#allocation3 + $0x60] sm:$0xff]
        %v4133 = vld [vmem:[#allocation3 + $0x68] sm:$0xff]
        %v4134 = vld [vmem:[#allocation3 + $0x70] sm:$0xff]
        %v4135 = vld [vmem:[#allocation3 + $0x78] sm:$0xff]
        %4136 = vmax.xlane.f32.xlu0 %v4058
        %v4137 = vpop.xlane.xlu0 %4136
        %4138 = vmax.xlane.f32.xlu0 %v4061
        %v4139 = vpop.xlane.xlu0 %4138
        %4140 = vmax.xlane.f32.xlu0 %v4066
        %v4141 = vpop.xlane.xlu0 %4140
        %4142 = vmax.xlane.f32.xlu0 %v4069
        %v4143 = vpop.xlane.xlu0 %4142
        %4144 = vmax.xlane.f32.xlu0 %v4074
        %v4145 = vpop.xlane.xlu0 %4144
        %4146 = vmax.xlane.f32.xlu0 %v4077
        %v4147 = vpop.xlane.xlu0 %4146
        %4148 = vmax.xlane.f32.xlu0 %v4082
        %v4149 = vpop.xlane.xlu0 %4148
        %4150 = vmax.xlane.f32.xlu0 %v4085
        %v4151 = vpop.xlane.xlu0 %4150
        %4152 = vmax.xlane.f32.xlu0 %v4090
        %v4153 = vpop.xlane.xlu0 %4152
        %4154 = vmax.xlane.f32.xlu0 %v4093
        %v4155 = vpop.xlane.xlu0 %4154
        %4156 = vmax.xlane.f32.xlu0 %v4098
        %v4157 = vpop.xlane.xlu0 %4156
        %4158 = vmax.xlane.f32.xlu0 %v4101
        %v4159 = vpop.xlane.xlu0 %4158
        %4160 = vmax.xlane.f32.xlu0 %v4106
        %v4161 = vpop.xlane.xlu0 %4160
        %4162 = vmax.xlane.f32.xlu0 %v4109
        %v4163 = vpop.xlane.xlu0 %4162
        %4164 = vmax.xlane.f32.xlu0 %v4114
        %v4165 = vpop.xlane.xlu0 %4164
        %4166 = vmax.xlane.f32.xlu0 %v4117
        %v4167 = vpop.xlane.xlu0 %4166
        %v4168 = vmax.f32 %v4120, %v4137
        %v4169 = vmax.f32 %v4121, %v4139
        %v4170 = vmax.f32 %v4122, %v4141
        %v4171 = vmax.f32 %v4123, %v4143
        %v4172 = vmax.f32 %v4124, %v4145
        %v4173 = vmax.f32 %v4125, %v4147
        %v4174 = vmax.f32 %v4126, %v4149
        %v4175 = vmax.f32 %v4127, %v4151
        %v4176 = vmax.f32 %v4128, %v4153
        %v4177 = vmax.f32 %v4129, %v4155
        %v4178 = vmax.f32 %v4130, %v4157
        %v4179 = vmax.f32 %v4131, %v4159
        %v4180 = vmax.f32 %v4132, %v4161
        %v4181 = vmax.f32 %v4133, %v4163
        %v4182 = vmax.f32 %v4134, %v4165
        %v4183 = vmax.f32 %v4135, %v4167
        %v4184 = vsub.f32 %v4120, %v4168
        %v4185 = vsub.f32 %v4121, %v4169
        %v4186 = vsub.f32 %v4122, %v4170
        %v4187 = vsub.f32 %v4123, %v4171
        %v4188 = vsub.f32 %v4124, %v4172
        %v4189 = vsub.f32 %v4125, %v4173
        %v4190 = vsub.f32 %v4126, %v4174
        %v4191 = vsub.f32 %v4127, %v4175
        %v4192 = vsub.f32 %v4128, %v4176
        %v4193 = vsub.f32 %v4129, %v4177
        %v4194 = vsub.f32 %v4130, %v4178
        %v4195 = vsub.f32 %v4131, %v4179
        %v4196 = vsub.f32 %v4132, %v4180
        %v4197 = vsub.f32 %v4133, %v4181
        %v4198 = vsub.f32 %v4134, %v4182
        %v4199 = vsub.f32 %v4135, %v4183
        %v4200 = vmul.f32 %v4184, 1.442695
        %v4201 = vpow.pop %v4200
        %v4202 = vmul.f32 %v4185, 1.442695
        %v4203 = vpow.pop %v4202
        %v4204 = vmul.f32 %v4186, 1.442695
        %v4205 = vpow.pop %v4204
        %v4206 = vmul.f32 %v4187, 1.442695
        %v4207 = vpow.pop %v4206
        %v4208 = vmul.f32 %v4188, 1.442695
        %v4209 = vpow.pop %v4208
        %v4210 = vmul.f32 %v4189, 1.442695
        %v4211 = vpow.pop %v4210
        %v4212 = vmul.f32 %v4190, 1.442695
        %v4213 = vpow.pop %v4212
        %v4214 = vmul.f32 %v4191, 1.442695
        %v4215 = vpow.pop %v4214
        %v4216 = vmul.f32 %v4192, 1.442695
        %v4217 = vpow.pop %v4216
        %v4218 = vmul.f32 %v4193, 1.442695
        %v4219 = vpow.pop %v4218
        %v4220 = vmul.f32 %v4194, 1.442695
        %v4221 = vpow.pop %v4220
        %v4222 = vmul.f32 %v4195, 1.442695
        %v4223 = vpow.pop %v4222
        %v4224 = vmul.f32 %v4196, 1.442695
        %v4225 = vpow.pop %v4224
        %v4226 = vmul.f32 %v4197, 1.442695
        %v4227 = vpow.pop %v4226
        %v4228 = vmul.f32 %v4198, 1.442695
        %v4229 = vpow.pop %v4228
        %v4230 = vmul.f32 %v4199, 1.442695
        %v4231 = vpow.pop %v4230
        %4233 = vset.pattern.permute.xlu0 3
        %4234 = vperm.xlu0 %4233, %v4168
        %v4235 = vpop.permute.xlu0 %4234
        %4238 = vset.pattern.permute.xlu0 3
        %4239 = vperm.xlu0 %4238, %v4169
        %v4240 = vpop.permute.xlu0 %4239
        %4243 = vset.pattern.permute.xlu0 3
        %4244 = vperm.xlu0 %4243, %v4170
        %v4245 = vpop.permute.xlu0 %4244
        %4248 = vset.pattern.permute.xlu0 3
        %4249 = vperm.xlu0 %4248, %v4171
        %v4250 = vpop.permute.xlu0 %4249
        %4253 = vset.pattern.permute.xlu0 3
        %4254 = vperm.xlu0 %4253, %v4172
        %v4255 = vpop.permute.xlu0 %4254
        %4258 = vset.pattern.permute.xlu0 3
        %4259 = vperm.xlu0 %4258, %v4173
        %v4260 = vpop.permute.xlu0 %4259
        %4263 = vset.pattern.permute.xlu0 3
        %4264 = vperm.xlu0 %4263, %v4174
        %v4265 = vpop.permute.xlu0 %4264
        %4268 = vset.pattern.permute.xlu0 3
        %4269 = vperm.xlu0 %4268, %v4175
        %v4270 = vpop.permute.xlu0 %4269
        %4273 = vset.pattern.permute.xlu0 3
        %4274 = vperm.xlu0 %4273, %v4176
        %v4275 = vpop.permute.xlu0 %4274
        %4278 = vset.pattern.permute.xlu0 3
        %4279 = vperm.xlu0 %4278, %v4177
        %v4280 = vpop.permute.xlu0 %4279
        %4283 = vset.pattern.permute.xlu0 3
        %4284 = vperm.xlu0 %4283, %v4178
        %v4285 = vpop.permute.xlu0 %4284
        %4288 = vset.pattern.permute.xlu0 3
        %4289 = vperm.xlu0 %4288, %v4179
        %v4290 = vpop.permute.xlu0 %4289
        %4293 = vset.pattern.permute.xlu0 3
        %4294 = vperm.xlu0 %4293, %v4180
        %v4295 = vpop.permute.xlu0 %4294
        %4298 = vset.pattern.permute.xlu0 3
        %4299 = vperm.xlu0 %4298, %v4181
        %v4300 = vpop.permute.xlu0 %4299
        %4303 = vset.pattern.permute.xlu0 3
        %4304 = vperm.xlu0 %4303, %v4182
        %v4305 = vpop.permute.xlu0 %4304
        %4308 = vset.pattern.permute.xlu0 3
        %4309 = vperm.xlu0 %4308, %v4183
        %v4310 = vpop.permute.xlu0 %4309
        %v4312 = vsub.f32 %v4058, %v4235
        %v4313 = vsub.f32 %v4061, %v4240
        %v4314 = vsub.f32 %v4066, %v4245
        %v4315 = vsub.f32 %v4069, %v4250
        %v4316 = vsub.f32 %v4074, %v4255
        %v4317 = vsub.f32 %v4077, %v4260
        %v4318 = vsub.f32 %v4082, %v4265
        %v4319 = vsub.f32 %v4085, %v4270
        %v4320 = vsub.f32 %v4090, %v4275
        %v4321 = vsub.f32 %v4093, %v4280
        %v4322 = vsub.f32 %v4098, %v4285
        %v4323 = vsub.f32 %v4101, %v4290
        %v4324 = vsub.f32 %v4106, %v4295
        %v4325 = vsub.f32 %v4109, %v4300
        %v4326 = vsub.f32 %v4114, %v4305
        %v4327 = vsub.f32 %v4117, %v4310
        %v4328 = vmul.f32 %v4312, 1.442695
        %v4329 = vpow.pop %v4328
        %v4330 = vmul.f32 %v4313, 1.442695
        %v4331 = vpow.pop %v4330
        %v4332 = vmul.f32 %v4314, 1.442695
        %v4333 = vpow.pop %v4332
        %v4334 = vmul.f32 %v4315, 1.442695
        %v4335 = vpow.pop %v4334
        %v4336 = vmul.f32 %v4316, 1.442695
        %v4337 = vpow.pop %v4336
        %v4338 = vmul.f32 %v4317, 1.442695
        %v4339 = vpow.pop %v4338
        %v4340 = vmul.f32 %v4318, 1.442695
        %v4341 = vpow.pop %v4340
        %v4342 = vmul.f32 %v4319, 1.442695
        %v4343 = vpow.pop %v4342
        %v4344 = vmul.f32 %v4320, 1.442695
        %v4345 = vpow.pop %v4344
        %v4346 = vmul.f32 %v4321, 1.442695
        %v4347 = vpow.pop %v4346
        %v4348 = vmul.f32 %v4322, 1.442695
        %v4349 = vpow.pop %v4348
        %v4350 = vmul.f32 %v4323, 1.442695
        %v4351 = vpow.pop %v4350
        %v4352 = vmul.f32 %v4324, 1.442695
        %v4353 = vpow.pop %v4352
        %v4354 = vmul.f32 %v4325, 1.442695
        %v4355 = vpow.pop %v4354
        %v4356 = vmul.f32 %v4326, 1.442695
        %v4357 = vpow.pop %v4356
        %v4358 = vmul.f32 %v4327, 1.442695
        %v4359 = vpow.pop %v4358
        %v4360 = vld [vmem:[#allocation4] sm:$0xff]
        %v4361 = vld [vmem:[#allocation4 + $0x8] sm:$0xff]
        %v4362 = vld [vmem:[#allocation4 + $0x10] sm:$0xff]
        %v4363 = vld [vmem:[#allocation4 + $0x18] sm:$0xff]
        %v4364 = vld [vmem:[#allocation4 + $0x20] sm:$0xff]
        %v4365 = vld [vmem:[#allocation4 + $0x28] sm:$0xff]
        %v4366 = vld [vmem:[#allocation4 + $0x30] sm:$0xff]
        %v4367 = vld [vmem:[#allocation4 + $0x38] sm:$0xff]
        %v4368 = vld [vmem:[#allocation4 + $0x40] sm:$0xff]
        %v4369 = vld [vmem:[#allocation4 + $0x48] sm:$0xff]
        %v4370 = vld [vmem:[#allocation4 + $0x50] sm:$0xff]
        %v4371 = vld [vmem:[#allocation4 + $0x58] sm:$0xff]
        %v4372 = vld [vmem:[#allocation4 + $0x60] sm:$0xff]
        %v4373 = vld [vmem:[#allocation4 + $0x68] sm:$0xff]
        %v4374 = vld [vmem:[#allocation4 + $0x70] sm:$0xff]
        %v4375 = vld [vmem:[#allocation4 + $0x78] sm:$0xff]
        %v4376 = vmul.f32 %v4201, %v4360
        %v4377 = vmul.f32 %v4203, %v4361
        %v4378 = vmul.f32 %v4205, %v4362
        %v4379 = vmul.f32 %v4207, %v4363
        %v4380 = vmul.f32 %v4209, %v4364
        %v4381 = vmul.f32 %v4211, %v4365
        %v4382 = vmul.f32 %v4213, %v4366
        %v4383 = vmul.f32 %v4215, %v4367
        %v4384 = vmul.f32 %v4217, %v4368
        %v4385 = vmul.f32 %v4219, %v4369
        %v4386 = vmul.f32 %v4221, %v4370
        %v4387 = vmul.f32 %v4223, %v4371
        %v4388 = vmul.f32 %v4225, %v4372
        %v4389 = vmul.f32 %v4227, %v4373
        %v4390 = vmul.f32 %v4229, %v4374
        %v4391 = vmul.f32 %v4231, %v4375
        %4392 = vadd.xlane.f32.xlu0 %v4329
        %v4393 = vpop.xlane.xlu0 %4392
        %4394 = vadd.xlane.f32.xlu0 %v4331
        %v4395 = vpop.xlane.xlu0 %4394
        %4396 = vadd.xlane.f32.xlu0 %v4333
        %v4397 = vpop.xlane.xlu0 %4396
        %4398 = vadd.xlane.f32.xlu0 %v4335
        %v4399 = vpop.xlane.xlu0 %4398
        %4400 = vadd.xlane.f32.xlu0 %v4337
        %v4401 = vpop.xlane.xlu0 %4400
        %4402 = vadd.xlane.f32.xlu0 %v4339
        %v4403 = vpop.xlane.xlu0 %4402
        %4404 = vadd.xlane.f32.xlu0 %v4341
        %v4405 = vpop.xlane.xlu0 %4404
        %4406 = vadd.xlane.f32.xlu0 %v4343
        %v4407 = vpop.xlane.xlu0 %4406
        %4408 = vadd.xlane.f32.xlu0 %v4345
        %v4409 = vpop.xlane.xlu0 %4408
        %4410 = vadd.xlane.f32.xlu0 %v4347
        %v4411 = vpop.xlane.xlu0 %4410
        %4412 = vadd.xlane.f32.xlu0 %v4349
        %v4413 = vpop.xlane.xlu0 %4412
        %4414 = vadd.xlane.f32.xlu0 %v4351
        %v4415 = vpop.xlane.xlu0 %4414
        %4416 = vadd.xlane.f32.xlu0 %v4353
        %v4417 = vpop.xlane.xlu0 %4416
        %4418 = vadd.xlane.f32.xlu0 %v4355
        %v4419 = vpop.xlane.xlu0 %4418
        %4420 = vadd.xlane.f32.xlu0 %v4357
        %v4421 = vpop.xlane.xlu0 %4420
        %4422 = vadd.xlane.f32.xlu0 %v4359
        %v4423 = vpop.xlane.xlu0 %4422
        %v4424 = vadd.f32 %v4376, %v4393
        %v4425 = vadd.f32 %v4377, %v4395
        %v4426 = vadd.f32 %v4378, %v4397
        %v4427 = vadd.f32 %v4379, %v4399
        %v4428 = vadd.f32 %v4380, %v4401
        %v4429 = vadd.f32 %v4381, %v4403
        %v4430 = vadd.f32 %v4382, %v4405
        %v4431 = vadd.f32 %v4383, %v4407
        %v4432 = vadd.f32 %v4384, %v4409
        %v4433 = vadd.f32 %v4385, %v4411
        %v4434 = vadd.f32 %v4386, %v4413
        %v4435 = vadd.f32 %v4387, %v4415
        %v4436 = vadd.f32 %v4388, %v4417
        %v4437 = vadd.f32 %v4389, %v4419
        %v4438 = vadd.f32 %v4390, %v4421
        %v4439 = vadd.f32 %v4391, %v4423
        %v4440 = vpack.c.bf16 %v4331, %v4329
        %v4441 = vpack.c.bf16 %v4335, %v4333
        %v4442 = vpack.c.bf16 %v4339, %v4337
        %v4443 = vpack.c.bf16 %v4343, %v4341
        %v4444 = vpack.c.bf16 %v4347, %v4345
        %v4445 = vpack.c.bf16 %v4351, %v4349
        %v4446 = vpack.c.bf16 %v4355, %v4353
        %v4447 = vpack.c.bf16 %v4359, %v4357
        %4448 = vrot.lane.b32.xlu0 %v1386, 80
        %v4449 = vpop.permute.xlu0 %4448
        %4450 = vrot.lane.b32.xlu0 %v1387, 80
        %v4451 = vpop.permute.xlu0 %4450
        %4452 = vrot.lane.b32.xlu0 %v1388, 80
        %v4453 = vpop.permute.xlu0 %4452
        %4454 = vrot.lane.b32.xlu0 %v1389, 80
        %v4455 = vpop.permute.xlu0 %4454
        %4456 = vrot.lane.b32.xlu0 %v1390, 80
        %v4457 = vpop.permute.xlu0 %4456
        %4458 = vrot.lane.b32.xlu0 %v1391, 80
        %v4459 = vpop.permute.xlu0 %4458
        %4460 = vrot.lane.b32.xlu0 %v1392, 80
        %v4461 = vpop.permute.xlu0 %4460
        %4462 = vrot.lane.b32.xlu0 %v1393, 80
        %v4463 = vpop.permute.xlu0 %4462
        %4472 = vmatprep.subr.bf16.mxu0 0
        %4473 = vmatpush1.bf16.msra.mxu0 %v4449
        %4474 = vmatprep.subr.bf16.mxu0 0
        %4475 = vmatpush1.bf16.msra.mxu0 %v4451
        %4476 = vmatprep.subr.bf16.mxu0 0
        %4477 = vmatpush1.bf16.msra.mxu0 %v4453
        %4478 = vmatprep.subr.bf16.mxu0 0
        %4479 = vmatpush1.bf16.msra.mxu0 %v4455
        %4480 = vmatprep.subr.bf16.mxu0 0
        %4481 = vmatpush1.bf16.msra.mxu0 %v4457
        %4482 = vmatprep.subr.bf16.mxu0 0
        %4483 = vmatpush1.bf16.msra.mxu0 %v4459
        %4484 = vmatprep.subr.bf16.mxu0 0
        %4485 = vmatpush1.bf16.msra.mxu0 %v4461
        %4486 = vmatprep.subr.bf16.mxu0 0
        %4487 = vmatpush1.bf16.msra.mxu0 %v4463
        %4488 = vmatprep.subr.bf16.mxu0 0
        %4489 = vmatpush1.bf16.msra.mxu0 0
        %4490 = vmatprep.subr.bf16.mxu0 0
        %4491 = vmatpush1.bf16.msra.mxu0 0
        %4492 = vmatprep.subr.bf16.mxu0 0
        %4493 = vmatpush1.bf16.msra.mxu0 0
        %4494 = vmatprep.subr.bf16.mxu0 0
        %4495 = vmatpush1.bf16.msra.mxu0 0
        %4496 = vmatprep.subr.bf16.mxu0 0
        %4497 = vmatpush1.bf16.msra.mxu0 0
        %4498 = vmatprep.subr.bf16.mxu0 0
        %4499 = vmatpush1.bf16.msra.mxu0 0
        %4500 = vmatprep.subr.bf16.mxu0 0
        %4501 = vmatpush1.bf16.msra.mxu0 0
        %4502 = vmatprep.subr.bf16.mxu0 0
        %4503 = vmatpush1.bf16.msra.mxu0 0
        %4504 = vmatprep.mubr.bf16.mxu0 0
        %4505 = vmatmul.mubr.bf16.gmra.mrb[0].mxu0 %v4440
        %v4506 = vpop.f32.mrb[0].mxu0
        %v4507 = vadd.f32 0.0, %v4506
        %v4508 = vpop.f32.mrb[0].mxu0
        %v4509 = vpop.f32.mrb[0].mxu0
        %v4510 = vadd.f32 0.0, %v4509
        %v4511 = vpop.f32.mrb[0].mxu0
        %4512 = vmatprep.mubr.bf16.mxu0 0
        %4513 = vmatmul.mubr.bf16.gmra.mrb[0].mxu0 %v4441
        %v4514 = vpop.f32.mrb[0].mxu0
        %v4515 = vadd.f32 0.0, %v4514
        %v4516 = vpop.f32.mrb[0].mxu0
        %v4517 = vpop.f32.mrb[0].mxu0
        %v4518 = vadd.f32 0.0, %v4517
        %v4519 = vpop.f32.mrb[0].mxu0
        %4520 = vmatprep.mubr.bf16.mxu0 0
        %4521 = vmatmul.mubr.bf16.gmra.mrb[0].mxu0 %v4442
        %v4522 = vpop.f32.mrb[0].mxu0
        %v4523 = vadd.f32 0.0, %v4522
        %v4524 = vpop.f32.mrb[0].mxu0
        %v4525 = vpop.f32.mrb[0].mxu0
        %v4526 = vadd.f32 0.0, %v4525
        %v4527 = vpop.f32.mrb[0].mxu0
        %4528 = vmatprep.mubr.bf16.mxu0 0
        %4529 = vmatmul.mubr.bf16.gmra.mrb[0].mxu0 %v4443
        %v4530 = vpop.f32.mrb[0].mxu0
        %v4531 = vadd.f32 0.0, %v4530
        %v4532 = vpop.f32.mrb[0].mxu0
        %v4533 = vpop.f32.mrb[0].mxu0
        %v4534 = vadd.f32 0.0, %v4533
        %v4535 = vpop.f32.mrb[0].mxu0
        %4536 = vmatprep.mubr.bf16.mxu0 0
        %4537 = vmatmul.mubr.bf16.gmra.mrb[0].mxu0 %v4444
        %v4538 = vpop.f32.mrb[0].mxu0
        %v4539 = vadd.f32 0.0, %v4538
        %v4540 = vpop.f32.mrb[0].mxu0
        %v4541 = vpop.f32.mrb[0].mxu0
        %v4542 = vadd.f32 0.0, %v4541
        %v4543 = vpop.f32.mrb[0].mxu0
        %4544 = vmatprep.mubr.bf16.mxu0 0
        %4545 = vmatmul.mubr.bf16.gmra.mrb[0].mxu0 %v4445
        %v4546 = vpop.f32.mrb[0].mxu0
        %v4547 = vadd.f32 0.0, %v4546
        %v4548 = vpop.f32.mrb[0].mxu0
        %v4549 = vpop.f32.mrb[0].mxu0
        %v4550 = vadd.f32 0.0, %v4549
        %v4551 = vpop.f32.mrb[0].mxu0
        %4552 = vmatprep.mubr.bf16.mxu0 0
        %4553 = vmatmul.mubr.bf16.gmra.mrb[0].mxu0 %v4446
        %v4554 = vpop.f32.mrb[0].mxu0
        %v4555 = vadd.f32 0.0, %v4554
        %v4556 = vpop.f32.mrb[0].mxu0
        %v4557 = vpop.f32.mrb[0].mxu0
        %v4558 = vadd.f32 0.0, %v4557
        %v4559 = vpop.f32.mrb[0].mxu0
        %4560 = vmatprep.mubr.bf16.mxu0 0
        %4561 = vmatmul.mubr.bf16.gmra.mrb[0].mxu0 %v4447
        %v4562 = vpop.f32.mrb[0].mxu0
        %v4563 = vadd.f32 0.0, %v4562
        %v4564 = vpop.f32.mrb[0].mxu0
        %v4565 = vpop.f32.mrb[0].mxu0
        %v4566 = vadd.f32 0.0, %v4565
        %v4567 = vpop.f32.mrb[0].mxu0
        %4568 = vdwg.mxu0
        %v4569 = vld [vmem:[#allocation5] sm:$0xff]
        %v4570 = vld [vmem:[#allocation5 + $0x8] sm:$0xff]
        %v4571 = vld [vmem:[#allocation5 + $0x10] sm:$0xff]
        %v4572 = vld [vmem:[#allocation5 + $0x18] sm:$0xff]
        %v4573 = vld [vmem:[#allocation5 + $0x20] sm:$0xff]
        %v4574 = vld [vmem:[#allocation5 + $0x28] sm:$0xff]
        %v4575 = vld [vmem:[#allocation5 + $0x30] sm:$0xff]
        %v4576 = vld [vmem:[#allocation5 + $0x38] sm:$0xff]
        %v4577 = vld [vmem:[#allocation5 + $0x40] sm:$0xff]
        %v4578 = vld [vmem:[#allocation5 + $0x48] sm:$0xff]
        %v4579 = vld [vmem:[#allocation5 + $0x50] sm:$0xff]
        %v4580 = vld [vmem:[#allocation5 + $0x58] sm:$0xff]
        %v4581 = vld [vmem:[#allocation5 + $0x60] sm:$0xff]
        %v4582 = vld [vmem:[#allocation5 + $0x68] sm:$0xff]
        %v4583 = vld [vmem:[#allocation5 + $0x70] sm:$0xff]
        %v4584 = vld [vmem:[#allocation5 + $0x78] sm:$0xff]
        %4586 = vset.pattern.permute.xlu0 3
        %4587 = vperm.xlu0 %4586, %v4201
        %v4588 = vpop.permute.xlu0 %4587
        %4591 = vset.pattern.permute.xlu0 3
        %4592 = vperm.xlu0 %4591, %v4203
        %v4593 = vpop.permute.xlu0 %4592
        %4596 = vset.pattern.permute.xlu0 3
        %4597 = vperm.xlu0 %4596, %v4205
        %v4598 = vpop.permute.xlu0 %4597
        %4601 = vset.pattern.permute.xlu0 3
        %4602 = vperm.xlu0 %4601, %v4207
        %v4603 = vpop.permute.xlu0 %4602
        %4606 = vset.pattern.permute.xlu0 3
        %4607 = vperm.xlu0 %4606, %v4209
        %v4608 = vpop.permute.xlu0 %4607
        %4611 = vset.pattern.permute.xlu0 3
        %4612 = vperm.xlu0 %4611, %v4211
        %v4613 = vpop.permute.xlu0 %4612
        %4616 = vset.pattern.permute.xlu0 3
        %4617 = vperm.xlu0 %4616, %v4213
        %v4618 = vpop.permute.xlu0 %4617
        %4621 = vset.pattern.permute.xlu0 3
        %4622 = vperm.xlu0 %4621, %v4215
        %v4623 = vpop.permute.xlu0 %4622
        %4626 = vset.pattern.permute.xlu0 3
        %4627 = vperm.xlu0 %4626, %v4217
        %v4628 = vpop.permute.xlu0 %4627
        %4631 = vset.pattern.permute.xlu0 3
        %4632 = vperm.xlu0 %4631, %v4219
        %v4633 = vpop.permute.xlu0 %4632
        %4636 = vset.pattern.permute.xlu0 3
        %4637 = vperm.xlu0 %4636, %v4221
        %v4638 = vpop.permute.xlu0 %4637
        %4641 = vset.pattern.permute.xlu0 3
        %4642 = vperm.xlu0 %4641, %v4223
        %v4643 = vpop.permute.xlu0 %4642
        %4646 = vset.pattern.permute.xlu0 3
        %4647 = vperm.xlu0 %4646, %v4225
        %v4648 = vpop.permute.xlu0 %4647
        %4651 = vset.pattern.permute.xlu0 3
        %4652 = vperm.xlu0 %4651, %v4227
        %v4653 = vpop.permute.xlu0 %4652
        %4656 = vset.pattern.permute.xlu0 3
        %4657 = vperm.xlu0 %4656, %v4229
        %v4658 = vpop.permute.xlu0 %4657
        %4661 = vset.pattern.permute.xlu0 3
        %4662 = vperm.xlu0 %4661, %v4231
        %v4663 = vpop.permute.xlu0 %4662
        %v4665 = vmul.f32 %v4588, %v4569
        %v4666 = vmul.f32 %v4593, %v4570
        %v4667 = vmul.f32 %v4598, %v4571
        %v4668 = vmul.f32 %v4603, %v4572
        %v4669 = vmul.f32 %v4608, %v4573
        %v4670 = vmul.f32 %v4613, %v4574
        %v4671 = vmul.f32 %v4618, %v4575
        %v4672 = vmul.f32 %v4623, %v4576
        %v4673 = vmul.f32 %v4628, %v4577
        %v4674 = vmul.f32 %v4633, %v4578
        %v4675 = vmul.f32 %v4638, %v4579
        %v4676 = vmul.f32 %v4643, %v4580
        %v4677 = vmul.f32 %v4648, %v4581
        %v4678 = vmul.f32 %v4653, %v4582
        %v4679 = vmul.f32 %v4658, %v4583
        %v4680 = vmul.f32 %v4663, %v4584
        %4697 = vrot.lane.b32.xlu0 %v4507, 48
        %v4698 = vpop.permute.xlu0 %4697
        %4699 = vrot.lane.b32.xlu0 %v4510, 48
        %v4700 = vpop.permute.xlu0 %4699
        %4701 = vrot.lane.b32.xlu0 %v4515, 48
        %v4702 = vpop.permute.xlu0 %4701
        %4703 = vrot.lane.b32.xlu0 %v4518, 48
        %v4704 = vpop.permute.xlu0 %4703
        %4705 = vrot.lane.b32.xlu0 %v4523, 48
        %v4706 = vpop.permute.xlu0 %4705
        %4707 = vrot.lane.b32.xlu0 %v4526, 48
        %v4708 = vpop.permute.xlu0 %4707
        %4709 = vrot.lane.b32.xlu0 %v4531, 48
        %v4710 = vpop.permute.xlu0 %4709
        %4711 = vrot.lane.b32.xlu0 %v4534, 48
        %v4712 = vpop.permute.xlu0 %4711
        %4713 = vrot.lane.b32.xlu0 %v4539, 48
        %v4714 = vpop.permute.xlu0 %4713
        %4715 = vrot.lane.b32.xlu0 %v4542, 48
        %v4716 = vpop.permute.xlu0 %4715
        %4717 = vrot.lane.b32.xlu0 %v4547, 48
        %v4718 = vpop.permute.xlu0 %4717
        %4719 = vrot.lane.b32.xlu0 %v4550, 48
        %v4720 = vpop.permute.xlu0 %4719
        %4721 = vrot.lane.b32.xlu0 %v4555, 48
        %v4722 = vpop.permute.xlu0 %4721
        %4723 = vrot.lane.b32.xlu0 %v4558, 48
        %v4724 = vpop.permute.xlu0 %4723
        %4725 = vrot.lane.b32.xlu0 %v4563, 48
        %v4726 = vpop.permute.xlu0 %4725
        %4727 = vrot.lane.b32.xlu0 %v4566, 48
        %v4728 = vpop.permute.xlu0 %4727
        %v4745 = vadd.f32 %v4665, %v4698
        %v4746 = vadd.f32 %v4666, %v4700
        %v4747 = vadd.f32 %v4667, %v4702
        %v4748 = vadd.f32 %v4668, %v4704
        %v4749 = vadd.f32 %v4669, %v4706
        %v4750 = vadd.f32 %v4670, %v4708
        %v4751 = vadd.f32 %v4671, %v4710
        %v4752 = vadd.f32 %v4672, %v4712
        %v4753 = vadd.f32 %v4673, %v4714
        %v4754 = vadd.f32 %v4674, %v4716
        %v4755 = vadd.f32 %v4675, %v4718
        %v4756 = vadd.f32 %v4676, %v4720
        %v4757 = vadd.f32 %v4677, %v4722
        %v4758 = vadd.f32 %v4678, %v4724
        %v4759 = vadd.f32 %v4679, %v4726
        %v4760 = vadd.f32 %v4680, %v4728
        %vm4761 = vcmask 523648
        %4762 = vst.msk [vmem:[#allocation5] sm:$0xff] %vm4761, %v4745
        %4763 = vst.msk [vmem:[#allocation5 + $0x8] sm:$0xff] %vm4761, %v4746
        %4764 = vst.msk [vmem:[#allocation5 + $0x10] sm:$0xff] %vm4761, %v4747
        %4765 = vst.msk [vmem:[#allocation5 + $0x18] sm:$0xff] %vm4761, %v4748
        %4766 = vst.msk [vmem:[#allocation5 + $0x20] sm:$0xff] %vm4761, %v4749
        %4767 = vst.msk [vmem:[#allocation5 + $0x28] sm:$0xff] %vm4761, %v4750
        %4768 = vst.msk [vmem:[#allocation5 + $0x30] sm:$0xff] %vm4761, %v4751
        %4769 = vst.msk [vmem:[#allocation5 + $0x38] sm:$0xff] %vm4761, %v4752
        %4770 = vst.msk [vmem:[#allocation5 + $0x40] sm:$0xff] %vm4761, %v4753
        %4771 = vst.msk [vmem:[#allocation5 + $0x48] sm:$0xff] %vm4761, %v4754
        %4772 = vst.msk [vmem:[#allocation5 + $0x50] sm:$0xff] %vm4761, %v4755
        %4773 = vst.msk [vmem:[#allocation5 + $0x58] sm:$0xff] %vm4761, %v4756
        %4774 = vst.msk [vmem:[#allocation5 + $0x60] sm:$0xff] %vm4761, %v4757
        %4775 = vst.msk [vmem:[#allocation5 + $0x68] sm:$0xff] %vm4761, %v4758
        %4776 = vst.msk [vmem:[#allocation5 + $0x70] sm:$0xff] %vm4761, %v4759
        %4777 = vst.msk [vmem:[#allocation5 + $0x78] sm:$0xff] %vm4761, %v4760
        %vm4778 = vcmask 31768
        %4779 = vst.msk [vmem:[#allocation3] sm:$0xff] %vm4778, %v4168
        %4780 = vst.msk [vmem:[#allocation3 + $0x8] sm:$0xff] %vm4778, %v4169
        %4781 = vst.msk [vmem:[#allocation3 + $0x10] sm:$0xff] %vm4778, %v4170
        %4782 = vst.msk [vmem:[#allocation3 + $0x18] sm:$0xff] %vm4778, %v4171
        %4783 = vst.msk [vmem:[#allocation3 + $0x20] sm:$0xff] %vm4778, %v4172
        %4784 = vst.msk [vmem:[#allocation3 + $0x28] sm:$0xff] %vm4778, %v4173
        %4785 = vst.msk [vmem:[#allocation3 + $0x30] sm:$0xff] %vm4778, %v4174
        %4786 = vst.msk [vmem:[#allocation3 + $0x38] sm:$0xff] %vm4778, %v4175
        %4787 = vst.msk [vmem:[#allocation3 + $0x40] sm:$0xff] %vm4778, %v4176
        %4788 = vst.msk [vmem:[#allocation3 + $0x48] sm:$0xff] %vm4778, %v4177
        %4789 = vst.msk [vmem:[#allocation3 + $0x50] sm:$0xff] %vm4778, %v4178
        %4790 = vst.msk [vmem:[#allocation3 + $0x58] sm:$0xff] %vm4778, %v4179
        %4791 = vst.msk [vmem:[#allocation3 + $0x60] sm:$0xff] %vm4778, %v4180
        %4792 = vst.msk [vmem:[#allocation3 + $0x68] sm:$0xff] %vm4778, %v4181
        %4793 = vst.msk [vmem:[#allocation3 + $0x70] sm:$0xff] %vm4778, %v4182
        %4794 = vst.msk [vmem:[#allocation3 + $0x78] sm:$0xff] %vm4778, %v4183
        %4795 = vst.msk [vmem:[#allocation4] sm:$0xff] %vm4778, %v4424
        %4796 = vst.msk [vmem:[#allocation4 + $0x8] sm:$0xff] %vm4778, %v4425
        %4797 = vst.msk [vmem:[#allocation4 + $0x10] sm:$0xff] %vm4778, %v4426
        %4798 = vst.msk [vmem:[#allocation4 + $0x18] sm:$0xff] %vm4778, %v4427
        %4799 = vst.msk [vmem:[#allocation4 + $0x20] sm:$0xff] %vm4778, %v4428
        %4800 = vst.msk [vmem:[#allocation4 + $0x28] sm:$0xff] %vm4778, %v4429
        %4801 = vst.msk [vmem:[#allocation4 + $0x30] sm:$0xff] %vm4778, %v4430
        %4802 = vst.msk [vmem:[#allocation4 + $0x38] sm:$0xff] %vm4778, %v4431
        %4803 = vst.msk [vmem:[#allocation4 + $0x40] sm:$0xff] %vm4778, %v4432
        %4804 = vst.msk [vmem:[#allocation4 + $0x48] sm:$0xff] %vm4778, %v4433
        %4805 = vst.msk [vmem:[#allocation4 + $0x50] sm:$0xff] %vm4778, %v4434
        %4806 = vst.msk [vmem:[#allocation4 + $0x58] sm:$0xff] %vm4778, %v4435
        %4807 = vst.msk [vmem:[#allocation4 + $0x60] sm:$0xff] %vm4778, %v4436
        %4808 = vst.msk [vmem:[#allocation4 + $0x68] sm:$0xff] %vm4778, %v4437
        %4809 = vst.msk [vmem:[#allocation4 + $0x70] sm:$0xff] %vm4778, %v4438
        %4810 = vst.msk [vmem:[#allocation4 + $0x78] sm:$0xff] %vm4778, %v4439
        %4811 = vrot.lane.b32.xlu0 %v1426, 96
        %v4812 = vpop.permute.xlu0 %4811
        %4813 = vrot.lane.b32.xlu0 %v1427, 96
        %v4814 = vpop.permute.xlu0 %4813
        %4815 = vrot.lane.b32.xlu0 %v1428, 96
        %v4816 = vpop.permute.xlu0 %4815
        %4817 = vrot.lane.b32.xlu0 %v1429, 96
        %v4818 = vpop.permute.xlu0 %4817
        %4819 = vrot.lane.b32.xlu0 %v1430, 96
        %v4820 = vpop.permute.xlu0 %4819
        %4821 = vrot.lane.b32.xlu0 %v1431, 96
        %v4822 = vpop.permute.xlu0 %4821
        %4823 = vrot.lane.b32.xlu0 %v1432, 96
        %v4824 = vpop.permute.xlu0 %4823
        %4825 = vrot.lane.b32.xlu0 %v1433, 96
        %v4826 = vpop.permute.xlu0 %4825
        %4827 = vrot.lane.b32.xlu0 %v1162, 96
        %v4828 = vpop.permute.xlu0 %4827
        %4829 = vrot.lane.b32.xlu0 %v1163, 96
        %v4830 = vpop.permute.xlu0 %4829
        %4831 = vrot.lane.b32.xlu0 %v1164, 96
        %v4832 = vpop.permute.xlu0 %4831
        %4833 = vrot.lane.b32.xlu0 %v1165, 96
        %v4834 = vpop.permute.xlu0 %4833
        %4835 = vrot.lane.b32.xlu0 %v1166, 96
        %v4836 = vpop.permute.xlu0 %4835
        %4837 = vrot.lane.b32.xlu0 %v1167, 96
        %v4838 = vpop.permute.xlu0 %4837
        %4839 = vrot.lane.b32.xlu0 %v1168, 96
        %v4840 = vpop.permute.xlu0 %4839
        %4841 = vrot.lane.b32.xlu0 %v1169, 96
        %v4842 = vpop.permute.xlu0 %4841
        %v4844 = vsel %vm1434, %v4812, 0
        %v4847 = vsel %vm1434, %v4814, 0
        %v4850 = vsel %vm1434, %v4816, 0
        %v4853 = vsel %vm1434, %v4818, 0
        %v4856 = vsel %vm1434, %v4820, 0
        %v4859 = vsel %vm1434, %v4822, 0
        %v4862 = vsel %vm1434, %v4824, 0
        %v4865 = vsel %vm1434, %v4826, 0
        %v4868 = vsel %vm1434, %v4828, 0
        %v4871 = vsel %vm1434, %v4830, 0
        %v4874 = vsel %vm1434, %v4832, 0
        %v4877 = vsel %vm1434, %v4834, 0
        %v4880 = vsel %vm1434, %v4836, 0
        %v4883 = vsel %vm1434, %v4838, 0
        %v4886 = vsel %vm1434, %v4840, 0
        %v4889 = vsel %vm1434, %v4842, 0
        %4891 = vmatprep.subr.bf16.mxu0 0
        %4892 = vmatpush1.bf16.xpose.msra.mxu0 %v4868
        %4893 = vmatprep.subr.bf16.mxu0 0
        %4894 = vmatpush1.bf16.xpose.msra.mxu0 %v4871
        %4895 = vmatprep.subr.bf16.mxu0 0
        %4896 = vmatpush1.bf16.xpose.msra.mxu0 %v4874
        %4897 = vmatprep.subr.bf16.mxu0 0
        %4898 = vmatpush1.bf16.xpose.msra.mxu0 %v4877
        %4899 = vmatprep.subr.bf16.mxu0 0
        %4900 = vmatpush1.bf16.xpose.msra.mxu0 %v4880
        %4901 = vmatprep.subr.bf16.mxu0 0
        %4902 = vmatpush1.bf16.xpose.msra.mxu0 %v4883
        %4903 = vmatprep.subr.bf16.mxu0 0
        %4904 = vmatpush1.bf16.xpose.msra.mxu0 %v4886
        %4905 = vmatprep.subr.bf16.mxu0 0
        %4906 = vmatpush1.bf16.xpose.msra.mxu0 %v4889
        %4907 = vmatprep.subr.bf16.mxu0 0
        %4908 = vmatpush1.bf16.xpose.msra.mxu0 0
        %4909 = vmatprep.subr.bf16.mxu0 0
        %4910 = vmatpush1.bf16.xpose.msra.mxu0 0
        %4911 = vmatprep.subr.bf16.mxu0 0
        %4912 = vmatpush1.bf16.xpose.msra.mxu0 0
        %4913 = vmatprep.subr.bf16.mxu0 0
        %4914 = vmatpush1.bf16.xpose.msra.mxu0 0
        %4915 = vmatprep.subr.bf16.mxu0 0
        %4916 = vmatpush1.bf16.xpose.msra.mxu0 0
        %4917 = vmatprep.subr.bf16.mxu0 0
        %4918 = vmatpush1.bf16.xpose.msra.mxu0 0
        %4919 = vmatprep.subr.bf16.mxu0 0
        %4920 = vmatpush1.bf16.xpose.msra.mxu0 0
        %4921 = vmatprep.subr.bf16.mxu0 0
        %4922 = vmatpush1.bf16.xpose.msra.mxu0 0
        %4923 = vmatprep.mubr.bf16.mxu0 0
        %4924 = vmatmul.mubr.bf16.gmra.mrb[0].mxu0 %v4844
        %v4925 = vpop.f32.mrb[0].mxu0
        %v4926 = vadd.f32 %v1410, %v4925
        %v4927 = vpop.f32.mrb[0].mxu0
        %v4928 = vpop.f32.mrb[0].mxu0
        %v4929 = vadd.f32 %v1411, %v4928
        %v4930 = vpop.f32.mrb[0].mxu0
        %4931 = vmatprep.mubr.bf16.mxu0 0
        %4932 = vmatmul.mubr.bf16.gmra.mrb[0].mxu0 %v4847
        %v4933 = vpop.f32.mrb[0].mxu0
        %v4934 = vadd.f32 %v1412, %v4933
        %v4935 = vpop.f32.mrb[0].mxu0
        %v4936 = vpop.f32.mrb[0].mxu0
        %v4937 = vadd.f32 %v1413, %v4936
        %v4938 = vpop.f32.mrb[0].mxu0
        %4939 = vmatprep.mubr.bf16.mxu0 0
        %4940 = vmatmul.mubr.bf16.gmra.mrb[0].mxu0 %v4850
        %v4941 = vpop.f32.mrb[0].mxu0
        %v4942 = vadd.f32 %v1414, %v4941
        %v4943 = vpop.f32.mrb[0].mxu0
        %v4944 = vpop.f32.mrb[0].mxu0
        %v4945 = vadd.f32 %v1415, %v4944
        %v4946 = vpop.f32.mrb[0].mxu0
        %4947 = vmatprep.mubr.bf16.mxu0 0
        %4948 = vmatmul.mubr.bf16.gmra.mrb[0].mxu0 %v4853
        %v4949 = vpop.f32.mrb[0].mxu0
        %v4950 = vadd.f32 %v1416, %v4949
        %v4951 = vpop.f32.mrb[0].mxu0
        %v4952 = vpop.f32.mrb[0].mxu0
        %v4953 = vadd.f32 %v1417, %v4952
        %v4954 = vpop.f32.mrb[0].mxu0
        %4955 = vmatprep.mubr.bf16.mxu0 0
        %4956 = vmatmul.mubr.bf16.gmra.mrb[0].mxu0 %v4856
        %v4957 = vpop.f32.mrb[0].mxu0
        %v4958 = vadd.f32 %v1418, %v4957
        %v4959 = vpop.f32.mrb[0].mxu0
        %v4960 = vpop.f32.mrb[0].mxu0
        %v4961 = vadd.f32 %v1419, %v4960
        %v4962 = vpop.f32.mrb[0].mxu0
        %4963 = vmatprep.mubr.bf16.mxu0 0
        %4964 = vmatmul.mubr.bf16.gmra.mrb[0].mxu0 %v4859
        %v4965 = vpop.f32.mrb[0].mxu0
        %v4966 = vadd.f32 %v1420, %v4965
        %v4967 = vpop.f32.mrb[0].mxu0
        %v4968 = vpop.f32.mrb[0].mxu0
        %v4969 = vadd.f32 %v1421, %v4968
        %v4970 = vpop.f32.mrb[0].mxu0
        %4971 = vmatprep.mubr.bf16.mxu0 0
        %4972 = vmatmul.mubr.bf16.gmra.mrb[0].mxu0 %v4862
        %v4973 = vpop.f32.mrb[0].mxu0
        %v4974 = vadd.f32 %v1422, %v4973
        %v4975 = vpop.f32.mrb[0].mxu0
        %v4976 = vpop.f32.mrb[0].mxu0
        %v4977 = vadd.f32 %v1423, %v4976
        %v4978 = vpop.f32.mrb[0].mxu0
        %4979 = vmatprep.mubr.bf16.mxu0 0
        %4980 = vmatmul.mubr.bf16.gmra.mrb[0].mxu0 %v4865
        %v4981 = vpop.f32.mrb[0].mxu0
        %v4982 = vadd.f32 %v1424, %v4981
        %v4983 = vpop.f32.mrb[0].mxu0
        %v4984 = vpop.f32.mrb[0].mxu0
        %v4985 = vadd.f32 %v1425, %v4984
        %v4986 = vpop.f32.mrb[0].mxu0
        %4987 = vdwg.mxu0
        %v4988 = vld [vmem:[#allocation3] sm:$0xff]
        %v4989 = vld [vmem:[#allocation3 + $0x8] sm:$0xff]
        %v4990 = vld [vmem:[#allocation3 + $0x10] sm:$0xff]
        %v4991 = vld [vmem:[#allocation3 + $0x18] sm:$0xff]
        %v4992 = vld [vmem:[#allocation3 + $0x20] sm:$0xff]
        %v4993 = vld [vmem:[#allocation3 + $0x28] sm:$0xff]
        %v4994 = vld [vmem:[#allocation3 + $0x30] sm:$0xff]
        %v4995 = vld [vmem:[#allocation3 + $0x38] sm:$0xff]
        %v4996 = vld [vmem:[#allocation3 + $0x40] sm:$0xff]
        %v4997 = vld [vmem:[#allocation3 + $0x48] sm:$0xff]
        %v4998 = vld [vmem:[#allocation3 + $0x50] sm:$0xff]
        %v4999 = vld [vmem:[#allocation3 + $0x58] sm:$0xff]
        %v5000 = vld [vmem:[#allocation3 + $0x60] sm:$0xff]
        %v5001 = vld [vmem:[#allocation3 + $0x68] sm:$0xff]
        %v5002 = vld [vmem:[#allocation3 + $0x70] sm:$0xff]
        %v5003 = vld [vmem:[#allocation3 + $0x78] sm:$0xff]
        %5004 = vmax.xlane.f32.xlu0 %v4926
        %v5005 = vpop.xlane.xlu0 %5004
        %5006 = vmax.xlane.f32.xlu0 %v4929
        %v5007 = vpop.xlane.xlu0 %5006
        %5008 = vmax.xlane.f32.xlu0 %v4934
        %v5009 = vpop.xlane.xlu0 %5008
        %5010 = vmax.xlane.f32.xlu0 %v4937
        %v5011 = vpop.xlane.xlu0 %5010
        %5012 = vmax.xlane.f32.xlu0 %v4942
        %v5013 = vpop.xlane.xlu0 %5012
        %5014 = vmax.xlane.f32.xlu0 %v4945
        %v5015 = vpop.xlane.xlu0 %5014
        %5016 = vmax.xlane.f32.xlu0 %v4950
        %v5017 = vpop.xlane.xlu0 %5016
        %5018 = vmax.xlane.f32.xlu0 %v4953
        %v5019 = vpop.xlane.xlu0 %5018
        %5020 = vmax.xlane.f32.xlu0 %v4958
        %v5021 = vpop.xlane.xlu0 %5020
        %5022 = vmax.xlane.f32.xlu0 %v4961
        %v5023 = vpop.xlane.xlu0 %5022
        %5024 = vmax.xlane.f32.xlu0 %v4966
        %v5025 = vpop.xlane.xlu0 %5024
        %5026 = vmax.xlane.f32.xlu0 %v4969
        %v5027 = vpop.xlane.xlu0 %5026
        %5028 = vmax.xlane.f32.xlu0 %v4974
        %v5029 = vpop.xlane.xlu0 %5028
        %5030 = vmax.xlane.f32.xlu0 %v4977
        %v5031 = vpop.xlane.xlu0 %5030
        %5032 = vmax.xlane.f32.xlu0 %v4982
        %v5033 = vpop.xlane.xlu0 %5032
        %5034 = vmax.xlane.f32.xlu0 %v4985
        %v5035 = vpop.xlane.xlu0 %5034
        %v5036 = vmax.f32 %v4988, %v5005
        %v5037 = vmax.f32 %v4989, %v5007
        %v5038 = vmax.f32 %v4990, %v5009
        %v5039 = vmax.f32 %v4991, %v5011
        %v5040 = vmax.f32 %v4992, %v5013
        %v5041 = vmax.f32 %v4993, %v5015
        %v5042 = vmax.f32 %v4994, %v5017
        %v5043 = vmax.f32 %v4995, %v5019
        %v5044 = vmax.f32 %v4996, %v5021
        %v5045 = vmax.f32 %v4997, %v5023
        %v5046 = vmax.f32 %v4998, %v5025
        %v5047 = vmax.f32 %v4999, %v5027
        %v5048 = vmax.f32 %v5000, %v5029
        %v5049 = vmax.f32 %v5001, %v5031
        %v5050 = vmax.f32 %v5002, %v5033
        %v5051 = vmax.f32 %v5003, %v5035
        %v5052 = vsub.f32 %v4988, %v5036
        %v5053 = vsub.f32 %v4989, %v5037
        %v5054 = vsub.f32 %v4990, %v5038
        %v5055 = vsub.f32 %v4991, %v5039
        %v5056 = vsub.f32 %v4992, %v5040
        %v5057 = vsub.f32 %v4993, %v5041
        %v5058 = vsub.f32 %v4994, %v5042
        %v5059 = vsub.f32 %v4995, %v5043
        %v5060 = vsub.f32 %v4996, %v5044
        %v5061 = vsub.f32 %v4997, %v5045
        %v5062 = vsub.f32 %v4998, %v5046
        %v5063 = vsub.f32 %v4999, %v5047
        %v5064 = vsub.f32 %v5000, %v5048
        %v5065 = vsub.f32 %v5001, %v5049
        %v5066 = vsub.f32 %v5002, %v5050
        %v5067 = vsub.f32 %v5003, %v5051
        %v5068 = vmul.f32 %v5052, 1.442695
        %v5069 = vpow.pop %v5068
        %v5070 = vmul.f32 %v5053, 1.442695
        %v5071 = vpow.pop %v5070
        %v5072 = vmul.f32 %v5054, 1.442695
        %v5073 = vpow.pop %v5072
        %v5074 = vmul.f32 %v5055, 1.442695
        %v5075 = vpow.pop %v5074
        %v5076 = vmul.f32 %v5056, 1.442695
        %v5077 = vpow.pop %v5076
        %v5078 = vmul.f32 %v5057, 1.442695
        %v5079 = vpow.pop %v5078
        %v5080 = vmul.f32 %v5058, 1.442695
        %v5081 = vpow.pop %v5080
        %v5082 = vmul.f32 %v5059, 1.442695
        %v5083 = vpow.pop %v5082
        %v5084 = vmul.f32 %v5060, 1.442695
        %v5085 = vpow.pop %v5084
        %v5086 = vmul.f32 %v5061, 1.442695
        %v5087 = vpow.pop %v5086
        %v5088 = vmul.f32 %v5062, 1.442695
        %v5089 = vpow.pop %v5088
        %v5090 = vmul.f32 %v5063, 1.442695
        %v5091 = vpow.pop %v5090
        %v5092 = vmul.f32 %v5064, 1.442695
        %v5093 = vpow.pop %v5092
        %v5094 = vmul.f32 %v5065, 1.442695
        %v5095 = vpow.pop %v5094
        %v5096 = vmul.f32 %v5066, 1.442695
        %v5097 = vpow.pop %v5096
        %v5098 = vmul.f32 %v5067, 1.442695
        %v5099 = vpow.pop %v5098
        %5101 = vset.pattern.permute.xlu0 4
        %5102 = vperm.xlu0 %5101, %v5036
        %v5103 = vpop.permute.xlu0 %5102
        %5106 = vset.pattern.permute.xlu0 4
        %5107 = vperm.xlu0 %5106, %v5037
        %v5108 = vpop.permute.xlu0 %5107
        %5111 = vset.pattern.permute.xlu0 4
        %5112 = vperm.xlu0 %5111, %v5038
        %v5113 = vpop.permute.xlu0 %5112
        %5116 = vset.pattern.permute.xlu0 4
        %5117 = vperm.xlu0 %5116, %v5039
        %v5118 = vpop.permute.xlu0 %5117
        %5121 = vset.pattern.permute.xlu0 4
        %5122 = vperm.xlu0 %5121, %v5040
        %v5123 = vpop.permute.xlu0 %5122
        %5126 = vset.pattern.permute.xlu0 4
        %5127 = vperm.xlu0 %5126, %v5041
        %v5128 = vpop.permute.xlu0 %5127
        %5131 = vset.pattern.permute.xlu0 4
        %5132 = vperm.xlu0 %5131, %v5042
        %v5133 = vpop.permute.xlu0 %5132
        %5136 = vset.pattern.permute.xlu0 4
        %5137 = vperm.xlu0 %5136, %v5043
        %v5138 = vpop.permute.xlu0 %5137
        %5141 = vset.pattern.permute.xlu0 4
        %5142 = vperm.xlu0 %5141, %v5044
        %v5143 = vpop.permute.xlu0 %5142
        %5146 = vset.pattern.permute.xlu0 4
        %5147 = vperm.xlu0 %5146, %v5045
        %v5148 = vpop.permute.xlu0 %5147
        %5151 = vset.pattern.permute.xlu0 4
        %5152 = vperm.xlu0 %5151, %v5046
        %v5153 = vpop.permute.xlu0 %5152
        %5156 = vset.pattern.permute.xlu0 4
        %5157 = vperm.xlu0 %5156, %v5047
        %v5158 = vpop.permute.xlu0 %5157
        %5161 = vset.pattern.permute.xlu0 4
        %5162 = vperm.xlu0 %5161, %v5048
        %v5163 = vpop.permute.xlu0 %5162
        %5166 = vset.pattern.permute.xlu0 4
        %5167 = vperm.xlu0 %5166, %v5049
        %v5168 = vpop.permute.xlu0 %5167
        %5171 = vset.pattern.permute.xlu0 4
        %5172 = vperm.xlu0 %5171, %v5050
        %v5173 = vpop.permute.xlu0 %5172
        %5176 = vset.pattern.permute.xlu0 4
        %5177 = vperm.xlu0 %5176, %v5051
        %v5178 = vpop.permute.xlu0 %5177
        %v5180 = vsub.f32 %v4926, %v5103
        %v5181 = vsub.f32 %v4929, %v5108
        %v5182 = vsub.f32 %v4934, %v5113
        %v5183 = vsub.f32 %v4937, %v5118
        %v5184 = vsub.f32 %v4942, %v5123
        %v5185 = vsub.f32 %v4945, %v5128
        %v5186 = vsub.f32 %v4950, %v5133
        %v5187 = vsub.f32 %v4953, %v5138
        %v5188 = vsub.f32 %v4958, %v5143
        %v5189 = vsub.f32 %v4961, %v5148
        %v5190 = vsub.f32 %v4966, %v5153
        %v5191 = vsub.f32 %v4969, %v5158
        %v5192 = vsub.f32 %v4974, %v5163
        %v5193 = vsub.f32 %v4977, %v5168
        %v5194 = vsub.f32 %v4982, %v5173
        %v5195 = vsub.f32 %v4985, %v5178
        %v5196 = vmul.f32 %v5180, 1.442695
        %v5197 = vpow.pop %v5196
        %v5198 = vmul.f32 %v5181, 1.442695
        %v5199 = vpow.pop %v5198
        %v5200 = vmul.f32 %v5182, 1.442695
        %v5201 = vpow.pop %v5200
        %v5202 = vmul.f32 %v5183, 1.442695
        %v5203 = vpow.pop %v5202
        %v5204 = vmul.f32 %v5184, 1.442695
        %v5205 = vpow.pop %v5204
        %v5206 = vmul.f32 %v5185, 1.442695
        %v5207 = vpow.pop %v5206
        %v5208 = vmul.f32 %v5186, 1.442695
        %v5209 = vpow.pop %v5208
        %v5210 = vmul.f32 %v5187, 1.442695
        %v5211 = vpow.pop %v5210
        %v5212 = vmul.f32 %v5188, 1.442695
        %v5213 = vpow.pop %v5212
        %v5214 = vmul.f32 %v5189, 1.442695
        %v5215 = vpow.pop %v5214
        %v5216 = vmul.f32 %v5190, 1.442695
        %v5217 = vpow.pop %v5216
        %v5218 = vmul.f32 %v5191, 1.442695
        %v5219 = vpow.pop %v5218
        %v5220 = vmul.f32 %v5192, 1.442695
        %v5221 = vpow.pop %v5220
        %v5222 = vmul.f32 %v5193, 1.442695
        %v5223 = vpow.pop %v5222
        %v5224 = vmul.f32 %v5194, 1.442695
        %v5225 = vpow.pop %v5224
        %v5226 = vmul.f32 %v5195, 1.442695
        %v5227 = vpow.pop %v5226
        %v5228 = vld [vmem:[#allocation4] sm:$0xff]
        %v5229 = vld [vmem:[#allocation4 + $0x8] sm:$0xff]
        %v5230 = vld [vmem:[#allocation4 + $0x10] sm:$0xff]
        %v5231 = vld [vmem:[#allocation4 + $0x18] sm:$0xff]
        %v5232 = vld [vmem:[#allocation4 + $0x20] sm:$0xff]
        %v5233 = vld [vmem:[#allocation4 + $0x28] sm:$0xff]
        %v5234 = vld [vmem:[#allocation4 + $0x30] sm:$0xff]
        %v5235 = vld [vmem:[#allocation4 + $0x38] sm:$0xff]
        %v5236 = vld [vmem:[#allocation4 + $0x40] sm:$0xff]
        %v5237 = vld [vmem:[#allocation4 + $0x48] sm:$0xff]
        %v5238 = vld [vmem:[#allocation4 + $0x50] sm:$0xff]
        %v5239 = vld [vmem:[#allocation4 + $0x58] sm:$0xff]
        %v5240 = vld [vmem:[#allocation4 + $0x60] sm:$0xff]
        %v5241 = vld [vmem:[#allocation4 + $0x68] sm:$0xff]
        %v5242 = vld [vmem:[#allocation4 + $0x70] sm:$0xff]
        %v5243 = vld [vmem:[#allocation4 + $0x78] sm:$0xff]
        %v5244 = vmul.f32 %v5069, %v5228
        %v5245 = vmul.f32 %v5071, %v5229
        %v5246 = vmul.f32 %v5073, %v5230
        %v5247 = vmul.f32 %v5075, %v5231
        %v5248 = vmul.f32 %v5077, %v5232
        %v5249 = vmul.f32 %v5079, %v5233
        %v5250 = vmul.f32 %v5081, %v5234
        %v5251 = vmul.f32 %v5083, %v5235
        %v5252 = vmul.f32 %v5085, %v5236
        %v5253 = vmul.f32 %v5087, %v5237
        %v5254 = vmul.f32 %v5089, %v5238
        %v5255 = vmul.f32 %v5091, %v5239
        %v5256 = vmul.f32 %v5093, %v5240
        %v5257 = vmul.f32 %v5095, %v5241
        %v5258 = vmul.f32 %v5097, %v5242
        %v5259 = vmul.f32 %v5099, %v5243
        %5260 = vadd.xlane.f32.xlu0 %v5197
        %v5261 = vpop.xlane.xlu0 %5260
        %5262 = vadd.xlane.f32.xlu0 %v5199
        %v5263 = vpop.xlane.xlu0 %5262
        %5264 = vadd.xlane.f32.xlu0 %v5201
        %v5265 = vpop.xlane.xlu0 %5264
        %5266 = vadd.xlane.f32.xlu0 %v5203
        %v5267 = vpop.xlane.xlu0 %5266
        %5268 = vadd.xlane.f32.xlu0 %v5205
        %v5269 = vpop.xlane.xlu0 %5268
        %5270 = vadd.xlane.f32.xlu0 %v5207
        %v5271 = vpop.xlane.xlu0 %5270
        %5272 = vadd.xlane.f32.xlu0 %v5209
        %v5273 = vpop.xlane.xlu0 %5272
        %5274 = vadd.xlane.f32.xlu0 %v5211
        %v5275 = vpop.xlane.xlu0 %5274
        %5276 = vadd.xlane.f32.xlu0 %v5213
        %v5277 = vpop.xlane.xlu0 %5276
        %5278 = vadd.xlane.f32.xlu0 %v5215
        %v5279 = vpop.xlane.xlu0 %5278
        %5280 = vadd.xlane.f32.xlu0 %v5217
        %v5281 = vpop.xlane.xlu0 %5280
        %5282 = vadd.xlane.f32.xlu0 %v5219
        %v5283 = vpop.xlane.xlu0 %5282
        %5284 = vadd.xlane.f32.xlu0 %v5221
        %v5285 = vpop.xlane.xlu0 %5284
        %5286 = vadd.xlane.f32.xlu0 %v5223
        %v5287 = vpop.xlane.xlu0 %5286
        %5288 = vadd.xlane.f32.xlu0 %v5225
        %v5289 = vpop.xlane.xlu0 %5288
        %5290 = vadd.xlane.f32.xlu0 %v5227
        %v5291 = vpop.xlane.xlu0 %5290
        %v5292 = vadd.f32 %v5244, %v5261
        %v5293 = vadd.f32 %v5245, %v5263
        %v5294 = vadd.f32 %v5246, %v5265
        %v5295 = vadd.f32 %v5247, %v5267
        %v5296 = vadd.f32 %v5248, %v5269
        %v5297 = vadd.f32 %v5249, %v5271
        %v5298 = vadd.f32 %v5250, %v5273
        %v5299 = vadd.f32 %v5251, %v5275
        %v5300 = vadd.f32 %v5252, %v5277
        %v5301 = vadd.f32 %v5253, %v5279
        %v5302 = vadd.f32 %v5254, %v5281
        %v5303 = vadd.f32 %v5255, %v5283
        %v5304 = vadd.f32 %v5256, %v5285
        %v5305 = vadd.f32 %v5257, %v5287
        %v5306 = vadd.f32 %v5258, %v5289
        %v5307 = vadd.f32 %v5259, %v5291
        %v5308 = vpack.c.bf16 %v5199, %v5197
        %v5309 = vpack.c.bf16 %v5203, %v5201
        %v5310 = vpack.c.bf16 %v5207, %v5205
        %v5311 = vpack.c.bf16 %v5211, %v5209
        %v5312 = vpack.c.bf16 %v5215, %v5213
        %v5313 = vpack.c.bf16 %v5219, %v5217
        %v5314 = vpack.c.bf16 %v5223, %v5221
        %v5315 = vpack.c.bf16 %v5227, %v5225
        %5316 = vrot.lane.b32.xlu0 %v1386, 64
        %v5317 = vpop.permute.xlu0 %5316
        %5318 = vrot.lane.b32.xlu0 %v1387, 64
        %v5319 = vpop.permute.xlu0 %5318
        %5320 = vrot.lane.b32.xlu0 %v1388, 64
        %v5321 = vpop.permute.xlu0 %5320
        %5322 = vrot.lane.b32.xlu0 %v1389, 64
        %v5323 = vpop.permute.xlu0 %5322
        %5324 = vrot.lane.b32.xlu0 %v1390, 64
        %v5325 = vpop.permute.xlu0 %5324
        %5326 = vrot.lane.b32.xlu0 %v1391, 64
        %v5327 = vpop.permute.xlu0 %5326
        %5328 = vrot.lane.b32.xlu0 %v1392, 64
        %v5329 = vpop.permute.xlu0 %5328
        %5330 = vrot.lane.b32.xlu0 %v1393, 64
        %v5331 = vpop.permute.xlu0 %5330
        %5340 = vmatprep.subr.bf16.mxu0 0
        %5341 = vmatpush1.bf16.msra.mxu0 %v5317
        %5342 = vmatprep.subr.bf16.mxu0 0
        %5343 = vmatpush1.bf16.msra.mxu0 %v5319
        %5344 = vmatprep.subr.bf16.mxu0 0
        %5345 = vmatpush1.bf16.msra.mxu0 %v5321
        %5346 = vmatprep.subr.bf16.mxu0 0
        %5347 = vmatpush1.bf16.msra.mxu0 %v5323
        %5348 = vmatprep.subr.bf16.mxu0 0
        %5349 = vmatpush1.bf16.msra.mxu0 %v5325
        %5350 = vmatprep.subr.bf16.mxu0 0
        %5351 = vmatpush1.bf16.msra.mxu0 %v5327
        %5352 = vmatprep.subr.bf16.mxu0 0
        %5353 = vmatpush1.bf16.msra.mxu0 %v5329
        %5354 = vmatprep.subr.bf16.mxu0 0
        %5355 = vmatpush1.bf16.msra.mxu0 %v5331
        %5356 = vmatprep.subr.bf16.mxu0 0
        %5357 = vmatpush1.bf16.msra.mxu0 0
        %5358 = vmatprep.subr.bf16.mxu0 0
        %5359 = vmatpush1.bf16.msra.mxu0 0
        %5360 = vmatprep.subr.bf16.mxu0 0
        %5361 = vmatpush1.bf16.msra.mxu0 0
        %5362 = vmatprep.subr.bf16.mxu0 0
        %5363 = vmatpush1.bf16.msra.mxu0 0
        %5364 = vmatprep.subr.bf16.mxu0 0
        %5365 = vmatpush1.bf16.msra.mxu0 0
        %5366 = vmatprep.subr.bf16.mxu0 0
        %5367 = vmatpush1.bf16.msra.mxu0 0
        %5368 = vmatprep.subr.bf16.mxu0 0
        %5369 = vmatpush1.bf16.msra.mxu0 0
        %5370 = vmatprep.subr.bf16.mxu0 0
        %5371 = vmatpush1.bf16.msra.mxu0 0
        %5372 = vmatprep.mubr.bf16.mxu0 0
        %5373 = vmatmul.mubr.bf16.gmra.mrb[0].mxu0 %v5308
        %v5374 = vpop.f32.mrb[0].mxu0
        %v5375 = vadd.f32 0.0, %v5374
        %v5376 = vpop.f32.mrb[0].mxu0
        %v5377 = vpop.f32.mrb[0].mxu0
        %v5378 = vadd.f32 0.0, %v5377
        %v5379 = vpop.f32.mrb[0].mxu0
        %5380 = vmatprep.mubr.bf16.mxu0 0
        %5381 = vmatmul.mubr.bf16.gmra.mrb[0].mxu0 %v5309
        %v5382 = vpop.f32.mrb[0].mxu0
        %v5383 = vadd.f32 0.0, %v5382
        %v5384 = vpop.f32.mrb[0].mxu0
        %v5385 = vpop.f32.mrb[0].mxu0
        %v5386 = vadd.f32 0.0, %v5385
        %v5387 = vpop.f32.mrb[0].mxu0
        %5388 = vmatprep.mubr.bf16.mxu0 0
        %5389 = vmatmul.mubr.bf16.gmra.mrb[0].mxu0 %v5310
        %v5390 = vpop.f32.mrb[0].mxu0
        %v5391 = vadd.f32 0.0, %v5390
        %v5392 = vpop.f32.mrb[0].mxu0
        %v5393 = vpop.f32.mrb[0].mxu0
        %v5394 = vadd.f32 0.0, %v5393
        %v5395 = vpop.f32.mrb[0].mxu0
        %5396 = vmatprep.mubr.bf16.mxu0 0
        %5397 = vmatmul.mubr.bf16.gmra.mrb[0].mxu0 %v5311
        %v5398 = vpop.f32.mrb[0].mxu0
        %v5399 = vadd.f32 0.0, %v5398
        %v5400 = vpop.f32.mrb[0].mxu0
        %v5401 = vpop.f32.mrb[0].mxu0
        %v5402 = vadd.f32 0.0, %v5401
        %v5403 = vpop.f32.mrb[0].mxu0
        %5404 = vmatprep.mubr.bf16.mxu0 0
        %5405 = vmatmul.mubr.bf16.gmra.mrb[0].mxu0 %v5312
        %v5406 = vpop.f32.mrb[0].mxu0
        %v5407 = vadd.f32 0.0, %v5406
        %v5408 = vpop.f32.mrb[0].mxu0
        %v5409 = vpop.f32.mrb[0].mxu0
        %v5410 = vadd.f32 0.0, %v5409
        %v5411 = vpop.f32.mrb[0].mxu0
        %5412 = vmatprep.mubr.bf16.mxu0 0
        %5413 = vmatmul.mubr.bf16.gmra.mrb[0].mxu0 %v5313
        %v5414 = vpop.f32.mrb[0].mxu0
        %v5415 = vadd.f32 0.0, %v5414
        %v5416 = vpop.f32.mrb[0].mxu0
        %v5417 = vpop.f32.mrb[0].mxu0
        %v5418 = vadd.f32 0.0, %v5417
        %v5419 = vpop.f32.mrb[0].mxu0
        %5420 = vmatprep.mubr.bf16.mxu0 0
        %5421 = vmatmul.mubr.bf16.gmra.mrb[0].mxu0 %v5314
        %v5422 = vpop.f32.mrb[0].mxu0
        %v5423 = vadd.f32 0.0, %v5422
        %v5424 = vpop.f32.mrb[0].mxu0
        %v5425 = vpop.f32.mrb[0].mxu0
        %v5426 = vadd.f32 0.0, %v5425
        %v5427 = vpop.f32.mrb[0].mxu0
        %5428 = vmatprep.mubr.bf16.mxu0 0
        %5429 = vmatmul.mubr.bf16.gmra.mrb[0].mxu0 %v5315
        %v5430 = vpop.f32.mrb[0].mxu0
        %v5431 = vadd.f32 0.0, %v5430
        %v5432 = vpop.f32.mrb[0].mxu0
        %v5433 = vpop.f32.mrb[0].mxu0
        %v5434 = vadd.f32 0.0, %v5433
        %v5435 = vpop.f32.mrb[0].mxu0
        %5436 = vdwg.mxu0
        %v5437 = vld [vmem:[#allocation5] sm:$0xff]
        %v5438 = vld [vmem:[#allocation5 + $0x8] sm:$0xff]
        %v5439 = vld [vmem:[#allocation5 + $0x10] sm:$0xff]
        %v5440 = vld [vmem:[#allocation5 + $0x18] sm:$0xff]
        %v5441 = vld [vmem:[#allocation5 + $0x20] sm:$0xff]
        %v5442 = vld [vmem:[#allocation5 + $0x28] sm:$0xff]
        %v5443 = vld [vmem:[#allocation5 + $0x30] sm:$0xff]
        %v5444 = vld [vmem:[#allocation5 + $0x38] sm:$0xff]
        %v5445 = vld [vmem:[#allocation5 + $0x40] sm:$0xff]
        %v5446 = vld [vmem:[#allocation5 + $0x48] sm:$0xff]
        %v5447 = vld [vmem:[#allocation5 + $0x50] sm:$0xff]
        %v5448 = vld [vmem:[#allocation5 + $0x58] sm:$0xff]
        %v5449 = vld [vmem:[#allocation5 + $0x60] sm:$0xff]
        %v5450 = vld [vmem:[#allocation5 + $0x68] sm:$0xff]
        %v5451 = vld [vmem:[#allocation5 + $0x70] sm:$0xff]
        %v5452 = vld [vmem:[#allocation5 + $0x78] sm:$0xff]
        %5454 = vset.pattern.permute.xlu0 4
        %5455 = vperm.xlu0 %5454, %v5069
        %v5456 = vpop.permute.xlu0 %5455
        %5459 = vset.pattern.permute.xlu0 4
        %5460 = vperm.xlu0 %5459, %v5071
        %v5461 = vpop.permute.xlu0 %5460
        %5464 = vset.pattern.permute.xlu0 4
        %5465 = vperm.xlu0 %5464, %v5073
        %v5466 = vpop.permute.xlu0 %5465
        %5469 = vset.pattern.permute.xlu0 4
        %5470 = vperm.xlu0 %5469, %v5075
        %v5471 = vpop.permute.xlu0 %5470
        %5474 = vset.pattern.permute.xlu0 4
        %5475 = vperm.xlu0 %5474, %v5077
        %v5476 = vpop.permute.xlu0 %5475
        %5479 = vset.pattern.permute.xlu0 4
        %5480 = vperm.xlu0 %5479, %v5079
        %v5481 = vpop.permute.xlu0 %5480
        %5484 = vset.pattern.permute.xlu0 4
        %5485 = vperm.xlu0 %5484, %v5081
        %v5486 = vpop.permute.xlu0 %5485
        %5489 = vset.pattern.permute.xlu0 4
        %5490 = vperm.xlu0 %5489, %v5083
        %v5491 = vpop.permute.xlu0 %5490
        %5494 = vset.pattern.permute.xlu0 4
        %5495 = vperm.xlu0 %5494, %v5085
        %v5496 = vpop.permute.xlu0 %5495
        %5499 = vset.pattern.permute.xlu0 4
        %5500 = vperm.xlu0 %5499, %v5087
        %v5501 = vpop.permute.xlu0 %5500
        %5504 = vset.pattern.permute.xlu0 4
        %5505 = vperm.xlu0 %5504, %v5089
        %v5506 = vpop.permute.xlu0 %5505
        %5509 = vset.pattern.permute.xlu0 4
        %5510 = vperm.xlu0 %5509, %v5091
        %v5511 = vpop.permute.xlu0 %5510
        %5514 = vset.pattern.permute.xlu0 4
        %5515 = vperm.xlu0 %5514, %v5093
        %v5516 = vpop.permute.xlu0 %5515
        %5519 = vset.pattern.permute.xlu0 4
        %5520 = vperm.xlu0 %5519, %v5095
        %v5521 = vpop.permute.xlu0 %5520
        %5524 = vset.pattern.permute.xlu0 4
        %5525 = vperm.xlu0 %5524, %v5097
        %v5526 = vpop.permute.xlu0 %5525
        %5529 = vset.pattern.permute.xlu0 4
        %5530 = vperm.xlu0 %5529, %v5099
        %v5531 = vpop.permute.xlu0 %5530
        %v5533 = vmul.f32 %v5456, %v5437
        %v5534 = vmul.f32 %v5461, %v5438
        %v5535 = vmul.f32 %v5466, %v5439
        %v5536 = vmul.f32 %v5471, %v5440
        %v5537 = vmul.f32 %v5476, %v5441
        %v5538 = vmul.f32 %v5481, %v5442
        %v5539 = vmul.f32 %v5486, %v5443
        %v5540 = vmul.f32 %v5491, %v5444
        %v5541 = vmul.f32 %v5496, %v5445
        %v5542 = vmul.f32 %v5501, %v5446
        %v5543 = vmul.f32 %v5506, %v5447
        %v5544 = vmul.f32 %v5511, %v5448
        %v5545 = vmul.f32 %v5516, %v5449
        %v5546 = vmul.f32 %v5521, %v5450
        %v5547 = vmul.f32 %v5526, %v5451
        %v5548 = vmul.f32 %v5531, %v5452
        %5565 = vrot.lane.b32.xlu0 %v5375, 64
        %v5566 = vpop.permute.xlu0 %5565
        %5567 = vrot.lane.b32.xlu0 %v5378, 64
        %v5568 = vpop.permute.xlu0 %5567
        %5569 = vrot.lane.b32.xlu0 %v5383, 64
        %v5570 = vpop.permute.xlu0 %5569
        %5571 = vrot.lane.b32.xlu0 %v5386, 64
        %v5572 = vpop.permute.xlu0 %5571
        %5573 = vrot.lane.b32.xlu0 %v5391, 64
        %v5574 = vpop.permute.xlu0 %5573
        %5575 = vrot.lane.b32.xlu0 %v5394, 64
        %v5576 = vpop.permute.xlu0 %5575
        %5577 = vrot.lane.b32.xlu0 %v5399, 64
        %v5578 = vpop.permute.xlu0 %5577
        %5579 = vrot.lane.b32.xlu0 %v5402, 64
        %v5580 = vpop.permute.xlu0 %5579
        %5581 = vrot.lane.b32.xlu0 %v5407, 64
        %v5582 = vpop.permute.xlu0 %5581
        %5583 = vrot.lane.b32.xlu0 %v5410, 64
        %v5584 = vpop.permute.xlu0 %5583
        %5585 = vrot.lane.b32.xlu0 %v5415, 64
        %v5586 = vpop.permute.xlu0 %5585
        %5587 = vrot.lane.b32.xlu0 %v5418, 64
        %v5588 = vpop.permute.xlu0 %5587
        %5589 = vrot.lane.b32.xlu0 %v5423, 64
        %v5590 = vpop.permute.xlu0 %5589
        %5591 = vrot.lane.b32.xlu0 %v5426, 64
        %v5592 = vpop.permute.xlu0 %5591
        %5593 = vrot.lane.b32.xlu0 %v5431, 64
        %v5594 = vpop.permute.xlu0 %5593
        %5595 = vrot.lane.b32.xlu0 %v5434, 64
        %v5596 = vpop.permute.xlu0 %5595
        %v5613 = vadd.f32 %v5533, %v5566
        %v5614 = vadd.f32 %v5534, %v5568
        %v5615 = vadd.f32 %v5535, %v5570
        %v5616 = vadd.f32 %v5536, %v5572
        %v5617 = vadd.f32 %v5537, %v5574
        %v5618 = vadd.f32 %v5538, %v5576
        %v5619 = vadd.f32 %v5539, %v5578
        %v5620 = vadd.f32 %v5540, %v5580
        %v5621 = vadd.f32 %v5541, %v5582
        %v5622 = vadd.f32 %v5542, %v5584
        %v5623 = vadd.f32 %v5543, %v5586
        %v5624 = vadd.f32 %v5544, %v5588
        %v5625 = vadd.f32 %v5545, %v5590
        %v5626 = vadd.f32 %v5546, %v5592
        %v5627 = vadd.f32 %v5547, %v5594
        %v5628 = vadd.f32 %v5548, %v5596
        %vm5629 = vcmask 654848
        %5630 = vst.msk [vmem:[#allocation5] sm:$0xff] %vm5629, %v5613
        %5631 = vst.msk [vmem:[#allocation5 + $0x8] sm:$0xff] %vm5629, %v5614
        %5632 = vst.msk [vmem:[#allocation5 + $0x10] sm:$0xff] %vm5629, %v5615
        %5633 = vst.msk [vmem:[#allocation5 + $0x18] sm:$0xff] %vm5629, %v5616
        %5634 = vst.msk [vmem:[#allocation5 + $0x20] sm:$0xff] %vm5629, %v5617
        %5635 = vst.msk [vmem:[#allocation5 + $0x28] sm:$0xff] %vm5629, %v5618
        %5636 = vst.msk [vmem:[#allocation5 + $0x30] sm:$0xff] %vm5629, %v5619
        %5637 = vst.msk [vmem:[#allocation5 + $0x38] sm:$0xff] %vm5629, %v5620
        %5638 = vst.msk [vmem:[#allocation5 + $0x40] sm:$0xff] %vm5629, %v5621
        %5639 = vst.msk [vmem:[#allocation5 + $0x48] sm:$0xff] %vm5629, %v5622
        %5640 = vst.msk [vmem:[#allocation5 + $0x50] sm:$0xff] %vm5629, %v5623
        %5641 = vst.msk [vmem:[#allocation5 + $0x58] sm:$0xff] %vm5629, %v5624
        %5642 = vst.msk [vmem:[#allocation5 + $0x60] sm:$0xff] %vm5629, %v5625
        %5643 = vst.msk [vmem:[#allocation5 + $0x68] sm:$0xff] %vm5629, %v5626
        %5644 = vst.msk [vmem:[#allocation5 + $0x70] sm:$0xff] %vm5629, %v5627
        %5645 = vst.msk [vmem:[#allocation5 + $0x78] sm:$0xff] %vm5629, %v5628
        %vm5646 = vcmask 39968
        %5647 = vst.msk [vmem:[#allocation3] sm:$0xff] %vm5646, %v5036
        %5648 = vst.msk [vmem:[#allocation3 + $0x8] sm:$0xff] %vm5646, %v5037
        %5649 = vst.msk [vmem:[#allocation3 + $0x10] sm:$0xff] %vm5646, %v5038
        %5650 = vst.msk [vmem:[#allocation3 + $0x18] sm:$0xff] %vm5646, %v5039
        %5651 = vst.msk [vmem:[#allocation3 + $0x20] sm:$0xff] %vm5646, %v5040
        %5652 = vst.msk [vmem:[#allocation3 + $0x28] sm:$0xff] %vm5646, %v5041
        %5653 = vst.msk [vmem:[#allocation3 + $0x30] sm:$0xff] %vm5646, %v5042
        %5654 = vst.msk [vmem:[#allocation3 + $0x38] sm:$0xff] %vm5646, %v5043
        %5655 = vst.msk [vmem:[#allocation3 + $0x40] sm:$0xff] %vm5646, %v5044
        %5656 = vst.msk [vmem:[#allocation3 + $0x48] sm:$0xff] %vm5646, %v5045
        %5657 = vst.msk [vmem:[#allocation3 + $0x50] sm:$0xff] %vm5646, %v5046
        %5658 = vst.msk [vmem:[#allocation3 + $0x58] sm:$0xff] %vm5646, %v5047
        %5659 = vst.msk [vmem:[#allocation3 + $0x60] sm:$0xff] %vm5646, %v5048
        %5660 = vst.msk [vmem:[#allocation3 + $0x68] sm:$0xff] %vm5646, %v5049
        %5661 = vst.msk [vmem:[#allocation3 + $0x70] sm:$0xff] %vm5646, %v5050
        %5662 = vst.msk [vmem:[#allocation3 + $0x78] sm:$0xff] %vm5646, %v5051
        %5663 = vst.msk [vmem:[#allocation4] sm:$0xff] %vm5646, %v5292
        %5664 = vst.msk [vmem:[#allocation4 + $0x8] sm:$0xff] %vm5646, %v5293
        %5665 = vst.msk [vmem:[#allocation4 + $0x10] sm:$0xff] %vm5646, %v5294
        %5666 = vst.msk [vmem:[#allocation4 + $0x18] sm:$0xff] %vm5646, %v5295
        %5667 = vst.msk [vmem:[#allocation4 + $0x20] sm:$0xff] %vm5646, %v5296
        %5668 = vst.msk [vmem:[#allocation4 + $0x28] sm:$0xff] %vm5646, %v5297
        %5669 = vst.msk [vmem:[#allocation4 + $0x30] sm:$0xff] %vm5646, %v5298
        %5670 = vst.msk [vmem:[#allocation4 + $0x38] sm:$0xff] %vm5646, %v5299
        %5671 = vst.msk [vmem:[#allocation4 + $0x40] sm:$0xff] %vm5646, %v5300
        %5672 = vst.msk [vmem:[#allocation4 + $0x48] sm:$0xff] %vm5646, %v5301
        %5673 = vst.msk [vmem:[#allocation4 + $0x50] sm:$0xff] %vm5646, %v5302
        %5674 = vst.msk [vmem:[#allocation4 + $0x58] sm:$0xff] %vm5646, %v5303
        %5675 = vst.msk [vmem:[#allocation4 + $0x60] sm:$0xff] %vm5646, %v5304
        %5676 = vst.msk [vmem:[#allocation4 + $0x68] sm:$0xff] %vm5646, %v5305
        %5677 = vst.msk [vmem:[#allocation4 + $0x70] sm:$0xff] %vm5646, %v5306
        %5678 = vst.msk [vmem:[#allocation4 + $0x78] sm:$0xff] %vm5646, %v5307
        %5679 = vrot.lane.b32.xlu0 %v1426, 88
        %v5680 = vpop.permute.xlu0 %5679
        %5681 = vrot.lane.b32.xlu0 %v1427, 88
        %v5682 = vpop.permute.xlu0 %5681
        %5683 = vrot.lane.b32.xlu0 %v1428, 88
        %v5684 = vpop.permute.xlu0 %5683
        %5685 = vrot.lane.b32.xlu0 %v1429, 88
        %v5686 = vpop.permute.xlu0 %5685
        %5687 = vrot.lane.b32.xlu0 %v1430, 88
        %v5688 = vpop.permute.xlu0 %5687
        %5689 = vrot.lane.b32.xlu0 %v1431, 88
        %v5690 = vpop.permute.xlu0 %5689
        %5691 = vrot.lane.b32.xlu0 %v1432, 88
        %v5692 = vpop.permute.xlu0 %5691
        %5693 = vrot.lane.b32.xlu0 %v1433, 88
        %v5694 = vpop.permute.xlu0 %5693
        %5695 = vrot.lane.b32.xlu0 %v1162, 88
        %v5696 = vpop.permute.xlu0 %5695
        %5697 = vrot.lane.b32.xlu0 %v1163, 88
        %v5698 = vpop.permute.xlu0 %5697
        %5699 = vrot.lane.b32.xlu0 %v1164, 88
        %v5700 = vpop.permute.xlu0 %5699
        %5701 = vrot.lane.b32.xlu0 %v1165, 88
        %v5702 = vpop.permute.xlu0 %5701
        %5703 = vrot.lane.b32.xlu0 %v1166, 88
        %v5704 = vpop.permute.xlu0 %5703
        %5705 = vrot.lane.b32.xlu0 %v1167, 88
        %v5706 = vpop.permute.xlu0 %5705
        %5707 = vrot.lane.b32.xlu0 %v1168, 88
        %v5708 = vpop.permute.xlu0 %5707
        %5709 = vrot.lane.b32.xlu0 %v1169, 88
        %v5710 = vpop.permute.xlu0 %5709
        %v5712 = vsel %vm1434, %v5680, 0
        %v5715 = vsel %vm1434, %v5682, 0
        %v5718 = vsel %vm1434, %v5684, 0
        %v5721 = vsel %vm1434, %v5686, 0
        %v5724 = vsel %vm1434, %v5688, 0
        %v5727 = vsel %vm1434, %v5690, 0
        %v5730 = vsel %vm1434, %v5692, 0
        %v5733 = vsel %vm1434, %v5694, 0
        %v5736 = vsel %vm1434, %v5696, 0
        %v5739 = vsel %vm1434, %v5698, 0
        %v5742 = vsel %vm1434, %v5700, 0
        %v5745 = vsel %vm1434, %v5702, 0
        %v5748 = vsel %vm1434, %v5704, 0
        %v5751 = vsel %vm1434, %v5706, 0
        %v5754 = vsel %vm1434, %v5708, 0
        %v5757 = vsel %vm1434, %v5710, 0
        %5759 = vmatprep.subr.bf16.mxu0 0
        %5760 = vmatpush1.bf16.xpose.msra.mxu0 %v5736
        %5761 = vmatprep.subr.bf16.mxu0 0
        %5762 = vmatpush1.bf16.xpose.msra.mxu0 %v5739
        %5763 = vmatprep.subr.bf16.mxu0 0
        %5764 = vmatpush1.bf16.xpose.msra.mxu0 %v5742
        %5765 = vmatprep.subr.bf16.mxu0 0
        %5766 = vmatpush1.bf16.xpose.msra.mxu0 %v5745
        %5767 = vmatprep.subr.bf16.mxu0 0
        %5768 = vmatpush1.bf16.xpose.msra.mxu0 %v5748
        %5769 = vmatprep.subr.bf16.mxu0 0
        %5770 = vmatpush1.bf16.xpose.msra.mxu0 %v5751
        %5771 = vmatprep.subr.bf16.mxu0 0
        %5772 = vmatpush1.bf16.xpose.msra.mxu0 %v5754
        %5773 = vmatprep.subr.bf16.mxu0 0
        %5774 = vmatpush1.bf16.xpose.msra.mxu0 %v5757
        %5775 = vmatprep.subr.bf16.mxu0 0
        %5776 = vmatpush1.bf16.xpose.msra.mxu0 0
        %5777 = vmatprep.subr.bf16.mxu0 0
        %5778 = vmatpush1.bf16.xpose.msra.mxu0 0
        %5779 = vmatprep.subr.bf16.mxu0 0
        %5780 = vmatpush1.bf16.xpose.msra.mxu0 0
        %5781 = vmatprep.subr.bf16.mxu0 0
        %5782 = vmatpush1.bf16.xpose.msra.mxu0 0
        %5783 = vmatprep.subr.bf16.mxu0 0
        %5784 = vmatpush1.bf16.xpose.msra.mxu0 0
        %5785 = vmatprep.subr.bf16.mxu0 0
        %5786 = vmatpush1.bf16.xpose.msra.mxu0 0
        %5787 = vmatprep.subr.bf16.mxu0 0
        %5788 = vmatpush1.bf16.xpose.msra.mxu0 0
        %5789 = vmatprep.subr.bf16.mxu0 0
        %5790 = vmatpush1.bf16.xpose.msra.mxu0 0
        %5791 = vmatprep.mubr.bf16.mxu0 0
        %5792 = vmatmul.mubr.bf16.gmra.mrb[0].mxu0 %v5712
        %v5793 = vpop.f32.mrb[0].mxu0
        %v5794 = vadd.f32 %v1410, %v5793
        %v5795 = vpop.f32.mrb[0].mxu0
        %v5796 = vpop.f32.mrb[0].mxu0
        %v5797 = vadd.f32 %v1411, %v5796
        %v5798 = vpop.f32.mrb[0].mxu0
        %5799 = vmatprep.mubr.bf16.mxu0 0
        %5800 = vmatmul.mubr.bf16.gmra.mrb[0].mxu0 %v5715
        %v5801 = vpop.f32.mrb[0].mxu0
        %v5802 = vadd.f32 %v1412, %v5801
        %v5803 = vpop.f32.mrb[0].mxu0
        %v5804 = vpop.f32.mrb[0].mxu0
        %v5805 = vadd.f32 %v1413, %v5804
        %v5806 = vpop.f32.mrb[0].mxu0
        %5807 = vmatprep.mubr.bf16.mxu0 0
        %5808 = vmatmul.mubr.bf16.gmra.mrb[0].mxu0 %v5718
        %v5809 = vpop.f32.mrb[0].mxu0
        %v5810 = vadd.f32 %v1414, %v5809
        %v5811 = vpop.f32.mrb[0].mxu0
        %v5812 = vpop.f32.mrb[0].mxu0
        %v5813 = vadd.f32 %v1415, %v5812
        %v5814 = vpop.f32.mrb[0].mxu0
        %5815 = vmatprep.mubr.bf16.mxu0 0
        %5816 = vmatmul.mubr.bf16.gmra.mrb[0].mxu0 %v5721
        %v5817 = vpop.f32.mrb[0].mxu0
        %v5818 = vadd.f32 %v1416, %v5817
        %v5819 = vpop.f32.mrb[0].mxu0
        %v5820 = vpop.f32.mrb[0].mxu0
        %v5821 = vadd.f32 %v1417, %v5820
        %v5822 = vpop.f32.mrb[0].mxu0
        %5823 = vmatprep.mubr.bf16.mxu0 0
        %5824 = vmatmul.mubr.bf16.gmra.mrb[0].mxu0 %v5724
        %v5825 = vpop.f32.mrb[0].mxu0
        %v5826 = vadd.f32 %v1418, %v5825
        %v5827 = vpop.f32.mrb[0].mxu0
        %v5828 = vpop.f32.mrb[0].mxu0
        %v5829 = vadd.f32 %v1419, %v5828
        %v5830 = vpop.f32.mrb[0].mxu0
        %5831 = vmatprep.mubr.bf16.mxu0 0
        %5832 = vmatmul.mubr.bf16.gmra.mrb[0].mxu0 %v5727
        %v5833 = vpop.f32.mrb[0].mxu0
        %v5834 = vadd.f32 %v1420, %v5833
        %v5835 = vpop.f32.mrb[0].mxu0
        %v5836 = vpop.f32.mrb[0].mxu0
        %v5837 = vadd.f32 %v1421, %v5836
        %v5838 = vpop.f32.mrb[0].mxu0
        %5839 = vmatprep.mubr.bf16.mxu0 0
        %5840 = vmatmul.mubr.bf16.gmra.mrb[0].mxu0 %v5730
        %v5841 = vpop.f32.mrb[0].mxu0
        %v5842 = vadd.f32 %v1422, %v5841
        %v5843 = vpop.f32.mrb[0].mxu0
        %v5844 = vpop.f32.mrb[0].mxu0
        %v5845 = vadd.f32 %v1423, %v5844
        %v5846 = vpop.f32.mrb[0].mxu0
        %5847 = vmatprep.mubr.bf16.mxu0 0
        %5848 = vmatmul.mubr.bf16.gmra.mrb[0].mxu0 %v5733
        %v5849 = vpop.f32.mrb[0].mxu0
        %v5850 = vadd.f32 %v1424, %v5849
        %v5851 = vpop.f32.mrb[0].mxu0
        %v5852 = vpop.f32.mrb[0].mxu0
        %v5853 = vadd.f32 %v1425, %v5852
        %v5854 = vpop.f32.mrb[0].mxu0
        %5855 = vdwg.mxu0
        %v5856 = vld [vmem:[#allocation3] sm:$0xff]
        %v5857 = vld [vmem:[#allocation3 + $0x8] sm:$0xff]
        %v5858 = vld [vmem:[#allocation3 + $0x10] sm:$0xff]
        %v5859 = vld [vmem:[#allocation3 + $0x18] sm:$0xff]
        %v5860 = vld [vmem:[#allocation3 + $0x20] sm:$0xff]
        %v5861 = vld [vmem:[#allocation3 + $0x28] sm:$0xff]
        %v5862 = vld [vmem:[#allocation3 + $0x30] sm:$0xff]
        %v5863 = vld [vmem:[#allocation3 + $0x38] sm:$0xff]
        %v5864 = vld [vmem:[#allocation3 + $0x40] sm:$0xff]
        %v5865 = vld [vmem:[#allocation3 + $0x48] sm:$0xff]
        %v5866 = vld [vmem:[#allocation3 + $0x50] sm:$0xff]
        %v5867 = vld [vmem:[#allocation3 + $0x58] sm:$0xff]
        %v5868 = vld [vmem:[#allocation3 + $0x60] sm:$0xff]
        %v5869 = vld [vmem:[#allocation3 + $0x68] sm:$0xff]
        %v5870 = vld [vmem:[#allocation3 + $0x70] sm:$0xff]
        %v5871 = vld [vmem:[#allocation3 + $0x78] sm:$0xff]
        %5872 = vmax.xlane.f32.xlu0 %v5794
        %v5873 = vpop.xlane.xlu0 %5872
        %5874 = vmax.xlane.f32.xlu0 %v5797
        %v5875 = vpop.xlane.xlu0 %5874
        %5876 = vmax.xlane.f32.xlu0 %v5802
        %v5877 = vpop.xlane.xlu0 %5876
        %5878 = vmax.xlane.f32.xlu0 %v5805
        %v5879 = vpop.xlane.xlu0 %5878
        %5880 = vmax.xlane.f32.xlu0 %v5810
        %v5881 = vpop.xlane.xlu0 %5880
        %5882 = vmax.xlane.f32.xlu0 %v5813
        %v5883 = vpop.xlane.xlu0 %5882
        %5884 = vmax.xlane.f32.xlu0 %v5818
        %v5885 = vpop.xlane.xlu0 %5884
        %5886 = vmax.xlane.f32.xlu0 %v5821
        %v5887 = vpop.xlane.xlu0 %5886
        %5888 = vmax.xlane.f32.xlu0 %v5826
        %v5889 = vpop.xlane.xlu0 %5888
        %5890 = vmax.xlane.f32.xlu0 %v5829
        %v5891 = vpop.xlane.xlu0 %5890
        %5892 = vmax.xlane.f32.xlu0 %v5834
        %v5893 = vpop.xlane.xlu0 %5892
        %5894 = vmax.xlane.f32.xlu0 %v5837
        %v5895 = vpop.xlane.xlu0 %5894
        %5896 = vmax.xlane.f32.xlu0 %v5842
        %v5897 = vpop.xlane.xlu0 %5896
        %5898 = vmax.xlane.f32.xlu0 %v5845
        %v5899 = vpop.xlane.xlu0 %5898
        %5900 = vmax.xlane.f32.xlu0 %v5850
        %v5901 = vpop.xlane.xlu0 %5900
        %5902 = vmax.xlane.f32.xlu0 %v5853
        %v5903 = vpop.xlane.xlu0 %5902
        %v5904 = vmax.f32 %v5856, %v5873
        %v5905 = vmax.f32 %v5857, %v5875
        %v5906 = vmax.f32 %v5858, %v5877
        %v5907 = vmax.f32 %v5859, %v5879
        %v5908 = vmax.f32 %v5860, %v5881
        %v5909 = vmax.f32 %v5861, %v5883
        %v5910 = vmax.f32 %v5862, %v5885
        %v5911 = vmax.f32 %v5863, %v5887
        %v5912 = vmax.f32 %v5864, %v5889
        %v5913 = vmax.f32 %v5865, %v5891
        %v5914 = vmax.f32 %v5866, %v5893
        %v5915 = vmax.f32 %v5867, %v5895
        %v5916 = vmax.f32 %v5868, %v5897
        %v5917 = vmax.f32 %v5869, %v5899
        %v5918 = vmax.f32 %v5870, %v5901
        %v5919 = vmax.f32 %v5871, %v5903
        %v5920 = vsub.f32 %v5856, %v5904
        %v5921 = vsub.f32 %v5857, %v5905
        %v5922 = vsub.f32 %v5858, %v5906
        %v5923 = vsub.f32 %v5859, %v5907
        %v5924 = vsub.f32 %v5860, %v5908
        %v5925 = vsub.f32 %v5861, %v5909
        %v5926 = vsub.f32 %v5862, %v5910
        %v5927 = vsub.f32 %v5863, %v5911
        %v5928 = vsub.f32 %v5864, %v5912
        %v5929 = vsub.f32 %v5865, %v5913
        %v5930 = vsub.f32 %v5866, %v5914
        %v5931 = vsub.f32 %v5867, %v5915
        %v5932 = vsub.f32 %v5868, %v5916
        %v5933 = vsub.f32 %v5869, %v5917
        %v5934 = vsub.f32 %v5870, %v5918
        %v5935 = vsub.f32 %v5871, %v5919
        %v5936 = vmul.f32 %v5920, 1.442695
        %v5937 = vpow.pop %v5936
        %v5938 = vmul.f32 %v5921, 1.442695
        %v5939 = vpow.pop %v5938
        %v5940 = vmul.f32 %v5922, 1.442695
        %v5941 = vpow.pop %v5940
        %v5942 = vmul.f32 %v5923, 1.442695
        %v5943 = vpow.pop %v5942
        %v5944 = vmul.f32 %v5924, 1.442695
        %v5945 = vpow.pop %v5944
        %v5946 = vmul.f32 %v5925, 1.442695
        %v5947 = vpow.pop %v5946
        %v5948 = vmul.f32 %v5926, 1.442695
        %v5949 = vpow.pop %v5948
        %v5950 = vmul.f32 %v5927, 1.442695
        %v5951 = vpow.pop %v5950
        %v5952 = vmul.f32 %v5928, 1.442695
        %v5953 = vpow.pop %v5952
        %v5954 = vmul.f32 %v5929, 1.442695
        %v5955 = vpow.pop %v5954
        %v5956 = vmul.f32 %v5930, 1.442695
        %v5957 = vpow.pop %v5956
        %v5958 = vmul.f32 %v5931, 1.442695
        %v5959 = vpow.pop %v5958
        %v5960 = vmul.f32 %v5932, 1.442695
        %v5961 = vpow.pop %v5960
        %v5962 = vmul.f32 %v5933, 1.442695
        %v5963 = vpow.pop %v5962
        %v5964 = vmul.f32 %v5934, 1.442695
        %v5965 = vpow.pop %v5964
        %v5966 = vmul.f32 %v5935, 1.442695
        %v5967 = vpow.pop %v5966
        %5969 = vset.pattern.permute.xlu0 5
        %5970 = vperm.xlu0 %5969, %v5904
        %v5971 = vpop.permute.xlu0 %5970
        %5974 = vset.pattern.permute.xlu0 5
        %5975 = vperm.xlu0 %5974, %v5905
        %v5976 = vpop.permute.xlu0 %5975
        %5979 = vset.pattern.permute.xlu0 5
        %5980 = vperm.xlu0 %5979, %v5906
        %v5981 = vpop.permute.xlu0 %5980
        %5984 = vset.pattern.permute.xlu0 5
        %5985 = vperm.xlu0 %5984, %v5907
        %v5986 = vpop.permute.xlu0 %5985
        %5989 = vset.pattern.permute.xlu0 5
        %5990 = vperm.xlu0 %5989, %v5908
        %v5991 = vpop.permute.xlu0 %5990
        %5994 = vset.pattern.permute.xlu0 5
        %5995 = vperm.xlu0 %5994, %v5909
        %v5996 = vpop.permute.xlu0 %5995
        %5999 = vset.pattern.permute.xlu0 5
        %6000 = vperm.xlu0 %5999, %v5910
        %v6001 = vpop.permute.xlu0 %6000
        %6004 = vset.pattern.permute.xlu0 5
        %6005 = vperm.xlu0 %6004, %v5911
        %v6006 = vpop.permute.xlu0 %6005
        %6009 = vset.pattern.permute.xlu0 5
        %6010 = vperm.xlu0 %6009, %v5912
        %v6011 = vpop.permute.xlu0 %6010
        %6014 = vset.pattern.permute.xlu0 5
        %6015 = vperm.xlu0 %6014, %v5913
        %v6016 = vpop.permute.xlu0 %6015
        %6019 = vset.pattern.permute.xlu0 5
        %6020 = vperm.xlu0 %6019, %v5914
        %v6021 = vpop.permute.xlu0 %6020
        %6024 = vset.pattern.permute.xlu0 5
        %6025 = vperm.xlu0 %6024, %v5915
        %v6026 = vpop.permute.xlu0 %6025
        %6029 = vset.pattern.permute.xlu0 5
        %6030 = vperm.xlu0 %6029, %v5916
        %v6031 = vpop.permute.xlu0 %6030
        %6034 = vset.pattern.permute.xlu0 5
        %6035 = vperm.xlu0 %6034, %v5917
        %v6036 = vpop.permute.xlu0 %6035
        %6039 = vset.pattern.permute.xlu0 5
        %6040 = vperm.xlu0 %6039, %v5918
        %v6041 = vpop.permute.xlu0 %6040
        %6044 = vset.pattern.permute.xlu0 5
        %6045 = vperm.xlu0 %6044, %v5919
        %v6046 = vpop.permute.xlu0 %6045
        %v6048 = vsub.f32 %v5794, %v5971
        %v6049 = vsub.f32 %v5797, %v5976
        %v6050 = vsub.f32 %v5802, %v5981
        %v6051 = vsub.f32 %v5805, %v5986
        %v6052 = vsub.f32 %v5810, %v5991
        %v6053 = vsub.f32 %v5813, %v5996
        %v6054 = vsub.f32 %v5818, %v6001
        %v6055 = vsub.f32 %v5821, %v6006
        %v6056 = vsub.f32 %v5826, %v6011
        %v6057 = vsub.f32 %v5829, %v6016
        %v6058 = vsub.f32 %v5834, %v6021
        %v6059 = vsub.f32 %v5837, %v6026
        %v6060 = vsub.f32 %v5842, %v6031
        %v6061 = vsub.f32 %v5845, %v6036
        %v6062 = vsub.f32 %v5850, %v6041
        %v6063 = vsub.f32 %v5853, %v6046
        %v6064 = vmul.f32 %v6048, 1.442695
        %v6065 = vpow.pop %v6064
        %v6066 = vmul.f32 %v6049, 1.442695
        %v6067 = vpow.pop %v6066
        %v6068 = vmul.f32 %v6050, 1.442695
        %v6069 = vpow.pop %v6068
        %v6070 = vmul.f32 %v6051, 1.442695
        %v6071 = vpow.pop %v6070
        %v6072 = vmul.f32 %v6052, 1.442695
        %v6073 = vpow.pop %v6072
        %v6074 = vmul.f32 %v6053, 1.442695
        %v6075 = vpow.pop %v6074
        %v6076 = vmul.f32 %v6054, 1.442695
        %v6077 = vpow.pop %v6076
        %v6078 = vmul.f32 %v6055, 1.442695
        %v6079 = vpow.pop %v6078
        %v6080 = vmul.f32 %v6056, 1.442695
        %v6081 = vpow.pop %v6080
        %v6082 = vmul.f32 %v6057, 1.442695
        %v6083 = vpow.pop %v6082
        %v6084 = vmul.f32 %v6058, 1.442695
        %v6085 = vpow.pop %v6084
        %v6086 = vmul.f32 %v6059, 1.442695
        %v6087 = vpow.pop %v6086
        %v6088 = vmul.f32 %v6060, 1.442695
        %v6089 = vpow.pop %v6088
        %v6090 = vmul.f32 %v6061, 1.442695
        %v6091 = vpow.pop %v6090
        %v6092 = vmul.f32 %v6062, 1.442695
        %v6093 = vpow.pop %v6092
        %v6094 = vmul.f32 %v6063, 1.442695
        %v6095 = vpow.pop %v6094
        %v6096 = vld [vmem:[#allocation4] sm:$0xff]
        %v6097 = vld [vmem:[#allocation4 + $0x8] sm:$0xff]
        %v6098 = vld [vmem:[#allocation4 + $0x10] sm:$0xff]
        %v6099 = vld [vmem:[#allocation4 + $0x18] sm:$0xff]
        %v6100 = vld [vmem:[#allocation4 + $0x20] sm:$0xff]
        %v6101 = vld [vmem:[#allocation4 + $0x28] sm:$0xff]
        %v6102 = vld [vmem:[#allocation4 + $0x30] sm:$0xff]
        %v6103 = vld [vmem:[#allocation4 + $0x38] sm:$0xff]
        %v6104 = vld [vmem:[#allocation4 + $0x40] sm:$0xff]
        %v6105 = vld [vmem:[#allocation4 + $0x48] sm:$0xff]
        %v6106 = vld [vmem:[#allocation4 + $0x50] sm:$0xff]
        %v6107 = vld [vmem:[#allocation4 + $0x58] sm:$0xff]
        %v6108 = vld [vmem:[#allocation4 + $0x60] sm:$0xff]
        %v6109 = vld [vmem:[#allocation4 + $0x68] sm:$0xff]
        %v6110 = vld [vmem:[#allocation4 + $0x70] sm:$0xff]
        %v6111 = vld [vmem:[#allocation4 + $0x78] sm:$0xff]
        %v6112 = vmul.f32 %v5937, %v6096
        %v6113 = vmul.f32 %v5939, %v6097
        %v6114 = vmul.f32 %v5941, %v6098
        %v6115 = vmul.f32 %v5943, %v6099
        %v6116 = vmul.f32 %v5945, %v6100
        %v6117 = vmul.f32 %v5947, %v6101
        %v6118 = vmul.f32 %v5949, %v6102
        %v6119 = vmul.f32 %v5951, %v6103
        %v6120 = vmul.f32 %v5953, %v6104
        %v6121 = vmul.f32 %v5955, %v6105
        %v6122 = vmul.f32 %v5957, %v6106
        %v6123 = vmul.f32 %v5959, %v6107
        %v6124 = vmul.f32 %v5961, %v6108
        %v6125 = vmul.f32 %v5963, %v6109
        %v6126 = vmul.f32 %v5965, %v6110
        %v6127 = vmul.f32 %v5967, %v6111
        %6128 = vadd.xlane.f32.xlu0 %v6065
        %v6129 = vpop.xlane.xlu0 %6128
        %6130 = vadd.xlane.f32.xlu0 %v6067
        %v6131 = vpop.xlane.xlu0 %6130
        %6132 = vadd.xlane.f32.xlu0 %v6069
        %v6133 = vpop.xlane.xlu0 %6132
        %6134 = vadd.xlane.f32.xlu0 %v6071
        %v6135 = vpop.xlane.xlu0 %6134
        %6136 = vadd.xlane.f32.xlu0 %v6073
        %v6137 = vpop.xlane.xlu0 %6136
        %6138 = vadd.xlane.f32.xlu0 %v6075
        %v6139 = vpop.xlane.xlu0 %6138
        %6140 = vadd.xlane.f32.xlu0 %v6077
        %v6141 = vpop.xlane.xlu0 %6140
        %6142 = vadd.xlane.f32.xlu0 %v6079
        %v6143 = vpop.xlane.xlu0 %6142
        %6144 = vadd.xlane.f32.xlu0 %v6081
        %v6145 = vpop.xlane.xlu0 %6144
        %6146 = vadd.xlane.f32.xlu0 %v6083
        %v6147 = vpop.xlane.xlu0 %6146
        %6148 = vadd.xlane.f32.xlu0 %v6085
        %v6149 = vpop.xlane.xlu0 %6148
        %6150 = vadd.xlane.f32.xlu0 %v6087
        %v6151 = vpop.xlane.xlu0 %6150
        %6152 = vadd.xlane.f32.xlu0 %v6089
        %v6153 = vpop.xlane.xlu0 %6152
        %6154 = vadd.xlane.f32.xlu0 %v6091
        %v6155 = vpop.xlane.xlu0 %6154
        %6156 = vadd.xlane.f32.xlu0 %v6093
        %v6157 = vpop.xlane.xlu0 %6156
        %6158 = vadd.xlane.f32.xlu0 %v6095
        %v6159 = vpop.xlane.xlu0 %6158
        %v6160 = vadd.f32 %v6112, %v6129
        %v6161 = vadd.f32 %v6113, %v6131
        %v6162 = vadd.f32 %v6114, %v6133
        %v6163 = vadd.f32 %v6115, %v6135
        %v6164 = vadd.f32 %v6116, %v6137
        %v6165 = vadd.f32 %v6117, %v6139
        %v6166 = vadd.f32 %v6118, %v6141
        %v6167 = vadd.f32 %v6119, %v6143
        %v6168 = vadd.f32 %v6120, %v6145
        %v6169 = vadd.f32 %v6121, %v6147
        %v6170 = vadd.f32 %v6122, %v6149
        %v6171 = vadd.f32 %v6123, %v6151
        %v6172 = vadd.f32 %v6124, %v6153
        %v6173 = vadd.f32 %v6125, %v6155
        %v6174 = vadd.f32 %v6126, %v6157
        %v6175 = vadd.f32 %v6127, %v6159
        %v6176 = vpack.c.bf16 %v6067, %v6065
        %v6177 = vpack.c.bf16 %v6071, %v6069
        %v6178 = vpack.c.bf16 %v6075, %v6073
        %v6179 = vpack.c.bf16 %v6079, %v6077
        %v6180 = vpack.c.bf16 %v6083, %v6081
        %v6181 = vpack.c.bf16 %v6087, %v6085
        %v6182 = vpack.c.bf16 %v6091, %v6089
        %v6183 = vpack.c.bf16 %v6095, %v6093
        %6184 = vrot.lane.b32.xlu0 %v1386, 48
        %v6185 = vpop.permute.xlu0 %6184
        %6186 = vrot.lane.b32.xlu0 %v1387, 48
        %v6187 = vpop.permute.xlu0 %6186
        %6188 = vrot.lane.b32.xlu0 %v1388, 48
        %v6189 = vpop.permute.xlu0 %6188
        %6190 = vrot.lane.b32.xlu0 %v1389, 48
        %v6191 = vpop.permute.xlu0 %6190
        %6192 = vrot.lane.b32.xlu0 %v1390, 48
        %v6193 = vpop.permute.xlu0 %6192
        %6194 = vrot.lane.b32.xlu0 %v1391, 48
        %v6195 = vpop.permute.xlu0 %6194
        %6196 = vrot.lane.b32.xlu0 %v1392, 48
        %v6197 = vpop.permute.xlu0 %6196
        %6198 = vrot.lane.b32.xlu0 %v1393, 48
        %v6199 = vpop.permute.xlu0 %6198
        %6208 = vmatprep.subr.bf16.mxu0 0
        %6209 = vmatpush1.bf16.msra.mxu0 %v6185
        %6210 = vmatprep.subr.bf16.mxu0 0
        %6211 = vmatpush1.bf16.msra.mxu0 %v6187
        %6212 = vmatprep.subr.bf16.mxu0 0
        %6213 = vmatpush1.bf16.msra.mxu0 %v6189
        %6214 = vmatprep.subr.bf16.mxu0 0
        %6215 = vmatpush1.bf16.msra.mxu0 %v6191
        %6216 = vmatprep.subr.bf16.mxu0 0
        %6217 = vmatpush1.bf16.msra.mxu0 %v6193
        %6218 = vmatprep.subr.bf16.mxu0 0
        %6219 = vmatpush1.bf16.msra.mxu0 %v6195
        %6220 = vmatprep.subr.bf16.mxu0 0
        %6221 = vmatpush1.bf16.msra.mxu0 %v6197
        %6222 = vmatprep.subr.bf16.mxu0 0
        %6223 = vmatpush1.bf16.msra.mxu0 %v6199
        %6224 = vmatprep.subr.bf16.mxu0 0
        %6225 = vmatpush1.bf16.msra.mxu0 0
        %6226 = vmatprep.subr.bf16.mxu0 0
        %6227 = vmatpush1.bf16.msra.mxu0 0
        %6228 = vmatprep.subr.bf16.mxu0 0
        %6229 = vmatpush1.bf16.msra.mxu0 0
        %6230 = vmatprep.subr.bf16.mxu0 0
        %6231 = vmatpush1.bf16.msra.mxu0 0
        %6232 = vmatprep.subr.bf16.mxu0 0
        %6233 = vmatpush1.bf16.msra.mxu0 0
        %6234 = vmatprep.subr.bf16.mxu0 0
        %6235 = vmatpush1.bf16.msra.mxu0 0
        %6236 = vmatprep.subr.bf16.mxu0 0
        %6237 = vmatpush1.bf16.msra.mxu0 0
        %6238 = vmatprep.subr.bf16.mxu0 0
        %6239 = vmatpush1.bf16.msra.mxu0 0
        %6240 = vmatprep.mubr.bf16.mxu0 0
        %6241 = vmatmul.mubr.bf16.gmra.mrb[0].mxu0 %v6176
        %v6242 = vpop.f32.mrb[0].mxu0
        %v6243 = vadd.f32 0.0, %v6242
        %v6244 = vpop.f32.mrb[0].mxu0
        %v6245 = vpop.f32.mrb[0].mxu0
        %v6246 = vadd.f32 0.0, %v6245
        %v6247 = vpop.f32.mrb[0].mxu0
        %6248 = vmatprep.mubr.bf16.mxu0 0
        %6249 = vmatmul.mubr.bf16.gmra.mrb[0].mxu0 %v6177
        %v6250 = vpop.f32.mrb[0].mxu0
        %v6251 = vadd.f32 0.0, %v6250
        %v6252 = vpop.f32.mrb[0].mxu0
        %v6253 = vpop.f32.mrb[0].mxu0
        %v6254 = vadd.f32 0.0, %v6253
        %v6255 = vpop.f32.mrb[0].mxu0
        %6256 = vmatprep.mubr.bf16.mxu0 0
        %6257 = vmatmul.mubr.bf16.gmra.mrb[0].mxu0 %v6178
        %v6258 = vpop.f32.mrb[0].mxu0
        %v6259 = vadd.f32 0.0, %v6258
        %v6260 = vpop.f32.mrb[0].mxu0
        %v6261 = vpop.f32.mrb[0].mxu0
        %v6262 = vadd.f32 0.0, %v6261
        %v6263 = vpop.f32.mrb[0].mxu0
        %6264 = vmatprep.mubr.bf16.mxu0 0
        %6265 = vmatmul.mubr.bf16.gmra.mrb[0].mxu0 %v6179
        %v6266 = vpop.f32.mrb[0].mxu0
        %v6267 = vadd.f32 0.0, %v6266
        %v6268 = vpop.f32.mrb[0].mxu0
        %v6269 = vpop.f32.mrb[0].mxu0
        %v6270 = vadd.f32 0.0, %v6269
        %v6271 = vpop.f32.mrb[0].mxu0
        %6272 = vmatprep.mubr.bf16.mxu0 0
        %6273 = vmatmul.mubr.bf16.gmra.mrb[0].mxu0 %v6180
        %v6274 = vpop.f32.mrb[0].mxu0
        %v6275 = vadd.f32 0.0, %v6274
        %v6276 = vpop.f32.mrb[0].mxu0
        %v6277 = vpop.f32.mrb[0].mxu0
        %v6278 = vadd.f32 0.0, %v6277
        %v6279 = vpop.f32.mrb[0].mxu0
        %6280 = vmatprep.mubr.bf16.mxu0 0
        %6281 = vmatmul.mubr.bf16.gmra.mrb[0].mxu0 %v6181
        %v6282 = vpop.f32.mrb[0].mxu0
        %v6283 = vadd.f32 0.0, %v6282
        %v6284 = vpop.f32.mrb[0].mxu0
        %v6285 = vpop.f32.mrb[0].mxu0
        %v6286 = vadd.f32 0.0, %v6285
        %v6287 = vpop.f32.mrb[0].mxu0
        %6288 = vmatprep.mubr.bf16.mxu0 0
        %6289 = vmatmul.mubr.bf16.gmra.mrb[0].mxu0 %v6182
        %v6290 = vpop.f32.mrb[0].mxu0
        %v6291 = vadd.f32 0.0, %v6290
        %v6292 = vpop.f32.mrb[0].mxu0
        %v6293 = vpop.f32.mrb[0].mxu0
        %v6294 = vadd.f32 0.0, %v6293
        %v6295 = vpop.f32.mrb[0].mxu0
        %6296 = vmatprep.mubr.bf16.mxu0 0
        %6297 = vmatmul.mubr.bf16.gmra.mrb[0].mxu0 %v6183
        %v6298 = vpop.f32.mrb[0].mxu0
        %v6299 = vadd.f32 0.0, %v6298
        %v6300 = vpop.f32.mrb[0].mxu0
        %v6301 = vpop.f32.mrb[0].mxu0
        %v6302 = vadd.f32 0.0, %v6301
        %v6303 = vpop.f32.mrb[0].mxu0
        %6304 = vdwg.mxu0
        %v6305 = vld [vmem:[#allocation5] sm:$0xff]
        %v6306 = vld [vmem:[#allocation5 + $0x8] sm:$0xff]
        %v6307 = vld [vmem:[#allocation5 + $0x10] sm:$0xff]
        %v6308 = vld [vmem:[#allocation5 + $0x18] sm:$0xff]
        %v6309 = vld [vmem:[#allocation5 + $0x20] sm:$0xff]
        %v6310 = vld [vmem:[#allocation5 + $0x28] sm:$0xff]
        %v6311 = vld [vmem:[#allocation5 + $0x30] sm:$0xff]
        %v6312 = vld [vmem:[#allocation5 + $0x38] sm:$0xff]
        %v6313 = vld [vmem:[#allocation5 + $0x40] sm:$0xff]
        %v6314 = vld [vmem:[#allocation5 + $0x48] sm:$0xff]
        %v6315 = vld [vmem:[#allocation5 + $0x50] sm:$0xff]
        %v6316 = vld [vmem:[#allocation5 + $0x58] sm:$0xff]
        %v6317 = vld [vmem:[#allocation5 + $0x60] sm:$0xff]
        %v6318 = vld [vmem:[#allocation5 + $0x68] sm:$0xff]
        %v6319 = vld [vmem:[#allocation5 + $0x70] sm:$0xff]
        %v6320 = vld [vmem:[#allocation5 + $0x78] sm:$0xff]
        %6322 = vset.pattern.permute.xlu0 5
        %6323 = vperm.xlu0 %6322, %v5937
        %v6324 = vpop.permute.xlu0 %6323
        %6327 = vset.pattern.permute.xlu0 5
        %6328 = vperm.xlu0 %6327, %v5939
        %v6329 = vpop.permute.xlu0 %6328
        %6332 = vset.pattern.permute.xlu0 5
        %6333 = vperm.xlu0 %6332, %v5941
        %v6334 = vpop.permute.xlu0 %6333
        %6337 = vset.pattern.permute.xlu0 5
        %6338 = vperm.xlu0 %6337, %v5943
        %v6339 = vpop.permute.xlu0 %6338
        %6342 = vset.pattern.permute.xlu0 5
        %6343 = vperm.xlu0 %6342, %v5945
        %v6344 = vpop.permute.xlu0 %6343
        %6347 = vset.pattern.permute.xlu0 5
        %6348 = vperm.xlu0 %6347, %v5947
        %v6349 = vpop.permute.xlu0 %6348
        %6352 = vset.pattern.permute.xlu0 5
        %6353 = vperm.xlu0 %6352, %v5949
        %v6354 = vpop.permute.xlu0 %6353
        %6357 = vset.pattern.permute.xlu0 5
        %6358 = vperm.xlu0 %6357, %v5951
        %v6359 = vpop.permute.xlu0 %6358
        %6362 = vset.pattern.permute.xlu0 5
        %6363 = vperm.xlu0 %6362, %v5953
        %v6364 = vpop.permute.xlu0 %6363
        %6367 = vset.pattern.permute.xlu0 5
        %6368 = vperm.xlu0 %6367, %v5955
        %v6369 = vpop.permute.xlu0 %6368
        %6372 = vset.pattern.permute.xlu0 5
        %6373 = vperm.xlu0 %6372, %v5957
        %v6374 = vpop.permute.xlu0 %6373
        %6377 = vset.pattern.permute.xlu0 5
        %6378 = vperm.xlu0 %6377, %v5959
        %v6379 = vpop.permute.xlu0 %6378
        %6382 = vset.pattern.permute.xlu0 5
        %6383 = vperm.xlu0 %6382, %v5961
        %v6384 = vpop.permute.xlu0 %6383
        %6387 = vset.pattern.permute.xlu0 5
        %6388 = vperm.xlu0 %6387, %v5963
        %v6389 = vpop.permute.xlu0 %6388
        %6392 = vset.pattern.permute.xlu0 5
        %6393 = vperm.xlu0 %6392, %v5965
        %v6394 = vpop.permute.xlu0 %6393
        %6397 = vset.pattern.permute.xlu0 5
        %6398 = vperm.xlu0 %6397, %v5967
        %v6399 = vpop.permute.xlu0 %6398
        %v6401 = vmul.f32 %v6324, %v6305
        %v6402 = vmul.f32 %v6329, %v6306
        %v6403 = vmul.f32 %v6334, %v6307
        %v6404 = vmul.f32 %v6339, %v6308
        %v6405 = vmul.f32 %v6344, %v6309
        %v6406 = vmul.f32 %v6349, %v6310
        %v6407 = vmul.f32 %v6354, %v6311
        %v6408 = vmul.f32 %v6359, %v6312
        %v6409 = vmul.f32 %v6364, %v6313
        %v6410 = vmul.f32 %v6369, %v6314
        %v6411 = vmul.f32 %v6374, %v6315
        %v6412 = vmul.f32 %v6379, %v6316
        %v6413 = vmul.f32 %v6384, %v6317
        %v6414 = vmul.f32 %v6389, %v6318
        %v6415 = vmul.f32 %v6394, %v6319
        %v6416 = vmul.f32 %v6399, %v6320
        %6433 = vrot.lane.b32.xlu0 %v6243, 80
        %v6434 = vpop.permute.xlu0 %6433
        %6435 = vrot.lane.b32.xlu0 %v6246, 80
        %v6436 = vpop.permute.xlu0 %6435
        %6437 = vrot.lane.b32.xlu0 %v6251, 80
        %v6438 = vpop.permute.xlu0 %6437
        %6439 = vrot.lane.b32.xlu0 %v6254, 80
        %v6440 = vpop.permute.xlu0 %6439
        %6441 = vrot.lane.b32.xlu0 %v6259, 80
        %v6442 = vpop.permute.xlu0 %6441
        %6443 = vrot.lane.b32.xlu0 %v6262, 80
        %v6444 = vpop.permute.xlu0 %6443
        %6445 = vrot.lane.b32.xlu0 %v6267, 80
        %v6446 = vpop.permute.xlu0 %6445
        %6447 = vrot.lane.b32.xlu0 %v6270, 80
        %v6448 = vpop.permute.xlu0 %6447
        %6449 = vrot.lane.b32.xlu0 %v6275, 80
        %v6450 = vpop.permute.xlu0 %6449
        %6451 = vrot.lane.b32.xlu0 %v6278, 80
        %v6452 = vpop.permute.xlu0 %6451
        %6453 = vrot.lane.b32.xlu0 %v6283, 80
        %v6454 = vpop.permute.xlu0 %6453
        %6455 = vrot.lane.b32.xlu0 %v6286, 80
        %v6456 = vpop.permute.xlu0 %6455
        %6457 = vrot.lane.b32.xlu0 %v6291, 80
        %v6458 = vpop.permute.xlu0 %6457
        %6459 = vrot.lane.b32.xlu0 %v6294, 80
        %v6460 = vpop.permute.xlu0 %6459
        %6461 = vrot.lane.b32.xlu0 %v6299, 80
        %v6462 = vpop.permute.xlu0 %6461
        %6463 = vrot.lane.b32.xlu0 %v6302, 80
        %v6464 = vpop.permute.xlu0 %6463
        %v6481 = vadd.f32 %v6401, %v6434
        %v6482 = vadd.f32 %v6402, %v6436
        %v6483 = vadd.f32 %v6403, %v6438
        %v6484 = vadd.f32 %v6404, %v6440
        %v6485 = vadd.f32 %v6405, %v6442
        %v6486 = vadd.f32 %v6406, %v6444
        %v6487 = vadd.f32 %v6407, %v6446
        %v6488 = vadd.f32 %v6408, %v6448
        %v6489 = vadd.f32 %v6409, %v6450
        %v6490 = vadd.f32 %v6410, %v6452
        %v6491 = vadd.f32 %v6411, %v6454
        %v6492 = vadd.f32 %v6412, %v6456
        %v6493 = vadd.f32 %v6413, %v6458
        %v6494 = vadd.f32 %v6414, %v6460
        %v6495 = vadd.f32 %v6415, %v6462
        %v6496 = vadd.f32 %v6416, %v6464
        %vm6497 = vcmask 786048
        %6498 = vst.msk [vmem:[#allocation5] sm:$0xff] %vm6497, %v6481
        %6499 = vst.msk [vmem:[#allocation5 + $0x8] sm:$0xff] %vm6497, %v6482
        %6500 = vst.msk [vmem:[#allocation5 + $0x10] sm:$0xff] %vm6497, %v6483
        %6501 = vst.msk [vmem:[#allocation5 + $0x18] sm:$0xff] %vm6497, %v6484
        %6502 = vst.msk [vmem:[#allocation5 + $0x20] sm:$0xff] %vm6497, %v6485
        %6503 = vst.msk [vmem:[#allocation5 + $0x28] sm:$0xff] %vm6497, %v6486
        %6504 = vst.msk [vmem:[#allocation5 + $0x30] sm:$0xff] %vm6497, %v6487
        %6505 = vst.msk [vmem:[#allocation5 + $0x38] sm:$0xff] %vm6497, %v6488
        %6506 = vst.msk [vmem:[#allocation5 + $0x40] sm:$0xff] %vm6497, %v6489
        %6507 = vst.msk [vmem:[#allocation5 + $0x48] sm:$0xff] %vm6497, %v6490
        %6508 = vst.msk [vmem:[#allocation5 + $0x50] sm:$0xff] %vm6497, %v6491
        %6509 = vst.msk [vmem:[#allocation5 + $0x58] sm:$0xff] %vm6497, %v6492
        %6510 = vst.msk [vmem:[#allocation5 + $0x60] sm:$0xff] %vm6497, %v6493
        %6511 = vst.msk [vmem:[#allocation5 + $0x68] sm:$0xff] %vm6497, %v6494
        %6512 = vst.msk [vmem:[#allocation5 + $0x70] sm:$0xff] %vm6497, %v6495
        %6513 = vst.msk [vmem:[#allocation5 + $0x78] sm:$0xff] %vm6497, %v6496
        %vm6514 = vcmask 48168
        %6515 = vst.msk [vmem:[#allocation3] sm:$0xff] %vm6514, %v5904
        %6516 = vst.msk [vmem:[#allocation3 + $0x8] sm:$0xff] %vm6514, %v5905
        %6517 = vst.msk [vmem:[#allocation3 + $0x10] sm:$0xff] %vm6514, %v5906
        %6518 = vst.msk [vmem:[#allocation3 + $0x18] sm:$0xff] %vm6514, %v5907
        %6519 = vst.msk [vmem:[#allocation3 + $0x20] sm:$0xff] %vm6514, %v5908
        %6520 = vst.msk [vmem:[#allocation3 + $0x28] sm:$0xff] %vm6514, %v5909
        %6521 = vst.msk [vmem:[#allocation3 + $0x30] sm:$0xff] %vm6514, %v5910
        %6522 = vst.msk [vmem:[#allocation3 + $0x38] sm:$0xff] %vm6514, %v5911
        %6523 = vst.msk [vmem:[#allocation3 + $0x40] sm:$0xff] %vm6514, %v5912
        %6524 = vst.msk [vmem:[#allocation3 + $0x48] sm:$0xff] %vm6514, %v5913
        %6525 = vst.msk [vmem:[#allocation3 + $0x50] sm:$0xff] %vm6514, %v5914
        %6526 = vst.msk [vmem:[#allocation3 + $0x58] sm:$0xff] %vm6514, %v5915
        %6527 = vst.msk [vmem:[#allocation3 + $0x60] sm:$0xff] %vm6514, %v5916
        %6528 = vst.msk [vmem:[#allocation3 + $0x68] sm:$0xff] %vm6514, %v5917
        %6529 = vst.msk [vmem:[#allocation3 + $0x70] sm:$0xff] %vm6514, %v5918
        %6530 = vst.msk [vmem:[#allocation3 + $0x78] sm:$0xff] %vm6514, %v5919
        %6531 = vst.msk [vmem:[#allocation4] sm:$0xff] %vm6514, %v6160
        %6532 = vst.msk [vmem:[#allocation4 + $0x8] sm:$0xff] %vm6514, %v6161
        %6533 = vst.msk [vmem:[#allocation4 + $0x10] sm:$0xff] %vm6514, %v6162
        %6534 = vst.msk [vmem:[#allocation4 + $0x18] sm:$0xff] %vm6514, %v6163
        %6535 = vst.msk [vmem:[#allocation4 + $0x20] sm:$0xff] %vm6514, %v6164
        %6536 = vst.msk [vmem:[#allocation4 + $0x28] sm:$0xff] %vm6514, %v6165
        %6537 = vst.msk [vmem:[#allocation4 + $0x30] sm:$0xff] %vm6514, %v6166
        %6538 = vst.msk [vmem:[#allocation4 + $0x38] sm:$0xff] %vm6514, %v6167
        %6539 = vst.msk [vmem:[#allocation4 + $0x40] sm:$0xff] %vm6514, %v6168
        %6540 = vst.msk [vmem:[#allocation4 + $0x48] sm:$0xff] %vm6514, %v6169
        %6541 = vst.msk [vmem:[#allocation4 + $0x50] sm:$0xff] %vm6514, %v6170
        %6542 = vst.msk [vmem:[#allocation4 + $0x58] sm:$0xff] %vm6514, %v6171
        %6543 = vst.msk [vmem:[#allocation4 + $0x60] sm:$0xff] %vm6514, %v6172
        %6544 = vst.msk [vmem:[#allocation4 + $0x68] sm:$0xff] %vm6514, %v6173
        %6545 = vst.msk [vmem:[#allocation4 + $0x70] sm:$0xff] %vm6514, %v6174
        %6546 = vst.msk [vmem:[#allocation4 + $0x78] sm:$0xff] %vm6514, %v6175
        %6547 = vrot.lane.b32.xlu0 %v1426, 80
        %v6548 = vpop.permute.xlu0 %6547
        %6549 = vrot.lane.b32.xlu0 %v1427, 80
        %v6550 = vpop.permute.xlu0 %6549
        %6551 = vrot.lane.b32.xlu0 %v1428, 80
        %v6552 = vpop.permute.xlu0 %6551
        %6553 = vrot.lane.b32.xlu0 %v1429, 80
        %v6554 = vpop.permute.xlu0 %6553
        %6555 = vrot.lane.b32.xlu0 %v1430, 80
        %v6556 = vpop.permute.xlu0 %6555
        %6557 = vrot.lane.b32.xlu0 %v1431, 80
        %v6558 = vpop.permute.xlu0 %6557
        %6559 = vrot.lane.b32.xlu0 %v1432, 80
        %v6560 = vpop.permute.xlu0 %6559
        %6561 = vrot.lane.b32.xlu0 %v1433, 80
        %v6562 = vpop.permute.xlu0 %6561
        %6563 = vrot.lane.b32.xlu0 %v1162, 80
        %v6564 = vpop.permute.xlu0 %6563
        %6565 = vrot.lane.b32.xlu0 %v1163, 80
        %v6566 = vpop.permute.xlu0 %6565
        %6567 = vrot.lane.b32.xlu0 %v1164, 80
        %v6568 = vpop.permute.xlu0 %6567
        %6569 = vrot.lane.b32.xlu0 %v1165, 80
        %v6570 = vpop.permute.xlu0 %6569
        %6571 = vrot.lane.b32.xlu0 %v1166, 80
        %v6572 = vpop.permute.xlu0 %6571
        %6573 = vrot.lane.b32.xlu0 %v1167, 80
        %v6574 = vpop.permute.xlu0 %6573
        %6575 = vrot.lane.b32.xlu0 %v1168, 80
        %v6576 = vpop.permute.xlu0 %6575
        %6577 = vrot.lane.b32.xlu0 %v1169, 80
        %v6578 = vpop.permute.xlu0 %6577
        %v6580 = vsel %vm1434, %v6548, 0
        %v6583 = vsel %vm1434, %v6550, 0
        %v6586 = vsel %vm1434, %v6552, 0
        %v6589 = vsel %vm1434, %v6554, 0
        %v6592 = vsel %vm1434, %v6556, 0
        %v6595 = vsel %vm1434, %v6558, 0
        %v6598 = vsel %vm1434, %v6560, 0
        %v6601 = vsel %vm1434, %v6562, 0
        %v6604 = vsel %vm1434, %v6564, 0
        %v6607 = vsel %vm1434, %v6566, 0
        %v6610 = vsel %vm1434, %v6568, 0
        %v6613 = vsel %vm1434, %v6570, 0
        %v6616 = vsel %vm1434, %v6572, 0
        %v6619 = vsel %vm1434, %v6574, 0
        %v6622 = vsel %vm1434, %v6576, 0
        %v6625 = vsel %vm1434, %v6578, 0
        %6627 = vmatprep.subr.bf16.mxu0 0
        %6628 = vmatpush1.bf16.xpose.msra.mxu0 %v6604
        %6629 = vmatprep.subr.bf16.mxu0 0
        %6630 = vmatpush1.bf16.xpose.msra.mxu0 %v6607
        %6631 = vmatprep.subr.bf16.mxu0 0
        %6632 = vmatpush1.bf16.xpose.msra.mxu0 %v6610
        %6633 = vmatprep.subr.bf16.mxu0 0
        %6634 = vmatpush1.bf16.xpose.msra.mxu0 %v6613
        %6635 = vmatprep.subr.bf16.mxu0 0
        %6636 = vmatpush1.bf16.xpose.msra.mxu0 %v6616
        %6637 = vmatprep.subr.bf16.mxu0 0
        %6638 = vmatpush1.bf16.xpose.msra.mxu0 %v6619
        %6639 = vmatprep.subr.bf16.mxu0 0
        %6640 = vmatpush1.bf16.xpose.msra.mxu0 %v6622
        %6641 = vmatprep.subr.bf16.mxu0 0
        %6642 = vmatpush1.bf16.xpose.msra.mxu0 %v6625
        %6643 = vmatprep.subr.bf16.mxu0 0
        %6644 = vmatpush1.bf16.xpose.msra.mxu0 0
        %6645 = vmatprep.subr.bf16.mxu0 0
        %6646 = vmatpush1.bf16.xpose.msra.mxu0 0
        %6647 = vmatprep.subr.bf16.mxu0 0
        %6648 = vmatpush1.bf16.xpose.msra.mxu0 0
        %6649 = vmatprep.subr.bf16.mxu0 0
        %6650 = vmatpush1.bf16.xpose.msra.mxu0 0
        %6651 = vmatprep.subr.bf16.mxu0 0
        %6652 = vmatpush1.bf16.xpose.msra.mxu0 0
        %6653 = vmatprep.subr.bf16.mxu0 0
        %6654 = vmatpush1.bf16.xpose.msra.mxu0 0
        %6655 = vmatprep.subr.bf16.mxu0 0
        %6656 = vmatpush1.bf16.xpose.msra.mxu0 0
        %6657 = vmatprep.subr.bf16.mxu0 0
        %6658 = vmatpush1.bf16.xpose.msra.mxu0 0
        %6659 = vmatprep.mubr.bf16.mxu0 0
        %6660 = vmatmul.mubr.bf16.gmra.mrb[0].mxu0 %v6580
        %v6661 = vpop.f32.mrb[0].mxu0
        %v6662 = vadd.f32 %v1410, %v6661
        %v6663 = vpop.f32.mrb[0].mxu0
        %v6664 = vpop.f32.mrb[0].mxu0
        %v6665 = vadd.f32 %v1411, %v6664
        %v6666 = vpop.f32.mrb[0].mxu0
        %6667 = vmatprep.mubr.bf16.mxu0 0
        %6668 = vmatmul.mubr.bf16.gmra.mrb[0].mxu0 %v6583
        %v6669 = vpop.f32.mrb[0].mxu0
        %v6670 = vadd.f32 %v1412, %v6669
        %v6671 = vpop.f32.mrb[0].mxu0
        %v6672 = vpop.f32.mrb[0].mxu0
        %v6673 = vadd.f32 %v1413, %v6672
        %v6674 = vpop.f32.mrb[0].mxu0
        %6675 = vmatprep.mubr.bf16.mxu0 0
        %6676 = vmatmul.mubr.bf16.gmra.mrb[0].mxu0 %v6586
        %v6677 = vpop.f32.mrb[0].mxu0
        %v6678 = vadd.f32 %v1414, %v6677
        %v6679 = vpop.f32.mrb[0].mxu0
        %v6680 = vpop.f32.mrb[0].mxu0
        %v6681 = vadd.f32 %v1415, %v6680
        %v6682 = vpop.f32.mrb[0].mxu0
        %6683 = vmatprep.mubr.bf16.mxu0 0
        %6684 = vmatmul.mubr.bf16.gmra.mrb[0].mxu0 %v6589
        %v6685 = vpop.f32.mrb[0].mxu0
        %v6686 = vadd.f32 %v1416, %v6685
        %v6687 = vpop.f32.mrb[0].mxu0
        %v6688 = vpop.f32.mrb[0].mxu0
        %v6689 = vadd.f32 %v1417, %v6688
        %v6690 = vpop.f32.mrb[0].mxu0
        %6691 = vmatprep.mubr.bf16.mxu0 0
        %6692 = vmatmul.mubr.bf16.gmra.mrb[0].mxu0 %v6592
        %v6693 = vpop.f32.mrb[0].mxu0
        %v6694 = vadd.f32 %v1418, %v6693
        %v6695 = vpop.f32.mrb[0].mxu0
        %v6696 = vpop.f32.mrb[0].mxu0
        %v6697 = vadd.f32 %v1419, %v6696
        %v6698 = vpop.f32.mrb[0].mxu0
        %6699 = vmatprep.mubr.bf16.mxu0 0
        %6700 = vmatmul.mubr.bf16.gmra.mrb[0].mxu0 %v6595
        %v6701 = vpop.f32.mrb[0].mxu0
        %v6702 = vadd.f32 %v1420, %v6701
        %v6703 = vpop.f32.mrb[0].mxu0
        %v6704 = vpop.f32.mrb[0].mxu0
        %v6705 = vadd.f32 %v1421, %v6704
        %v6706 = vpop.f32.mrb[0].mxu0
        %6707 = vmatprep.mubr.bf16.mxu0 0
        %6708 = vmatmul.mubr.bf16.gmra.mrb[0].mxu0 %v6598
        %v6709 = vpop.f32.mrb[0].mxu0
        %v6710 = vadd.f32 %v1422, %v6709
        %v6711 = vpop.f32.mrb[0].mxu0
        %v6712 = vpop.f32.mrb[0].mxu0
        %v6713 = vadd.f32 %v1423, %v6712
        %v6714 = vpop.f32.mrb[0].mxu0
        %6715 = vmatprep.mubr.bf16.mxu0 0
        %6716 = vmatmul.mubr.bf16.gmra.mrb[0].mxu0 %v6601
        %v6717 = vpop.f32.mrb[0].mxu0
        %v6718 = vadd.f32 %v1424, %v6717
        %v6719 = vpop.f32.mrb[0].mxu0
        %v6720 = vpop.f32.mrb[0].mxu0
        %v6721 = vadd.f32 %v1425, %v6720
        %v6722 = vpop.f32.mrb[0].mxu0
        %6723 = vdwg.mxu0
        %v6724 = vld [vmem:[#allocation3] sm:$0xff]
        %v6725 = vld [vmem:[#allocation3 + $0x8] sm:$0xff]
        %v6726 = vld [vmem:[#allocation3 + $0x10] sm:$0xff]
        %v6727 = vld [vmem:[#allocation3 + $0x18] sm:$0xff]
        %v6728 = vld [vmem:[#allocation3 + $0x20] sm:$0xff]
        %v6729 = vld [vmem:[#allocation3 + $0x28] sm:$0xff]
        %v6730 = vld [vmem:[#allocation3 + $0x30] sm:$0xff]
        %v6731 = vld [vmem:[#allocation3 + $0x38] sm:$0xff]
        %v6732 = vld [vmem:[#allocation3 + $0x40] sm:$0xff]
        %v6733 = vld [vmem:[#allocation3 + $0x48] sm:$0xff]
        %v6734 = vld [vmem:[#allocation3 + $0x50] sm:$0xff]
        %v6735 = vld [vmem:[#allocation3 + $0x58] sm:$0xff]
        %v6736 = vld [vmem:[#allocation3 + $0x60] sm:$0xff]
        %v6737 = vld [vmem:[#allocation3 + $0x68] sm:$0xff]
        %v6738 = vld [vmem:[#allocation3 + $0x70] sm:$0xff]
        %v6739 = vld [vmem:[#allocation3 + $0x78] sm:$0xff]
        %6740 = vmax.xlane.f32.xlu0 %v6662
        %v6741 = vpop.xlane.xlu0 %6740
        %6742 = vmax.xlane.f32.xlu0 %v6665
        %v6743 = vpop.xlane.xlu0 %6742
        %6744 = vmax.xlane.f32.xlu0 %v6670
        %v6745 = vpop.xlane.xlu0 %6744
        %6746 = vmax.xlane.f32.xlu0 %v6673
        %v6747 = vpop.xlane.xlu0 %6746
        %6748 = vmax.xlane.f32.xlu0 %v6678
        %v6749 = vpop.xlane.xlu0 %6748
        %6750 = vmax.xlane.f32.xlu0 %v6681
        %v6751 = vpop.xlane.xlu0 %6750
        %6752 = vmax.xlane.f32.xlu0 %v6686
        %v6753 = vpop.xlane.xlu0 %6752
        %6754 = vmax.xlane.f32.xlu0 %v6689
        %v6755 = vpop.xlane.xlu0 %6754
        %6756 = vmax.xlane.f32.xlu0 %v6694
        %v6757 = vpop.xlane.xlu0 %6756
        %6758 = vmax.xlane.f32.xlu0 %v6697
        %v6759 = vpop.xlane.xlu0 %6758
        %6760 = vmax.xlane.f32.xlu0 %v6702
        %v6761 = vpop.xlane.xlu0 %6760
        %6762 = vmax.xlane.f32.xlu0 %v6705
        %v6763 = vpop.xlane.xlu0 %6762
        %6764 = vmax.xlane.f32.xlu0 %v6710
        %v6765 = vpop.xlane.xlu0 %6764
        %6766 = vmax.xlane.f32.xlu0 %v6713
        %v6767 = vpop.xlane.xlu0 %6766
        %6768 = vmax.xlane.f32.xlu0 %v6718
        %v6769 = vpop.xlane.xlu0 %6768
        %6770 = vmax.xlane.f32.xlu0 %v6721
        %v6771 = vpop.xlane.xlu0 %6770
        %v6772 = vmax.f32 %v6724, %v6741
        %v6773 = vmax.f32 %v6725, %v6743
        %v6774 = vmax.f32 %v6726, %v6745
        %v6775 = vmax.f32 %v6727, %v6747
        %v6776 = vmax.f32 %v6728, %v6749
        %v6777 = vmax.f32 %v6729, %v6751
        %v6778 = vmax.f32 %v6730, %v6753
        %v6779 = vmax.f32 %v6731, %v6755
        %v6780 = vmax.f32 %v6732, %v6757
        %v6781 = vmax.f32 %v6733, %v6759
        %v6782 = vmax.f32 %v6734, %v6761
        %v6783 = vmax.f32 %v6735, %v6763
        %v6784 = vmax.f32 %v6736, %v6765
        %v6785 = vmax.f32 %v6737, %v6767
        %v6786 = vmax.f32 %v6738, %v6769
        %v6787 = vmax.f32 %v6739, %v6771
        %v6788 = vsub.f32 %v6724, %v6772
        %v6789 = vsub.f32 %v6725, %v6773
        %v6790 = vsub.f32 %v6726, %v6774
        %v6791 = vsub.f32 %v6727, %v6775
        %v6792 = vsub.f32 %v6728, %v6776
        %v6793 = vsub.f32 %v6729, %v6777
        %v6794 = vsub.f32 %v6730, %v6778
        %v6795 = vsub.f32 %v6731, %v6779
        %v6796 = vsub.f32 %v6732, %v6780
        %v6797 = vsub.f32 %v6733, %v6781
        %v6798 = vsub.f32 %v6734, %v6782
        %v6799 = vsub.f32 %v6735, %v6783
        %v6800 = vsub.f32 %v6736, %v6784
        %v6801 = vsub.f32 %v6737, %v6785
        %v6802 = vsub.f32 %v6738, %v6786
        %v6803 = vsub.f32 %v6739, %v6787
        %v6804 = vmul.f32 %v6788, 1.442695
        %v6805 = vpow.pop %v6804
        %v6806 = vmul.f32 %v6789, 1.442695
        %v6807 = vpow.pop %v6806
        %v6808 = vmul.f32 %v6790, 1.442695
        %v6809 = vpow.pop %v6808
        %v6810 = vmul.f32 %v6791, 1.442695
        %v6811 = vpow.pop %v6810
        %v6812 = vmul.f32 %v6792, 1.442695
        %v6813 = vpow.pop %v6812
        %v6814 = vmul.f32 %v6793, 1.442695
        %v6815 = vpow.pop %v6814
        %v6816 = vmul.f32 %v6794, 1.442695
        %v6817 = vpow.pop %v6816
        %v6818 = vmul.f32 %v6795, 1.442695
        %v6819 = vpow.pop %v6818
        %v6820 = vmul.f32 %v6796, 1.442695
        %v6821 = vpow.pop %v6820
        %v6822 = vmul.f32 %v6797, 1.442695
        %v6823 = vpow.pop %v6822
        %v6824 = vmul.f32 %v6798, 1.442695
        %v6825 = vpow.pop %v6824
        %v6826 = vmul.f32 %v6799, 1.442695
        %v6827 = vpow.pop %v6826
        %v6828 = vmul.f32 %v6800, 1.442695
        %v6829 = vpow.pop %v6828
        %v6830 = vmul.f32 %v6801, 1.442695
        %v6831 = vpow.pop %v6830
        %v6832 = vmul.f32 %v6802, 1.442695
        %v6833 = vpow.pop %v6832
        %v6834 = vmul.f32 %v6803, 1.442695
        %v6835 = vpow.pop %v6834
        %6837 = vset.pattern.permute.xlu0 6
        %6838 = vperm.xlu0 %6837, %v6772
        %v6839 = vpop.permute.xlu0 %6838
        %6842 = vset.pattern.permute.xlu0 6
        %6843 = vperm.xlu0 %6842, %v6773
        %v6844 = vpop.permute.xlu0 %6843
        %6847 = vset.pattern.permute.xlu0 6
        %6848 = vperm.xlu0 %6847, %v6774
        %v6849 = vpop.permute.xlu0 %6848
        %6852 = vset.pattern.permute.xlu0 6
        %6853 = vperm.xlu0 %6852, %v6775
        %v6854 = vpop.permute.xlu0 %6853
        %6857 = vset.pattern.permute.xlu0 6
        %6858 = vperm.xlu0 %6857, %v6776
        %v6859 = vpop.permute.xlu0 %6858
        %6862 = vset.pattern.permute.xlu0 6
        %6863 = vperm.xlu0 %6862, %v6777
        %v6864 = vpop.permute.xlu0 %6863
        %6867 = vset.pattern.permute.xlu0 6
        %6868 = vperm.xlu0 %6867, %v6778
        %v6869 = vpop.permute.xlu0 %6868
        %6872 = vset.pattern.permute.xlu0 6
        %6873 = vperm.xlu0 %6872, %v6779
        %v6874 = vpop.permute.xlu0 %6873
        %6877 = vset.pattern.permute.xlu0 6
        %6878 = vperm.xlu0 %6877, %v6780
        %v6879 = vpop.permute.xlu0 %6878
        %6882 = vset.pattern.permute.xlu0 6
        %6883 = vperm.xlu0 %6882, %v6781
        %v6884 = vpop.permute.xlu0 %6883
        %6887 = vset.pattern.permute.xlu0 6
        %6888 = vperm.xlu0 %6887, %v6782
        %v6889 = vpop.permute.xlu0 %6888
        %6892 = vset.pattern.permute.xlu0 6
        %6893 = vperm.xlu0 %6892, %v6783
        %v6894 = vpop.permute.xlu0 %6893
        %6897 = vset.pattern.permute.xlu0 6
        %6898 = vperm.xlu0 %6897, %v6784
        %v6899 = vpop.permute.xlu0 %6898
        %6902 = vset.pattern.permute.xlu0 6
        %6903 = vperm.xlu0 %6902, %v6785
        %v6904 = vpop.permute.xlu0 %6903
        %6907 = vset.pattern.permute.xlu0 6
        %6908 = vperm.xlu0 %6907, %v6786
        %v6909 = vpop.permute.xlu0 %6908
        %6912 = vset.pattern.permute.xlu0 6
        %6913 = vperm.xlu0 %6912, %v6787
        %v6914 = vpop.permute.xlu0 %6913
        %v6916 = vsub.f32 %v6662, %v6839
        %v6917 = vsub.f32 %v6665, %v6844
        %v6918 = vsub.f32 %v6670, %v6849
        %v6919 = vsub.f32 %v6673, %v6854
        %v6920 = vsub.f32 %v6678, %v6859
        %v6921 = vsub.f32 %v6681, %v6864
        %v6922 = vsub.f32 %v6686, %v6869
        %v6923 = vsub.f32 %v6689, %v6874
        %v6924 = vsub.f32 %v6694, %v6879
        %v6925 = vsub.f32 %v6697, %v6884
        %v6926 = vsub.f32 %v6702, %v6889
        %v6927 = vsub.f32 %v6705, %v6894
        %v6928 = vsub.f32 %v6710, %v6899
        %v6929 = vsub.f32 %v6713, %v6904
        %v6930 = vsub.f32 %v6718, %v6909
        %v6931 = vsub.f32 %v6721, %v6914
        %v6932 = vmul.f32 %v6916, 1.442695
        %v6933 = vpow.pop %v6932
        %v6934 = vmul.f32 %v6917, 1.442695
        %v6935 = vpow.pop %v6934
        %v6936 = vmul.f32 %v6918, 1.442695
        %v6937 = vpow.pop %v6936
        %v6938 = vmul.f32 %v6919, 1.442695
        %v6939 = vpow.pop %v6938
        %v6940 = vmul.f32 %v6920, 1.442695
        %v6941 = vpow.pop %v6940
        %v6942 = vmul.f32 %v6921, 1.442695
        %v6943 = vpow.pop %v6942
        %v6944 = vmul.f32 %v6922, 1.442695
        %v6945 = vpow.pop %v6944
        %v6946 = vmul.f32 %v6923, 1.442695
        %v6947 = vpow.pop %v6946
        %v6948 = vmul.f32 %v6924, 1.442695
        %v6949 = vpow.pop %v6948
        %v6950 = vmul.f32 %v6925, 1.442695
        %v6951 = vpow.pop %v6950
        %v6952 = vmul.f32 %v6926, 1.442695
        %v6953 = vpow.pop %v6952
        %v6954 = vmul.f32 %v6927, 1.442695
        %v6955 = vpow.pop %v6954
        %v6956 = vmul.f32 %v6928, 1.442695
        %v6957 = vpow.pop %v6956
        %v6958 = vmul.f32 %v6929, 1.442695
        %v6959 = vpow.pop %v6958
        %v6960 = vmul.f32 %v6930, 1.442695
        %v6961 = vpow.pop %v6960
        %v6962 = vmul.f32 %v6931, 1.442695
        %v6963 = vpow.pop %v6962
        %v6964 = vld [vmem:[#allocation4] sm:$0xff]
        %v6965 = vld [vmem:[#allocation4 + $0x8] sm:$0xff]
        %v6966 = vld [vmem:[#allocation4 + $0x10] sm:$0xff]
        %v6967 = vld [vmem:[#allocation4 + $0x18] sm:$0xff]
        %v6968 = vld [vmem:[#allocation4 + $0x20] sm:$0xff]
        %v6969 = vld [vmem:[#allocation4 + $0x28] sm:$0xff]
        %v6970 = vld [vmem:[#allocation4 + $0x30] sm:$0xff]
        %v6971 = vld [vmem:[#allocation4 + $0x38] sm:$0xff]
        %v6972 = vld [vmem:[#allocation4 + $0x40] sm:$0xff]
        %v6973 = vld [vmem:[#allocation4 + $0x48] sm:$0xff]
        %v6974 = vld [vmem:[#allocation4 + $0x50] sm:$0xff]
        %v6975 = vld [vmem:[#allocation4 + $0x58] sm:$0xff]
        %v6976 = vld [vmem:[#allocation4 + $0x60] sm:$0xff]
        %v6977 = vld [vmem:[#allocation4 + $0x68] sm:$0xff]
        %v6978 = vld [vmem:[#allocation4 + $0x70] sm:$0xff]
        %v6979 = vld [vmem:[#allocation4 + $0x78] sm:$0xff]
        %v6980 = vmul.f32 %v6805, %v6964
        %v6981 = vmul.f32 %v6807, %v6965
        %v6982 = vmul.f32 %v6809, %v6966
        %v6983 = vmul.f32 %v6811, %v6967
        %v6984 = vmul.f32 %v6813, %v6968
        %v6985 = vmul.f32 %v6815, %v6969
        %v6986 = vmul.f32 %v6817, %v6970
        %v6987 = vmul.f32 %v6819, %v6971
        %v6988 = vmul.f32 %v6821, %v6972
        %v6989 = vmul.f32 %v6823, %v6973
        %v6990 = vmul.f32 %v6825, %v6974
        %v6991 = vmul.f32 %v6827, %v6975
        %v6992 = vmul.f32 %v6829, %v6976
        %v6993 = vmul.f32 %v6831, %v6977
        %v6994 = vmul.f32 %v6833, %v6978
        %v6995 = vmul.f32 %v6835, %v6979
        %6996 = vadd.xlane.f32.xlu0 %v6933
        %v6997 = vpop.xlane.xlu0 %6996
        %6998 = vadd.xlane.f32.xlu0 %v6935
        %v6999 = vpop.xlane.xlu0 %6998
        %7000 = vadd.xlane.f32.xlu0 %v6937
        %v7001 = vpop.xlane.xlu0 %7000
        %7002 = vadd.xlane.f32.xlu0 %v6939
        %v7003 = vpop.xlane.xlu0 %7002
        %7004 = vadd.xlane.f32.xlu0 %v6941
        %v7005 = vpop.xlane.xlu0 %7004
        %7006 = vadd.xlane.f32.xlu0 %v6943
        %v7007 = vpop.xlane.xlu0 %7006
        %7008 = vadd.xlane.f32.xlu0 %v6945
        %v7009 = vpop.xlane.xlu0 %7008
        %7010 = vadd.xlane.f32.xlu0 %v6947
        %v7011 = vpop.xlane.xlu0 %7010
        %7012 = vadd.xlane.f32.xlu0 %v6949
        %v7013 = vpop.xlane.xlu0 %7012
        %7014 = vadd.xlane.f32.xlu0 %v6951
        %v7015 = vpop.xlane.xlu0 %7014
        %7016 = vadd.xlane.f32.xlu0 %v6953
        %v7017 = vpop.xlane.xlu0 %7016
        %7018 = vadd.xlane.f32.xlu0 %v6955
        %v7019 = vpop.xlane.xlu0 %7018
        %7020 = vadd.xlane.f32.xlu0 %v6957
        %v7021 = vpop.xlane.xlu0 %7020
        %7022 = vadd.xlane.f32.xlu0 %v6959
        %v7023 = vpop.xlane.xlu0 %7022
        %7024 = vadd.xlane.f32.xlu0 %v6961
        %v7025 = vpop.xlane.xlu0 %7024
        %7026 = vadd.xlane.f32.xlu0 %v6963
        %v7027 = vpop.xlane.xlu0 %7026
        %v7028 = vadd.f32 %v6980, %v6997
        %v7029 = vadd.f32 %v6981, %v6999
        %v7030 = vadd.f32 %v6982, %v7001
        %v7031 = vadd.f32 %v6983, %v7003
        %v7032 = vadd.f32 %v6984, %v7005
        %v7033 = vadd.f32 %v6985, %v7007
        %v7034 = vadd.f32 %v6986, %v7009
        %v7035 = vadd.f32 %v6987, %v7011
        %v7036 = vadd.f32 %v6988, %v7013
        %v7037 = vadd.f32 %v6989, %v7015
        %v7038 = vadd.f32 %v6990, %v7017
        %v7039 = vadd.f32 %v6991, %v7019
        %v7040 = vadd.f32 %v6992, %v7021
        %v7041 = vadd.f32 %v6993, %v7023
        %v7042 = vadd.f32 %v6994, %v7025
        %v7043 = vadd.f32 %v6995, %v7027
        %v7044 = vpack.c.bf16 %v6935, %v6933
        %v7045 = vpack.c.bf16 %v6939, %v6937
        %v7046 = vpack.c.bf16 %v6943, %v6941
        %v7047 = vpack.c.bf16 %v6947, %v6945
        %v7048 = vpack.c.bf16 %v6951, %v6949
        %v7049 = vpack.c.bf16 %v6955, %v6953
        %v7050 = vpack.c.bf16 %v6959, %v6957
        %v7051 = vpack.c.bf16 %v6963, %v6961
        %7052 = vrot.lane.b32.xlu0 %v1386, 32
        %v7053 = vpop.permute.xlu0 %7052
        %7054 = vrot.lane.b32.xlu0 %v1387, 32
        %v7055 = vpop.permute.xlu0 %7054
        %7056 = vrot.lane.b32.xlu0 %v1388, 32
        %v7057 = vpop.permute.xlu0 %7056
        %7058 = vrot.lane.b32.xlu0 %v1389, 32
        %v7059 = vpop.permute.xlu0 %7058
        %7060 = vrot.lane.b32.xlu0 %v1390, 32
        %v7061 = vpop.permute.xlu0 %7060
        %7062 = vrot.lane.b32.xlu0 %v1391, 32
        %v7063 = vpop.permute.xlu0 %7062
        %7064 = vrot.lane.b32.xlu0 %v1392, 32
        %v7065 = vpop.permute.xlu0 %7064
        %7066 = vrot.lane.b32.xlu0 %v1393, 32
        %v7067 = vpop.permute.xlu0 %7066
        %7076 = vmatprep.subr.bf16.mxu0 0
        %7077 = vmatpush1.bf16.msra.mxu0 %v7053
        %7078 = vmatprep.subr.bf16.mxu0 0
        %7079 = vmatpush1.bf16.msra.mxu0 %v7055
        %7080 = vmatprep.subr.bf16.mxu0 0
        %7081 = vmatpush1.bf16.msra.mxu0 %v7057
        %7082 = vmatprep.subr.bf16.mxu0 0
        %7083 = vmatpush1.bf16.msra.mxu0 %v7059
        %7084 = vmatprep.subr.bf16.mxu0 0
        %7085 = vmatpush1.bf16.msra.mxu0 %v7061
        %7086 = vmatprep.subr.bf16.mxu0 0
        %7087 = vmatpush1.bf16.msra.mxu0 %v7063
        %7088 = vmatprep.subr.bf16.mxu0 0
        %7089 = vmatpush1.bf16.msra.mxu0 %v7065
        %7090 = vmatprep.subr.bf16.mxu0 0
        %7091 = vmatpush1.bf16.msra.mxu0 %v7067
        %7092 = vmatprep.subr.bf16.mxu0 0
        %7093 = vmatpush1.bf16.msra.mxu0 0
        %7094 = vmatprep.subr.bf16.mxu0 0
        %7095 = vmatpush1.bf16.msra.mxu0 0
        %7096 = vmatprep.subr.bf16.mxu0 0
        %7097 = vmatpush1.bf16.msra.mxu0 0
        %7098 = vmatprep.subr.bf16.mxu0 0
        %7099 = vmatpush1.bf16.msra.mxu0 0
        %7100 = vmatprep.subr.bf16.mxu0 0
        %7101 = vmatpush1.bf16.msra.mxu0 0
        %7102 = vmatprep.subr.bf16.mxu0 0
        %7103 = vmatpush1.bf16.msra.mxu0 0
        %7104 = vmatprep.subr.bf16.mxu0 0
        %7105 = vmatpush1.bf16.msra.mxu0 0
        %7106 = vmatprep.subr.bf16.mxu0 0
        %7107 = vmatpush1.bf16.msra.mxu0 0
        %7108 = vmatprep.mubr.bf16.mxu0 0
        %7109 = vmatmul.mubr.bf16.gmra.mrb[0].mxu0 %v7044
        %v7110 = vpop.f32.mrb[0].mxu0
        %v7111 = vadd.f32 0.0, %v7110
        %v7112 = vpop.f32.mrb[0].mxu0
        %v7113 = vpop.f32.mrb[0].mxu0
        %v7114 = vadd.f32 0.0, %v7113
        %v7115 = vpop.f32.mrb[0].mxu0
        %7116 = vmatprep.mubr.bf16.mxu0 0
        %7117 = vmatmul.mubr.bf16.gmra.mrb[0].mxu0 %v7045
        %v7118 = vpop.f32.mrb[0].mxu0
        %v7119 = vadd.f32 0.0, %v7118
        %v7120 = vpop.f32.mrb[0].mxu0
        %v7121 = vpop.f32.mrb[0].mxu0
        %v7122 = vadd.f32 0.0, %v7121
        %v7123 = vpop.f32.mrb[0].mxu0
        %7124 = vmatprep.mubr.bf16.mxu0 0
        %7125 = vmatmul.mubr.bf16.gmra.mrb[0].mxu0 %v7046
        %v7126 = vpop.f32.mrb[0].mxu0
        %v7127 = vadd.f32 0.0, %v7126
        %v7128 = vpop.f32.mrb[0].mxu0
        %v7129 = vpop.f32.mrb[0].mxu0
        %v7130 = vadd.f32 0.0, %v7129
        %v7131 = vpop.f32.mrb[0].mxu0
        %7132 = vmatprep.mubr.bf16.mxu0 0
        %7133 = vmatmul.mubr.bf16.gmra.mrb[0].mxu0 %v7047
        %v7134 = vpop.f32.mrb[0].mxu0
        %v7135 = vadd.f32 0.0, %v7134
        %v7136 = vpop.f32.mrb[0].mxu0
        %v7137 = vpop.f32.mrb[0].mxu0
        %v7138 = vadd.f32 0.0, %v7137
        %v7139 = vpop.f32.mrb[0].mxu0
        %7140 = vmatprep.mubr.bf16.mxu0 0
        %7141 = vmatmul.mubr.bf16.gmra.mrb[0].mxu0 %v7048
        %v7142 = vpop.f32.mrb[0].mxu0
        %v7143 = vadd.f32 0.0, %v7142
        %v7144 = vpop.f32.mrb[0].mxu0
        %v7145 = vpop.f32.mrb[0].mxu0
        %v7146 = vadd.f32 0.0, %v7145
        %v7147 = vpop.f32.mrb[0].mxu0
        %7148 = vmatprep.mubr.bf16.mxu0 0
        %7149 = vmatmul.mubr.bf16.gmra.mrb[0].mxu0 %v7049
        %v7150 = vpop.f32.mrb[0].mxu0
        %v7151 = vadd.f32 0.0, %v7150
        %v7152 = vpop.f32.mrb[0].mxu0
        %v7153 = vpop.f32.mrb[0].mxu0
        %v7154 = vadd.f32 0.0, %v7153
        %v7155 = vpop.f32.mrb[0].mxu0
        %7156 = vmatprep.mubr.bf16.mxu0 0
        %7157 = vmatmul.mubr.bf16.gmra.mrb[0].mxu0 %v7050
        %v7158 = vpop.f32.mrb[0].mxu0
        %v7159 = vadd.f32 0.0, %v7158
        %v7160 = vpop.f32.mrb[0].mxu0
        %v7161 = vpop.f32.mrb[0].mxu0
        %v7162 = vadd.f32 0.0, %v7161
        %v7163 = vpop.f32.mrb[0].mxu0
        %7164 = vmatprep.mubr.bf16.mxu0 0
        %7165 = vmatmul.mubr.bf16.gmra.mrb[0].mxu0 %v7051
        %v7166 = vpop.f32.mrb[0].mxu0
        %v7167 = vadd.f32 0.0, %v7166
        %v7168 = vpop.f32.mrb[0].mxu0
        %v7169 = vpop.f32.mrb[0].mxu0
        %v7170 = vadd.f32 0.0, %v7169
        %v7171 = vpop.f32.mrb[0].mxu0
        %7172 = vdwg.mxu0
        %v7173 = vld [vmem:[#allocation5] sm:$0xff]
        %v7174 = vld [vmem:[#allocation5 + $0x8] sm:$0xff]
        %v7175 = vld [vmem:[#allocation5 + $0x10] sm:$0xff]
        %v7176 = vld [vmem:[#allocation5 + $0x18] sm:$0xff]
        %v7177 = vld [vmem:[#allocation5 + $0x20] sm:$0xff]
        %v7178 = vld [vmem:[#allocation5 + $0x28] sm:$0xff]
        %v7179 = vld [vmem:[#allocation5 + $0x30] sm:$0xff]
        %v7180 = vld [vmem:[#allocation5 + $0x38] sm:$0xff]
        %v7181 = vld [vmem:[#allocation5 + $0x40] sm:$0xff]
        %v7182 = vld [vmem:[#allocation5 + $0x48] sm:$0xff]
        %v7183 = vld [vmem:[#allocation5 + $0x50] sm:$0xff]
        %v7184 = vld [vmem:[#allocation5 + $0x58] sm:$0xff]
        %v7185 = vld [vmem:[#allocation5 + $0x60] sm:$0xff]
        %v7186 = vld [vmem:[#allocation5 + $0x68] sm:$0xff]
        %v7187 = vld [vmem:[#allocation5 + $0x70] sm:$0xff]
        %v7188 = vld [vmem:[#allocation5 + $0x78] sm:$0xff]
        %7190 = vset.pattern.permute.xlu0 6
        %7191 = vperm.xlu0 %7190, %v6805
        %v7192 = vpop.permute.xlu0 %7191
        %7195 = vset.pattern.permute.xlu0 6
        %7196 = vperm.xlu0 %7195, %v6807
        %v7197 = vpop.permute.xlu0 %7196
        %7200 = vset.pattern.permute.xlu0 6
        %7201 = vperm.xlu0 %7200, %v6809
        %v7202 = vpop.permute.xlu0 %7201
        %7205 = vset.pattern.permute.xlu0 6
        %7206 = vperm.xlu0 %7205, %v6811
        %v7207 = vpop.permute.xlu0 %7206
        %7210 = vset.pattern.permute.xlu0 6
        %7211 = vperm.xlu0 %7210, %v6813
        %v7212 = vpop.permute.xlu0 %7211
        %7215 = vset.pattern.permute.xlu0 6
        %7216 = vperm.xlu0 %7215, %v6815
        %v7217 = vpop.permute.xlu0 %7216
        %7220 = vset.pattern.permute.xlu0 6
        %7221 = vperm.xlu0 %7220, %v6817
        %v7222 = vpop.permute.xlu0 %7221
        %7225 = vset.pattern.permute.xlu0 6
        %7226 = vperm.xlu0 %7225, %v6819
        %v7227 = vpop.permute.xlu0 %7226
        %7230 = vset.pattern.permute.xlu0 6
        %7231 = vperm.xlu0 %7230, %v6821
        %v7232 = vpop.permute.xlu0 %7231
        %7235 = vset.pattern.permute.xlu0 6
        %7236 = vperm.xlu0 %7235, %v6823
        %v7237 = vpop.permute.xlu0 %7236
        %7240 = vset.pattern.permute.xlu0 6
        %7241 = vperm.xlu0 %7240, %v6825
        %v7242 = vpop.permute.xlu0 %7241
        %7245 = vset.pattern.permute.xlu0 6
        %7246 = vperm.xlu0 %7245, %v6827
        %v7247 = vpop.permute.xlu0 %7246
        %7250 = vset.pattern.permute.xlu0 6
        %7251 = vperm.xlu0 %7250, %v6829
        %v7252 = vpop.permute.xlu0 %7251
        %7255 = vset.pattern.permute.xlu0 6
        %7256 = vperm.xlu0 %7255, %v6831
        %v7257 = vpop.permute.xlu0 %7256
        %7260 = vset.pattern.permute.xlu0 6
        %7261 = vperm.xlu0 %7260, %v6833
        %v7262 = vpop.permute.xlu0 %7261
        %7265 = vset.pattern.permute.xlu0 6
        %7266 = vperm.xlu0 %7265, %v6835
        %v7267 = vpop.permute.xlu0 %7266
        %v7269 = vmul.f32 %v7192, %v7173
        %v7270 = vmul.f32 %v7197, %v7174
        %v7271 = vmul.f32 %v7202, %v7175
        %v7272 = vmul.f32 %v7207, %v7176
        %v7273 = vmul.f32 %v7212, %v7177
        %v7274 = vmul.f32 %v7217, %v7178
        %v7275 = vmul.f32 %v7222, %v7179
        %v7276 = vmul.f32 %v7227, %v7180
        %v7277 = vmul.f32 %v7232, %v7181
        %v7278 = vmul.f32 %v7237, %v7182
        %v7279 = vmul.f32 %v7242, %v7183
        %v7280 = vmul.f32 %v7247, %v7184
        %v7281 = vmul.f32 %v7252, %v7185
        %v7282 = vmul.f32 %v7257, %v7186
        %v7283 = vmul.f32 %v7262, %v7187
        %v7284 = vmul.f32 %v7267, %v7188
        %7301 = vrot.lane.b32.xlu0 %v7111, 96
        %v7302 = vpop.permute.xlu0 %7301
        %7303 = vrot.lane.b32.xlu0 %v7114, 96
        %v7304 = vpop.permute.xlu0 %7303
        %7305 = vrot.lane.b32.xlu0 %v7119, 96
        %v7306 = vpop.permute.xlu0 %7305
        %7307 = vrot.lane.b32.xlu0 %v7122, 96
        %v7308 = vpop.permute.xlu0 %7307
        %7309 = vrot.lane.b32.xlu0 %v7127, 96
        %v7310 = vpop.permute.xlu0 %7309
        %7311 = vrot.lane.b32.xlu0 %v7130, 96
        %v7312 = vpop.permute.xlu0 %7311
        %7313 = vrot.lane.b32.xlu0 %v7135, 96
        %v7314 = vpop.permute.xlu0 %7313
        %7315 = vrot.lane.b32.xlu0 %v7138, 96
        %v7316 = vpop.permute.xlu0 %7315
        %7317 = vrot.lane.b32.xlu0 %v7143, 96
        %v7318 = vpop.permute.xlu0 %7317
        %7319 = vrot.lane.b32.xlu0 %v7146, 96
        %v7320 = vpop.permute.xlu0 %7319
        %7321 = vrot.lane.b32.xlu0 %v7151, 96
        %v7322 = vpop.permute.xlu0 %7321
        %7323 = vrot.lane.b32.xlu0 %v7154, 96
        %v7324 = vpop.permute.xlu0 %7323
        %7325 = vrot.lane.b32.xlu0 %v7159, 96
        %v7326 = vpop.permute.xlu0 %7325
        %7327 = vrot.lane.b32.xlu0 %v7162, 96
        %v7328 = vpop.permute.xlu0 %7327
        %7329 = vrot.lane.b32.xlu0 %v7167, 96
        %v7330 = vpop.permute.xlu0 %7329
        %7331 = vrot.lane.b32.xlu0 %v7170, 96
        %v7332 = vpop.permute.xlu0 %7331
        %v7349 = vadd.f32 %v7269, %v7302
        %v7350 = vadd.f32 %v7270, %v7304
        %v7351 = vadd.f32 %v7271, %v7306
        %v7352 = vadd.f32 %v7272, %v7308
        %v7353 = vadd.f32 %v7273, %v7310
        %v7354 = vadd.f32 %v7274, %v7312
        %v7355 = vadd.f32 %v7275, %v7314
        %v7356 = vadd.f32 %v7276, %v7316
        %v7357 = vadd.f32 %v7277, %v7318
        %v7358 = vadd.f32 %v7278, %v7320
        %v7359 = vadd.f32 %v7279, %v7322
        %v7360 = vadd.f32 %v7280, %v7324
        %v7361 = vadd.f32 %v7281, %v7326
        %v7362 = vadd.f32 %v7282, %v7328
        %v7363 = vadd.f32 %v7283, %v7330
        %v7364 = vadd.f32 %v7284, %v7332
        %vm7365 = vcmask 917248
        %7366 = vst.msk [vmem:[#allocation5] sm:$0xff] %vm7365, %v7349
        %7367 = vst.msk [vmem:[#allocation5 + $0x8] sm:$0xff] %vm7365, %v7350
        %7368 = vst.msk [vmem:[#allocation5 + $0x10] sm:$0xff] %vm7365, %v7351
        %7369 = vst.msk [vmem:[#allocation5 + $0x18] sm:$0xff] %vm7365, %v7352
        %7370 = vst.msk [vmem:[#allocation5 + $0x20] sm:$0xff] %vm7365, %v7353
        %7371 = vst.msk [vmem:[#allocation5 + $0x28] sm:$0xff] %vm7365, %v7354
        %7372 = vst.msk [vmem:[#allocation5 + $0x30] sm:$0xff] %vm7365, %v7355
        %7373 = vst.msk [vmem:[#allocation5 + $0x38] sm:$0xff] %vm7365, %v7356
        %7374 = vst.msk [vmem:[#allocation5 + $0x40] sm:$0xff] %vm7365, %v7357
        %7375 = vst.msk [vmem:[#allocation5 + $0x48] sm:$0xff] %vm7365, %v7358
        %7376 = vst.msk [vmem:[#allocation5 + $0x50] sm:$0xff] %vm7365, %v7359
        %7377 = vst.msk [vmem:[#allocation5 + $0x58] sm:$0xff] %vm7365, %v7360
        %7378 = vst.msk [vmem:[#allocation5 + $0x60] sm:$0xff] %vm7365, %v7361
        %7379 = vst.msk [vmem:[#allocation5 + $0x68] sm:$0xff] %vm7365, %v7362
        %7380 = vst.msk [vmem:[#allocation5 + $0x70] sm:$0xff] %vm7365, %v7363
        %7381 = vst.msk [vmem:[#allocation5 + $0x78] sm:$0xff] %vm7365, %v7364
        %vm7382 = vcmask 56368
        %7383 = vst.msk [vmem:[#allocation3] sm:$0xff] %vm7382, %v6772
        %7384 = vst.msk [vmem:[#allocation3 + $0x8] sm:$0xff] %vm7382, %v6773
        %7385 = vst.msk [vmem:[#allocation3 + $0x10] sm:$0xff] %vm7382, %v6774
        %7386 = vst.msk [vmem:[#allocation3 + $0x18] sm:$0xff] %vm7382, %v6775
        %7387 = vst.msk [vmem:[#allocation3 + $0x20] sm:$0xff] %vm7382, %v6776
        %7388 = vst.msk [vmem:[#allocation3 + $0x28] sm:$0xff] %vm7382, %v6777
        %7389 = vst.msk [vmem:[#allocation3 + $0x30] sm:$0xff] %vm7382, %v6778
        %7390 = vst.msk [vmem:[#allocation3 + $0x38] sm:$0xff] %vm7382, %v6779
        %7391 = vst.msk [vmem:[#allocation3 + $0x40] sm:$0xff] %vm7382, %v6780
        %7392 = vst.msk [vmem:[#allocation3 + $0x48] sm:$0xff] %vm7382, %v6781
        %7393 = vst.msk [vmem:[#allocation3 + $0x50] sm:$0xff] %vm7382, %v6782
        %7394 = vst.msk [vmem:[#allocation3 + $0x58] sm:$0xff] %vm7382, %v6783
        %7395 = vst.msk [vmem:[#allocation3 + $0x60] sm:$0xff] %vm7382, %v6784
        %7396 = vst.msk [vmem:[#allocation3 + $0x68] sm:$0xff] %vm7382, %v6785
        %7397 = vst.msk [vmem:[#allocation3 + $0x70] sm:$0xff] %vm7382, %v6786
        %7398 = vst.msk [vmem:[#allocation3 + $0x78] sm:$0xff] %vm7382, %v6787
        %7399 = vst.msk [vmem:[#allocation4] sm:$0xff] %vm7382, %v7028
        %7400 = vst.msk [vmem:[#allocation4 + $0x8] sm:$0xff] %vm7382, %v7029
        %7401 = vst.msk [vmem:[#allocation4 + $0x10] sm:$0xff] %vm7382, %v7030
        %7402 = vst.msk [vmem:[#allocation4 + $0x18] sm:$0xff] %vm7382, %v7031
        %7403 = vst.msk [vmem:[#allocation4 + $0x20] sm:$0xff] %vm7382, %v7032
        %7404 = vst.msk [vmem:[#allocation4 + $0x28] sm:$0xff] %vm7382, %v7033
        %7405 = vst.msk [vmem:[#allocation4 + $0x30] sm:$0xff] %vm7382, %v7034
        %7406 = vst.msk [vmem:[#allocation4 + $0x38] sm:$0xff] %vm7382, %v7035
        %7407 = vst.msk [vmem:[#allocation4 + $0x40] sm:$0xff] %vm7382, %v7036
        %7408 = vst.msk [vmem:[#allocation4 + $0x48] sm:$0xff] %vm7382, %v7037
        %7409 = vst.msk [vmem:[#allocation4 + $0x50] sm:$0xff] %vm7382, %v7038
        %7410 = vst.msk [vmem:[#allocation4 + $0x58] sm:$0xff] %vm7382, %v7039
        %7411 = vst.msk [vmem:[#allocation4 + $0x60] sm:$0xff] %vm7382, %v7040
        %7412 = vst.msk [vmem:[#allocation4 + $0x68] sm:$0xff] %vm7382, %v7041
        %7413 = vst.msk [vmem:[#allocation4 + $0x70] sm:$0xff] %vm7382, %v7042
        %7414 = vst.msk [vmem:[#allocation4 + $0x78] sm:$0xff] %vm7382, %v7043
        %7415 = vrot.lane.b32.xlu0 %v1426, 72
        %v7416 = vpop.permute.xlu0 %7415
        %7417 = vrot.lane.b32.xlu0 %v1427, 72
        %v7418 = vpop.permute.xlu0 %7417
        %7419 = vrot.lane.b32.xlu0 %v1428, 72
        %v7420 = vpop.permute.xlu0 %7419
        %7421 = vrot.lane.b32.xlu0 %v1429, 72
        %v7422 = vpop.permute.xlu0 %7421
        %7423 = vrot.lane.b32.xlu0 %v1430, 72
        %v7424 = vpop.permute.xlu0 %7423
        %7425 = vrot.lane.b32.xlu0 %v1431, 72
        %v7426 = vpop.permute.xlu0 %7425
        %7427 = vrot.lane.b32.xlu0 %v1432, 72
        %v7428 = vpop.permute.xlu0 %7427
        %7429 = vrot.lane.b32.xlu0 %v1433, 72
        %v7430 = vpop.permute.xlu0 %7429
        %7431 = vrot.lane.b32.xlu0 %v1162, 72
        %v7432 = vpop.permute.xlu0 %7431
        %7433 = vrot.lane.b32.xlu0 %v1163, 72
        %v7434 = vpop.permute.xlu0 %7433
        %7435 = vrot.lane.b32.xlu0 %v1164, 72
        %v7436 = vpop.permute.xlu0 %7435
        %7437 = vrot.lane.b32.xlu0 %v1165, 72
        %v7438 = vpop.permute.xlu0 %7437
        %7439 = vrot.lane.b32.xlu0 %v1166, 72
        %v7440 = vpop.permute.xlu0 %7439
        %7441 = vrot.lane.b32.xlu0 %v1167, 72
        %v7442 = vpop.permute.xlu0 %7441
        %7443 = vrot.lane.b32.xlu0 %v1168, 72
        %v7444 = vpop.permute.xlu0 %7443
        %7445 = vrot.lane.b32.xlu0 %v1169, 72
        %v7446 = vpop.permute.xlu0 %7445
        %v7448 = vsel %vm1434, %v7416, 0
        %v7451 = vsel %vm1434, %v7418, 0
        %v7454 = vsel %vm1434, %v7420, 0
        %v7457 = vsel %vm1434, %v7422, 0
        %v7460 = vsel %vm1434, %v7424, 0
        %v7463 = vsel %vm1434, %v7426, 0
        %v7466 = vsel %vm1434, %v7428, 0
        %v7469 = vsel %vm1434, %v7430, 0
        %v7472 = vsel %vm1434, %v7432, 0
        %v7475 = vsel %vm1434, %v7434, 0
        %v7478 = vsel %vm1434, %v7436, 0
        %v7481 = vsel %vm1434, %v7438, 0
        %v7484 = vsel %vm1434, %v7440, 0
        %v7487 = vsel %vm1434, %v7442, 0
        %v7490 = vsel %vm1434, %v7444, 0
        %v7493 = vsel %vm1434, %v7446, 0
        %7495 = vmatprep.subr.bf16.mxu0 0
        %7496 = vmatpush1.bf16.xpose.msra.mxu0 %v7472
        %7497 = vmatprep.subr.bf16.mxu0 0
        %7498 = vmatpush1.bf16.xpose.msra.mxu0 %v7475
        %7499 = vmatprep.subr.bf16.mxu0 0
        %7500 = vmatpush1.bf16.xpose.msra.mxu0 %v7478
        %7501 = vmatprep.subr.bf16.mxu0 0
        %7502 = vmatpush1.bf16.xpose.msra.mxu0 %v7481
        %7503 = vmatprep.subr.bf16.mxu0 0
        %7504 = vmatpush1.bf16.xpose.msra.mxu0 %v7484
        %7505 = vmatprep.subr.bf16.mxu0 0
        %7506 = vmatpush1.bf16.xpose.msra.mxu0 %v7487
        %7507 = vmatprep.subr.bf16.mxu0 0
        %7508 = vmatpush1.bf16.xpose.msra.mxu0 %v7490
        %7509 = vmatprep.subr.bf16.mxu0 0
        %7510 = vmatpush1.bf16.xpose.msra.mxu0 %v7493
        %7511 = vmatprep.subr.bf16.mxu0 0
        %7512 = vmatpush1.bf16.xpose.msra.mxu0 0
        %7513 = vmatprep.subr.bf16.mxu0 0
        %7514 = vmatpush1.bf16.xpose.msra.mxu0 0
        %7515 = vmatprep.subr.bf16.mxu0 0
        %7516 = vmatpush1.bf16.xpose.msra.mxu0 0
        %7517 = vmatprep.subr.bf16.mxu0 0
        %7518 = vmatpush1.bf16.xpose.msra.mxu0 0
        %7519 = vmatprep.subr.bf16.mxu0 0
        %7520 = vmatpush1.bf16.xpose.msra.mxu0 0
        %7521 = vmatprep.subr.bf16.mxu0 0
        %7522 = vmatpush1.bf16.xpose.msra.mxu0 0
        %7523 = vmatprep.subr.bf16.mxu0 0
        %7524 = vmatpush1.bf16.xpose.msra.mxu0 0
        %7525 = vmatprep.subr.bf16.mxu0 0
        %7526 = vmatpush1.bf16.xpose.msra.mxu0 0
        %7527 = vmatprep.mubr.bf16.mxu0 0
        %7528 = vmatmul.mubr.bf16.gmra.mrb[0].mxu0 %v7448
        %v7529 = vpop.f32.mrb[0].mxu0
        %v7530 = vadd.f32 %v1410, %v7529
        %v7531 = vpop.f32.mrb[0].mxu0
        %v7532 = vpop.f32.mrb[0].mxu0
        %v7533 = vadd.f32 %v1411, %v7532
        %v7534 = vpop.f32.mrb[0].mxu0
        %7535 = vmatprep.mubr.bf16.mxu0 0
        %7536 = vmatmul.mubr.bf16.gmra.mrb[0].mxu0 %v7451
        %v7537 = vpop.f32.mrb[0].mxu0
        %v7538 = vadd.f32 %v1412, %v7537
        %v7539 = vpop.f32.mrb[0].mxu0
        %v7540 = vpop.f32.mrb[0].mxu0
        %v7541 = vadd.f32 %v1413, %v7540
        %v7542 = vpop.f32.mrb[0].mxu0
        %7543 = vmatprep.mubr.bf16.mxu0 0
        %7544 = vmatmul.mubr.bf16.gmra.mrb[0].mxu0 %v7454
        %v7545 = vpop.f32.mrb[0].mxu0
        %v7546 = vadd.f32 %v1414, %v7545
        %v7547 = vpop.f32.mrb[0].mxu0
        %v7548 = vpop.f32.mrb[0].mxu0
        %v7549 = vadd.f32 %v1415, %v7548
        %v7550 = vpop.f32.mrb[0].mxu0
        %7551 = vmatprep.mubr.bf16.mxu0 0
        %7552 = vmatmul.mubr.bf16.gmra.mrb[0].mxu0 %v7457
        %v7553 = vpop.f32.mrb[0].mxu0
        %v7554 = vadd.f32 %v1416, %v7553
        %v7555 = vpop.f32.mrb[0].mxu0
        %v7556 = vpop.f32.mrb[0].mxu0
        %v7557 = vadd.f32 %v1417, %v7556
        %v7558 = vpop.f32.mrb[0].mxu0
        %7559 = vmatprep.mubr.bf16.mxu0 0
        %7560 = vmatmul.mubr.bf16.gmra.mrb[0].mxu0 %v7460
        %v7561 = vpop.f32.mrb[0].mxu0
        %v7562 = vadd.f32 %v1418, %v7561
        %v7563 = vpop.f32.mrb[0].mxu0
        %v7564 = vpop.f32.mrb[0].mxu0
        %v7565 = vadd.f32 %v1419, %v7564
        %v7566 = vpop.f32.mrb[0].mxu0
        %7567 = vmatprep.mubr.bf16.mxu0 0
        %7568 = vmatmul.mubr.bf16.gmra.mrb[0].mxu0 %v7463
        %v7569 = vpop.f32.mrb[0].mxu0
        %v7570 = vadd.f32 %v1420, %v7569
        %v7571 = vpop.f32.mrb[0].mxu0
        %v7572 = vpop.f32.mrb[0].mxu0
        %v7573 = vadd.f32 %v1421, %v7572
        %v7574 = vpop.f32.mrb[0].mxu0
        %7575 = vmatprep.mubr.bf16.mxu0 0
        %7576 = vmatmul.mubr.bf16.gmra.mrb[0].mxu0 %v7466
        %v7577 = vpop.f32.mrb[0].mxu0
        %v7578 = vadd.f32 %v1422, %v7577
        %v7579 = vpop.f32.mrb[0].mxu0
        %v7580 = vpop.f32.mrb[0].mxu0
        %v7581 = vadd.f32 %v1423, %v7580
        %v7582 = vpop.f32.mrb[0].mxu0
        %7583 = vmatprep.mubr.bf16.mxu0 0
        %7584 = vmatmul.mubr.bf16.gmra.mrb[0].mxu0 %v7469
        %v7585 = vpop.f32.mrb[0].mxu0
        %v7586 = vadd.f32 %v1424, %v7585
        %v7587 = vpop.f32.mrb[0].mxu0
        %v7588 = vpop.f32.mrb[0].mxu0
        %v7589 = vadd.f32 %v1425, %v7588
        %v7590 = vpop.f32.mrb[0].mxu0
        %7591 = vdwg.mxu0
        %v7592 = vld [vmem:[#allocation3] sm:$0xff]
        %v7593 = vld [vmem:[#allocation3 + $0x8] sm:$0xff]
        %v7594 = vld [vmem:[#allocation3 + $0x10] sm:$0xff]
        %v7595 = vld [vmem:[#allocation3 + $0x18] sm:$0xff]
        %v7596 = vld [vmem:[#allocation3 + $0x20] sm:$0xff]
        %v7597 = vld [vmem:[#allocation3 + $0x28] sm:$0xff]
        %v7598 = vld [vmem:[#allocation3 + $0x30] sm:$0xff]
        %v7599 = vld [vmem:[#allocation3 + $0x38] sm:$0xff]
        %v7600 = vld [vmem:[#allocation3 + $0x40] sm:$0xff]
        %v7601 = vld [vmem:[#allocation3 + $0x48] sm:$0xff]
        %v7602 = vld [vmem:[#allocation3 + $0x50] sm:$0xff]
        %v7603 = vld [vmem:[#allocation3 + $0x58] sm:$0xff]
        %v7604 = vld [vmem:[#allocation3 + $0x60] sm:$0xff]
        %v7605 = vld [vmem:[#allocation3 + $0x68] sm:$0xff]
        %v7606 = vld [vmem:[#allocation3 + $0x70] sm:$0xff]
        %v7607 = vld [vmem:[#allocation3 + $0x78] sm:$0xff]
        %7608 = vmax.xlane.f32.xlu0 %v7530
        %v7609 = vpop.xlane.xlu0 %7608
        %7610 = vmax.xlane.f32.xlu0 %v7533
        %v7611 = vpop.xlane.xlu0 %7610
        %7612 = vmax.xlane.f32.xlu0 %v7538
        %v7613 = vpop.xlane.xlu0 %7612
        %7614 = vmax.xlane.f32.xlu0 %v7541
        %v7615 = vpop.xlane.xlu0 %7614
        %7616 = vmax.xlane.f32.xlu0 %v7546
        %v7617 = vpop.xlane.xlu0 %7616
        %7618 = vmax.xlane.f32.xlu0 %v7549
        %v7619 = vpop.xlane.xlu0 %7618
        %7620 = vmax.xlane.f32.xlu0 %v7554
        %v7621 = vpop.xlane.xlu0 %7620
        %7622 = vmax.xlane.f32.xlu0 %v7557
        %v7623 = vpop.xlane.xlu0 %7622
        %7624 = vmax.xlane.f32.xlu0 %v7562
        %v7625 = vpop.xlane.xlu0 %7624
        %7626 = vmax.xlane.f32.xlu0 %v7565
        %v7627 = vpop.xlane.xlu0 %7626
        %7628 = vmax.xlane.f32.xlu0 %v7570
        %v7629 = vpop.xlane.xlu0 %7628
        %7630 = vmax.xlane.f32.xlu0 %v7573
        %v7631 = vpop.xlane.xlu0 %7630
        %7632 = vmax.xlane.f32.xlu0 %v7578
        %v7633 = vpop.xlane.xlu0 %7632
        %7634 = vmax.xlane.f32.xlu0 %v7581
        %v7635 = vpop.xlane.xlu0 %7634
        %7636 = vmax.xlane.f32.xlu0 %v7586
        %v7637 = vpop.xlane.xlu0 %7636
        %7638 = vmax.xlane.f32.xlu0 %v7589
        %v7639 = vpop.xlane.xlu0 %7638
        %v7640 = vmax.f32 %v7592, %v7609
        %v7641 = vmax.f32 %v7593, %v7611
        %v7642 = vmax.f32 %v7594, %v7613
        %v7643 = vmax.f32 %v7595, %v7615
        %v7644 = vmax.f32 %v7596, %v7617
        %v7645 = vmax.f32 %v7597, %v7619
        %v7646 = vmax.f32 %v7598, %v7621
        %v7647 = vmax.f32 %v7599, %v7623
        %v7648 = vmax.f32 %v7600, %v7625
        %v7649 = vmax.f32 %v7601, %v7627
        %v7650 = vmax.f32 %v7602, %v7629
        %v7651 = vmax.f32 %v7603, %v7631
        %v7652 = vmax.f32 %v7604, %v7633
        %v7653 = vmax.f32 %v7605, %v7635
        %v7654 = vmax.f32 %v7606, %v7637
        %v7655 = vmax.f32 %v7607, %v7639
        %v7656 = vsub.f32 %v7592, %v7640
        %v7657 = vsub.f32 %v7593, %v7641
        %v7658 = vsub.f32 %v7594, %v7642
        %v7659 = vsub.f32 %v7595, %v7643
        %v7660 = vsub.f32 %v7596, %v7644
        %v7661 = vsub.f32 %v7597, %v7645
        %v7662 = vsub.f32 %v7598, %v7646
        %v7663 = vsub.f32 %v7599, %v7647
        %v7664 = vsub.f32 %v7600, %v7648
        %v7665 = vsub.f32 %v7601, %v7649
        %v7666 = vsub.f32 %v7602, %v7650
        %v7667 = vsub.f32 %v7603, %v7651
        %v7668 = vsub.f32 %v7604, %v7652
        %v7669 = vsub.f32 %v7605, %v7653
        %v7670 = vsub.f32 %v7606, %v7654
        %v7671 = vsub.f32 %v7607, %v7655
        %v7672 = vmul.f32 %v7656, 1.442695
        %v7673 = vpow.pop %v7672
        %v7674 = vmul.f32 %v7657, 1.442695
        %v7675 = vpow.pop %v7674
        %v7676 = vmul.f32 %v7658, 1.442695
        %v7677 = vpow.pop %v7676
        %v7678 = vmul.f32 %v7659, 1.442695
        %v7679 = vpow.pop %v7678
        %v7680 = vmul.f32 %v7660, 1.442695
        %v7681 = vpow.pop %v7680
        %v7682 = vmul.f32 %v7661, 1.442695
        %v7683 = vpow.pop %v7682
        %v7684 = vmul.f32 %v7662, 1.442695
        %v7685 = vpow.pop %v7684
        %v7686 = vmul.f32 %v7663, 1.442695
        %v7687 = vpow.pop %v7686
        %v7688 = vmul.f32 %v7664, 1.442695
        %v7689 = vpow.pop %v7688
        %v7690 = vmul.f32 %v7665, 1.442695
        %v7691 = vpow.pop %v7690
        %v7692 = vmul.f32 %v7666, 1.442695
        %v7693 = vpow.pop %v7692
        %v7694 = vmul.f32 %v7667, 1.442695
        %v7695 = vpow.pop %v7694
        %v7696 = vmul.f32 %v7668, 1.442695
        %v7697 = vpow.pop %v7696
        %v7698 = vmul.f32 %v7669, 1.442695
        %v7699 = vpow.pop %v7698
        %v7700 = vmul.f32 %v7670, 1.442695
        %v7701 = vpow.pop %v7700
        %v7702 = vmul.f32 %v7671, 1.442695
        %v7703 = vpow.pop %v7702
        %7705 = vset.pattern.permute.xlu0 7
        %7706 = vperm.xlu0 %7705, %v7640
        %v7707 = vpop.permute.xlu0 %7706
        %7710 = vset.pattern.permute.xlu0 7
        %7711 = vperm.xlu0 %7710, %v7641
        %v7712 = vpop.permute.xlu0 %7711
        %7715 = vset.pattern.permute.xlu0 7
        %7716 = vperm.xlu0 %7715, %v7642
        %v7717 = vpop.permute.xlu0 %7716
        %7720 = vset.pattern.permute.xlu0 7
        %7721 = vperm.xlu0 %7720, %v7643
        %v7722 = vpop.permute.xlu0 %7721
        %7725 = vset.pattern.permute.xlu0 7
        %7726 = vperm.xlu0 %7725, %v7644
        %v7727 = vpop.permute.xlu0 %7726
        %7730 = vset.pattern.permute.xlu0 7
        %7731 = vperm.xlu0 %7730, %v7645
        %v7732 = vpop.permute.xlu0 %7731
        %7735 = vset.pattern.permute.xlu0 7
        %7736 = vperm.xlu0 %7735, %v7646
        %v7737 = vpop.permute.xlu0 %7736
        %7740 = vset.pattern.permute.xlu0 7
        %7741 = vperm.xlu0 %7740, %v7647
        %v7742 = vpop.permute.xlu0 %7741
        %7745 = vset.pattern.permute.xlu0 7
        %7746 = vperm.xlu0 %7745, %v7648
        %v7747 = vpop.permute.xlu0 %7746
        %7750 = vset.pattern.permute.xlu0 7
        %7751 = vperm.xlu0 %7750, %v7649
        %v7752 = vpop.permute.xlu0 %7751
        %7755 = vset.pattern.permute.xlu0 7
        %7756 = vperm.xlu0 %7755, %v7650
        %v7757 = vpop.permute.xlu0 %7756
        %7760 = vset.pattern.permute.xlu0 7
        %7761 = vperm.xlu0 %7760, %v7651
        %v7762 = vpop.permute.xlu0 %7761
        %7765 = vset.pattern.permute.xlu0 7
        %7766 = vperm.xlu0 %7765, %v7652
        %v7767 = vpop.permute.xlu0 %7766
        %7770 = vset.pattern.permute.xlu0 7
        %7771 = vperm.xlu0 %7770, %v7653
        %v7772 = vpop.permute.xlu0 %7771
        %7775 = vset.pattern.permute.xlu0 7
        %7776 = vperm.xlu0 %7775, %v7654
        %v7777 = vpop.permute.xlu0 %7776
        %7780 = vset.pattern.permute.xlu0 7
        %7781 = vperm.xlu0 %7780, %v7655
        %v7782 = vpop.permute.xlu0 %7781
        %v7784 = vsub.f32 %v7530, %v7707
        %v7785 = vsub.f32 %v7533, %v7712
        %v7786 = vsub.f32 %v7538, %v7717
        %v7787 = vsub.f32 %v7541, %v7722
        %v7788 = vsub.f32 %v7546, %v7727
        %v7789 = vsub.f32 %v7549, %v7732
        %v7790 = vsub.f32 %v7554, %v7737
        %v7791 = vsub.f32 %v7557, %v7742
        %v7792 = vsub.f32 %v7562, %v7747
        %v7793 = vsub.f32 %v7565, %v7752
        %v7794 = vsub.f32 %v7570, %v7757
        %v7795 = vsub.f32 %v7573, %v7762
        %v7796 = vsub.f32 %v7578, %v7767
        %v7797 = vsub.f32 %v7581, %v7772
        %v7798 = vsub.f32 %v7586, %v7777
        %v7799 = vsub.f32 %v7589, %v7782
        %v7800 = vmul.f32 %v7784, 1.442695
        %v7801 = vpow.pop %v7800
        %v7802 = vmul.f32 %v7785, 1.442695
        %v7803 = vpow.pop %v7802
        %v7804 = vmul.f32 %v7786, 1.442695
        %v7805 = vpow.pop %v7804
        %v7806 = vmul.f32 %v7787, 1.442695
        %v7807 = vpow.pop %v7806
        %v7808 = vmul.f32 %v7788, 1.442695
        %v7809 = vpow.pop %v7808
        %v7810 = vmul.f32 %v7789, 1.442695
        %v7811 = vpow.pop %v7810
        %v7812 = vmul.f32 %v7790, 1.442695
        %v7813 = vpow.pop %v7812
        %v7814 = vmul.f32 %v7791, 1.442695
        %v7815 = vpow.pop %v7814
        %v7816 = vmul.f32 %v7792, 1.442695
        %v7817 = vpow.pop %v7816
        %v7818 = vmul.f32 %v7793, 1.442695
        %v7819 = vpow.pop %v7818
        %v7820 = vmul.f32 %v7794, 1.442695
        %v7821 = vpow.pop %v7820
        %v7822 = vmul.f32 %v7795, 1.442695
        %v7823 = vpow.pop %v7822
        %v7824 = vmul.f32 %v7796, 1.442695
        %v7825 = vpow.pop %v7824
        %v7826 = vmul.f32 %v7797, 1.442695
        %v7827 = vpow.pop %v7826
        %v7828 = vmul.f32 %v7798, 1.442695
        %v7829 = vpow.pop %v7828
        %v7830 = vmul.f32 %v7799, 1.442695
        %v7831 = vpow.pop %v7830
        %v7832 = vld [vmem:[#allocation4] sm:$0xff]
        %v7833 = vld [vmem:[#allocation4 + $0x8] sm:$0xff]
        %v7834 = vld [vmem:[#allocation4 + $0x10] sm:$0xff]
        %v7835 = vld [vmem:[#allocation4 + $0x18] sm:$0xff]
        %v7836 = vld [vmem:[#allocation4 + $0x20] sm:$0xff]
        %v7837 = vld [vmem:[#allocation4 + $0x28] sm:$0xff]
        %v7838 = vld [vmem:[#allocation4 + $0x30] sm:$0xff]
        %v7839 = vld [vmem:[#allocation4 + $0x38] sm:$0xff]
        %v7840 = vld [vmem:[#allocation4 + $0x40] sm:$0xff]
        %v7841 = vld [vmem:[#allocation4 + $0x48] sm:$0xff]
        %v7842 = vld [vmem:[#allocation4 + $0x50] sm:$0xff]
        %v7843 = vld [vmem:[#allocation4 + $0x58] sm:$0xff]
        %v7844 = vld [vmem:[#allocation4 + $0x60] sm:$0xff]
        %v7845 = vld [vmem:[#allocation4 + $0x68] sm:$0xff]
        %v7846 = vld [vmem:[#allocation4 + $0x70] sm:$0xff]
        %v7847 = vld [vmem:[#allocation4 + $0x78] sm:$0xff]
        %v7848 = vmul.f32 %v7673, %v7832
        %v7849 = vmul.f32 %v7675, %v7833
        %v7850 = vmul.f32 %v7677, %v7834
        %v7851 = vmul.f32 %v7679, %v7835
        %v7852 = vmul.f32 %v7681, %v7836
        %v7853 = vmul.f32 %v7683, %v7837
        %v7854 = vmul.f32 %v7685, %v7838
        %v7855 = vmul.f32 %v7687, %v7839
        %v7856 = vmul.f32 %v7689, %v7840
        %v7857 = vmul.f32 %v7691, %v7841
        %v7858 = vmul.f32 %v7693, %v7842
        %v7859 = vmul.f32 %v7695, %v7843
        %v7860 = vmul.f32 %v7697, %v7844
        %v7861 = vmul.f32 %v7699, %v7845
        %v7862 = vmul.f32 %v7701, %v7846
        %v7863 = vmul.f32 %v7703, %v7847
        %7864 = vadd.xlane.f32.xlu0 %v7801
        %v7865 = vpop.xlane.xlu0 %7864
        %7866 = vadd.xlane.f32.xlu0 %v7803
        %v7867 = vpop.xlane.xlu0 %7866
        %7868 = vadd.xlane.f32.xlu0 %v7805
        %v7869 = vpop.xlane.xlu0 %7868
        %7870 = vadd.xlane.f32.xlu0 %v7807
        %v7871 = vpop.xlane.xlu0 %7870
        %7872 = vadd.xlane.f32.xlu0 %v7809
        %v7873 = vpop.xlane.xlu0 %7872
        %7874 = vadd.xlane.f32.xlu0 %v7811
        %v7875 = vpop.xlane.xlu0 %7874
        %7876 = vadd.xlane.f32.xlu0 %v7813
        %v7877 = vpop.xlane.xlu0 %7876
        %7878 = vadd.xlane.f32.xlu0 %v7815
        %v7879 = vpop.xlane.xlu0 %7878
        %7880 = vadd.xlane.f32.xlu0 %v7817
        %v7881 = vpop.xlane.xlu0 %7880
        %7882 = vadd.xlane.f32.xlu0 %v7819
        %v7883 = vpop.xlane.xlu0 %7882
        %7884 = vadd.xlane.f32.xlu0 %v7821
        %v7885 = vpop.xlane.xlu0 %7884
        %7886 = vadd.xlane.f32.xlu0 %v7823
        %v7887 = vpop.xlane.xlu0 %7886
        %7888 = vadd.xlane.f32.xlu0 %v7825
        %v7889 = vpop.xlane.xlu0 %7888
        %7890 = vadd.xlane.f32.xlu0 %v7827
        %v7891 = vpop.xlane.xlu0 %7890
        %7892 = vadd.xlane.f32.xlu0 %v7829
        %v7893 = vpop.xlane.xlu0 %7892
        %7894 = vadd.xlane.f32.xlu0 %v7831
        %v7895 = vpop.xlane.xlu0 %7894
        %v7896 = vadd.f32 %v7848, %v7865
        %v7897 = vadd.f32 %v7849, %v7867
        %v7898 = vadd.f32 %v7850, %v7869
        %v7899 = vadd.f32 %v7851, %v7871
        %v7900 = vadd.f32 %v7852, %v7873
        %v7901 = vadd.f32 %v7853, %v7875
        %v7902 = vadd.f32 %v7854, %v7877
        %v7903 = vadd.f32 %v7855, %v7879
        %v7904 = vadd.f32 %v7856, %v7881
        %v7905 = vadd.f32 %v7857, %v7883
        %v7906 = vadd.f32 %v7858, %v7885
        %v7907 = vadd.f32 %v7859, %v7887
        %v7908 = vadd.f32 %v7860, %v7889
        %v7909 = vadd.f32 %v7861, %v7891
        %v7910 = vadd.f32 %v7862, %v7893
        %v7911 = vadd.f32 %v7863, %v7895
        %v7912 = vpack.c.bf16 %v7803, %v7801
        %v7913 = vpack.c.bf16 %v7807, %v7805
        %v7914 = vpack.c.bf16 %v7811, %v7809
        %v7915 = vpack.c.bf16 %v7815, %v7813
        %v7916 = vpack.c.bf16 %v7819, %v7817
        %v7917 = vpack.c.bf16 %v7823, %v7821
        %v7918 = vpack.c.bf16 %v7827, %v7825
        %v7919 = vpack.c.bf16 %v7831, %v7829
        %7920 = vrot.lane.b32.xlu0 %v1386, 16
        %v7921 = vpop.permute.xlu0 %7920
        %7922 = vrot.lane.b32.xlu0 %v1387, 16
        %v7923 = vpop.permute.xlu0 %7922
        %7924 = vrot.lane.b32.xlu0 %v1388, 16
        %v7925 = vpop.permute.xlu0 %7924
        %7926 = vrot.lane.b32.xlu0 %v1389, 16
        %v7927 = vpop.permute.xlu0 %7926
        %7928 = vrot.lane.b32.xlu0 %v1390, 16
        %v7929 = vpop.permute.xlu0 %7928
        %7930 = vrot.lane.b32.xlu0 %v1391, 16
        %v7931 = vpop.permute.xlu0 %7930
        %7932 = vrot.lane.b32.xlu0 %v1392, 16
        %v7933 = vpop.permute.xlu0 %7932
        %7934 = vrot.lane.b32.xlu0 %v1393, 16
        %v7935 = vpop.permute.xlu0 %7934
        %7944 = vmatprep.subr.bf16.mxu0 0
        %7945 = vmatpush1.bf16.msra.mxu0 %v7921
        %7946 = vmatprep.subr.bf16.mxu0 0
        %7947 = vmatpush1.bf16.msra.mxu0 %v7923
        %7948 = vmatprep.subr.bf16.mxu0 0
        %7949 = vmatpush1.bf16.msra.mxu0 %v7925
        %7950 = vmatprep.subr.bf16.mxu0 0
        %7951 = vmatpush1.bf16.msra.mxu0 %v7927
        %7952 = vmatprep.subr.bf16.mxu0 0
        %7953 = vmatpush1.bf16.msra.mxu0 %v7929
        %7954 = vmatprep.subr.bf16.mxu0 0
        %7955 = vmatpush1.bf16.msra.mxu0 %v7931
        %7956 = vmatprep.subr.bf16.mxu0 0
        %7957 = vmatpush1.bf16.msra.mxu0 %v7933
        %7958 = vmatprep.subr.bf16.mxu0 0
        %7959 = vmatpush1.bf16.msra.mxu0 %v7935
        %7960 = vmatprep.subr.bf16.mxu0 0
        %7961 = vmatpush1.bf16.msra.mxu0 0
        %7962 = vmatprep.subr.bf16.mxu0 0
        %7963 = vmatpush1.bf16.msra.mxu0 0
        %7964 = vmatprep.subr.bf16.mxu0 0
        %7965 = vmatpush1.bf16.msra.mxu0 0
        %7966 = vmatprep.subr.bf16.mxu0 0
        %7967 = vmatpush1.bf16.msra.mxu0 0
        %7968 = vmatprep.subr.bf16.mxu0 0
        %7969 = vmatpush1.bf16.msra.mxu0 0
        %7970 = vmatprep.subr.bf16.mxu0 0
        %7971 = vmatpush1.bf16.msra.mxu0 0
        %7972 = vmatprep.subr.bf16.mxu0 0
        %7973 = vmatpush1.bf16.msra.mxu0 0
        %7974 = vmatprep.subr.bf16.mxu0 0
        %7975 = vmatpush1.bf16.msra.mxu0 0
        %7976 = vmatprep.mubr.bf16.mxu0 0
        %7977 = vmatmul.mubr.bf16.gmra.mrb[0].mxu0 %v7912
        %v7978 = vpop.f32.mrb[0].mxu0
        %v7979 = vadd.f32 0.0, %v7978
        %v7980 = vpop.f32.mrb[0].mxu0
        %v7981 = vpop.f32.mrb[0].mxu0
        %v7982 = vadd.f32 0.0, %v7981
        %v7983 = vpop.f32.mrb[0].mxu0
        %7984 = vmatprep.mubr.bf16.mxu0 0
        %7985 = vmatmul.mubr.bf16.gmra.mrb[0].mxu0 %v7913
        %v7986 = vpop.f32.mrb[0].mxu0
        %v7987 = vadd.f32 0.0, %v7986
        %v7988 = vpop.f32.mrb[0].mxu0
        %v7989 = vpop.f32.mrb[0].mxu0
        %v7990 = vadd.f32 0.0, %v7989
        %v7991 = vpop.f32.mrb[0].mxu0
        %7992 = vmatprep.mubr.bf16.mxu0 0
        %7993 = vmatmul.mubr.bf16.gmra.mrb[0].mxu0 %v7914
        %v7994 = vpop.f32.mrb[0].mxu0
        %v7995 = vadd.f32 0.0, %v7994
        %v7996 = vpop.f32.mrb[0].mxu0
        %v7997 = vpop.f32.mrb[0].mxu0
        %v7998 = vadd.f32 0.0, %v7997
        %v7999 = vpop.f32.mrb[0].mxu0
        %8000 = vmatprep.mubr.bf16.mxu0 0
        %8001 = vmatmul.mubr.bf16.gmra.mrb[0].mxu0 %v7915
        %v8002 = vpop.f32.mrb[0].mxu0
        %v8003 = vadd.f32 0.0, %v8002
        %v8004 = vpop.f32.mrb[0].mxu0
        %v8005 = vpop.f32.mrb[0].mxu0
        %v8006 = vadd.f32 0.0, %v8005
        %v8007 = vpop.f32.mrb[0].mxu0
        %8008 = vmatprep.mubr.bf16.mxu0 0
        %8009 = vmatmul.mubr.bf16.gmra.mrb[0].mxu0 %v7916
        %v8010 = vpop.f32.mrb[0].mxu0
        %v8011 = vadd.f32 0.0, %v8010
        %v8012 = vpop.f32.mrb[0].mxu0
        %v8013 = vpop.f32.mrb[0].mxu0
        %v8014 = vadd.f32 0.0, %v8013
        %v8015 = vpop.f32.mrb[0].mxu0
        %8016 = vmatprep.mubr.bf16.mxu0 0
        %8017 = vmatmul.mubr.bf16.gmra.mrb[0].mxu0 %v7917
        %v8018 = vpop.f32.mrb[0].mxu0
        %v8019 = vadd.f32 0.0, %v8018
        %v8020 = vpop.f32.mrb[0].mxu0
        %v8021 = vpop.f32.mrb[0].mxu0
        %v8022 = vadd.f32 0.0, %v8021
        %v8023 = vpop.f32.mrb[0].mxu0
        %8024 = vmatprep.mubr.bf16.mxu0 0
        %8025 = vmatmul.mubr.bf16.gmra.mrb[0].mxu0 %v7918
        %v8026 = vpop.f32.mrb[0].mxu0
        %v8027 = vadd.f32 0.0, %v8026
        %v8028 = vpop.f32.mrb[0].mxu0
        %v8029 = vpop.f32.mrb[0].mxu0
        %v8030 = vadd.f32 0.0, %v8029
        %v8031 = vpop.f32.mrb[0].mxu0
        %8032 = vmatprep.mubr.bf16.mxu0 0
        %8033 = vmatmul.mubr.bf16.gmra.mrb[0].mxu0 %v7919
        %v8034 = vpop.f32.mrb[0].mxu0
        %v8035 = vadd.f32 0.0, %v8034
        %v8036 = vpop.f32.mrb[0].mxu0
        %v8037 = vpop.f32.mrb[0].mxu0
        %v8038 = vadd.f32 0.0, %v8037
        %v8039 = vpop.f32.mrb[0].mxu0
        %8040 = vdwg.mxu0
        %v8041 = vld [vmem:[#allocation5] sm:$0xff]
        %v8042 = vld [vmem:[#allocation5 + $0x8] sm:$0xff]
        %v8043 = vld [vmem:[#allocation5 + $0x10] sm:$0xff]
        %v8044 = vld [vmem:[#allocation5 + $0x18] sm:$0xff]
        %v8045 = vld [vmem:[#allocation5 + $0x20] sm:$0xff]
        %v8046 = vld [vmem:[#allocation5 + $0x28] sm:$0xff]
        %v8047 = vld [vmem:[#allocation5 + $0x30] sm:$0xff]
        %v8048 = vld [vmem:[#allocation5 + $0x38] sm:$0xff]
        %v8049 = vld [vmem:[#allocation5 + $0x40] sm:$0xff]
        %v8050 = vld [vmem:[#allocation5 + $0x48] sm:$0xff]
        %v8051 = vld [vmem:[#allocation5 + $0x50] sm:$0xff]
        %v8052 = vld [vmem:[#allocation5 + $0x58] sm:$0xff]
        %v8053 = vld [vmem:[#allocation5 + $0x60] sm:$0xff]
        %v8054 = vld [vmem:[#allocation5 + $0x68] sm:$0xff]
        %v8055 = vld [vmem:[#allocation5 + $0x70] sm:$0xff]
        %v8056 = vld [vmem:[#allocation5 + $0x78] sm:$0xff]
        %8058 = vset.pattern.permute.xlu0 7
        %8059 = vperm.xlu0 %8058, %v7673
        %v8060 = vpop.permute.xlu0 %8059
        %8063 = vset.pattern.permute.xlu0 7
        %8064 = vperm.xlu0 %8063, %v7675
        %v8065 = vpop.permute.xlu0 %8064
        %8068 = vset.pattern.permute.xlu0 7
        %8069 = vperm.xlu0 %8068, %v7677
        %v8070 = vpop.permute.xlu0 %8069
        %8073 = vset.pattern.permute.xlu0 7
        %8074 = vperm.xlu0 %8073, %v7679
        %v8075 = vpop.permute.xlu0 %8074
        %8078 = vset.pattern.permute.xlu0 7
        %8079 = vperm.xlu0 %8078, %v7681
        %v8080 = vpop.permute.xlu0 %8079
        %8083 = vset.pattern.permute.xlu0 7
        %8084 = vperm.xlu0 %8083, %v7683
        %v8085 = vpop.permute.xlu0 %8084
        %8088 = vset.pattern.permute.xlu0 7
        %8089 = vperm.xlu0 %8088, %v7685
        %v8090 = vpop.permute.xlu0 %8089
        %8093 = vset.pattern.permute.xlu0 7
        %8094 = vperm.xlu0 %8093, %v7687
        %v8095 = vpop.permute.xlu0 %8094
        %8098 = vset.pattern.permute.xlu0 7
        %8099 = vperm.xlu0 %8098, %v7689
        %v8100 = vpop.permute.xlu0 %8099
        %8103 = vset.pattern.permute.xlu0 7
        %8104 = vperm.xlu0 %8103, %v7691
        %v8105 = vpop.permute.xlu0 %8104
        %8108 = vset.pattern.permute.xlu0 7
        %8109 = vperm.xlu0 %8108, %v7693
        %v8110 = vpop.permute.xlu0 %8109
        %8113 = vset.pattern.permute.xlu0 7
        %8114 = vperm.xlu0 %8113, %v7695
        %v8115 = vpop.permute.xlu0 %8114
        %8118 = vset.pattern.permute.xlu0 7
        %8119 = vperm.xlu0 %8118, %v7697
        %v8120 = vpop.permute.xlu0 %8119
        %8123 = vset.pattern.permute.xlu0 7
        %8124 = vperm.xlu0 %8123, %v7699
        %v8125 = vpop.permute.xlu0 %8124
        %8128 = vset.pattern.permute.xlu0 7
        %8129 = vperm.xlu0 %8128, %v7701
        %v8130 = vpop.permute.xlu0 %8129
        %8133 = vset.pattern.permute.xlu0 7
        %8134 = vperm.xlu0 %8133, %v7703
        %v8135 = vpop.permute.xlu0 %8134
        %v8137 = vmul.f32 %v8060, %v8041
        %v8138 = vmul.f32 %v8065, %v8042
        %v8139 = vmul.f32 %v8070, %v8043
        %v8140 = vmul.f32 %v8075, %v8044
        %v8141 = vmul.f32 %v8080, %v8045
        %v8142 = vmul.f32 %v8085, %v8046
        %v8143 = vmul.f32 %v8090, %v8047
        %v8144 = vmul.f32 %v8095, %v8048
        %v8145 = vmul.f32 %v8100, %v8049
        %v8146 = vmul.f32 %v8105, %v8050
        %v8147 = vmul.f32 %v8110, %v8051
        %v8148 = vmul.f32 %v8115, %v8052
        %v8149 = vmul.f32 %v8120, %v8053
        %v8150 = vmul.f32 %v8125, %v8054
        %v8151 = vmul.f32 %v8130, %v8055
        %v8152 = vmul.f32 %v8135, %v8056
        %8169 = vrot.lane.b32.xlu0 %v7979, 112
        %v8170 = vpop.permute.xlu0 %8169
        %8171 = vrot.lane.b32.xlu0 %v7982, 112
        %v8172 = vpop.permute.xlu0 %8171
        %8173 = vrot.lane.b32.xlu0 %v7987, 112
        %v8174 = vpop.permute.xlu0 %8173
        %8175 = vrot.lane.b32.xlu0 %v7990, 112
        %v8176 = vpop.permute.xlu0 %8175
        %8177 = vrot.lane.b32.xlu0 %v7995, 112
        %v8178 = vpop.permute.xlu0 %8177
        %8179 = vrot.lane.b32.xlu0 %v7998, 112
        %v8180 = vpop.permute.xlu0 %8179
        %8181 = vrot.lane.b32.xlu0 %v8003, 112
        %v8182 = vpop.permute.xlu0 %8181
        %8183 = vrot.lane.b32.xlu0 %v8006, 112
        %v8184 = vpop.permute.xlu0 %8183
        %8185 = vrot.lane.b32.xlu0 %v8011, 112
        %v8186 = vpop.permute.xlu0 %8185
        %8187 = vrot.lane.b32.xlu0 %v8014, 112
        %v8188 = vpop.permute.xlu0 %8187
        %8189 = vrot.lane.b32.xlu0 %v8019, 112
        %v8190 = vpop.permute.xlu0 %8189
        %8191 = vrot.lane.b32.xlu0 %v8022, 112
        %v8192 = vpop.permute.xlu0 %8191
        %8193 = vrot.lane.b32.xlu0 %v8027, 112
        %v8194 = vpop.permute.xlu0 %8193
        %8195 = vrot.lane.b32.xlu0 %v8030, 112
        %v8196 = vpop.permute.xlu0 %8195
        %8197 = vrot.lane.b32.xlu0 %v8035, 112
        %v8198 = vpop.permute.xlu0 %8197
        %8199 = vrot.lane.b32.xlu0 %v8038, 112
        %v8200 = vpop.permute.xlu0 %8199
        %v8217 = vadd.f32 %v8137, %v8170
        %v8218 = vadd.f32 %v8138, %v8172
        %v8219 = vadd.f32 %v8139, %v8174
        %v8220 = vadd.f32 %v8140, %v8176
        %v8221 = vadd.f32 %v8141, %v8178
        %v8222 = vadd.f32 %v8142, %v8180
        %v8223 = vadd.f32 %v8143, %v8182
        %v8224 = vadd.f32 %v8144, %v8184
        %v8225 = vadd.f32 %v8145, %v8186
        %v8226 = vadd.f32 %v8146, %v8188
        %v8227 = vadd.f32 %v8147, %v8190
        %v8228 = vadd.f32 %v8148, %v8192
        %v8229 = vadd.f32 %v8149, %v8194
        %v8230 = vadd.f32 %v8150, %v8196
        %v8231 = vadd.f32 %v8151, %v8198
        %v8232 = vadd.f32 %v8152, %v8200
        %vm8233 = vcmask 1048448
        %8234 = vst.msk [vmem:[#allocation5] sm:$0xff] %vm8233, %v8217
        %8235 = vst.msk [vmem:[#allocation5 + $0x8] sm:$0xff] %vm8233, %v8218
        %8236 = vst.msk [vmem:[#allocation5 + $0x10] sm:$0xff] %vm8233, %v8219
        %8237 = vst.msk [vmem:[#allocation5 + $0x18] sm:$0xff] %vm8233, %v8220
        %8238 = vst.msk [vmem:[#allocation5 + $0x20] sm:$0xff] %vm8233, %v8221
        %8239 = vst.msk [vmem:[#allocation5 + $0x28] sm:$0xff] %vm8233, %v8222
        %8240 = vst.msk [vmem:[#allocation5 + $0x30] sm:$0xff] %vm8233, %v8223
        %8241 = vst.msk [vmem:[#allocation5 + $0x38] sm:$0xff] %vm8233, %v8224
        %8242 = vst.msk [vmem:[#allocation5 + $0x40] sm:$0xff] %vm8233, %v8225
        %8243 = vst.msk [vmem:[#allocation5 + $0x48] sm:$0xff] %vm8233, %v8226
        %8244 = vst.msk [vmem:[#allocation5 + $0x50] sm:$0xff] %vm8233, %v8227
        %8245 = vst.msk [vmem:[#allocation5 + $0x58] sm:$0xff] %vm8233, %v8228
        %8246 = vst.msk [vmem:[#allocation5 + $0x60] sm:$0xff] %vm8233, %v8229
        %8247 = vst.msk [vmem:[#allocation5 + $0x68] sm:$0xff] %vm8233, %v8230
        %8248 = vst.msk [vmem:[#allocation5 + $0x70] sm:$0xff] %vm8233, %v8231
        %8249 = vst.msk [vmem:[#allocation5 + $0x78] sm:$0xff] %vm8233, %v8232
        %vm8250 = vcmask 64568
        %8251 = vst.msk [vmem:[#allocation3] sm:$0xff] %vm8250, %v7640
        %8252 = vst.msk [vmem:[#allocation3 + $0x8] sm:$0xff] %vm8250, %v7641
        %8253 = vst.msk [vmem:[#allocation3 + $0x10] sm:$0xff] %vm8250, %v7642
        %8254 = vst.msk [vmem:[#allocation3 + $0x18] sm:$0xff] %vm8250, %v7643
        %8255 = vst.msk [vmem:[#allocation3 + $0x20] sm:$0xff] %vm8250, %v7644
        %8256 = vst.msk [vmem:[#allocation3 + $0x28] sm:$0xff] %vm8250, %v7645
        %8257 = vst.msk [vmem:[#allocation3 + $0x30] sm:$0xff] %vm8250, %v7646
        %8258 = vst.msk [vmem:[#allocation3 + $0x38] sm:$0xff] %vm8250, %v7647
        %8259 = vst.msk [vmem:[#allocation3 + $0x40] sm:$0xff] %vm8250, %v7648
        %8260 = vst.msk [vmem:[#allocation3 + $0x48] sm:$0xff] %vm8250, %v7649
        %8261 = vst.msk [vmem:[#allocation3 + $0x50] sm:$0xff] %vm8250, %v7650
        %8262 = vst.msk [vmem:[#allocation3 + $0x58] sm:$0xff] %vm8250, %v7651
        %8263 = vst.msk [vmem:[#allocation3 + $0x60] sm:$0xff] %vm8250, %v7652
        %8264 = vst.msk [vmem:[#allocation3 + $0x68] sm:$0xff] %vm8250, %v7653
        %8265 = vst.msk [vmem:[#allocation3 + $0x70] sm:$0xff] %vm8250, %v7654
        %8266 = vst.msk [vmem:[#allocation3 + $0x78] sm:$0xff] %vm8250, %v7655
        %8267 = vst.msk [vmem:[#allocation4] sm:$0xff] %vm8250, %v7896
        %8268 = vst.msk [vmem:[#allocation4 + $0x8] sm:$0xff] %vm8250, %v7897
        %8269 = vst.msk [vmem:[#allocation4 + $0x10] sm:$0xff] %vm8250, %v7898
        %8270 = vst.msk [vmem:[#allocation4 + $0x18] sm:$0xff] %vm8250, %v7899
        %8271 = vst.msk [vmem:[#allocation4 + $0x20] sm:$0xff] %vm8250, %v7900
        %8272 = vst.msk [vmem:[#allocation4 + $0x28] sm:$0xff] %vm8250, %v7901
        %8273 = vst.msk [vmem:[#allocation4 + $0x30] sm:$0xff] %vm8250, %v7902
        %8274 = vst.msk [vmem:[#allocation4 + $0x38] sm:$0xff] %vm8250, %v7903
        %8275 = vst.msk [vmem:[#allocation4 + $0x40] sm:$0xff] %vm8250, %v7904
        %8276 = vst.msk [vmem:[#allocation4 + $0x48] sm:$0xff] %vm8250, %v7905
        %8277 = vst.msk [vmem:[#allocation4 + $0x50] sm:$0xff] %vm8250, %v7906
        %8278 = vst.msk [vmem:[#allocation4 + $0x58] sm:$0xff] %vm8250, %v7907
        %8279 = vst.msk [vmem:[#allocation4 + $0x60] sm:$0xff] %vm8250, %v7908
        %8280 = vst.msk [vmem:[#allocation4 + $0x68] sm:$0xff] %vm8250, %v7909
        %8281 = vst.msk [vmem:[#allocation4 + $0x70] sm:$0xff] %vm8250, %v7910
        %8282 = vst.msk [vmem:[#allocation4 + $0x78] sm:$0xff] %vm8250, %v7911
        %p8283 = scmp.eq.s32.totalorder %s42, 1
        // Predicated region
        $region89: #{tpu_custom_call.1} parent=67 // pred_check
          %p8284 = pneg %p8283
        $region90: #{tpu_custom_call.1} parent=67 // pred_check_branch
          %8286 = sbr.rel (%p8284) target = $region92
        $region91: #{tpu_custom_call.1} parent=67 // pred_region
          %v8287 = vld [vmem:[#allocation4] sm:$0xff]
          %v8288 = vld [vmem:[#allocation4 + $0x8] sm:$0xff]
          %v8289 = vld [vmem:[#allocation4 + $0x10] sm:$0xff]
          %v8290 = vld [vmem:[#allocation4 + $0x18] sm:$0xff]
          %v8291 = vld [vmem:[#allocation4 + $0x20] sm:$0xff]
          %v8292 = vld [vmem:[#allocation4 + $0x28] sm:$0xff]
          %v8293 = vld [vmem:[#allocation4 + $0x30] sm:$0xff]
          %v8294 = vld [vmem:[#allocation4 + $0x38] sm:$0xff]
          %v8295 = vld [vmem:[#allocation4 + $0x40] sm:$0xff]
          %v8296 = vld [vmem:[#allocation4 + $0x48] sm:$0xff]
          %v8297 = vld [vmem:[#allocation4 + $0x50] sm:$0xff]
          %v8298 = vld [vmem:[#allocation4 + $0x58] sm:$0xff]
          %v8299 = vld [vmem:[#allocation4 + $0x60] sm:$0xff]
          %v8300 = vld [vmem:[#allocation4 + $0x68] sm:$0xff]
          %v8301 = vld [vmem:[#allocation4 + $0x70] sm:$0xff]
          %v8302 = vld [vmem:[#allocation4 + $0x78] sm:$0xff]
          %v8303 = vrcp.pop %v8287
          %v8304 = vrcp.pop %v8288
          %v8305 = vrcp.pop %v8289
          %v8306 = vrcp.pop %v8290
          %v8307 = vrcp.pop %v8291
          %v8308 = vrcp.pop %v8292
          %v8309 = vrcp.pop %v8293
          %v8310 = vrcp.pop %v8294
          %v8311 = vrcp.pop %v8295
          %v8312 = vrcp.pop %v8296
          %v8313 = vrcp.pop %v8297
          %v8314 = vrcp.pop %v8298
          %v8315 = vrcp.pop %v8299
          %v8316 = vrcp.pop %v8300
          %v8317 = vrcp.pop %v8301
          %v8318 = vrcp.pop %v8302
          %v8319 = vld [vmem:[#allocation5] sm:$0xff]
          %v8320 = vld [vmem:[#allocation5 + $0x8] sm:$0xff]
          %v8321 = vld [vmem:[#allocation5 + $0x10] sm:$0xff]
          %v8322 = vld [vmem:[#allocation5 + $0x18] sm:$0xff]
          %v8323 = vld [vmem:[#allocation5 + $0x20] sm:$0xff]
          %v8324 = vld [vmem:[#allocation5 + $0x28] sm:$0xff]
          %v8325 = vld [vmem:[#allocation5 + $0x30] sm:$0xff]
          %v8326 = vld [vmem:[#allocation5 + $0x38] sm:$0xff]
          %v8327 = vld [vmem:[#allocation5 + $0x40] sm:$0xff]
          %v8328 = vld [vmem:[#allocation5 + $0x48] sm:$0xff]
          %v8329 = vld [vmem:[#allocation5 + $0x50] sm:$0xff]
          %v8330 = vld [vmem:[#allocation5 + $0x58] sm:$0xff]
          %v8331 = vld [vmem:[#allocation5 + $0x60] sm:$0xff]
          %v8332 = vld [vmem:[#allocation5 + $0x68] sm:$0xff]
          %v8333 = vld [vmem:[#allocation5 + $0x70] sm:$0xff]
          %v8334 = vld [vmem:[#allocation5 + $0x78] sm:$0xff]
          %8336 = vset.pattern.permute.xlu0 0
          %8337 = vperm.xlu0 %8336, %v8303
          %v8338 = vpop.permute.xlu0 %8337
          %8341 = vset.pattern.permute.xlu0 0
          %8342 = vperm.xlu0 %8341, %v8304
          %v8343 = vpop.permute.xlu0 %8342
          %8346 = vset.pattern.permute.xlu0 0
          %8347 = vperm.xlu0 %8346, %v8305
          %v8348 = vpop.permute.xlu0 %8347
          %8351 = vset.pattern.permute.xlu0 0
          %8352 = vperm.xlu0 %8351, %v8306
          %v8353 = vpop.permute.xlu0 %8352
          %8356 = vset.pattern.permute.xlu0 0
          %8357 = vperm.xlu0 %8356, %v8307
          %v8358 = vpop.permute.xlu0 %8357
          %8361 = vset.pattern.permute.xlu0 0
          %8362 = vperm.xlu0 %8361, %v8308
          %v8363 = vpop.permute.xlu0 %8362
          %8366 = vset.pattern.permute.xlu0 0
          %8367 = vperm.xlu0 %8366, %v8309
          %v8368 = vpop.permute.xlu0 %8367
          %8371 = vset.pattern.permute.xlu0 0
          %8372 = vperm.xlu0 %8371, %v8310
          %v8373 = vpop.permute.xlu0 %8372
          %8376 = vset.pattern.permute.xlu0 0
          %8377 = vperm.xlu0 %8376, %v8311
          %v8378 = vpop.permute.xlu0 %8377
          %8381 = vset.pattern.permute.xlu0 0
          %8382 = vperm.xlu0 %8381, %v8312
          %v8383 = vpop.permute.xlu0 %8382
          %8386 = vset.pattern.permute.xlu0 0
          %8387 = vperm.xlu0 %8386, %v8313
          %v8388 = vpop.permute.xlu0 %8387
          %8391 = vset.pattern.permute.xlu0 0
          %8392 = vperm.xlu0 %8391, %v8314
          %v8393 = vpop.permute.xlu0 %8392
          %8396 = vset.pattern.permute.xlu0 0
          %8397 = vperm.xlu0 %8396, %v8315
          %v8398 = vpop.permute.xlu0 %8397
          %8401 = vset.pattern.permute.xlu0 0
          %8402 = vperm.xlu0 %8401, %v8316
          %v8403 = vpop.permute.xlu0 %8402
          %8406 = vset.pattern.permute.xlu0 0
          %8407 = vperm.xlu0 %8406, %v8317
          %v8408 = vpop.permute.xlu0 %8407
          %8411 = vset.pattern.permute.xlu0 0
          %8412 = vperm.xlu0 %8411, %v8318
          %v8413 = vpop.permute.xlu0 %8412
          %v8415 = vmul.f32 %v8319, %v8338
          %v8416 = vmul.f32 %v8320, %v8343
          %v8417 = vmul.f32 %v8321, %v8348
          %v8418 = vmul.f32 %v8322, %v8353
          %v8419 = vmul.f32 %v8323, %v8358
          %v8420 = vmul.f32 %v8324, %v8363
          %v8421 = vmul.f32 %v8325, %v8368
          %v8422 = vmul.f32 %v8326, %v8373
          %v8423 = vmul.f32 %v8327, %v8378
          %v8424 = vmul.f32 %v8328, %v8383
          %v8425 = vmul.f32 %v8329, %v8388
          %v8426 = vmul.f32 %v8330, %v8393
          %v8427 = vmul.f32 %v8331, %v8398
          %v8428 = vmul.f32 %v8332, %v8403
          %v8429 = vmul.f32 %v8333, %v8408
          %v8430 = vmul.f32 %v8334, %v8413
          %8431 = vst.msk [vmem:[#allocation5] sm:$0xff] %vm2133, %v8415
          %8432 = vst.msk [vmem:[#allocation5 + $0x8] sm:$0xff] %vm2133, %v8416
          %8433 = vst.msk [vmem:[#allocation5 + $0x10] sm:$0xff] %vm2133, %v8417
          %8434 = vst.msk [vmem:[#allocation5 + $0x18] sm:$0xff] %vm2133, %v8418
          %8435 = vst.msk [vmem:[#allocation5 + $0x20] sm:$0xff] %vm2133, %v8419
          %8436 = vst.msk [vmem:[#allocation5 + $0x28] sm:$0xff] %vm2133, %v8420
          %8437 = vst.msk [vmem:[#allocation5 + $0x30] sm:$0xff] %vm2133, %v8421
          %8438 = vst.msk [vmem:[#allocation5 + $0x38] sm:$0xff] %vm2133, %v8422
          %8439 = vst.msk [vmem:[#allocation5 + $0x40] sm:$0xff] %vm2133, %v8423
          %8440 = vst.msk [vmem:[#allocation5 + $0x48] sm:$0xff] %vm2133, %v8424
          %8441 = vst.msk [vmem:[#allocation5 + $0x50] sm:$0xff] %vm2133, %v8425
          %8442 = vst.msk [vmem:[#allocation5 + $0x58] sm:$0xff] %vm2133, %v8426
          %8443 = vst.msk [vmem:[#allocation5 + $0x60] sm:$0xff] %vm2133, %v8427
          %8444 = vst.msk [vmem:[#allocation5 + $0x68] sm:$0xff] %vm2133, %v8428
          %8445 = vst.msk [vmem:[#allocation5 + $0x70] sm:$0xff] %vm2133, %v8429
          %8446 = vst.msk [vmem:[#allocation5 + $0x78] sm:$0xff] %vm2133, %v8430
          %v8447 = vld [vmem:[#allocation4] sm:$0xff]
          %v8448 = vld [vmem:[#allocation4 + $0x8] sm:$0xff]
          %v8449 = vld [vmem:[#allocation4 + $0x10] sm:$0xff]
          %v8450 = vld [vmem:[#allocation4 + $0x18] sm:$0xff]
          %v8451 = vld [vmem:[#allocation4 + $0x20] sm:$0xff]
          %v8452 = vld [vmem:[#allocation4 + $0x28] sm:$0xff]
          %v8453 = vld [vmem:[#allocation4 + $0x30] sm:$0xff]
          %v8454 = vld [vmem:[#allocation4 + $0x38] sm:$0xff]
          %v8455 = vld [vmem:[#allocation4 + $0x40] sm:$0xff]
          %v8456 = vld [vmem:[#allocation4 + $0x48] sm:$0xff]
          %v8457 = vld [vmem:[#allocation4 + $0x50] sm:$0xff]
          %v8458 = vld [vmem:[#allocation4 + $0x58] sm:$0xff]
          %v8459 = vld [vmem:[#allocation4 + $0x60] sm:$0xff]
          %v8460 = vld [vmem:[#allocation4 + $0x68] sm:$0xff]
          %v8461 = vld [vmem:[#allocation4 + $0x70] sm:$0xff]
          %v8462 = vld [vmem:[#allocation4 + $0x78] sm:$0xff]
          %v8463 = vrcp.pop %v8447
          %v8464 = vrcp.pop %v8448
          %v8465 = vrcp.pop %v8449
          %v8466 = vrcp.pop %v8450
          %v8467 = vrcp.pop %v8451
          %v8468 = vrcp.pop %v8452
          %v8469 = vrcp.pop %v8453
          %v8470 = vrcp.pop %v8454
          %v8471 = vrcp.pop %v8455
          %v8472 = vrcp.pop %v8456
          %v8473 = vrcp.pop %v8457
          %v8474 = vrcp.pop %v8458
          %v8475 = vrcp.pop %v8459
          %v8476 = vrcp.pop %v8460
          %v8477 = vrcp.pop %v8461
          %v8478 = vrcp.pop %v8462
          %v8479 = vld [vmem:[#allocation5] sm:$0xff]
          %v8480 = vld [vmem:[#allocation5 + $0x8] sm:$0xff]
          %v8481 = vld [vmem:[#allocation5 + $0x10] sm:$0xff]
          %v8482 = vld [vmem:[#allocation5 + $0x18] sm:$0xff]
          %v8483 = vld [vmem:[#allocation5 + $0x20] sm:$0xff]
          %v8484 = vld [vmem:[#allocation5 + $0x28] sm:$0xff]
          %v8485 = vld [vmem:[#allocation5 + $0x30] sm:$0xff]
          %v8486 = vld [vmem:[#allocation5 + $0x38] sm:$0xff]
          %v8487 = vld [vmem:[#allocation5 + $0x40] sm:$0xff]
          %v8488 = vld [vmem:[#allocation5 + $0x48] sm:$0xff]
          %v8489 = vld [vmem:[#allocation5 + $0x50] sm:$0xff]
          %v8490 = vld [vmem:[#allocation5 + $0x58] sm:$0xff]
          %v8491 = vld [vmem:[#allocation5 + $0x60] sm:$0xff]
          %v8492 = vld [vmem:[#allocation5 + $0x68] sm:$0xff]
          %v8493 = vld [vmem:[#allocation5 + $0x70] sm:$0xff]
          %v8494 = vld [vmem:[#allocation5 + $0x78] sm:$0xff]
          %8496 = vset.pattern.permute.xlu0 1
          %8497 = vperm.xlu0 %8496, %v8463
          %v8498 = vpop.permute.xlu0 %8497
          %8501 = vset.pattern.permute.xlu0 1
          %8502 = vperm.xlu0 %8501, %v8464
          %v8503 = vpop.permute.xlu0 %8502
          %8506 = vset.pattern.permute.xlu0 1
          %8507 = vperm.xlu0 %8506, %v8465
          %v8508 = vpop.permute.xlu0 %8507
          %8511 = vset.pattern.permute.xlu0 1
          %8512 = vperm.xlu0 %8511, %v8466
          %v8513 = vpop.permute.xlu0 %8512
          %8516 = vset.pattern.permute.xlu0 1
          %8517 = vperm.xlu0 %8516, %v8467
          %v8518 = vpop.permute.xlu0 %8517
          %8521 = vset.pattern.permute.xlu0 1
          %8522 = vperm.xlu0 %8521, %v8468
          %v8523 = vpop.permute.xlu0 %8522
          %8526 = vset.pattern.permute.xlu0 1
          %8527 = vperm.xlu0 %8526, %v8469
          %v8528 = vpop.permute.xlu0 %8527
          %8531 = vset.pattern.permute.xlu0 1
          %8532 = vperm.xlu0 %8531, %v8470
          %v8533 = vpop.permute.xlu0 %8532
          %8536 = vset.pattern.permute.xlu0 1
          %8537 = vperm.xlu0 %8536, %v8471
          %v8538 = vpop.permute.xlu0 %8537
          %8541 = vset.pattern.permute.xlu0 1
          %8542 = vperm.xlu0 %8541, %v8472
          %v8543 = vpop.permute.xlu0 %8542
          %8546 = vset.pattern.permute.xlu0 1
          %8547 = vperm.xlu0 %8546, %v8473
          %v8548 = vpop.permute.xlu0 %8547
          %8551 = vset.pattern.permute.xlu0 1
          %8552 = vperm.xlu0 %8551, %v8474
          %v8553 = vpop.permute.xlu0 %8552
          %8556 = vset.pattern.permute.xlu0 1
          %8557 = vperm.xlu0 %8556, %v8475
          %v8558 = vpop.permute.xlu0 %8557
          %8561 = vset.pattern.permute.xlu0 1
          %8562 = vperm.xlu0 %8561, %v8476
          %v8563 = vpop.permute.xlu0 %8562
          %8566 = vset.pattern.permute.xlu0 1
          %8567 = vperm.xlu0 %8566, %v8477
          %v8568 = vpop.permute.xlu0 %8567
          %8571 = vset.pattern.permute.xlu0 1
          %8572 = vperm.xlu0 %8571, %v8478
          %v8573 = vpop.permute.xlu0 %8572
          %v8575 = vmul.f32 %v8479, %v8498
          %v8576 = vmul.f32 %v8480, %v8503
          %v8577 = vmul.f32 %v8481, %v8508
          %v8578 = vmul.f32 %v8482, %v8513
          %v8579 = vmul.f32 %v8483, %v8518
          %v8580 = vmul.f32 %v8484, %v8523
          %v8581 = vmul.f32 %v8485, %v8528
          %v8582 = vmul.f32 %v8486, %v8533
          %v8583 = vmul.f32 %v8487, %v8538
          %v8584 = vmul.f32 %v8488, %v8543
          %v8585 = vmul.f32 %v8489, %v8548
          %v8586 = vmul.f32 %v8490, %v8553
          %v8587 = vmul.f32 %v8491, %v8558
          %v8588 = vmul.f32 %v8492, %v8563
          %v8589 = vmul.f32 %v8493, %v8568
          %v8590 = vmul.f32 %v8494, %v8573
          %8591 = vst.msk [vmem:[#allocation5] sm:$0xff] %vm3025, %v8575
          %8592 = vst.msk [vmem:[#allocation5 + $0x8] sm:$0xff] %vm3025, %v8576
          %8593 = vst.msk [vmem:[#allocation5 + $0x10] sm:$0xff] %vm3025, %v8577
          %8594 = vst.msk [vmem:[#allocation5 + $0x18] sm:$0xff] %vm3025, %v8578
          %8595 = vst.msk [vmem:[#allocation5 + $0x20] sm:$0xff] %vm3025, %v8579
          %8596 = vst.msk [vmem:[#allocation5 + $0x28] sm:$0xff] %vm3025, %v8580
          %8597 = vst.msk [vmem:[#allocation5 + $0x30] sm:$0xff] %vm3025, %v8581
          %8598 = vst.msk [vmem:[#allocation5 + $0x38] sm:$0xff] %vm3025, %v8582
          %8599 = vst.msk [vmem:[#allocation5 + $0x40] sm:$0xff] %vm3025, %v8583
          %8600 = vst.msk [vmem:[#allocation5 + $0x48] sm:$0xff] %vm3025, %v8584
          %8601 = vst.msk [vmem:[#allocation5 + $0x50] sm:$0xff] %vm3025, %v8585
          %8602 = vst.msk [vmem:[#allocation5 + $0x58] sm:$0xff] %vm3025, %v8586
          %8603 = vst.msk [vmem:[#allocation5 + $0x60] sm:$0xff] %vm3025, %v8587
          %8604 = vst.msk [vmem:[#allocation5 + $0x68] sm:$0xff] %vm3025, %v8588
          %8605 = vst.msk [vmem:[#allocation5 + $0x70] sm:$0xff] %vm3025, %v8589
          %8606 = vst.msk [vmem:[#allocation5 + $0x78] sm:$0xff] %vm3025, %v8590
          %v8607 = vld [vmem:[#allocation4] sm:$0xff]
          %v8608 = vld [vmem:[#allocation4 + $0x8] sm:$0xff]
          %v8609 = vld [vmem:[#allocation4 + $0x10] sm:$0xff]
          %v8610 = vld [vmem:[#allocation4 + $0x18] sm:$0xff]
          %v8611 = vld [vmem:[#allocation4 + $0x20] sm:$0xff]
          %v8612 = vld [vmem:[#allocation4 + $0x28] sm:$0xff]
          %v8613 = vld [vmem:[#allocation4 + $0x30] sm:$0xff]
          %v8614 = vld [vmem:[#allocation4 + $0x38] sm:$0xff]
          %v8615 = vld [vmem:[#allocation4 + $0x40] sm:$0xff]
          %v8616 = vld [vmem:[#allocation4 + $0x48] sm:$0xff]
          %v8617 = vld [vmem:[#allocation4 + $0x50] sm:$0xff]
          %v8618 = vld [vmem:[#allocation4 + $0x58] sm:$0xff]
          %v8619 = vld [vmem:[#allocation4 + $0x60] sm:$0xff]
          %v8620 = vld [vmem:[#allocation4 + $0x68] sm:$0xff]
          %v8621 = vld [vmem:[#allocation4 + $0x70] sm:$0xff]
          %v8622 = vld [vmem:[#allocation4 + $0x78] sm:$0xff]
          %v8623 = vrcp.pop %v8607
          %v8624 = vrcp.pop %v8608
          %v8625 = vrcp.pop %v8609
          %v8626 = vrcp.pop %v8610
          %v8627 = vrcp.pop %v8611
          %v8628 = vrcp.pop %v8612
          %v8629 = vrcp.pop %v8613
          %v8630 = vrcp.pop %v8614
          %v8631 = vrcp.pop %v8615
          %v8632 = vrcp.pop %v8616
          %v8633 = vrcp.pop %v8617
          %v8634 = vrcp.pop %v8618
          %v8635 = vrcp.pop %v8619
          %v8636 = vrcp.pop %v8620
          %v8637 = vrcp.pop %v8621
          %v8638 = vrcp.pop %v8622
          %v8639 = vld [vmem:[#allocation5] sm:$0xff]
          %v8640 = vld [vmem:[#allocation5 + $0x8] sm:$0xff]
          %v8641 = vld [vmem:[#allocation5 + $0x10] sm:$0xff]
          %v8642 = vld [vmem:[#allocation5 + $0x18] sm:$0xff]
          %v8643 = vld [vmem:[#allocation5 + $0x20] sm:$0xff]
          %v8644 = vld [vmem:[#allocation5 + $0x28] sm:$0xff]
          %v8645 = vld [vmem:[#allocation5 + $0x30] sm:$0xff]
          %v8646 = vld [vmem:[#allocation5 + $0x38] sm:$0xff]
          %v8647 = vld [vmem:[#allocation5 + $0x40] sm:$0xff]
          %v8648 = vld [vmem:[#allocation5 + $0x48] sm:$0xff]
          %v8649 = vld [vmem:[#allocation5 + $0x50] sm:$0xff]
          %v8650 = vld [vmem:[#allocation5 + $0x58] sm:$0xff]
          %v8651 = vld [vmem:[#allocation5 + $0x60] sm:$0xff]
          %v8652 = vld [vmem:[#allocation5 + $0x68] sm:$0xff]
          %v8653 = vld [vmem:[#allocation5 + $0x70] sm:$0xff]
          %v8654 = vld [vmem:[#allocation5 + $0x78] sm:$0xff]
          %8656 = vset.pattern.permute.xlu0 2
          %8657 = vperm.xlu0 %8656, %v8623
          %v8658 = vpop.permute.xlu0 %8657
          %8661 = vset.pattern.permute.xlu0 2
          %8662 = vperm.xlu0 %8661, %v8624
          %v8663 = vpop.permute.xlu0 %8662
          %8666 = vset.pattern.permute.xlu0 2
          %8667 = vperm.xlu0 %8666, %v8625
          %v8668 = vpop.permute.xlu0 %8667
          %8671 = vset.pattern.permute.xlu0 2
          %8672 = vperm.xlu0 %8671, %v8626
          %v8673 = vpop.permute.xlu0 %8672
          %8676 = vset.pattern.permute.xlu0 2
          %8677 = vperm.xlu0 %8676, %v8627
          %v8678 = vpop.permute.xlu0 %8677
          %8681 = vset.pattern.permute.xlu0 2
          %8682 = vperm.xlu0 %8681, %v8628
          %v8683 = vpop.permute.xlu0 %8682
          %8686 = vset.pattern.permute.xlu0 2
          %8687 = vperm.xlu0 %8686, %v8629
          %v8688 = vpop.permute.xlu0 %8687
          %8691 = vset.pattern.permute.xlu0 2
          %8692 = vperm.xlu0 %8691, %v8630
          %v8693 = vpop.permute.xlu0 %8692
          %8696 = vset.pattern.permute.xlu0 2
          %8697 = vperm.xlu0 %8696, %v8631
          %v8698 = vpop.permute.xlu0 %8697
          %8701 = vset.pattern.permute.xlu0 2
          %8702 = vperm.xlu0 %8701, %v8632
          %v8703 = vpop.permute.xlu0 %8702
          %8706 = vset.pattern.permute.xlu0 2
          %8707 = vperm.xlu0 %8706, %v8633
          %v8708 = vpop.permute.xlu0 %8707
          %8711 = vset.pattern.permute.xlu0 2
          %8712 = vperm.xlu0 %8711, %v8634
          %v8713 = vpop.permute.xlu0 %8712
          %8716 = vset.pattern.permute.xlu0 2
          %8717 = vperm.xlu0 %8716, %v8635
          %v8718 = vpop.permute.xlu0 %8717
          %8721 = vset.pattern.permute.xlu0 2
          %8722 = vperm.xlu0 %8721, %v8636
          %v8723 = vpop.permute.xlu0 %8722
          %8726 = vset.pattern.permute.xlu0 2
          %8727 = vperm.xlu0 %8726, %v8637
          %v8728 = vpop.permute.xlu0 %8727
          %8731 = vset.pattern.permute.xlu0 2
          %8732 = vperm.xlu0 %8731, %v8638
          %v8733 = vpop.permute.xlu0 %8732
          %v8735 = vmul.f32 %v8639, %v8658
          %v8736 = vmul.f32 %v8640, %v8663
          %v8737 = vmul.f32 %v8641, %v8668
          %v8738 = vmul.f32 %v8642, %v8673
          %v8739 = vmul.f32 %v8643, %v8678
          %v8740 = vmul.f32 %v8644, %v8683
          %v8741 = vmul.f32 %v8645, %v8688
          %v8742 = vmul.f32 %v8646, %v8693
          %v8743 = vmul.f32 %v8647, %v8698
          %v8744 = vmul.f32 %v8648, %v8703
          %v8745 = vmul.f32 %v8649, %v8708
          %v8746 = vmul.f32 %v8650, %v8713
          %v8747 = vmul.f32 %v8651, %v8718
          %v8748 = vmul.f32 %v8652, %v8723
          %v8749 = vmul.f32 %v8653, %v8728
          %v8750 = vmul.f32 %v8654, %v8733
          %8751 = vst.msk [vmem:[#allocation5] sm:$0xff] %vm3893, %v8735
          %8752 = vst.msk [vmem:[#allocation5 + $0x8] sm:$0xff] %vm3893, %v8736
          %8753 = vst.msk [vmem:[#allocation5 + $0x10] sm:$0xff] %vm3893, %v8737
          %8754 = vst.msk [vmem:[#allocation5 + $0x18] sm:$0xff] %vm3893, %v8738
          %8755 = vst.msk [vmem:[#allocation5 + $0x20] sm:$0xff] %vm3893, %v8739
          %8756 = vst.msk [vmem:[#allocation5 + $0x28] sm:$0xff] %vm3893, %v8740
          %8757 = vst.msk [vmem:[#allocation5 + $0x30] sm:$0xff] %vm3893, %v8741
          %8758 = vst.msk [vmem:[#allocation5 + $0x38] sm:$0xff] %vm3893, %v8742
          %8759 = vst.msk [vmem:[#allocation5 + $0x40] sm:$0xff] %vm3893, %v8743
          %8760 = vst.msk [vmem:[#allocation5 + $0x48] sm:$0xff] %vm3893, %v8744
          %8761 = vst.msk [vmem:[#allocation5 + $0x50] sm:$0xff] %vm3893, %v8745
          %8762 = vst.msk [vmem:[#allocation5 + $0x58] sm:$0xff] %vm3893, %v8746
          %8763 = vst.msk [vmem:[#allocation5 + $0x60] sm:$0xff] %vm3893, %v8747
          %8764 = vst.msk [vmem:[#allocation5 + $0x68] sm:$0xff] %vm3893, %v8748
          %8765 = vst.msk [vmem:[#allocation5 + $0x70] sm:$0xff] %vm3893, %v8749
          %8766 = vst.msk [vmem:[#allocation5 + $0x78] sm:$0xff] %vm3893, %v8750
          %v8767 = vld [vmem:[#allocation4] sm:$0xff]
          %v8768 = vld [vmem:[#allocation4 + $0x8] sm:$0xff]
          %v8769 = vld [vmem:[#allocation4 + $0x10] sm:$0xff]
          %v8770 = vld [vmem:[#allocation4 + $0x18] sm:$0xff]
          %v8771 = vld [vmem:[#allocation4 + $0x20] sm:$0xff]
          %v8772 = vld [vmem:[#allocation4 + $0x28] sm:$0xff]
          %v8773 = vld [vmem:[#allocation4 + $0x30] sm:$0xff]
          %v8774 = vld [vmem:[#allocation4 + $0x38] sm:$0xff]
          %v8775 = vld [vmem:[#allocation4 + $0x40] sm:$0xff]
          %v8776 = vld [vmem:[#allocation4 + $0x48] sm:$0xff]
          %v8777 = vld [vmem:[#allocation4 + $0x50] sm:$0xff]
          %v8778 = vld [vmem:[#allocation4 + $0x58] sm:$0xff]
          %v8779 = vld [vmem:[#allocation4 + $0x60] sm:$0xff]
          %v8780 = vld [vmem:[#allocation4 + $0x68] sm:$0xff]
          %v8781 = vld [vmem:[#allocation4 + $0x70] sm:$0xff]
          %v8782 = vld [vmem:[#allocation4 + $0x78] sm:$0xff]
          %v8783 = vrcp.pop %v8767
          %v8784 = vrcp.pop %v8768
          %v8785 = vrcp.pop %v8769
          %v8786 = vrcp.pop %v8770
          %v8787 = vrcp.pop %v8771
          %v8788 = vrcp.pop %v8772
          %v8789 = vrcp.pop %v8773
          %v8790 = vrcp.pop %v8774
          %v8791 = vrcp.pop %v8775
          %v8792 = vrcp.pop %v8776
          %v8793 = vrcp.pop %v8777
          %v8794 = vrcp.pop %v8778
          %v8795 = vrcp.pop %v8779
          %v8796 = vrcp.pop %v8780
          %v8797 = vrcp.pop %v8781
          %v8798 = vrcp.pop %v8782
          %v8799 = vld [vmem:[#allocation5] sm:$0xff]
          %v8800 = vld [vmem:[#allocation5 + $0x8] sm:$0xff]
          %v8801 = vld [vmem:[#allocation5 + $0x10] sm:$0xff]
          %v8802 = vld [vmem:[#allocation5 + $0x18] sm:$0xff]
          %v8803 = vld [vmem:[#allocation5 + $0x20] sm:$0xff]
          %v8804 = vld [vmem:[#allocation5 + $0x28] sm:$0xff]
          %v8805 = vld [vmem:[#allocation5 + $0x30] sm:$0xff]
          %v8806 = vld [vmem:[#allocation5 + $0x38] sm:$0xff]
          %v8807 = vld [vmem:[#allocation5 + $0x40] sm:$0xff]
          %v8808 = vld [vmem:[#allocation5 + $0x48] sm:$0xff]
          %v8809 = vld [vmem:[#allocation5 + $0x50] sm:$0xff]
          %v8810 = vld [vmem:[#allocation5 + $0x58] sm:$0xff]
          %v8811 = vld [vmem:[#allocation5 + $0x60] sm:$0xff]
          %v8812 = vld [vmem:[#allocation5 + $0x68] sm:$0xff]
          %v8813 = vld [vmem:[#allocation5 + $0x70] sm:$0xff]
          %v8814 = vld [vmem:[#allocation5 + $0x78] sm:$0xff]
          %8816 = vset.pattern.permute.xlu0 3
          %8817 = vperm.xlu0 %8816, %v8783
          %v8818 = vpop.permute.xlu0 %8817
          %8821 = vset.pattern.permute.xlu0 3
          %8822 = vperm.xlu0 %8821, %v8784
          %v8823 = vpop.permute.xlu0 %8822
          %8826 = vset.pattern.permute.xlu0 3
          %8827 = vperm.xlu0 %8826, %v8785
          %v8828 = vpop.permute.xlu0 %8827
          %8831 = vset.pattern.permute.xlu0 3
          %8832 = vperm.xlu0 %8831, %v8786
          %v8833 = vpop.permute.xlu0 %8832
          %8836 = vset.pattern.permute.xlu0 3
          %8837 = vperm.xlu0 %8836, %v8787
          %v8838 = vpop.permute.xlu0 %8837
          %8841 = vset.pattern.permute.xlu0 3
          %8842 = vperm.xlu0 %8841, %v8788
          %v8843 = vpop.permute.xlu0 %8842
          %8846 = vset.pattern.permute.xlu0 3
          %8847 = vperm.xlu0 %8846, %v8789
          %v8848 = vpop.permute.xlu0 %8847
          %8851 = vset.pattern.permute.xlu0 3
          %8852 = vperm.xlu0 %8851, %v8790
          %v8853 = vpop.permute.xlu0 %8852
          %8856 = vset.pattern.permute.xlu0 3
          %8857 = vperm.xlu0 %8856, %v8791
          %v8858 = vpop.permute.xlu0 %8857
          %8861 = vset.pattern.permute.xlu0 3
          %8862 = vperm.xlu0 %8861, %v8792
          %v8863 = vpop.permute.xlu0 %8862
          %8866 = vset.pattern.permute.xlu0 3
          %8867 = vperm.xlu0 %8866, %v8793
          %v8868 = vpop.permute.xlu0 %8867
          %8871 = vset.pattern.permute.xlu0 3
          %8872 = vperm.xlu0 %8871, %v8794
          %v8873 = vpop.permute.xlu0 %8872
          %8876 = vset.pattern.permute.xlu0 3
          %8877 = vperm.xlu0 %8876, %v8795
          %v8878 = vpop.permute.xlu0 %8877
          %8881 = vset.pattern.permute.xlu0 3
          %8882 = vperm.xlu0 %8881, %v8796
          %v8883 = vpop.permute.xlu0 %8882
          %8886 = vset.pattern.permute.xlu0 3
          %8887 = vperm.xlu0 %8886, %v8797
          %v8888 = vpop.permute.xlu0 %8887
          %8891 = vset.pattern.permute.xlu0 3
          %8892 = vperm.xlu0 %8891, %v8798
          %v8893 = vpop.permute.xlu0 %8892
          %v8895 = vmul.f32 %v8799, %v8818
          %v8896 = vmul.f32 %v8800, %v8823
          %v8897 = vmul.f32 %v8801, %v8828
          %v8898 = vmul.f32 %v8802, %v8833
          %v8899 = vmul.f32 %v8803, %v8838
          %v8900 = vmul.f32 %v8804, %v8843
          %v8901 = vmul.f32 %v8805, %v8848
          %v8902 = vmul.f32 %v8806, %v8853
          %v8903 = vmul.f32 %v8807, %v8858
          %v8904 = vmul.f32 %v8808, %v8863
          %v8905 = vmul.f32 %v8809, %v8868
          %v8906 = vmul.f32 %v8810, %v8873
          %v8907 = vmul.f32 %v8811, %v8878
          %v8908 = vmul.f32 %v8812, %v8883
          %v8909 = vmul.f32 %v8813, %v8888
          %v8910 = vmul.f32 %v8814, %v8893
          %8911 = vst.msk [vmem:[#allocation5] sm:$0xff] %vm4761, %v8895
          %8912 = vst.msk [vmem:[#allocation5 + $0x8] sm:$0xff] %vm4761, %v8896
          %8913 = vst.msk [vmem:[#allocation5 + $0x10] sm:$0xff] %vm4761, %v8897
          %8914 = vst.msk [vmem:[#allocation5 + $0x18] sm:$0xff] %vm4761, %v8898
          %8915 = vst.msk [vmem:[#allocation5 + $0x20] sm:$0xff] %vm4761, %v8899
          %8916 = vst.msk [vmem:[#allocation5 + $0x28] sm:$0xff] %vm4761, %v8900
          %8917 = vst.msk [vmem:[#allocation5 + $0x30] sm:$0xff] %vm4761, %v8901
          %8918 = vst.msk [vmem:[#allocation5 + $0x38] sm:$0xff] %vm4761, %v8902
          %8919 = vst.msk [vmem:[#allocation5 + $0x40] sm:$0xff] %vm4761, %v8903
          %8920 = vst.msk [vmem:[#allocation5 + $0x48] sm:$0xff] %vm4761, %v8904
          %8921 = vst.msk [vmem:[#allocation5 + $0x50] sm:$0xff] %vm4761, %v8905
          %8922 = vst.msk [vmem:[#allocation5 + $0x58] sm:$0xff] %vm4761, %v8906
          %8923 = vst.msk [vmem:[#allocation5 + $0x60] sm:$0xff] %vm4761, %v8907
          %8924 = vst.msk [vmem:[#allocation5 + $0x68] sm:$0xff] %vm4761, %v8908
          %8925 = vst.msk [vmem:[#allocation5 + $0x70] sm:$0xff] %vm4761, %v8909
          %8926 = vst.msk [vmem:[#allocation5 + $0x78] sm:$0xff] %vm4761, %v8910
          %v8927 = vld [vmem:[#allocation4] sm:$0xff]
          %v8928 = vld [vmem:[#allocation4 + $0x8] sm:$0xff]
          %v8929 = vld [vmem:[#allocation4 + $0x10] sm:$0xff]
          %v8930 = vld [vmem:[#allocation4 + $0x18] sm:$0xff]
          %v8931 = vld [vmem:[#allocation4 + $0x20] sm:$0xff]
          %v8932 = vld [vmem:[#allocation4 + $0x28] sm:$0xff]
          %v8933 = vld [vmem:[#allocation4 + $0x30] sm:$0xff]
          %v8934 = vld [vmem:[#allocation4 + $0x38] sm:$0xff]
          %v8935 = vld [vmem:[#allocation4 + $0x40] sm:$0xff]
          %v8936 = vld [vmem:[#allocation4 + $0x48] sm:$0xff]
          %v8937 = vld [vmem:[#allocation4 + $0x50] sm:$0xff]
          %v8938 = vld [vmem:[#allocation4 + $0x58] sm:$0xff]
          %v8939 = vld [vmem:[#allocation4 + $0x60] sm:$0xff]
          %v8940 = vld [vmem:[#allocation4 + $0x68] sm:$0xff]
          %v8941 = vld [vmem:[#allocation4 + $0x70] sm:$0xff]
          %v8942 = vld [vmem:[#allocation4 + $0x78] sm:$0xff]
          %v8943 = vrcp.pop %v8927
          %v8944 = vrcp.pop %v8928
          %v8945 = vrcp.pop %v8929
          %v8946 = vrcp.pop %v8930
          %v8947 = vrcp.pop %v8931
          %v8948 = vrcp.pop %v8932
          %v8949 = vrcp.pop %v8933
          %v8950 = vrcp.pop %v8934
          %v8951 = vrcp.pop %v8935
          %v8952 = vrcp.pop %v8936
          %v8953 = vrcp.pop %v8937
          %v8954 = vrcp.pop %v8938
          %v8955 = vrcp.pop %v8939
          %v8956 = vrcp.pop %v8940
          %v8957 = vrcp.pop %v8941
          %v8958 = vrcp.pop %v8942
          %v8959 = vld [vmem:[#allocation5] sm:$0xff]
          %v8960 = vld [vmem:[#allocation5 + $0x8] sm:$0xff]
          %v8961 = vld [vmem:[#allocation5 + $0x10] sm:$0xff]
          %v8962 = vld [vmem:[#allocation5 + $0x18] sm:$0xff]
          %v8963 = vld [vmem:[#allocation5 + $0x20] sm:$0xff]
          %v8964 = vld [vmem:[#allocation5 + $0x28] sm:$0xff]
          %v8965 = vld [vmem:[#allocation5 + $0x30] sm:$0xff]
          %v8966 = vld [vmem:[#allocation5 + $0x38] sm:$0xff]
          %v8967 = vld [vmem:[#allocation5 + $0x40] sm:$0xff]
          %v8968 = vld [vmem:[#allocation5 + $0x48] sm:$0xff]
          %v8969 = vld [vmem:[#allocation5 + $0x50] sm:$0xff]
          %v8970 = vld [vmem:[#allocation5 + $0x58] sm:$0xff]
          %v8971 = vld [vmem:[#allocation5 + $0x60] sm:$0xff]
          %v8972 = vld [vmem:[#allocation5 + $0x68] sm:$0xff]
          %v8973 = vld [vmem:[#allocation5 + $0x70] sm:$0xff]
          %v8974 = vld [vmem:[#allocation5 + $0x78] sm:$0xff]
          %8976 = vset.pattern.permute.xlu0 4
          %8977 = vperm.xlu0 %8976, %v8943
          %v8978 = vpop.permute.xlu0 %8977
          %8981 = vset.pattern.permute.xlu0 4
          %8982 = vperm.xlu0 %8981, %v8944
          %v8983 = vpop.permute.xlu0 %8982
          %8986 = vset.pattern.permute.xlu0 4
          %8987 = vperm.xlu0 %8986, %v8945
          %v8988 = vpop.permute.xlu0 %8987
          %8991 = vset.pattern.permute.xlu0 4
          %8992 = vperm.xlu0 %8991, %v8946
          %v8993 = vpop.permute.xlu0 %8992
          %8996 = vset.pattern.permute.xlu0 4
          %8997 = vperm.xlu0 %8996, %v8947
          %v8998 = vpop.permute.xlu0 %8997
          %9001 = vset.pattern.permute.xlu0 4
          %9002 = vperm.xlu0 %9001, %v8948
          %v9003 = vpop.permute.xlu0 %9002
          %9006 = vset.pattern.permute.xlu0 4
          %9007 = vperm.xlu0 %9006, %v8949
          %v9008 = vpop.permute.xlu0 %9007
          %9011 = vset.pattern.permute.xlu0 4
          %9012 = vperm.xlu0 %9011, %v8950
          %v9013 = vpop.permute.xlu0 %9012
          %9016 = vset.pattern.permute.xlu0 4
          %9017 = vperm.xlu0 %9016, %v8951
          %v9018 = vpop.permute.xlu0 %9017
          %9021 = vset.pattern.permute.xlu0 4
          %9022 = vperm.xlu0 %9021, %v8952
          %v9023 = vpop.permute.xlu0 %9022
          %9026 = vset.pattern.permute.xlu0 4
          %9027 = vperm.xlu0 %9026, %v8953
          %v9028 = vpop.permute.xlu0 %9027
          %9031 = vset.pattern.permute.xlu0 4
          %9032 = vperm.xlu0 %9031, %v8954
          %v9033 = vpop.permute.xlu0 %9032
          %9036 = vset.pattern.permute.xlu0 4
          %9037 = vperm.xlu0 %9036, %v8955
          %v9038 = vpop.permute.xlu0 %9037
          %9041 = vset.pattern.permute.xlu0 4
          %9042 = vperm.xlu0 %9041, %v8956
          %v9043 = vpop.permute.xlu0 %9042
          %9046 = vset.pattern.permute.xlu0 4
          %9047 = vperm.xlu0 %9046, %v8957
          %v9048 = vpop.permute.xlu0 %9047
          %9051 = vset.pattern.permute.xlu0 4
          %9052 = vperm.xlu0 %9051, %v8958
          %v9053 = vpop.permute.xlu0 %9052
          %v9055 = vmul.f32 %v8959, %v8978
          %v9056 = vmul.f32 %v8960, %v8983
          %v9057 = vmul.f32 %v8961, %v8988
          %v9058 = vmul.f32 %v8962, %v8993
          %v9059 = vmul.f32 %v8963, %v8998
          %v9060 = vmul.f32 %v8964, %v9003
          %v9061 = vmul.f32 %v8965, %v9008
          %v9062 = vmul.f32 %v8966, %v9013
          %v9063 = vmul.f32 %v8967, %v9018
          %v9064 = vmul.f32 %v8968, %v9023
          %v9065 = vmul.f32 %v8969, %v9028
          %v9066 = vmul.f32 %v8970, %v9033
          %v9067 = vmul.f32 %v8971, %v9038
          %v9068 = vmul.f32 %v8972, %v9043
          %v9069 = vmul.f32 %v8973, %v9048
          %v9070 = vmul.f32 %v8974, %v9053
          %9071 = vst.msk [vmem:[#allocation5] sm:$0xff] %vm5629, %v9055
          %9072 = vst.msk [vmem:[#allocation5 + $0x8] sm:$0xff] %vm5629, %v9056
          %9073 = vst.msk [vmem:[#allocation5 + $0x10] sm:$0xff] %vm5629, %v9057
          %9074 = vst.msk [vmem:[#allocation5 + $0x18] sm:$0xff] %vm5629, %v9058
          %9075 = vst.msk [vmem:[#allocation5 + $0x20] sm:$0xff] %vm5629, %v9059
          %9076 = vst.msk [vmem:[#allocation5 + $0x28] sm:$0xff] %vm5629, %v9060
          %9077 = vst.msk [vmem:[#allocation5 + $0x30] sm:$0xff] %vm5629, %v9061
          %9078 = vst.msk [vmem:[#allocation5 + $0x38] sm:$0xff] %vm5629, %v9062
          %9079 = vst.msk [vmem:[#allocation5 + $0x40] sm:$0xff] %vm5629, %v9063
          %9080 = vst.msk [vmem:[#allocation5 + $0x48] sm:$0xff] %vm5629, %v9064
          %9081 = vst.msk [vmem:[#allocation5 + $0x50] sm:$0xff] %vm5629, %v9065
          %9082 = vst.msk [vmem:[#allocation5 + $0x58] sm:$0xff] %vm5629, %v9066
          %9083 = vst.msk [vmem:[#allocation5 + $0x60] sm:$0xff] %vm5629, %v9067
          %9084 = vst.msk [vmem:[#allocation5 + $0x68] sm:$0xff] %vm5629, %v9068
          %9085 = vst.msk [vmem:[#allocation5 + $0x70] sm:$0xff] %vm5629, %v9069
          %9086 = vst.msk [vmem:[#allocation5 + $0x78] sm:$0xff] %vm5629, %v9070
          %v9087 = vld [vmem:[#allocation4] sm:$0xff]
          %v9088 = vld [vmem:[#allocation4 + $0x8] sm:$0xff]
          %v9089 = vld [vmem:[#allocation4 + $0x10] sm:$0xff]
          %v9090 = vld [vmem:[#allocation4 + $0x18] sm:$0xff]
          %v9091 = vld [vmem:[#allocation4 + $0x20] sm:$0xff]
          %v9092 = vld [vmem:[#allocation4 + $0x28] sm:$0xff]
          %v9093 = vld [vmem:[#allocation4 + $0x30] sm:$0xff]
          %v9094 = vld [vmem:[#allocation4 + $0x38] sm:$0xff]
          %v9095 = vld [vmem:[#allocation4 + $0x40] sm:$0xff]
          %v9096 = vld [vmem:[#allocation4 + $0x48] sm:$0xff]
          %v9097 = vld [vmem:[#allocation4 + $0x50] sm:$0xff]
          %v9098 = vld [vmem:[#allocation4 + $0x58] sm:$0xff]
          %v9099 = vld [vmem:[#allocation4 + $0x60] sm:$0xff]
          %v9100 = vld [vmem:[#allocation4 + $0x68] sm:$0xff]
          %v9101 = vld [vmem:[#allocation4 + $0x70] sm:$0xff]
          %v9102 = vld [vmem:[#allocation4 + $0x78] sm:$0xff]
          %v9103 = vrcp.pop %v9087
          %v9104 = vrcp.pop %v9088
          %v9105 = vrcp.pop %v9089
          %v9106 = vrcp.pop %v9090
          %v9107 = vrcp.pop %v9091
          %v9108 = vrcp.pop %v9092
          %v9109 = vrcp.pop %v9093
          %v9110 = vrcp.pop %v9094
          %v9111 = vrcp.pop %v9095
          %v9112 = vrcp.pop %v9096
          %v9113 = vrcp.pop %v9097
          %v9114 = vrcp.pop %v9098
          %v9115 = vrcp.pop %v9099
          %v9116 = vrcp.pop %v9100
          %v9117 = vrcp.pop %v9101
          %v9118 = vrcp.pop %v9102
          %v9119 = vld [vmem:[#allocation5] sm:$0xff]
          %v9120 = vld [vmem:[#allocation5 + $0x8] sm:$0xff]
          %v9121 = vld [vmem:[#allocation5 + $0x10] sm:$0xff]
          %v9122 = vld [vmem:[#allocation5 + $0x18] sm:$0xff]
          %v9123 = vld [vmem:[#allocation5 + $0x20] sm:$0xff]
          %v9124 = vld [vmem:[#allocation5 + $0x28] sm:$0xff]
          %v9125 = vld [vmem:[#allocation5 + $0x30] sm:$0xff]
          %v9126 = vld [vmem:[#allocation5 + $0x38] sm:$0xff]
          %v9127 = vld [vmem:[#allocation5 + $0x40] sm:$0xff]
          %v9128 = vld [vmem:[#allocation5 + $0x48] sm:$0xff]
          %v9129 = vld [vmem:[#allocation5 + $0x50] sm:$0xff]
          %v9130 = vld [vmem:[#allocation5 + $0x58] sm:$0xff]
          %v9131 = vld [vmem:[#allocation5 + $0x60] sm:$0xff]
          %v9132 = vld [vmem:[#allocation5 + $0x68] sm:$0xff]
          %v9133 = vld [vmem:[#allocation5 + $0x70] sm:$0xff]
          %v9134 = vld [vmem:[#allocation5 + $0x78] sm:$0xff]
          %9136 = vset.pattern.permute.xlu0 5
          %9137 = vperm.xlu0 %9136, %v9103
          %v9138 = vpop.permute.xlu0 %9137
          %9141 = vset.pattern.permute.xlu0 5
          %9142 = vperm.xlu0 %9141, %v9104
          %v9143 = vpop.permute.xlu0 %9142
          %9146 = vset.pattern.permute.xlu0 5
          %9147 = vperm.xlu0 %9146, %v9105
          %v9148 = vpop.permute.xlu0 %9147
          %9151 = vset.pattern.permute.xlu0 5
          %9152 = vperm.xlu0 %9151, %v9106
          %v9153 = vpop.permute.xlu0 %9152
          %9156 = vset.pattern.permute.xlu0 5
          %9157 = vperm.xlu0 %9156, %v9107
          %v9158 = vpop.permute.xlu0 %9157
          %9161 = vset.pattern.permute.xlu0 5
          %9162 = vperm.xlu0 %9161, %v9108
          %v9163 = vpop.permute.xlu0 %9162
          %9166 = vset.pattern.permute.xlu0 5
          %9167 = vperm.xlu0 %9166, %v9109
          %v9168 = vpop.permute.xlu0 %9167
          %9171 = vset.pattern.permute.xlu0 5
          %9172 = vperm.xlu0 %9171, %v9110
          %v9173 = vpop.permute.xlu0 %9172
          %9176 = vset.pattern.permute.xlu0 5
          %9177 = vperm.xlu0 %9176, %v9111
          %v9178 = vpop.permute.xlu0 %9177
          %9181 = vset.pattern.permute.xlu0 5
          %9182 = vperm.xlu0 %9181, %v9112
          %v9183 = vpop.permute.xlu0 %9182
          %9186 = vset.pattern.permute.xlu0 5
          %9187 = vperm.xlu0 %9186, %v9113
          %v9188 = vpop.permute.xlu0 %9187
          %9191 = vset.pattern.permute.xlu0 5
          %9192 = vperm.xlu0 %9191, %v9114
          %v9193 = vpop.permute.xlu0 %9192
          %9196 = vset.pattern.permute.xlu0 5
          %9197 = vperm.xlu0 %9196, %v9115
          %v9198 = vpop.permute.xlu0 %9197
          %9201 = vset.pattern.permute.xlu0 5
          %9202 = vperm.xlu0 %9201, %v9116
          %v9203 = vpop.permute.xlu0 %9202
          %9206 = vset.pattern.permute.xlu0 5
          %9207 = vperm.xlu0 %9206, %v9117
          %v9208 = vpop.permute.xlu0 %9207
          %9211 = vset.pattern.permute.xlu0 5
          %9212 = vperm.xlu0 %9211, %v9118
          %v9213 = vpop.permute.xlu0 %9212
          %v9215 = vmul.f32 %v9119, %v9138
          %v9216 = vmul.f32 %v9120, %v9143
          %v9217 = vmul.f32 %v9121, %v9148
          %v9218 = vmul.f32 %v9122, %v9153
          %v9219 = vmul.f32 %v9123, %v9158
          %v9220 = vmul.f32 %v9124, %v9163
          %v9221 = vmul.f32 %v9125, %v9168
          %v9222 = vmul.f32 %v9126, %v9173
          %v9223 = vmul.f32 %v9127, %v9178
          %v9224 = vmul.f32 %v9128, %v9183
          %v9225 = vmul.f32 %v9129, %v9188
          %v9226 = vmul.f32 %v9130, %v9193
          %v9227 = vmul.f32 %v9131, %v9198
          %v9228 = vmul.f32 %v9132, %v9203
          %v9229 = vmul.f32 %v9133, %v9208
          %v9230 = vmul.f32 %v9134, %v9213
          %9231 = vst.msk [vmem:[#allocation5] sm:$0xff] %vm6497, %v9215
          %9232 = vst.msk [vmem:[#allocation5 + $0x8] sm:$0xff] %vm6497, %v9216
          %9233 = vst.msk [vmem:[#allocation5 + $0x10] sm:$0xff] %vm6497, %v9217
          %9234 = vst.msk [vmem:[#allocation5 + $0x18] sm:$0xff] %vm6497, %v9218
          %9235 = vst.msk [vmem:[#allocation5 + $0x20] sm:$0xff] %vm6497, %v9219
          %9236 = vst.msk [vmem:[#allocation5 + $0x28] sm:$0xff] %vm6497, %v9220
          %9237 = vst.msk [vmem:[#allocation5 + $0x30] sm:$0xff] %vm6497, %v9221
          %9238 = vst.msk [vmem:[#allocation5 + $0x38] sm:$0xff] %vm6497, %v9222
          %9239 = vst.msk [vmem:[#allocation5 + $0x40] sm:$0xff] %vm6497, %v9223
          %9240 = vst.msk [vmem:[#allocation5 + $0x48] sm:$0xff] %vm6497, %v9224
          %9241 = vst.msk [vmem:[#allocation5 + $0x50] sm:$0xff] %vm6497, %v9225
          %9242 = vst.msk [vmem:[#allocation5 + $0x58] sm:$0xff] %vm6497, %v9226
          %9243 = vst.msk [vmem:[#allocation5 + $0x60] sm:$0xff] %vm6497, %v9227
          %9244 = vst.msk [vmem:[#allocation5 + $0x68] sm:$0xff] %vm6497, %v9228
          %9245 = vst.msk [vmem:[#allocation5 + $0x70] sm:$0xff] %vm6497, %v9229
          %9246 = vst.msk [vmem:[#allocation5 + $0x78] sm:$0xff] %vm6497, %v9230
          %v9247 = vld [vmem:[#allocation4] sm:$0xff]
          %v9248 = vld [vmem:[#allocation4 + $0x8] sm:$0xff]
          %v9249 = vld [vmem:[#allocation4 + $0x10] sm:$0xff]
          %v9250 = vld [vmem:[#allocation4 + $0x18] sm:$0xff]
          %v9251 = vld [vmem:[#allocation4 + $0x20] sm:$0xff]
          %v9252 = vld [vmem:[#allocation4 + $0x28] sm:$0xff]
          %v9253 = vld [vmem:[#allocation4 + $0x30] sm:$0xff]
          %v9254 = vld [vmem:[#allocation4 + $0x38] sm:$0xff]
          %v9255 = vld [vmem:[#allocation4 + $0x40] sm:$0xff]
          %v9256 = vld [vmem:[#allocation4 + $0x48] sm:$0xff]
          %v9257 = vld [vmem:[#allocation4 + $0x50] sm:$0xff]
          %v9258 = vld [vmem:[#allocation4 + $0x58] sm:$0xff]
          %v9259 = vld [vmem:[#allocation4 + $0x60] sm:$0xff]
          %v9260 = vld [vmem:[#allocation4 + $0x68] sm:$0xff]
          %v9261 = vld [vmem:[#allocation4 + $0x70] sm:$0xff]
          %v9262 = vld [vmem:[#allocation4 + $0x78] sm:$0xff]
          %v9263 = vrcp.pop %v9247
          %v9264 = vrcp.pop %v9248
          %v9265 = vrcp.pop %v9249
          %v9266 = vrcp.pop %v9250
          %v9267 = vrcp.pop %v9251
          %v9268 = vrcp.pop %v9252
          %v9269 = vrcp.pop %v9253
          %v9270 = vrcp.pop %v9254
          %v9271 = vrcp.pop %v9255
          %v9272 = vrcp.pop %v9256
          %v9273 = vrcp.pop %v9257
          %v9274 = vrcp.pop %v9258
          %v9275 = vrcp.pop %v9259
          %v9276 = vrcp.pop %v9260
          %v9277 = vrcp.pop %v9261
          %v9278 = vrcp.pop %v9262
          %v9279 = vld [vmem:[#allocation5] sm:$0xff]
          %v9280 = vld [vmem:[#allocation5 + $0x8] sm:$0xff]
          %v9281 = vld [vmem:[#allocation5 + $0x10] sm:$0xff]
          %v9282 = vld [vmem:[#allocation5 + $0x18] sm:$0xff]
          %v9283 = vld [vmem:[#allocation5 + $0x20] sm:$0xff]
          %v9284 = vld [vmem:[#allocation5 + $0x28] sm:$0xff]
          %v9285 = vld [vmem:[#allocation5 + $0x30] sm:$0xff]
          %v9286 = vld [vmem:[#allocation5 + $0x38] sm:$0xff]
          %v9287 = vld [vmem:[#allocation5 + $0x40] sm:$0xff]
          %v9288 = vld [vmem:[#allocation5 + $0x48] sm:$0xff]
          %v9289 = vld [vmem:[#allocation5 + $0x50] sm:$0xff]
          %v9290 = vld [vmem:[#allocation5 + $0x58] sm:$0xff]
          %v9291 = vld [vmem:[#allocation5 + $0x60] sm:$0xff]
          %v9292 = vld [vmem:[#allocation5 + $0x68] sm:$0xff]
          %v9293 = vld [vmem:[#allocation5 + $0x70] sm:$0xff]
          %v9294 = vld [vmem:[#allocation5 + $0x78] sm:$0xff]
          %9296 = vset.pattern.permute.xlu0 6
          %9297 = vperm.xlu0 %9296, %v9263
          %v9298 = vpop.permute.xlu0 %9297
          %9301 = vset.pattern.permute.xlu0 6
          %9302 = vperm.xlu0 %9301, %v9264
          %v9303 = vpop.permute.xlu0 %9302
          %9306 = vset.pattern.permute.xlu0 6
          %9307 = vperm.xlu0 %9306, %v9265
          %v9308 = vpop.permute.xlu0 %9307
          %9311 = vset.pattern.permute.xlu0 6
          %9312 = vperm.xlu0 %9311, %v9266
          %v9313 = vpop.permute.xlu0 %9312
          %9316 = vset.pattern.permute.xlu0 6
          %9317 = vperm.xlu0 %9316, %v9267
          %v9318 = vpop.permute.xlu0 %9317
          %9321 = vset.pattern.permute.xlu0 6
          %9322 = vperm.xlu0 %9321, %v9268
          %v9323 = vpop.permute.xlu0 %9322
          %9326 = vset.pattern.permute.xlu0 6
          %9327 = vperm.xlu0 %9326, %v9269
          %v9328 = vpop.permute.xlu0 %9327
          %9331 = vset.pattern.permute.xlu0 6
          %9332 = vperm.xlu0 %9331, %v9270
          %v9333 = vpop.permute.xlu0 %9332
          %9336 = vset.pattern.permute.xlu0 6
          %9337 = vperm.xlu0 %9336, %v9271
          %v9338 = vpop.permute.xlu0 %9337
          %9341 = vset.pattern.permute.xlu0 6
          %9342 = vperm.xlu0 %9341, %v9272
          %v9343 = vpop.permute.xlu0 %9342
          %9346 = vset.pattern.permute.xlu0 6
          %9347 = vperm.xlu0 %9346, %v9273
          %v9348 = vpop.permute.xlu0 %9347
          %9351 = vset.pattern.permute.xlu0 6
          %9352 = vperm.xlu0 %9351, %v9274
          %v9353 = vpop.permute.xlu0 %9352
          %9356 = vset.pattern.permute.xlu0 6
          %9357 = vperm.xlu0 %9356, %v9275
          %v9358 = vpop.permute.xlu0 %9357
          %9361 = vset.pattern.permute.xlu0 6
          %9362 = vperm.xlu0 %9361, %v9276
          %v9363 = vpop.permute.xlu0 %9362
          %9366 = vset.pattern.permute.xlu0 6
          %9367 = vperm.xlu0 %9366, %v9277
          %v9368 = vpop.permute.xlu0 %9367
          %9371 = vset.pattern.permute.xlu0 6
          %9372 = vperm.xlu0 %9371, %v9278
          %v9373 = vpop.permute.xlu0 %9372
          %v9375 = vmul.f32 %v9279, %v9298
          %v9376 = vmul.f32 %v9280, %v9303
          %v9377 = vmul.f32 %v9281, %v9308
          %v9378 = vmul.f32 %v9282, %v9313
          %v9379 = vmul.f32 %v9283, %v9318
          %v9380 = vmul.f32 %v9284, %v9323
          %v9381 = vmul.f32 %v9285, %v9328
          %v9382 = vmul.f32 %v9286, %v9333
          %v9383 = vmul.f32 %v9287, %v9338
          %v9384 = vmul.f32 %v9288, %v9343
          %v9385 = vmul.f32 %v9289, %v9348
          %v9386 = vmul.f32 %v9290, %v9353
          %v9387 = vmul.f32 %v9291, %v9358
          %v9388 = vmul.f32 %v9292, %v9363
          %v9389 = vmul.f32 %v9293, %v9368
          %v9390 = vmul.f32 %v9294, %v9373
          %9391 = vst.msk [vmem:[#allocation5] sm:$0xff] %vm7365, %v9375
          %9392 = vst.msk [vmem:[#allocation5 + $0x8] sm:$0xff] %vm7365, %v9376
          %9393 = vst.msk [vmem:[#allocation5 + $0x10] sm:$0xff] %vm7365, %v9377
          %9394 = vst.msk [vmem:[#allocation5 + $0x18] sm:$0xff] %vm7365, %v9378
          %9395 = vst.msk [vmem:[#allocation5 + $0x20] sm:$0xff] %vm7365, %v9379
          %9396 = vst.msk [vmem:[#allocation5 + $0x28] sm:$0xff] %vm7365, %v9380
          %9397 = vst.msk [vmem:[#allocation5 + $0x30] sm:$0xff] %vm7365, %v9381
          %9398 = vst.msk [vmem:[#allocation5 + $0x38] sm:$0xff] %vm7365, %v9382
          %9399 = vst.msk [vmem:[#allocation5 + $0x40] sm:$0xff] %vm7365, %v9383
          %9400 = vst.msk [vmem:[#allocation5 + $0x48] sm:$0xff] %vm7365, %v9384
          %9401 = vst.msk [vmem:[#allocation5 + $0x50] sm:$0xff] %vm7365, %v9385
          %9402 = vst.msk [vmem:[#allocation5 + $0x58] sm:$0xff] %vm7365, %v9386
          %9403 = vst.msk [vmem:[#allocation5 + $0x60] sm:$0xff] %vm7365, %v9387
          %9404 = vst.msk [vmem:[#allocation5 + $0x68] sm:$0xff] %vm7365, %v9388
          %9405 = vst.msk [vmem:[#allocation5 + $0x70] sm:$0xff] %vm7365, %v9389
          %9406 = vst.msk [vmem:[#allocation5 + $0x78] sm:$0xff] %vm7365, %v9390
          %v9407 = vld [vmem:[#allocation4] sm:$0xff]
          %v9408 = vld [vmem:[#allocation4 + $0x8] sm:$0xff]
          %v9409 = vld [vmem:[#allocation4 + $0x10] sm:$0xff]
          %v9410 = vld [vmem:[#allocation4 + $0x18] sm:$0xff]
          %v9411 = vld [vmem:[#allocation4 + $0x20] sm:$0xff]
          %v9412 = vld [vmem:[#allocation4 + $0x28] sm:$0xff]
          %v9413 = vld [vmem:[#allocation4 + $0x30] sm:$0xff]
          %v9414 = vld [vmem:[#allocation4 + $0x38] sm:$0xff]
          %v9415 = vld [vmem:[#allocation4 + $0x40] sm:$0xff]
          %v9416 = vld [vmem:[#allocation4 + $0x48] sm:$0xff]
          %v9417 = vld [vmem:[#allocation4 + $0x50] sm:$0xff]
          %v9418 = vld [vmem:[#allocation4 + $0x58] sm:$0xff]
          %v9419 = vld [vmem:[#allocation4 + $0x60] sm:$0xff]
          %v9420 = vld [vmem:[#allocation4 + $0x68] sm:$0xff]
          %v9421 = vld [vmem:[#allocation4 + $0x70] sm:$0xff]
          %v9422 = vld [vmem:[#allocation4 + $0x78] sm:$0xff]
          %v9423 = vrcp.pop %v9407
          %v9424 = vrcp.pop %v9408
          %v9425 = vrcp.pop %v9409
          %v9426 = vrcp.pop %v9410
          %v9427 = vrcp.pop %v9411
          %v9428 = vrcp.pop %v9412
          %v9429 = vrcp.pop %v9413
          %v9430 = vrcp.pop %v9414
          %v9431 = vrcp.pop %v9415
          %v9432 = vrcp.pop %v9416
          %v9433 = vrcp.pop %v9417
          %v9434 = vrcp.pop %v9418
          %v9435 = vrcp.pop %v9419
          %v9436 = vrcp.pop %v9420
          %v9437 = vrcp.pop %v9421
          %v9438 = vrcp.pop %v9422
          %v9439 = vld [vmem:[#allocation5] sm:$0xff]
          %v9440 = vld [vmem:[#allocation5 + $0x8] sm:$0xff]
          %v9441 = vld [vmem:[#allocation5 + $0x10] sm:$0xff]
          %v9442 = vld [vmem:[#allocation5 + $0x18] sm:$0xff]
          %v9443 = vld [vmem:[#allocation5 + $0x20] sm:$0xff]
          %v9444 = vld [vmem:[#allocation5 + $0x28] sm:$0xff]
          %v9445 = vld [vmem:[#allocation5 + $0x30] sm:$0xff]
          %v9446 = vld [vmem:[#allocation5 + $0x38] sm:$0xff]
          %v9447 = vld [vmem:[#allocation5 + $0x40] sm:$0xff]
          %v9448 = vld [vmem:[#allocation5 + $0x48] sm:$0xff]
          %v9449 = vld [vmem:[#allocation5 + $0x50] sm:$0xff]
          %v9450 = vld [vmem:[#allocation5 + $0x58] sm:$0xff]
          %v9451 = vld [vmem:[#allocation5 + $0x60] sm:$0xff]
          %v9452 = vld [vmem:[#allocation5 + $0x68] sm:$0xff]
          %v9453 = vld [vmem:[#allocation5 + $0x70] sm:$0xff]
          %v9454 = vld [vmem:[#allocation5 + $0x78] sm:$0xff]
          %9456 = vset.pattern.permute.xlu0 7
          %9457 = vperm.xlu0 %9456, %v9423
          %v9458 = vpop.permute.xlu0 %9457
          %9461 = vset.pattern.permute.xlu0 7
          %9462 = vperm.xlu0 %9461, %v9424
          %v9463 = vpop.permute.xlu0 %9462
          %9466 = vset.pattern.permute.xlu0 7
          %9467 = vperm.xlu0 %9466, %v9425
          %v9468 = vpop.permute.xlu0 %9467
          %9471 = vset.pattern.permute.xlu0 7
          %9472 = vperm.xlu0 %9471, %v9426
          %v9473 = vpop.permute.xlu0 %9472
          %9476 = vset.pattern.permute.xlu0 7
          %9477 = vperm.xlu0 %9476, %v9427
          %v9478 = vpop.permute.xlu0 %9477
          %9481 = vset.pattern.permute.xlu0 7
          %9482 = vperm.xlu0 %9481, %v9428
          %v9483 = vpop.permute.xlu0 %9482
          %9486 = vset.pattern.permute.xlu0 7
          %9487 = vperm.xlu0 %9486, %v9429
          %v9488 = vpop.permute.xlu0 %9487
          %9491 = vset.pattern.permute.xlu0 7
          %9492 = vperm.xlu0 %9491, %v9430
          %v9493 = vpop.permute.xlu0 %9492
          %9496 = vset.pattern.permute.xlu0 7
          %9497 = vperm.xlu0 %9496, %v9431
          %v9498 = vpop.permute.xlu0 %9497
          %9501 = vset.pattern.permute.xlu0 7
          %9502 = vperm.xlu0 %9501, %v9432
          %v9503 = vpop.permute.xlu0 %9502
          %9506 = vset.pattern.permute.xlu0 7
          %9507 = vperm.xlu0 %9506, %v9433
          %v9508 = vpop.permute.xlu0 %9507
          %9511 = vset.pattern.permute.xlu0 7
          %9512 = vperm.xlu0 %9511, %v9434
          %v9513 = vpop.permute.xlu0 %9512
          %9516 = vset.pattern.permute.xlu0 7
          %9517 = vperm.xlu0 %9516, %v9435
          %v9518 = vpop.permute.xlu0 %9517
          %9521 = vset.pattern.permute.xlu0 7
          %9522 = vperm.xlu0 %9521, %v9436
          %v9523 = vpop.permute.xlu0 %9522
          %9526 = vset.pattern.permute.xlu0 7
          %9527 = vperm.xlu0 %9526, %v9437
          %v9528 = vpop.permute.xlu0 %9527
          %9531 = vset.pattern.permute.xlu0 7
          %9532 = vperm.xlu0 %9531, %v9438
          %v9533 = vpop.permute.xlu0 %9532
          %v9535 = vmul.f32 %v9439, %v9458
          %v9536 = vmul.f32 %v9440, %v9463
          %v9537 = vmul.f32 %v9441, %v9468
          %v9538 = vmul.f32 %v9442, %v9473
          %v9539 = vmul.f32 %v9443, %v9478
          %v9540 = vmul.f32 %v9444, %v9483
          %v9541 = vmul.f32 %v9445, %v9488
          %v9542 = vmul.f32 %v9446, %v9493
          %v9543 = vmul.f32 %v9447, %v9498
          %v9544 = vmul.f32 %v9448, %v9503
          %v9545 = vmul.f32 %v9449, %v9508
          %v9546 = vmul.f32 %v9450, %v9513
          %v9547 = vmul.f32 %v9451, %v9518
          %v9548 = vmul.f32 %v9452, %v9523
          %v9549 = vmul.f32 %v9453, %v9528
          %v9550 = vmul.f32 %v9454, %v9533
          %9551 = vst.msk [vmem:[#allocation5] sm:$0xff] %vm8233, %v9535
          %9552 = vst.msk [vmem:[#allocation5 + $0x8] sm:$0xff] %vm8233, %v9536
          %9553 = vst.msk [vmem:[#allocation5 + $0x10] sm:$0xff] %vm8233, %v9537
          %9554 = vst.msk [vmem:[#allocation5 + $0x18] sm:$0xff] %vm8233, %v9538
          %9555 = vst.msk [vmem:[#allocation5 + $0x20] sm:$0xff] %vm8233, %v9539
          %9556 = vst.msk [vmem:[#allocation5 + $0x28] sm:$0xff] %vm8233, %v9540
          %9557 = vst.msk [vmem:[#allocation5 + $0x30] sm:$0xff] %vm8233, %v9541
          %9558 = vst.msk [vmem:[#allocation5 + $0x38] sm:$0xff] %vm8233, %v9542
          %9559 = vst.msk [vmem:[#allocation5 + $0x40] sm:$0xff] %vm8233, %v9543
          %9560 = vst.msk [vmem:[#allocation5 + $0x48] sm:$0xff] %vm8233, %v9544
          %9561 = vst.msk [vmem:[#allocation5 + $0x50] sm:$0xff] %vm8233, %v9545
          %9562 = vst.msk [vmem:[#allocation5 + $0x58] sm:$0xff] %vm8233, %v9546
          %9563 = vst.msk [vmem:[#allocation5 + $0x60] sm:$0xff] %vm8233, %v9547
          %9564 = vst.msk [vmem:[#allocation5 + $0x68] sm:$0xff] %vm8233, %v9548
          %9565 = vst.msk [vmem:[#allocation5 + $0x70] sm:$0xff] %vm8233, %v9549
          %9566 = vst.msk [vmem:[#allocation5 + $0x78] sm:$0xff] %vm8233, %v9550
          %v9567 = vld [vmem:[#allocation5] sm:$0xff]
          %v9568 = vld [vmem:[#allocation5 + $0x8] sm:$0xff]
          %v9569 = vld [vmem:[#allocation5 + $0x10] sm:$0xff]
          %v9570 = vld [vmem:[#allocation5 + $0x18] sm:$0xff]
          %v9571 = vld [vmem:[#allocation5 + $0x20] sm:$0xff]
          %v9572 = vld [vmem:[#allocation5 + $0x28] sm:$0xff]
          %v9573 = vld [vmem:[#allocation5 + $0x30] sm:$0xff]
          %v9574 = vld [vmem:[#allocation5 + $0x38] sm:$0xff]
          %v9575 = vld [vmem:[#allocation5 + $0x40] sm:$0xff]
          %v9576 = vld [vmem:[#allocation5 + $0x48] sm:$0xff]
          %v9577 = vld [vmem:[#allocation5 + $0x50] sm:$0xff]
          %v9578 = vld [vmem:[#allocation5 + $0x58] sm:$0xff]
          %v9579 = vld [vmem:[#allocation5 + $0x60] sm:$0xff]
          %v9580 = vld [vmem:[#allocation5 + $0x68] sm:$0xff]
          %v9581 = vld [vmem:[#allocation5 + $0x70] sm:$0xff]
          %v9582 = vld [vmem:[#allocation5 + $0x78] sm:$0xff]
          %v9583 = vpack.c.bf16 %v9568, %v9567
          %v9584 = vpack.c.bf16 %v9570, %v9569
          %v9585 = vpack.c.bf16 %v9572, %v9571
          %v9586 = vpack.c.bf16 %v9574, %v9573
          %v9587 = vpack.c.bf16 %v9576, %v9575
          %v9588 = vpack.c.bf16 %v9578, %v9577
          %v9589 = vpack.c.bf16 %v9580, %v9579
          %v9590 = vpack.c.bf16 %v9582, %v9581
          %v9591 = vld [vmem:[%s10] sm:$0xf]
          %v9592 = vld [vmem:[%s10 + $0x4] sm:$0xf]
          %v9593 = vld [vmem:[%s10 + $0x8] sm:$0xf]
          %v9594 = vld [vmem:[%s10 + $0xc] sm:$0xf]
          %v9595 = vld [vmem:[%s10 + $0x10] sm:$0xf]
          %v9596 = vld [vmem:[%s10 + $0x14] sm:$0xf]
          %v9597 = vld [vmem:[%s10 + $0x18] sm:$0xf]
          %v9598 = vld [vmem:[%s10 + $0x1c] sm:$0xf]
          %v9599 = vld [vmem:[%s10 + $0x20] sm:$0xf]
          %v9600 = vld [vmem:[%s10 + $0x24] sm:$0xf]
          %v9601 = vld [vmem:[%s10 + $0x28] sm:$0xf]
          %v9602 = vld [vmem:[%s10 + $0x2c] sm:$0xf]
          %v9603 = vld [vmem:[%s10 + $0x30] sm:$0xf]
          %v9604 = vld [vmem:[%s10 + $0x34] sm:$0xf]
          %v9605 = vld [vmem:[%s10 + $0x38] sm:$0xf]
          %v9606 = vld [vmem:[%s10 + $0x3c] sm:$0xf]
          %v9607 = vld [vmem:[%s11] sm:$0x1]
          %v9609 = vlaneseq
          %v9610 = vshrl.u32 %v9609, 7
          %v9611 = vsub.s32 0, %v9610
          %v9612 = vrot.slane %v9607, %v9611
          %v9630 = vunpack.c.l.b16 %v9591
          %v9631 = vunpack.c.l.b16 %v9592
          %v9632 = vunpack.c.l.b16 %v9593
          %v9633 = vunpack.c.l.b16 %v9594
          %v9634 = vunpack.c.l.b16 %v9595
          %v9635 = vunpack.c.l.b16 %v9596
          %v9636 = vunpack.c.l.b16 %v9597
          %v9637 = vunpack.c.l.b16 %v9598
          %v9638 = vunpack.c.l.b16 %v9599
          %v9639 = vunpack.c.l.b16 %v9600
          %v9640 = vunpack.c.l.b16 %v9601
          %v9641 = vunpack.c.l.b16 %v9602
          %v9642 = vunpack.c.l.b16 %v9603
          %v9643 = vunpack.c.l.b16 %v9604
          %v9644 = vunpack.c.l.b16 %v9605
          %v9645 = vunpack.c.l.b16 %v9606
          %v9646 = vpack.c.b16 %v9631, %v9630
          %v9647 = vpack.c.b16 %v9633, %v9632
          %v9648 = vpack.c.b16 %v9635, %v9634
          %v9649 = vpack.c.b16 %v9637, %v9636
          %v9650 = vpack.c.b16 %v9639, %v9638
          %v9651 = vpack.c.b16 %v9641, %v9640
          %v9652 = vpack.c.b16 %v9643, %v9642
          %v9653 = vpack.c.b16 %v9645, %v9644
          %9662 = vmatprep.subr.bf16.mxu0 0
          %9663 = vmatpush1.bf16.msra.mxu0 %v9646
          %9664 = vmatprep.subr.bf16.mxu0 0
          %9665 = vmatpush1.bf16.msra.mxu0 %v9647
          %9666 = vmatprep.subr.bf16.mxu0 0
          %9667 = vmatpush1.bf16.msra.mxu0 %v9648
          %9668 = vmatprep.subr.bf16.mxu0 0
          %9669 = vmatpush1.bf16.msra.mxu0 %v9649
          %9670 = vmatprep.subr.bf16.mxu0 0
          %9671 = vmatpush1.bf16.msra.mxu0 %v9650
          %9672 = vmatprep.subr.bf16.mxu0 0
          %9673 = vmatpush1.bf16.msra.mxu0 %v9651
          %9674 = vmatprep.subr.bf16.mxu0 0
          %9675 = vmatpush1.bf16.msra.mxu0 %v9652
          %9676 = vmatprep.subr.bf16.mxu0 0
          %9677 = vmatpush1.bf16.msra.mxu0 %v9653
          %9678 = vmatprep.subr.bf16.mxu0 0
          %9679 = vmatpush1.bf16.msra.mxu0 0
          %9680 = vmatprep.subr.bf16.mxu0 0
          %9681 = vmatpush1.bf16.msra.mxu0 0
          %9682 = vmatprep.subr.bf16.mxu0 0
          %9683 = vmatpush1.bf16.msra.mxu0 0
          %9684 = vmatprep.subr.bf16.mxu0 0
          %9685 = vmatpush1.bf16.msra.mxu0 0
          %9686 = vmatprep.subr.bf16.mxu0 0
          %9687 = vmatpush1.bf16.msra.mxu0 0
          %9688 = vmatprep.subr.bf16.mxu0 0
          %9689 = vmatpush1.bf16.msra.mxu0 0
          %9690 = vmatprep.subr.bf16.mxu0 0
          %9691 = vmatpush1.bf16.msra.mxu0 0
          %9692 = vmatprep.subr.bf16.mxu0 0
          %9693 = vmatpush1.bf16.msra.mxu0 0
          %9694 = vmatprep.mubr.bf16.mxu0 0
          %9695 = vmatmul.mubr.bf16.gmra.mrb[0].mxu0 %v9583
          %v9696 = vpop.f32.mrb[0].mxu0
          %v9697 = vadd.f32 %v9612, %v9696
          %v9698 = vpop.f32.mrb[0].mxu0
          %v9699 = vpop.f32.mrb[0].mxu0
          %v9700 = vadd.f32 %v9612, %v9699
          %v9701 = vpop.f32.mrb[0].mxu0
          %9702 = vmatprep.mubr.bf16.mxu0 0
          %9703 = vmatmul.mubr.bf16.gmra.mrb[0].mxu0 %v9584
          %v9704 = vpop.f32.mrb[0].mxu0
          %v9705 = vadd.f32 %v9612, %v9704
          %v9706 = vpop.f32.mrb[0].mxu0
          %v9707 = vpop.f32.mrb[0].mxu0
          %v9708 = vadd.f32 %v9612, %v9707
          %v9709 = vpop.f32.mrb[0].mxu0
          %9710 = vmatprep.mubr.bf16.mxu0 0
          %9711 = vmatmul.mubr.bf16.gmra.mrb[0].mxu0 %v9585
          %v9712 = vpop.f32.mrb[0].mxu0
          %v9713 = vadd.f32 %v9612, %v9712
          %v9714 = vpop.f32.mrb[0].mxu0
          %v9715 = vpop.f32.mrb[0].mxu0
          %v9716 = vadd.f32 %v9612, %v9715
          %v9717 = vpop.f32.mrb[0].mxu0
          %9718 = vmatprep.mubr.bf16.mxu0 0
          %9719 = vmatmul.mubr.bf16.gmra.mrb[0].mxu0 %v9586
          %v9720 = vpop.f32.mrb[0].mxu0
          %v9721 = vadd.f32 %v9612, %v9720
          %v9722 = vpop.f32.mrb[0].mxu0
          %v9723 = vpop.f32.mrb[0].mxu0
          %v9724 = vadd.f32 %v9612, %v9723
          %v9725 = vpop.f32.mrb[0].mxu0
          %9726 = vmatprep.mubr.bf16.mxu0 0
          %9727 = vmatmul.mubr.bf16.gmra.mrb[0].mxu0 %v9587
          %v9728 = vpop.f32.mrb[0].mxu0
          %v9729 = vadd.f32 %v9612, %v9728
          %v9730 = vpop.f32.mrb[0].mxu0
          %v9731 = vpop.f32.mrb[0].mxu0
          %v9732 = vadd.f32 %v9612, %v9731
          %v9733 = vpop.f32.mrb[0].mxu0
          %9734 = vmatprep.mubr.bf16.mxu0 0
          %9735 = vmatmul.mubr.bf16.gmra.mrb[0].mxu0 %v9588
          %v9736 = vpop.f32.mrb[0].mxu0
          %v9737 = vadd.f32 %v9612, %v9736
          %v9738 = vpop.f32.mrb[0].mxu0
          %v9739 = vpop.f32.mrb[0].mxu0
          %v9740 = vadd.f32 %v9612, %v9739
          %v9741 = vpop.f32.mrb[0].mxu0
          %9742 = vmatprep.mubr.bf16.mxu0 0
          %9743 = vmatmul.mubr.bf16.gmra.mrb[0].mxu0 %v9589
          %v9744 = vpop.f32.mrb[0].mxu0
          %v9745 = vadd.f32 %v9612, %v9744
          %v9746 = vpop.f32.mrb[0].mxu0
          %v9747 = vpop.f32.mrb[0].mxu0
          %v9748 = vadd.f32 %v9612, %v9747
          %v9749 = vpop.f32.mrb[0].mxu0
          %9750 = vmatprep.mubr.bf16.mxu0 0
          %9751 = vmatmul.mubr.bf16.gmra.mrb[0].mxu0 %v9590
          %v9752 = vpop.f32.mrb[0].mxu0
          %v9753 = vadd.f32 %v9612, %v9752
          %v9754 = vpop.f32.mrb[0].mxu0
          %v9755 = vpop.f32.mrb[0].mxu0
          %v9756 = vadd.f32 %v9612, %v9755
          %v9757 = vpop.f32.mrb[0].mxu0
          %9758 = vdwg.mxu0
          %9759 = vst [vmem:[%s589] sm:$0xff] %v9697
          %9760 = vst [vmem:[%s589 + $0x8] sm:$0xff] %v9700
          %9761 = vst [vmem:[%s589 + $0x10] sm:$0xff] %v9705
          %9762 = vst [vmem:[%s589 + $0x18] sm:$0xff] %v9708
          %9763 = vst [vmem:[%s589 + $0x20] sm:$0xff] %v9713
          %9764 = vst [vmem:[%s589 + $0x28] sm:$0xff] %v9716
          %9765 = vst [vmem:[%s589 + $0x30] sm:$0xff] %v9721
          %9766 = vst [vmem:[%s589 + $0x38] sm:$0xff] %v9724
          %9767 = vst [vmem:[%s589 + $0x40] sm:$0xff] %v9729
          %9768 = vst [vmem:[%s589 + $0x48] sm:$0xff] %v9732
          %9769 = vst [vmem:[%s589 + $0x50] sm:$0xff] %v9737
          %9770 = vst [vmem:[%s589 + $0x58] sm:$0xff] %v9740
          %9771 = vst [vmem:[%s589 + $0x60] sm:$0xff] %v9745
          %9772 = vst [vmem:[%s589 + $0x68] sm:$0xff] %v9748
          %9773 = vst [vmem:[%s589 + $0x70] sm:$0xff] %v9753
          %9774 = vst [vmem:[%s589 + $0x78] sm:$0xff] %v9756
        $region92: #{tpu_custom_call.1} parent=67 // pred_fallthru
          _
        %s9775 = sand.u32 %s346, 1
        %s9776 = scalar_lea.sflag [#allocation8], %s9775
        %s9777 = sand.u32 %s346, 1
        %s9778 = smul.addr %s9777, 128
        %s9779 = scalar_lea.vmem [#allocation14], %s9778
        // Predicated region
        $region93: #{tpu_custom_call.1} parent=67 // pred_check
          %p9780 = pneg %p356
        $region94: #{tpu_custom_call.1} parent=67 // pred_check_branch
          %9782 = sbr.rel (%p9780) target = $region96
        $region95: #{tpu_custom_call.1} parent=67 // pred_region
          %s9783 = smul.u32 16, %s41
          %s9785 = ssub.s32 2048, 2048
          %9786 = vsyncadd %s9776, %s9785
          %s9787 = smul.addr %s40, 32
          %s9788 = sadd.s32 %s9783, %s9787
          %s9789 = smul.addr %s9788, 128
          %s9790 = scalar_lea.hbm %s12, %s9789
          %s9791 = sshll.u32 %s9779, 4
          %s9792 = int_to_ptr.vmem [resolvable:$true] %s9791
          %9797 = dma.vmem_to_hbm [thread:$0]  %s9792, 2048, %s9790, %s9776, 128, 128, 8
        $region96: #{tpu_custom_call.1} parent=67 // pred_fallthru
          _
      $region68: #{tpu_custom_call.1} parent=5 // pred_fallthru
        _
      %p9798 = scmp.le.s32.totalorder 2, %s30
      // Predicated region
      $region97: #{tpu_custom_call.1} parent=5 // pred_check
        %p9799 = pneg %p9798
      $region98: #{tpu_custom_call.1} parent=5 // pred_check_branch
        %9801 = sbr.rel (%p9799) target = $region100
      $region99: #{tpu_custom_call.1} parent=5 // pred_region
        %s9802 = ssub.s32 %s30, 2
        // Predicated region
        $region101: #{tpu_custom_call.1} parent=99 // pred_check
          %p9803 = pneg %p362
        $region102: #{tpu_custom_call.1} parent=99 // pred_check_branch
          %9805 = sbr.rel (%p9803) target = $region104
        $region103: #{tpu_custom_call.1} parent=99 // pred_region
          %s9806 = sand.u32 %s347, 1
          %s9807 = scalar_lea.sflag [#allocation8], %s9806
          %s9808 = sand.u32 %s347, 1
          %s9809 = smul.addr %s9808, 128
          %s9810 = scalar_lea.vmem [#allocation14], %s9809
          %9811 = dma.done %s9807, 2048
        $region104: #{tpu_custom_call.1} parent=99 // pred_fallthru
          _
      $region100: #{tpu_custom_call.1} parent=5 // pred_fallthru
        _
    $region6: #{tpu_custom_call.1} parent=1 // loop_footer
      %s34 = sadd.s32 1, %s30
    $region7: #{tpu_custom_call.1} parent=1 // loop_footer_branch
      %29 = sbr.rel target = $region3
    $region8: #{tpu_custom_call.1} parent=1 // loop_exit
      _
    %9812 = vsyncpa [#allocation7], 1
    %s9813 = scalar_lea.sflag [#allocation7], 1
    %9814 = vsyncpa %s9813, 1
    %9815 = vsyncpa [#allocation10], 1
    %s9816 = scalar_lea.sflag [#allocation10], 1
    %9817 = vsyncpa %s9816, 1
    %9818 = vsyncpa [#allocation13], 1
    %s9819 = scalar_lea.sflag [#allocation13], 1
    %9820 = vsyncpa %s9819, 1
    %9821 = vsyncpa [#allocation8], 1
    %s9822 = scalar_lea.sflag [#allocation8], 1
    %9823 = vsyncpa %s9822, 1

</llo_original>
